<compile_context>
chip_gen: v7x
topology: tpu7x:2x2x1
jax: 0.10.0
libtpu: 0.0.40
codegen_flags: <defaults>
</compile_context>

<pallas_src>
import functools

import jax
import jax.numpy as jnp
from jax import lax
from jax.experimental import pallas as pl
from jax.experimental.pallas import tpu as pltpu

LANE = 128


def _round_up(x, m):
    return (x + m - 1) // m * m


def _pick_images_per_step(n, m, c, cmax, padr, c_pad):
    """Images folded into one grid step, capped by a v7x-safe VMEM budget and
    keeping the grid at >= 2 steps so both v7x TensorCores get work."""
    budget = 40 * 1024 * 1024            # v7x physical VMEM is 64 MiB; stay well under
    best = 1
    for g in range(1, n + 1):
        if n % g:
            continue
        if n >= 2 and (n // g) < 2:
            continue                     # keep >= 2 grid steps (megacore / v7x 2 TCs)
        io = 2 * 2 * g * m * c * 4                        # double-buffered in + out blocks
        pad = ((g + 1) * padr + g * m) * c_pad * 4        # f32 halo scratch
        live = g * m * (9 * cmax * 2 + 12 * max(c, cmax) * 4)   # im2col LHS + intermediates
        if io + pad + live <= budget:
            best = g
    return best


# ---------------------------------------------------------------------------
# Fused Inception-A kernel (G images per grid step)
# ---------------------------------------------------------------------------
def _inception_a_kernel(x_ref,
                        w1_ref, bb1_ref, w2h_ref, bb2_ref, w3h_ref, bb3_ref,
                        w2_ref, b2_ref, w3a_ref, b3a_ref, w3b_ref, b3b_ref,
                        wc1_ref, wc2_ref, wc3_ref, bc_ref,
                        o_ref, pad_ref,
                        *, G, H, W, C, oc, padr, res_scale):
    oc0, oc1, oc2, oc3, oc4, oc5 = oc
    m = H * W
    M = G * m

    x = x_ref[...].reshape(M, C)                    # true C, no 128-lane padding
    xb = x.astype(jnp.bfloat16)

    # --- branch-head 1x1 convs (BN folded). Three separate dots keep every
    # channel segment lane-aligned (no sub-128-lane slicing of a fused head).
    def head(w_ref, b_ref):
        h = jnp.dot(xb, w_ref[...], preferred_element_type=jnp.float32)
        return jnp.maximum(h + b_ref[...], 0.0)

    b1 = head(w1_ref, bb1_ref)                      # branch1 final output
    # Eagerly accumulate the final 1x1 conv so b1's live range ends here.
    y = jnp.dot(b1.astype(jnp.bfloat16), wc1_ref[...],
                preferred_element_type=jnp.float32)
    b2h = head(w2h_ref, bb2_ref)                    # branch2 head
    b3h = head(w3h_ref, bb3_ref)                    # branch3 head

    # Column-validity masks for the +-1-pixel horizontal taps; row validity is
    # handled by the zero halo rows of pad_ref.
    col = lax.broadcasted_iota(jnp.int32, (m, 1), 0) % W
    m_left = (col >= 1).astype(jnp.float32)         # for dw == -1
    m_right = (col <= W - 2).astype(jnp.float32)    # for dw == +1

    # Zero only the (G+1) halo/gap row blocks (every step, so megacore grid
    # sharding stays correct); interior rows are fully overwritten by each
    # conv before being read.
    zero_halo = jnp.zeros((padr, pad_ref.shape[1]), pad_ref.dtype)
    for g in range(G + 1):
        r0 = g * (m + padr)
        pad_ref[r0:r0 + padr, :] = zero_halo

    def conv3x3(act, w_taps_ref, bias_ref, cin, cout):
        # K-fused "same" 3x3 conv + folded BN + ReLU: gather the 9 shifted
        # taps from the padded activation buffer, apply the edge masks while
        # forming the im2col LHS, and run ONE matmul with K = 9*cin.
        # NOTE: tap reads only touch columns [:cin]; stale data in columns
        # >= cin (left over from a previous conv) is never read.
        for g in range(G):
            r0 = padr + g * (m + padr)
            pad_ref[r0:r0 + m, :cin] = act[g * m:(g + 1) * m, :]
        blocks = []
        for g in range(G):
            r0 = padr + g * (m + padr)
            taps = []
            for dh in (-1, 0, 1):
                for dw in (-1, 0, 1):
                    off = dh * W + dw
                    tap = pad_ref[r0 + off:r0 + off + m, :cin]
                    if dw == -1:
                        tap = tap * m_left
                    elif dw == 1:
                        tap = tap * m_right
                    taps.append(tap.astype(jnp.bfloat16))
            blocks.append(jnp.concatenate(taps, axis=1))       # (m, 9*cin)
        lhs = blocks[0] if G == 1 else jnp.concatenate(blocks, axis=0)
        acc = jnp.dot(lhs, w_taps_ref[...], preferred_element_type=jnp.float32)
        return jnp.maximum(acc + bias_ref[...], 0.0)

    b2o = conv3x3(b2h, w2_ref, b2_ref, oc1, oc2)         # branch2: 1x1 -> 3x3
    y = y + jnp.dot(b2o.astype(jnp.bfloat16), wc2_ref[...],
                    preferred_element_type=jnp.float32)
    t3 = conv3x3(b3h, w3a_ref, b3a_ref, oc3, oc4)        # branch3: 1x1 -> 3x3 -> 3x3
    b3o = conv3x3(t3, w3b_ref, b3b_ref, oc4, oc5)
    y = y + jnp.dot(b3o.astype(jnp.bfloat16), wc3_ref[...],
                    preferred_element_type=jnp.float32)

    # final bias + scaled residual + ReLU
    out = jnp.maximum(res_scale * (y + bc_ref[...]) + x, 0.0)
    o_ref[...] = out.reshape(G, m, C)


# ---------------------------------------------------------------------------
# InceptionAUnit
# ---------------------------------------------------------------------------
class InceptionAUnitPallas:
    """Inception-A unit: 3 conv branches, concat, 1x1 conv, scaled residual, ReLU."""

    def __init__(self, in_channels, out_channels_list, bn_eps, key):
        self.scale = 0.17
        self.bn_eps = bn_eps
        self.in_channels = in_channels
        self.oc = tuple(out_channels_list)
        oc = self.oc

        def conv_bn(k, cin, cout, ksz):
            k1, k2, k3, k4, k5 = jax.random.split(k, 5)
            return dict(
                w=0.1 * jax.random.normal(k1, (cout, cin, ksz, ksz), jnp.float32),
                gamma=1.0 + 0.1 * jax.random.normal(k2, (cout,), jnp.float32),
                beta=0.1 * jax.random.normal(k3, (cout,), jnp.float32),
                mean=0.1 * jax.random.normal(k4, (cout,), jnp.float32),
                var=1.0 + 0.1 * jax.random.uniform(k5, (cout,), jnp.float32),
                ksz=ksz)

        keys = jax.random.split(key, 8)
        cin = in_channels
        self.br1 = [conv_bn(keys[0], cin, oc[0], 1)]
        self.br2 = [conv_bn(keys[1], cin, oc[1], 1),
                    conv_bn(keys[2], oc[1], oc[2], 3)]
        self.br3 = [conv_bn(keys[3], cin, oc[3], 1),
                    conv_bn(keys[4], oc[3], oc[4], 3),
                    conv_bn(keys[5], oc[4], oc[5], 3)]
        c_cat = oc[0] + oc[2] + oc[5]
        self.conv_w = 0.1 * jax.random.normal(keys[6], (cin, c_cat, 1, 1),
                                              jnp.float32)
        self.conv_b = 0.1 * jax.random.normal(keys[7], (cin,), jnp.float32)

        self._prepare()

    def _fold(self, p):
        # Fold eval-mode BatchNorm into the conv weights; return
        # (KH*KW, Cin, Cout) tap weights and the per-Cout bias.
        scale = p['gamma'] / jnp.sqrt(p['var'] + self.bn_eps)
        bias = p['beta'] - p['mean'] * scale
        cout, cin, k, _ = p['w'].shape
        w = jnp.transpose(p['w'], (2, 3, 1, 0)).reshape(k * k, cin, cout)
        return w * scale[None, None, :], bias

    def _prepare(self):
        oc = self.oc

        def head(p):
            w, b = self._fold(p)                     # (1, Cin, Cout)
            return w[0].astype(jnp.bfloat16), b[None, :].astype(jnp.float32)

        def taps(p):
            w, b = self._fold(p)                     # (9, Cin, Cout)
            k9, cin, cout = w.shape                  # row k*cin+ci <-> slab col k*cin+ci
            return (w.reshape(k9 * cin, cout).astype(jnp.bfloat16),
                    b[None, :].astype(jnp.float32))

        self.w1, self.bb1 = head(self.br1[0])
        self.w2h, self.bb2 = head(self.br2[0])
        self.w3h, self.bb3 = head(self.br3[0])
        self.w2t, self.b2t = taps(self.br2[1])
        self.w3at, self.b3at = taps(self.br3[1])
        self.w3bt, self.b3bt = taps(self.br3[2])

        # Final 1x1 conv (bias=True); rows split per branch so the channel
        # concat happens inside three eagerly-accumulated matmuls.
        wc = jnp.transpose(self.conv_w[:, :, 0, 0], (1, 0))    # (C_cat, Cin)
        self.wc1 = wc[:oc[0]].astype(jnp.bfloat16)
        self.wc2 = wc[oc[0]:oc[0] + oc[2]].astype(jnp.bfloat16)
        self.wc3 = wc[oc[0] + oc[2]:].astype(jnp.bfloat16)
        self.bc = self.conv_b[None, :].astype(jnp.float32)

    def __call__(self, x_nchw):
        # NCHW interface to match the PyTorch module; the kernel works on
        # channels-last (N, H*W, C) slabs.
        # TODO(synk): if the surrounding network is channels-last, call
        # forward_nhwc directly and skip both host-side transposes.
        n, c, h, w = x_nchw.shape
        assert c == self.in_channels
        x = jnp.transpose(x_nchw, (0, 2, 3, 1))
        y = self.forward_nhwc(x)
        return jnp.transpose(y, (0, 3, 1, 2))

    def forward_nhwc(self, x_nhwc):
        n, h, w, c = x_nhwc.shape
        oc = self.oc
        m = h * w
        cmax = max(oc[1], oc[3], oc[4])
        c_pad = _round_up(max(cmax, 1), LANE)     # lane-dense scratch width
        padr = _round_up(w + 1, 16)               # sublane-aligned halo rows
        G = _pick_images_per_step(n, m, c, cmax, padr, c_pad)

        x = x_nhwc.reshape(n, m, c).astype(jnp.float32)

        kernel = functools.partial(
            _inception_a_kernel, G=G, H=h, W=w, C=c, oc=oc, padr=padr,
            res_scale=self.scale)

        const = lambda i: (0, 0)
        weights = (self.w1, self.bb1, self.w2h, self.bb2, self.w3h, self.bb3,
                   self.w2t, self.b2t, self.w3at, self.b3at,
                   self.w3bt, self.b3bt,
                   self.wc1, self.wc2, self.wc3, self.bc)
        weight_specs = [pl.BlockSpec(a.shape, const) for a in weights]

        # Only raise the scoped VMEM limit when the estimate actually needs it
        # (keeps the small-shape path identical to the validated default).
        vmem_est = (4 * G * m * c * 4
                    + ((G + 1) * padr + G * m) * c_pad * 4
                    + G * m * (9 * cmax * 2 + 12 * max(c, cmax) * 4))
        cparams = dict(dimension_semantics=("parallel",))
        if vmem_est > 16 * 1024 * 1024:
            cparams["vmem_limit_bytes"] = min(
                _round_up(2 * vmem_est, 1024 * 1024), 48 * 1024 * 1024)

        out = pl.pallas_call(
            kernel,
            out_shape=jax.ShapeDtypeStruct((n, m, c), jnp.float32),
            grid=(n // G,),
            in_specs=[pl.BlockSpec((G, m, c), lambda i: (i, 0, 0))]
                     + weight_specs,
            out_specs=pl.BlockSpec((G, m, c), lambda i: (i, 0, 0)),
            scratch_shapes=[
                pltpu.VMEM(((G + 1) * padr + G * m, c_pad), jnp.float32),
            ],
            compiler_params=pltpu.CompilerParams(**cparams),
        )(x, *weights)
        return out.reshape(n, h, w, c)


# ---------------------------------------------------------------------------
# Pure-JAX reference (f32, for verification only)
# ---------------------------------------------------------------------------
def _ref_forward(unit, x_nchw):
    x = jnp.transpose(x_nchw, (0, 2, 3, 1))

    def conv_bn_relu(v, p):
        pad = 1 if p['ksz'] == 3 else 0
        y = lax.conv_general_dilated(
            v, jnp.transpose(p['w'], (2, 3, 1, 0)), (1, 1),
            [(pad, pad), (pad, pad)],
            dimension_numbers=("NHWC", "HWIO", "NHWC"),
            precision=lax.Precision.HIGHEST)
        scale = p['gamma'] / jnp.sqrt(p['var'] + unit.bn_eps)
        return jnp.maximum(y * scale + (p['beta'] - p['mean'] * scale), 0.0)

    def run_branch(v, plist):
        for p in plist:
            v = conv_bn_relu(v, p)
        return v

    cat = jnp.concatenate([run_branch(x, unit.br1),
                           run_branch(x, unit.br2),
                           run_branch(x, unit.br3)], axis=-1)
    y = lax.conv_general_dilated(
        cat, jnp.transpose(unit.conv_w, (2, 3, 1, 0)), (1, 1),
        [(0, 0), (0, 0)], dimension_numbers=("NHWC", "HWIO", "NHWC"),
        precision=lax.Precision.HIGHEST) + unit.conv_b
    y = jnp.maximum(unit.scale * y + x, 0.0)
    return jnp.transpose(y, (0, 3, 1, 2))


if __name__ == "__main__":
    key = jax.random.PRNGKey(0)
    kx, kparams = jax.random.split(key)

    in_channels = 8
    out_channels_list = (8, 6, 8, 6, 8, 10)
    bn_eps = 1e-5
    N, H, W = 2, 16, 16

    x = jax.random.normal(kx, (N, in_channels, H, W), jnp.float32)

    unit = InceptionAUnitPallas(in_channels, out_channels_list, bn_eps, kparams)
    out = jax.block_until_ready(unit(x))
    assert out.shape == (N, in_channels, H, W), out.shape

    ref = jax.block_until_ready(_ref_forward(unit, x))
    max_err = float(jnp.max(jnp.abs(out - ref)))
    # bf16 MXU operands (f32 accumulation) -> relaxed tolerance vs f32 reference.
    assert jnp.allclose(out, ref, atol=1e-2, rtol=1e-2), max_err

    print("KERNEL_OK")
</pallas_src>

<mosaic_0001>
module attributes {stable_mosaic.version = 11 : i64} {
  func.func @_inception_a_kernel(%arg0: i32, %arg1: memref<1x256x8xf32, #tpu.memory_space<vmem>>, %arg2: memref<8x8xbf16, #tpu.memory_space<vmem>>, %arg3: memref<1x8xf32, #tpu.memory_space<vmem>>, %arg4: memref<8x6xbf16, #tpu.memory_space<vmem>>, %arg5: memref<1x6xf32, #tpu.memory_space<vmem>>, %arg6: memref<8x6xbf16, #tpu.memory_space<vmem>>, %arg7: memref<1x6xf32, #tpu.memory_space<vmem>>, %arg8: memref<54x8xbf16, #tpu.memory_space<vmem>>, %arg9: memref<1x8xf32, #tpu.memory_space<vmem>>, %arg10: memref<54x8xbf16, #tpu.memory_space<vmem>>, %arg11: memref<1x8xf32, #tpu.memory_space<vmem>>, %arg12: memref<72x10xbf16, #tpu.memory_space<vmem>>, %arg13: memref<1x10xf32, #tpu.memory_space<vmem>>, %arg14: memref<8x8xbf16, #tpu.memory_space<vmem>>, %arg15: memref<8x8xbf16, #tpu.memory_space<vmem>>, %arg16: memref<10x8xbf16, #tpu.memory_space<vmem>>, %arg17: memref<1x8xf32, #tpu.memory_space<vmem>>, %arg18: memref<1x256x8xf32, #tpu.memory_space<vmem>>, %arg19: memref<320x128xf32, #tpu.memory_space<vmem>>) attributes {dimension_semantics = [#tpu.dimension_semantics<parallel>], iteration_bounds = array<i64: 2>, scalar_prefetch = 0 : i64, scratch_operands = 1 : i64, tpu.core_type = #tpu.core_type<tc>, window_params = [{transform_indices = @transform_0, window_bounds = array<i64: 1, 256, 8>}, {pipeline_mode = #tpu.pipeline_mode<synchronous>, transform_indices = @transform_1, window_bounds = array<i64: 8, 8>}, {pipeline_mode = #tpu.pipeline_mode<synchronous>, transform_indices = @transform_2, window_bounds = array<i64: 1, 8>}, {pipeline_mode = #tpu.pipeline_mode<synchronous>, transform_indices = @transform_3, window_bounds = array<i64: 8, 6>}, {pipeline_mode = #tpu.pipeline_mode<synchronous>, transform_indices = @transform_4, window_bounds = array<i64: 1, 6>}, {pipeline_mode = #tpu.pipeline_mode<synchronous>, transform_indices = @transform_5, window_bounds = array<i64: 8, 6>}, {pipeline_mode = #tpu.pipeline_mode<synchronous>, transform_indices = @transform_6, window_bounds = array<i64: 1, 6>}, {pipeline_mode = #tpu.pipeline_mode<synchronous>, transform_indices = @transform_7, window_bounds = array<i64: 54, 8>}, {pipeline_mode = #tpu.pipeline_mode<synchronous>, transform_indices = @transform_8, window_bounds = array<i64: 1, 8>}, {pipeline_mode = #tpu.pipeline_mode<synchronous>, transform_indices = @transform_9, window_bounds = array<i64: 54, 8>}, {pipeline_mode = #tpu.pipeline_mode<synchronous>, transform_indices = @transform_10, window_bounds = array<i64: 1, 8>}, {pipeline_mode = #tpu.pipeline_mode<synchronous>, transform_indices = @transform_11, window_bounds = array<i64: 72, 10>}, {pipeline_mode = #tpu.pipeline_mode<synchronous>, transform_indices = @transform_12, window_bounds = array<i64: 1, 10>}, {pipeline_mode = #tpu.pipeline_mode<synchronous>, transform_indices = @transform_13, window_bounds = array<i64: 8, 8>}, {pipeline_mode = #tpu.pipeline_mode<synchronous>, transform_indices = @transform_14, window_bounds = array<i64: 8, 8>}, {pipeline_mode = #tpu.pipeline_mode<synchronous>, transform_indices = @transform_15, window_bounds = array<i64: 10, 8>}, {pipeline_mode = #tpu.pipeline_mode<synchronous>, transform_indices = @transform_16, window_bounds = array<i64: 1, 8>}, {transform_indices = @transform_17, window_bounds = array<i64: 1, 256, 8>}]} {
    %c0 = arith.constant 0 : index
    %c0_0 = arith.constant 0 : index
    %c0_1 = arith.constant 0 : index
    %0 = vector.load %arg1[%c0, %c0_0, %c0_1] : memref<1x256x8xf32, #tpu.memory_space<vmem>>, vector<1x256x8xf32>
    %1 = vector.shape_cast %0 : vector<1x256x8xf32> to vector<256x8xf32>
    %2 = arith.truncf %1 : vector<256x8xf32> to vector<256x8xbf16>
    %c0_2 = arith.constant 0 : index
    %c0_3 = arith.constant 0 : index
    %3 = vector.load %arg2[%c0_2, %c0_3] : memref<8x8xbf16, #tpu.memory_space<vmem>>, vector<8x8xbf16>
    %cst = arith.constant dense<0.000000e+00> : vector<256x8xf32>
    %4 = tpu.matmul %2, %3, %cst {dimension_numbers = #tpu.dot_dimension_numbers<[1], [0], [0], [1], [0, 0, 1, 1], [], []>} : vector<256x8xbf16>, vector<8x8xbf16>, vector<256x8xf32> -> vector<256x8xf32>
    %c0_4 = arith.constant 0 : index
    %c0_5 = arith.constant 0 : index
    %5 = vector.load %arg3[%c0_4, %c0_5] : memref<1x8xf32, #tpu.memory_space<vmem>>, vector<1x8xf32>
    %6 = vector.broadcast %5 : vector<1x8xf32> to vector<256x8xf32>
    %7 = arith.addf %4, %6 : vector<256x8xf32>
    %cst_6 = arith.constant 0.000000e+00 : f32
    %8 = vector.broadcast %cst_6 : f32 to vector<256x8xf32>
    %9 = arith.maximumf %7, %8 : vector<256x8xf32>
    %10 = arith.truncf %9 : vector<256x8xf32> to vector<256x8xbf16>
    %c0_7 = arith.constant 0 : index
    %c0_8 = arith.constant 0 : index
    %11 = vector.load %arg14[%c0_7, %c0_8] : memref<8x8xbf16, #tpu.memory_space<vmem>>, vector<8x8xbf16>
    %cst_9 = arith.constant dense<0.000000e+00> : vector<256x8xf32>
    %12 = tpu.matmul %10, %11, %cst_9 {dimension_numbers = #tpu.dot_dimension_numbers<[1], [0], [0], [1], [0, 0, 1, 1], [], []>} : vector<256x8xbf16>, vector<8x8xbf16>, vector<256x8xf32> -> vector<256x8xf32>
    %c0_10 = arith.constant 0 : index
    %c0_11 = arith.constant 0 : index
    %13 = vector.load %arg4[%c0_10, %c0_11] : memref<8x6xbf16, #tpu.memory_space<vmem>>, vector<8x6xbf16>
    %cst_12 = arith.constant dense<0.000000e+00> : vector<256x6xf32>
    %14 = tpu.matmul %2, %13, %cst_12 {dimension_numbers = #tpu.dot_dimension_numbers<[1], [0], [0], [1], [0, 0, 1, 1], [], []>} : vector<256x8xbf16>, vector<8x6xbf16>, vector<256x6xf32> -> vector<256x6xf32>
    %c0_13 = arith.constant 0 : index
    %c0_14 = arith.constant 0 : index
    %15 = vector.load %arg5[%c0_13, %c0_14] : memref<1x6xf32, #tpu.memory_space<vmem>>, vector<1x6xf32>
    %16 = vector.broadcast %15 : vector<1x6xf32> to vector<256x6xf32>
    %17 = arith.addf %14, %16 : vector<256x6xf32>
    %cst_15 = arith.constant 0.000000e+00 : f32
    %18 = vector.broadcast %cst_15 : f32 to vector<256x6xf32>
    %19 = arith.maximumf %17, %18 : vector<256x6xf32>
    %c0_16 = arith.constant 0 : index
    %c0_17 = arith.constant 0 : index
    %20 = vector.load %arg6[%c0_16, %c0_17] : memref<8x6xbf16, #tpu.memory_space<vmem>>, vector<8x6xbf16>
    %cst_18 = arith.constant dense<0.000000e+00> : vector<256x6xf32>
    %21 = tpu.matmul %2, %20, %cst_18 {dimension_numbers = #tpu.dot_dimension_numbers<[1], [0], [0], [1], [0, 0, 1, 1], [], []>} : vector<256x8xbf16>, vector<8x6xbf16>, vector<256x6xf32> -> vector<256x6xf32>
    %c0_19 = arith.constant 0 : index
    %c0_20 = arith.constant 0 : index
    %22 = vector.load %arg7[%c0_19, %c0_20] : memref<1x6xf32, #tpu.memory_space<vmem>>, vector<1x6xf32>
    %23 = vector.broadcast %22 : vector<1x6xf32> to vector<256x6xf32>
    %24 = arith.addf %21, %23 : vector<256x6xf32>
    %cst_21 = arith.constant 0.000000e+00 : f32
    %25 = vector.broadcast %cst_21 : f32 to vector<256x6xf32>
    %26 = arith.maximumf %24, %25 : vector<256x6xf32>
    %27 = tpu.iota {dimensions = array<i32: 0>} : vector<256x1xi32>
    %c16_i32 = arith.constant 16 : i32
    %c0_i32 = arith.constant 0 : i32
    %28 = arith.cmpi eq, %c16_i32, %c0_i32 : i32
    %c1_i32 = arith.constant 1 : i32
    %29 = arith.select %28, %c1_i32, %c16_i32 : i32
    %30 = vector.broadcast %29 : i32 to vector<256x1xi32>
    %31 = arith.remsi %27, %30 : vector<256x1xi32>
    %c0_i32_22 = arith.constant 0 : i32
    %32 = vector.broadcast %c0_i32_22 : i32 to vector<256x1xi32>
    %33 = arith.cmpi ne, %31, %32 : vector<256x1xi32>
    %c0_i32_23 = arith.constant 0 : i32
    %34 = vector.broadcast %c0_i32_23 : i32 to vector<256x1xi32>
    %35 = arith.cmpi slt, %31, %34 : vector<256x1xi32>
    %c0_i32_24 = arith.constant 0 : i32
    %36 = arith.cmpi slt, %29, %c0_i32_24 : i32
    %37 = vector.broadcast %36 : i1 to vector<256x1xi1>
    %38 = vector.broadcast %37 : vector<256x1xi1> to vector<256x1xi1>
    %39 = arith.xori %35, %38 : vector<256x1xi1>
    %40 = arith.andi %39, %33 : vector<256x1xi1>
    %41 = vector.broadcast %29 : i32 to vector<256x1xi32>
    %42 = arith.addi %31, %41 : vector<256x1xi32>
    %43 = arith.select %40, %42, %31 : vector<256x1xi1>, vector<256x1xi32>
    %c1_i32_25 = arith.constant 1 : i32
    %44 = vector.broadcast %c1_i32_25 : i32 to vector<256x1xi32>
    %45 = arith.cmpi sge, %43, %44 : vector<256x1xi32>
    %46 = arith.extui %45 : vector<256x1xi1> to vector<256x1xi32>
    %47 = arith.sitofp %46 : vector<256x1xi32> to vector<256x1xf32>
    %c14_i32 = arith.constant 14 : i32
    %48 = vector.broadcast %c14_i32 : i32 to vector<256x1xi32>
    %49 = arith.cmpi sle, %43, %48 : vector<256x1xi32>
    %50 = arith.extui %49 : vector<256x1xi1> to vector<256x1xi32>
    %51 = arith.sitofp %50 : vector<256x1xi32> to vector<256x1xf32>
    %cst_26 = arith.constant 0.000000e+00 : f32
    %52 = vector.broadcast %cst_26 : f32 to vector<32x128xf32>
    %c0_27 = arith.constant 0 : index
    %c0_28 = arith.constant 0 : index
    %53 = vector.load %arg19[%c0_27, %c0_28] : memref<320x128xf32, #tpu.memory_space<vmem>>, vector<32x128xf32>
    tpu.vector_store %arg19[%c0_27, %c0_28], %52 {strides = array<i32>} : memref<320x128xf32, #tpu.memory_space<vmem>>, vector<32x128xf32>,
    %c288 = arith.constant 288 : index
    %c0_29 = arith.constant 0 : index
    %54 = vector.load %arg19[%c288, %c0_29] : memref<320x128xf32, #tpu.memory_space<vmem>>, vector<32x128xf32>
    tpu.vector_store %arg19[%c288, %c0_29], %52 {strides = array<i32>} : memref<320x128xf32, #tpu.memory_space<vmem>>, vector<32x128xf32>,
    %c32 = arith.constant 32 : index
    %c0_30 = arith.constant 0 : index
    %55 = vector.load %arg19[%c32, %c0_30] : memref<320x128xf32, #tpu.memory_space<vmem>>, vector<256x6xf32>
    tpu.vector_store %arg19[%c32, %c0_30], %19 {strides = array<i32>} : memref<320x128xf32, #tpu.memory_space<vmem>>, vector<256x6xf32>,
    %c15 = arith.constant 15 : index
    %c0_31 = arith.constant 0 : index
    %56 = vector.load %arg19[%c15, %c0_31] : memref<320x128xf32, #tpu.memory_space<vmem>>, vector<256x6xf32>
    %57 = vector.broadcast %47 : vector<256x1xf32> to vector<256x6xf32>
    %58 = arith.mulf %56, %57 : vector<256x6xf32>
    %59 = arith.truncf %58 : vector<256x6xf32> to vector<256x6xbf16>
    %c16 = arith.constant 16 : index
    %c0_32 = arith.constant 0 : index
    %60 = vector.load %arg19[%c16, %c0_32] : memref<320x128xf32, #tpu.memory_space<vmem>>, vector<256x6xf32>
    %61 = arith.truncf %60 : vector<256x6xf32> to vector<256x6xbf16>
    %c17 = arith.constant 17 : index
    %c0_33 = arith.constant 0 : index
    %62 = vector.load %arg19[%c17, %c0_33] : memref<320x128xf32, #tpu.memory_space<vmem>>, vector<256x6xf32>
    %63 = vector.broadcast %51 : vector<256x1xf32> to vector<256x6xf32>
    %64 = arith.mulf %62, %63 : vector<256x6xf32>
    %65 = arith.truncf %64 : vector<256x6xf32> to vector<256x6xbf16>
    %c31 = arith.constant 31 : index
    %c0_34 = arith.constant 0 : index
    %66 = vector.load %arg19[%c31, %c0_34] : memref<320x128xf32, #tpu.memory_space<vmem>>, vector<256x6xf32>
    %67 = vector.broadcast %47 : vector<256x1xf32> to vector<256x6xf32>
    %68 = arith.mulf %66, %67 : vector<256x6xf32>
    %69 = arith.truncf %68 : vector<256x6xf32> to vector<256x6xbf16>
    %c32_35 = arith.constant 32 : index
    %c0_36 = arith.constant 0 : index
    %70 = vector.load %arg19[%c32_35, %c0_36] : memref<320x128xf32, #tpu.memory_space<vmem>>, vector<256x6xf32>
    %71 = arith.truncf %70 : vector<256x6xf32> to vector<256x6xbf16>
    %c33 = arith.constant 33 : index
    %c0_37 = arith.constant 0 : index
    %72 = vector.load %arg19[%c33, %c0_37] : memref<320x128xf32, #tpu.memory_space<vmem>>, vector<256x6xf32>
    %73 = vector.broadcast %51 : vector<256x1xf32> to vector<256x6xf32>
    %74 = arith.mulf %72, %73 : vector<256x6xf32>
    %75 = arith.truncf %74 : vector<256x6xf32> to vector<256x6xbf16>
    %c47 = arith.constant 47 : index
    %c0_38 = arith.constant 0 : index
    %76 = vector.load %arg19[%c47, %c0_38] : memref<320x128xf32, #tpu.memory_space<vmem>>, vector<256x6xf32>
    %77 = vector.broadcast %47 : vector<256x1xf32> to vector<256x6xf32>
    %78 = arith.mulf %76, %77 : vector<256x6xf32>
    %79 = arith.truncf %78 : vector<256x6xf32> to vector<256x6xbf16>
    %c48 = arith.constant 48 : index
    %c0_39 = arith.constant 0 : index
    %80 = vector.load %arg19[%c48, %c0_39] : memref<320x128xf32, #tpu.memory_space<vmem>>, vector<256x6xf32>
    %81 = arith.truncf %80 : vector<256x6xf32> to vector<256x6xbf16>
    %c49 = arith.constant 49 : index
    %c0_40 = arith.constant 0 : index
    %82 = vector.load %arg19[%c49, %c0_40] : memref<320x128xf32, #tpu.memory_space<vmem>>, vector<256x6xf32>
    %83 = vector.broadcast %51 : vector<256x1xf32> to vector<256x6xf32>
    %84 = arith.mulf %82, %83 : vector<256x6xf32>
    %85 = arith.truncf %84 : vector<256x6xf32> to vector<256x6xbf16>
    %86 = tpu.concatenate %59, %61, %65, %69, %71, %75, %79, %81, %85 in 1 : vector<256x6xbf16>, vector<256x6xbf16>, vector<256x6xbf16>, vector<256x6xbf16>, vector<256x6xbf16>, vector<256x6xbf16>, vector<256x6xbf16>, vector<256x6xbf16>, vector<256x6xbf16> -> vector<256x54xbf16>
    %c0_41 = arith.constant 0 : index
    %c0_42 = arith.constant 0 : index
    %87 = vector.load %arg8[%c0_41, %c0_42] : memref<54x8xbf16, #tpu.memory_space<vmem>>, vector<54x8xbf16>
    %cst_43 = arith.constant dense<0.000000e+00> : vector<256x8xf32>
    %88 = tpu.matmul %86, %87, %cst_43 {dimension_numbers = #tpu.dot_dimension_numbers<[1], [0], [0], [1], [0, 0, 1, 1], [], []>} : vector<256x54xbf16>, vector<54x8xbf16>, vector<256x8xf32> -> vector<256x8xf32>
    %c0_44 = arith.constant 0 : index
    %c0_45 = arith.constant 0 : index
    %89 = vector.load %arg9[%c0_44, %c0_45] : memref<1x8xf32, #tpu.memory_space<vmem>>, vector<1x8xf32>
    %90 = vector.broadcast %89 : vector<1x8xf32> to vector<256x8xf32>
    %91 = arith.addf %88, %90 : vector<256x8xf32>
    %cst_46 = arith.constant 0.000000e+00 : f32
    %92 = vector.broadcast %cst_46 : f32 to vector<256x8xf32>
    %93 = arith.maximumf %91, %92 : vector<256x8xf32>
    %94 = arith.truncf %93 : vector<256x8xf32> to vector<256x8xbf16>
    %c0_47 = arith.constant 0 : index
    %c0_48 = arith.constant 0 : index
    %95 = vector.load %arg15[%c0_47, %c0_48] : memref<8x8xbf16, #tpu.memory_space<vmem>>, vector<8x8xbf16>
    %cst_49 = arith.constant dense<0.000000e+00> : vector<256x8xf32>
    %96 = tpu.matmul %94, %95, %cst_49 {dimension_numbers = #tpu.dot_dimension_numbers<[1], [0], [0], [1], [0, 0, 1, 1], [], []>} : vector<256x8xbf16>, vector<8x8xbf16>, vector<256x8xf32> -> vector<256x8xf32>
    %97 = arith.addf %12, %96 : vector<256x8xf32>
    %c32_50 = arith.constant 32 : index
    %c0_51 = arith.constant 0 : index
    %98 = vector.load %arg19[%c32_50, %c0_51] : memref<320x128xf32, #tpu.memory_space<vmem>>, vector<256x6xf32>
    tpu.vector_store %arg19[%c32_50, %c0_51], %26 {strides = array<i32>} : memref<320x128xf32, #tpu.memory_space<vmem>>, vector<256x6xf32>,
    %c15_52 = arith.constant 15 : index
    %c0_53 = arith.constant 0 : index
    %99 = vector.load %arg19[%c15_52, %c0_53] : memref<320x128xf32, #tpu.memory_space<vmem>>, vector<256x6xf32>
    %100 = vector.broadcast %47 : vector<256x1xf32> to vector<256x6xf32>
    %101 = arith.mulf %99, %100 : vector<256x6xf32>
    %102 = arith.truncf %101 : vector<256x6xf32> to vector<256x6xbf16>
    %c16_54 = arith.constant 16 : index
    %c0_55 = arith.constant 0 : index
    %103 = vector.load %arg19[%c16_54, %c0_55] : memref<320x128xf32, #tpu.memory_space<vmem>>, vector<256x6xf32>
    %104 = arith.truncf %103 : vector<256x6xf32> to vector<256x6xbf16>
    %c17_56 = arith.constant 17 : index
    %c0_57 = arith.constant 0 : index
    %105 = vector.load %arg19[%c17_56, %c0_57] : memref<320x128xf32, #tpu.memory_space<vmem>>, vector<256x6xf32>
    %106 = vector.broadcast %51 : vector<256x1xf32> to vector<256x6xf32>
    %107 = arith.mulf %105, %106 : vector<256x6xf32>
    %108 = arith.truncf %107 : vector<256x6xf32> to vector<256x6xbf16>
    %c31_58 = arith.constant 31 : index
    %c0_59 = arith.constant 0 : index
    %109 = vector.load %arg19[%c31_58, %c0_59] : memref<320x128xf32, #tpu.memory_space<vmem>>, vector<256x6xf32>
    %110 = vector.broadcast %47 : vector<256x1xf32> to vector<256x6xf32>
    %111 = arith.mulf %109, %110 : vector<256x6xf32>
    %112 = arith.truncf %111 : vector<256x6xf32> to vector<256x6xbf16>
    %c32_60 = arith.constant 32 : index
    %c0_61 = arith.constant 0 : index
    %113 = vector.load %arg19[%c32_60, %c0_61] : memref<320x128xf32, #tpu.memory_space<vmem>>, vector<256x6xf32>
    %114 = arith.truncf %113 : vector<256x6xf32> to vector<256x6xbf16>
    %c33_62 = arith.constant 33 : index
    %c0_63 = arith.constant 0 : index
    %115 = vector.load %arg19[%c33_62, %c0_63] : memref<320x128xf32, #tpu.memory_space<vmem>>, vector<256x6xf32>
    %116 = vector.broadcast %51 : vector<256x1xf32> to vector<256x6xf32>
    %117 = arith.mulf %115, %116 : vector<256x6xf32>
    %118 = arith.truncf %117 : vector<256x6xf32> to vector<256x6xbf16>
    %c47_64 = arith.constant 47 : index
    %c0_65 = arith.constant 0 : index
    %119 = vector.load %arg19[%c47_64, %c0_65] : memref<320x128xf32, #tpu.memory_space<vmem>>, vector<256x6xf32>
    %120 = vector.broadcast %47 : vector<256x1xf32> to vector<256x6xf32>
    %121 = arith.mulf %119, %120 : vector<256x6xf32>
    %122 = arith.truncf %121 : vector<256x6xf32> to vector<256x6xbf16>
    %c48_66 = arith.constant 48 : index
    %c0_67 = arith.constant 0 : index
    %123 = vector.load %arg19[%c48_66, %c0_67] : memref<320x128xf32, #tpu.memory_space<vmem>>, vector<256x6xf32>
    %124 = arith.truncf %123 : vector<256x6xf32> to vector<256x6xbf16>
    %c49_68 = arith.constant 49 : index
    %c0_69 = arith.constant 0 : index
    %125 = vector.load %arg19[%c49_68, %c0_69] : memref<320x128xf32, #tpu.memory_space<vmem>>, vector<256x6xf32>
    %126 = vector.broadcast %51 : vector<256x1xf32> to vector<256x6xf32>
    %127 = arith.mulf %125, %126 : vector<256x6xf32>
    %128 = arith.truncf %127 : vector<256x6xf32> to vector<256x6xbf16>
    %129 = tpu.concatenate %102, %104, %108, %112, %114, %118, %122, %124, %128 in 1 : vector<256x6xbf16>, vector<256x6xbf16>, vector<256x6xbf16>, vector<256x6xbf16>, vector<256x6xbf16>, vector<256x6xbf16>, vector<256x6xbf16>, vector<256x6xbf16>, vector<256x6xbf16> -> vector<256x54xbf16>
    %c0_70 = arith.constant 0 : index
    %c0_71 = arith.constant 0 : index
    %130 = vector.load %arg10[%c0_70, %c0_71] : memref<54x8xbf16, #tpu.memory_space<vmem>>, vector<54x8xbf16>
    %cst_72 = arith.constant dense<0.000000e+00> : vector<256x8xf32>
    %131 = tpu.matmul %129, %130, %cst_72 {dimension_numbers = #tpu.dot_dimension_numbers<[1], [0], [0], [1], [0, 0, 1, 1], [], []>} : vector<256x54xbf16>, vector<54x8xbf16>, vector<256x8xf32> -> vector<256x8xf32>
    %c0_73 = arith.constant 0 : index
    %c0_74 = arith.constant 0 : index
    %132 = vector.load %arg11[%c0_73, %c0_74] : memref<1x8xf32, #tpu.memory_space<vmem>>, vector<1x8xf32>
    %133 = vector.broadcast %132 : vector<1x8xf32> to vector<256x8xf32>
    %134 = arith.addf %131, %133 : vector<256x8xf32>
    %cst_75 = arith.constant 0.000000e+00 : f32
    %135 = vector.broadcast %cst_75 : f32 to vector<256x8xf32>
    %136 = arith.maximumf %134, %135 : vector<256x8xf32>
    %c32_76 = arith.constant 32 : index
    %c0_77 = arith.constant 0 : index
    %137 = vector.load %arg19[%c32_76, %c0_77] : memref<320x128xf32, #tpu.memory_space<vmem>>, vector<256x8xf32>
    tpu.vector_store %arg19[%c32_76, %c0_77], %136 {strides = array<i32>} : memref<320x128xf32, #tpu.memory_space<vmem>>, vector<256x8xf32>,
    %c15_78 = arith.constant 15 : index
    %c0_79 = arith.constant 0 : index
    %138 = vector.load %arg19[%c15_78, %c0_79] : memref<320x128xf32, #tpu.memory_space<vmem>>, vector<256x8xf32>
    %139 = vector.broadcast %47 : vector<256x1xf32> to vector<256x8xf32>
    %140 = arith.mulf %138, %139 : vector<256x8xf32>
    %141 = arith.truncf %140 : vector<256x8xf32> to vector<256x8xbf16>
    %c16_80 = arith.constant 16 : index
    %c0_81 = arith.constant 0 : index
    %142 = vector.load %arg19[%c16_80, %c0_81] : memref<320x128xf32, #tpu.memory_space<vmem>>, vector<256x8xf32>
    %143 = arith.truncf %142 : vector<256x8xf32> to vector<256x8xbf16>
    %c17_82 = arith.constant 17 : index
    %c0_83 = arith.constant 0 : index
    %144 = vector.load %arg19[%c17_82, %c0_83] : memref<320x128xf32, #tpu.memory_space<vmem>>, vector<256x8xf32>
    %145 = vector.broadcast %51 : vector<256x1xf32> to vector<256x8xf32>
    %146 = arith.mulf %144, %145 : vector<256x8xf32>
    %147 = arith.truncf %146 : vector<256x8xf32> to vector<256x8xbf16>
    %c31_84 = arith.constant 31 : index
    %c0_85 = arith.constant 0 : index
    %148 = vector.load %arg19[%c31_84, %c0_85] : memref<320x128xf32, #tpu.memory_space<vmem>>, vector<256x8xf32>
    %149 = vector.broadcast %47 : vector<256x1xf32> to vector<256x8xf32>
    %150 = arith.mulf %148, %149 : vector<256x8xf32>
    %151 = arith.truncf %150 : vector<256x8xf32> to vector<256x8xbf16>
    %c32_86 = arith.constant 32 : index
    %c0_87 = arith.constant 0 : index
    %152 = vector.load %arg19[%c32_86, %c0_87] : memref<320x128xf32, #tpu.memory_space<vmem>>, vector<256x8xf32>
    %153 = arith.truncf %152 : vector<256x8xf32> to vector<256x8xbf16>
    %c33_88 = arith.constant 33 : index
    %c0_89 = arith.constant 0 : index
    %154 = vector.load %arg19[%c33_88, %c0_89] : memref<320x128xf32, #tpu.memory_space<vmem>>, vector<256x8xf32>
    %155 = vector.broadcast %51 : vector<256x1xf32> to vector<256x8xf32>
    %156 = arith.mulf %154, %155 : vector<256x8xf32>
    %157 = arith.truncf %156 : vector<256x8xf32> to vector<256x8xbf16>
    %c47_90 = arith.constant 47 : index
    %c0_91 = arith.constant 0 : index
    %158 = vector.load %arg19[%c47_90, %c0_91] : memref<320x128xf32, #tpu.memory_space<vmem>>, vector<256x8xf32>
    %159 = vector.broadcast %47 : vector<256x1xf32> to vector<256x8xf32>
    %160 = arith.mulf %158, %159 : vector<256x8xf32>
    %161 = arith.truncf %160 : vector<256x8xf32> to vector<256x8xbf16>
    %c48_92 = arith.constant 48 : index
    %c0_93 = arith.constant 0 : index
    %162 = vector.load %arg19[%c48_92, %c0_93] : memref<320x128xf32, #tpu.memory_space<vmem>>, vector<256x8xf32>
    %163 = arith.truncf %162 : vector<256x8xf32> to vector<256x8xbf16>
    %c49_94 = arith.constant 49 : index
    %c0_95 = arith.constant 0 : index
    %164 = vector.load %arg19[%c49_94, %c0_95] : memref<320x128xf32, #tpu.memory_space<vmem>>, vector<256x8xf32>
    %165 = vector.broadcast %51 : vector<256x1xf32> to vector<256x8xf32>
    %166 = arith.mulf %164, %165 : vector<256x8xf32>
    %167 = arith.truncf %166 : vector<256x8xf32> to vector<256x8xbf16>
    %168 = tpu.concatenate %141, %143, %147, %151, %153, %157, %161, %163, %167 in 1 : vector<256x8xbf16>, vector<256x8xbf16>, vector<256x8xbf16>, vector<256x8xbf16>, vector<256x8xbf16>, vector<256x8xbf16>, vector<256x8xbf16>, vector<256x8xbf16>, vector<256x8xbf16> -> vector<256x72xbf16>
    %c0_96 = arith.constant 0 : index
    %c0_97 = arith.constant 0 : index
    %169 = vector.load %arg12[%c0_96, %c0_97] : memref<72x10xbf16, #tpu.memory_space<vmem>>, vector<72x10xbf16>
    %cst_98 = arith.constant dense<0.000000e+00> : vector<256x10xf32>
    %170 = tpu.matmul %168, %169, %cst_98 {dimension_numbers = #tpu.dot_dimension_numbers<[1], [0], [0], [1], [0, 0, 1, 1], [], []>} : vector<256x72xbf16>, vector<72x10xbf16>, vector<256x10xf32> -> vector<256x10xf32>
    %c0_99 = arith.constant 0 : index
    %c0_100 = arith.constant 0 : index
    %171 = vector.load %arg13[%c0_99, %c0_100] : memref<1x10xf32, #tpu.memory_space<vmem>>, vector<1x10xf32>
    %172 = vector.broadcast %171 : vector<1x10xf32> to vector<256x10xf32>
    %173 = arith.addf %170, %172 : vector<256x10xf32>
    %cst_101 = arith.constant 0.000000e+00 : f32
    %174 = vector.broadcast %cst_101 : f32 to vector<256x10xf32>
    %175 = arith.maximumf %173, %174 : vector<256x10xf32>
    %176 = arith.truncf %175 : vector<256x10xf32> to vector<256x10xbf16>
    %c0_102 = arith.constant 0 : index
    %c0_103 = arith.constant 0 : index
    %177 = vector.load %arg16[%c0_102, %c0_103] : memref<10x8xbf16, #tpu.memory_space<vmem>>, vector<10x8xbf16>
    %cst_104 = arith.constant dense<0.000000e+00> : vector<256x8xf32>
    %178 = tpu.matmul %176, %177, %cst_104 {dimension_numbers = #tpu.dot_dimension_numbers<[1], [0], [0], [1], [0, 0, 1, 1], [], []>} : vector<256x10xbf16>, vector<10x8xbf16>, vector<256x8xf32> -> vector<256x8xf32>
    %179 = arith.addf %97, %178 : vector<256x8xf32>
    %c0_105 = arith.constant 0 : index
    %c0_106 = arith.constant 0 : index
    %180 = vector.load %arg17[%c0_105, %c0_106] : memref<1x8xf32, #tpu.memory_space<vmem>>, vector<1x8xf32>
    %181 = vector.broadcast %180 : vector<1x8xf32> to vector<256x8xf32>
    %182 = arith.addf %179, %181 : vector<256x8xf32>
    %cst_107 = arith.constant 1.700000e-01 : f32
    %183 = vector.broadcast %cst_107 : f32 to vector<256x8xf32>
    %184 = arith.mulf %183, %182 : vector<256x8xf32>
    %185 = arith.addf %184, %1 : vector<256x8xf32>
    %cst_108 = arith.constant 0.000000e+00 : f32
    %186 = vector.broadcast %cst_108 : f32 to vector<256x8xf32>
    %187 = arith.maximumf %185, %186 : vector<256x8xf32>
    %188 = vector.shape_cast %187 : vector<256x8xf32> to vector<1x256x8xf32>
    %c0_109 = arith.constant 0 : index
    %c0_110 = arith.constant 0 : index
    %c0_111 = arith.constant 0 : index
    %189 = vector.load %arg18[%c0_109, %c0_110, %c0_111] : memref<1x256x8xf32, #tpu.memory_space<vmem>>, vector<1x256x8xf32>
    tpu.vector_store %arg18[%c0_109, %c0_110, %c0_111], %188 {strides = array<i32>} : memref<1x256x8xf32, #tpu.memory_space<vmem>>, vector<1x256x8xf32>,
    return
  }
  func.func @transform_0(%arg0: i32) -> (i32, i32, i32) {
    %c0_i32 = arith.constant 0 : i32
    %c0_i32_0 = arith.constant 0 : i32
    %c0_i32_1 = arith.constant 0 : i32
    return %arg0, %c0_i32, %c0_i32_0 : i32, i32, i32
  }
  func.func @transform_1(%arg0: i32) -> (i32, i32) {
    %c0_i32 = arith.constant 0 : i32
    %c0_i32_0 = arith.constant 0 : i32
    %c0_i32_1 = arith.constant 0 : i32
    return %c0_i32, %c0_i32_0 : i32, i32
  }
  func.func @transform_2(%arg0: i32) -> (i32, i32) {
    %c0_i32 = arith.constant 0 : i32
    %c0_i32_0 = arith.constant 0 : i32
    %c0_i32_1 = arith.constant 0 : i32
    return %c0_i32, %c0_i32_0 : i32, i32
  }
  func.func @transform_3(%arg0: i32) -> (i32, i32) {
    %c0_i32 = arith.constant 0 : i32
    %c0_i32_0 = arith.constant 0 : i32
    %c0_i32_1 = arith.constant 0 : i32
    return %c0_i32, %c0_i32_0 : i32, i32
  }
  func.func @transform_4(%arg0: i32) -> (i32, i32) {
    %c0_i32 = arith.constant 0 : i32
    %c0_i32_0 = arith.constant 0 : i32
    %c0_i32_1 = arith.constant 0 : i32
    return %c0_i32, %c0_i32_0 : i32, i32
  }
  func.func @transform_5(%arg0: i32) -> (i32, i32) {
    %c0_i32 = arith.constant 0 : i32
    %c0_i32_0 = arith.constant 0 : i32
    %c0_i32_1 = arith.constant 0 : i32
    return %c0_i32, %c0_i32_0 : i32, i32
  }
  func.func @transform_6(%arg0: i32) -> (i32, i32) {
    %c0_i32 = arith.constant 0 : i32
    %c0_i32_0 = arith.constant 0 : i32
    %c0_i32_1 = arith.constant 0 : i32
    return %c0_i32, %c0_i32_0 : i32, i32
  }
  func.func @transform_7(%arg0: i32) -> (i32, i32) {
    %c0_i32 = arith.constant 0 : i32
    %c0_i32_0 = arith.constant 0 : i32
    %c0_i32_1 = arith.constant 0 : i32
    return %c0_i32, %c0_i32_0 : i32, i32
  }
  func.func @transform_8(%arg0: i32) -> (i32, i32) {
    %c0_i32 = arith.constant 0 : i32
    %c0_i32_0 = arith.constant 0 : i32
    %c0_i32_1 = arith.constant 0 : i32
    return %c0_i32, %c0_i32_0 : i32, i32
  }
  func.func @transform_9(%arg0: i32) -> (i32, i32) {
    %c0_i32 = arith.constant 0 : i32
    %c0_i32_0 = arith.constant 0 : i32
    %c0_i32_1 = arith.constant 0 : i32
    return %c0_i32, %c0_i32_0 : i32, i32
  }
  func.func @transform_10(%arg0: i32) -> (i32, i32) {
    %c0_i32 = arith.constant 0 : i32
    %c0_i32_0 = arith.constant 0 : i32
    %c0_i32_1 = arith.constant 0 : i32
    return %c0_i32, %c0_i32_0 : i32, i32
  }
  func.func @transform_11(%arg0: i32) -> (i32, i32) {
    %c0_i32 = arith.constant 0 : i32
    %c0_i32_0 = arith.constant 0 : i32
    %c0_i32_1 = arith.constant 0 : i32
    return %c0_i32, %c0_i32_0 : i32, i32
  }
  func.func @transform_12(%arg0: i32) -> (i32, i32) {
    %c0_i32 = arith.constant 0 : i32
    %c0_i32_0 = arith.constant 0 : i32
    %c0_i32_1 = arith.constant 0 : i32
    return %c0_i32, %c0_i32_0 : i32, i32
  }
  func.func @transform_13(%arg0: i32) -> (i32, i32) {
    %c0_i32 = arith.constant 0 : i32
    %c0_i32_0 = arith.constant 0 : i32
    %c0_i32_1 = arith.constant 0 : i32
    return %c0_i32, %c0_i32_0 : i32, i32
  }
  func.func @transform_14(%arg0: i32) -> (i32, i32) {
    %c0_i32 = arith.constant 0 : i32
    %c0_i32_0 = arith.constant 0 : i32
    %c0_i32_1 = arith.constant 0 : i32
    return %c0_i32, %c0_i32_0 : i32, i32
  }
  func.func @transform_15(%arg0: i32) -> (i32, i32) {
    %c0_i32 = arith.constant 0 : i32
    %c0_i32_0 = arith.constant 0 : i32
    %c0_i32_1 = arith.constant 0 : i32
    return %c0_i32, %c0_i32_0 : i32, i32
  }
  func.func @transform_16(%arg0: i32) -> (i32, i32) {
    %c0_i32 = arith.constant 0 : i32
    %c0_i32_0 = arith.constant 0 : i32
    %c0_i32_1 = arith.constant 0 : i32
    return %c0_i32, %c0_i32_0 : i32, i32
  }
  func.func @transform_17(%arg0: i32) -> (i32, i32, i32) {
    %c0_i32 = arith.constant 0 : i32
    %c0_i32_0 = arith.constant 0 : i32
    %c0_i32_1 = arith.constant 0 : i32
    return %arg0, %c0_i32, %c0_i32_0 : i32, i32, i32
  }
}

</mosaic_0001>

<llo_original>
// kernel: tpu_custom_call.1
$region0: #{tpu_custom_call.1}
  #allocation0 [shape = 'u32[]', space=smem, size = 0x4, offset = 0x4, fixed_abs, tag = 'smem constant byte address 0x4 - core index']
  #allocation1 [shape = 'u32[144,128]{1,0:T(1,128)}', space=vmem, size = 0x12000, scoped, tag = 'internal scratch']
  #allocation2 [shape = 'f32[320,128]{1,0:T(8,128)}', space=vmem, size = 0x28000, scoped, tag = 'scratch operand']
  %s0 = inlined_call_operand.vmem [shape: f32[2,256,8], index: 0, kind: input, shape index: {}]
  %s1 = inlined_call_operand.vmem [shape: bf16[8,8], index: 1, kind: input, shape index: {}]
  %s2 = inlined_call_operand.vmem [shape: f32[1,8], index: 2, kind: input, shape index: {}]
  %s3 = inlined_call_operand.vmem [shape: bf16[8,6], index: 3, kind: input, shape index: {}]
  %s4 = inlined_call_operand.vmem [shape: f32[1,6], index: 4, kind: input, shape index: {}]
  %s5 = inlined_call_operand.vmem [shape: bf16[8,6], index: 5, kind: input, shape index: {}]
  %s6 = inlined_call_operand.vmem [shape: f32[1,6], index: 6, kind: input, shape index: {}]
  %s7 = inlined_call_operand.vmem [shape: bf16[54,8], index: 7, kind: input, shape index: {}]
  %s8 = inlined_call_operand.vmem [shape: f32[1,8], index: 8, kind: input, shape index: {}]
  %s9 = inlined_call_operand.vmem [shape: bf16[54,8], index: 9, kind: input, shape index: {}]
  %s10 = inlined_call_operand.vmem [shape: f32[1,8], index: 10, kind: input, shape index: {}]
  %s11 = inlined_call_operand.vmem [shape: bf16[72,10], index: 11, kind: input, shape index: {}]
  %s12 = inlined_call_operand.vmem [shape: f32[1,10], index: 12, kind: input, shape index: {}]
  %s13 = inlined_call_operand.vmem [shape: bf16[8,8], index: 13, kind: input, shape index: {}]
  %s14 = inlined_call_operand.vmem [shape: bf16[8,8], index: 14, kind: input, shape index: {}]
  %s15 = inlined_call_operand.vmem [shape: bf16[10,8], index: 15, kind: input, shape index: {}]
  %s16 = inlined_call_operand.vmem [shape: f32[1,8], index: 16, kind: input, shape index: {}]
  %s17 = inlined_call_operand.vmem [shape: f32[2,256,8], index: 17, kind: output, shape index: {}]
  %s18 = sld [smem:[#allocation0]]
  $region101: #{tpu_custom_call.1} parent=0
    _
  %s20 = ssub.s32 1, %s18
  %s21 = scalar_select 0, %s20, %s18
  loop: start=0, step=1, limit=4
  $region2: #{tpu_custom_call.1} parent=0 // loop_pre_header
    _
  $region3: #{tpu_custom_call.1} parent=0 // loop_header
    %s23 = sphi 0, %s27
    %p24 = scmp.ge.s32.totalorder %s23, 4
    %s33 = sphi 0, %s35
    %s36 = sphi 0, %s33
    %s37 = sphi 0, %s36
    %s53 = sphi 0, %s37
    %s57 = sphi 0, %s57
    %s59 = sphi 0, %s57
    %s60 = sphi 0, %s59
    %s74 = sphi 0, %s60
    %s78 = sphi 0, %s78
    %s80 = sphi 0, %s78
    %s81 = sphi 0, %s80
    %s95 = sphi 0, %s81
    %s99 = sphi 0, %s99
    %s101 = sphi 0, %s99
    %s102 = sphi 0, %s101
    %s116 = sphi 0, %s102
    %s120 = sphi 0, %s120
    %s122 = sphi 0, %s120
    %s123 = sphi 0, %s122
    %s137 = sphi 0, %s123
    %s141 = sphi 0, %s141
    %s143 = sphi 0, %s141
    %s144 = sphi 0, %s143
    %s158 = sphi 0, %s144
    %s162 = sphi 0, %s162
    %s164 = sphi 0, %s162
    %s165 = sphi 0, %s164
    %s179 = sphi 0, %s165
    %s183 = sphi 0, %s183
    %s185 = sphi 0, %s183
    %s186 = sphi 0, %s185
    %s200 = sphi 0, %s186
    %s204 = sphi 0, %s204
    %s206 = sphi 0, %s204
    %s207 = sphi 0, %s206
    %s221 = sphi 0, %s207
    %s225 = sphi 0, %s225
    %s227 = sphi 0, %s225
    %s228 = sphi 0, %s227
    %s242 = sphi 0, %s228
    %s246 = sphi 0, %s246
    %s248 = sphi 0, %s246
    %s249 = sphi 0, %s248
    %s263 = sphi 0, %s249
    %s267 = sphi 0, %s267
    %s269 = sphi 0, %s267
    %s270 = sphi 0, %s269
    %s284 = sphi 0, %s270
    %s288 = sphi 0, %s288
    %s290 = sphi 0, %s288
    %s291 = sphi 0, %s290
    %s305 = sphi 0, %s291
    %s309 = sphi 0, %s309
    %s311 = sphi 0, %s309
    %s312 = sphi 0, %s311
    %s326 = sphi 0, %s312
    %s330 = sphi 0, %s330
    %s332 = sphi 0, %s330
    %s333 = sphi 0, %s332
    %s347 = sphi 0, %s333
    %s351 = sphi 0, %s351
    %s353 = sphi 0, %s351
    %s354 = sphi 0, %s353
    %s368 = sphi 0, %s354
    %s372 = sphi 0, %s372
    %s374 = sphi 0, %s372
    %s375 = sphi 0, %s374
    %s389 = sphi 0, %s375
    %s395 = sphi 0, %s397
    %s398 = sphi 0, %s395
    %s399 = sphi 0, %s398
    %s415 = sphi 0, %s399
  $region4: #{tpu_custom_call.1} parent=0 // loop_header_branch
    %26 = sbr.rel (%p24) target = $region8
  $region5: #{tpu_custom_call.1} parent=0 // loop_body
    %s28 = ssub.s32 %s23, 1
    %s29 = ssub.s32 %s23, 2
    %s30 = sadd.s32 %s23, 1
    %s31 = ssub.s32 %s23, %s30
    %p32 = scmp.eq.s32.totalorder %s31, 0
    %s34 = sadd.s32 %s33, 1
    %s35 = scalar_select %p32, %s33, %s34
    %p38 = pneg %p32
    %p39 = scmp.eq.s32.totalorder %s23, 1
    %p40 = por %p38, %p39
    %p41 = scmp.ne.s32.totalorder %s33, %s36
    %p42 = scmp.eq.s32.totalorder %s23, 0
    %p43 = por %p41, %p42
    %p44 = scmp.ne.s32.totalorder %s33, %s36
    %p45 = scmp.eq.s32.totalorder %s28, 1
    %p46 = por %p44, %p45
    %p47 = scmp.ne.s32.totalorder %s36, %s37
    %p48 = scmp.eq.s32.totalorder %s28, 0
    %p49 = por %p47, %p48
    %p50 = scmp.ne.s32.totalorder %s36, %s37
    %p51 = scmp.eq.s32.totalorder %s29, 1
    %p52 = por %p50, %p51
    %p54 = scmp.ne.s32.totalorder %s37, %s53
    %p55 = scmp.eq.s32.totalorder %s29, 0
    %p56 = por %p54, %p55
    %s58 = sadd.s32 %s57, 1
    %p61 = scmp.eq.s32.totalorder %s23, 1
    %p62 = scmp.ne.s32.totalorder %s57, %s59
    %p63 = scmp.eq.s32.totalorder %s23, 0
    %p64 = por %p62, %p63
    %p65 = scmp.ne.s32.totalorder %s57, %s59
    %p66 = scmp.eq.s32.totalorder %s28, 1
    %p67 = por %p65, %p66
    %p68 = scmp.ne.s32.totalorder %s59, %s60
    %p69 = scmp.eq.s32.totalorder %s28, 0
    %p70 = por %p68, %p69
    %p71 = scmp.ne.s32.totalorder %s59, %s60
    %p72 = scmp.eq.s32.totalorder %s29, 1
    %p73 = por %p71, %p72
    %p75 = scmp.ne.s32.totalorder %s60, %s74
    %p76 = scmp.eq.s32.totalorder %s29, 0
    %p77 = por %p75, %p76
    %s79 = sadd.s32 %s78, 1
    %p82 = scmp.eq.s32.totalorder %s23, 1
    %p83 = scmp.ne.s32.totalorder %s78, %s80
    %p84 = scmp.eq.s32.totalorder %s23, 0
    %p85 = por %p83, %p84
    %p86 = scmp.ne.s32.totalorder %s78, %s80
    %p87 = scmp.eq.s32.totalorder %s28, 1
    %p88 = por %p86, %p87
    %p89 = scmp.ne.s32.totalorder %s80, %s81
    %p90 = scmp.eq.s32.totalorder %s28, 0
    %p91 = por %p89, %p90
    %p92 = scmp.ne.s32.totalorder %s80, %s81
    %p93 = scmp.eq.s32.totalorder %s29, 1
    %p94 = por %p92, %p93
    %p96 = scmp.ne.s32.totalorder %s81, %s95
    %p97 = scmp.eq.s32.totalorder %s29, 0
    %p98 = por %p96, %p97
    %s100 = sadd.s32 %s99, 1
    %p103 = scmp.eq.s32.totalorder %s23, 1
    %p104 = scmp.ne.s32.totalorder %s99, %s101
    %p105 = scmp.eq.s32.totalorder %s23, 0
    %p106 = por %p104, %p105
    %p107 = scmp.ne.s32.totalorder %s99, %s101
    %p108 = scmp.eq.s32.totalorder %s28, 1
    %p109 = por %p107, %p108
    %p110 = scmp.ne.s32.totalorder %s101, %s102
    %p111 = scmp.eq.s32.totalorder %s28, 0
    %p112 = por %p110, %p111
    %p113 = scmp.ne.s32.totalorder %s101, %s102
    %p114 = scmp.eq.s32.totalorder %s29, 1
    %p115 = por %p113, %p114
    %p117 = scmp.ne.s32.totalorder %s102, %s116
    %p118 = scmp.eq.s32.totalorder %s29, 0
    %p119 = por %p117, %p118
    %s121 = sadd.s32 %s120, 1
    %p124 = scmp.eq.s32.totalorder %s23, 1
    %p125 = scmp.ne.s32.totalorder %s120, %s122
    %p126 = scmp.eq.s32.totalorder %s23, 0
    %p127 = por %p125, %p126
    %p128 = scmp.ne.s32.totalorder %s120, %s122
    %p129 = scmp.eq.s32.totalorder %s28, 1
    %p130 = por %p128, %p129
    %p131 = scmp.ne.s32.totalorder %s122, %s123
    %p132 = scmp.eq.s32.totalorder %s28, 0
    %p133 = por %p131, %p132
    %p134 = scmp.ne.s32.totalorder %s122, %s123
    %p135 = scmp.eq.s32.totalorder %s29, 1
    %p136 = por %p134, %p135
    %p138 = scmp.ne.s32.totalorder %s123, %s137
    %p139 = scmp.eq.s32.totalorder %s29, 0
    %p140 = por %p138, %p139
    %s142 = sadd.s32 %s141, 1
    %p145 = scmp.eq.s32.totalorder %s23, 1
    %p146 = scmp.ne.s32.totalorder %s141, %s143
    %p147 = scmp.eq.s32.totalorder %s23, 0
    %p148 = por %p146, %p147
    %p149 = scmp.ne.s32.totalorder %s141, %s143
    %p150 = scmp.eq.s32.totalorder %s28, 1
    %p151 = por %p149, %p150
    %p152 = scmp.ne.s32.totalorder %s143, %s144
    %p153 = scmp.eq.s32.totalorder %s28, 0
    %p154 = por %p152, %p153
    %p155 = scmp.ne.s32.totalorder %s143, %s144
    %p156 = scmp.eq.s32.totalorder %s29, 1
    %p157 = por %p155, %p156
    %p159 = scmp.ne.s32.totalorder %s144, %s158
    %p160 = scmp.eq.s32.totalorder %s29, 0
    %p161 = por %p159, %p160
    %s163 = sadd.s32 %s162, 1
    %p166 = scmp.eq.s32.totalorder %s23, 1
    %p167 = scmp.ne.s32.totalorder %s162, %s164
    %p168 = scmp.eq.s32.totalorder %s23, 0
    %p169 = por %p167, %p168
    %p170 = scmp.ne.s32.totalorder %s162, %s164
    %p171 = scmp.eq.s32.totalorder %s28, 1
    %p172 = por %p170, %p171
    %p173 = scmp.ne.s32.totalorder %s164, %s165
    %p174 = scmp.eq.s32.totalorder %s28, 0
    %p175 = por %p173, %p174
    %p176 = scmp.ne.s32.totalorder %s164, %s165
    %p177 = scmp.eq.s32.totalorder %s29, 1
    %p178 = por %p176, %p177
    %p180 = scmp.ne.s32.totalorder %s165, %s179
    %p181 = scmp.eq.s32.totalorder %s29, 0
    %p182 = por %p180, %p181
    %s184 = sadd.s32 %s183, 1
    %p187 = scmp.eq.s32.totalorder %s23, 1
    %p188 = scmp.ne.s32.totalorder %s183, %s185
    %p189 = scmp.eq.s32.totalorder %s23, 0
    %p190 = por %p188, %p189
    %p191 = scmp.ne.s32.totalorder %s183, %s185
    %p192 = scmp.eq.s32.totalorder %s28, 1
    %p193 = por %p191, %p192
    %p194 = scmp.ne.s32.totalorder %s185, %s186
    %p195 = scmp.eq.s32.totalorder %s28, 0
    %p196 = por %p194, %p195
    %p197 = scmp.ne.s32.totalorder %s185, %s186
    %p198 = scmp.eq.s32.totalorder %s29, 1
    %p199 = por %p197, %p198
    %p201 = scmp.ne.s32.totalorder %s186, %s200
    %p202 = scmp.eq.s32.totalorder %s29, 0
    %p203 = por %p201, %p202
    %s205 = sadd.s32 %s204, 1
    %p208 = scmp.eq.s32.totalorder %s23, 1
    %p209 = scmp.ne.s32.totalorder %s204, %s206
    %p210 = scmp.eq.s32.totalorder %s23, 0
    %p211 = por %p209, %p210
    %p212 = scmp.ne.s32.totalorder %s204, %s206
    %p213 = scmp.eq.s32.totalorder %s28, 1
    %p214 = por %p212, %p213
    %p215 = scmp.ne.s32.totalorder %s206, %s207
    %p216 = scmp.eq.s32.totalorder %s28, 0
    %p217 = por %p215, %p216
    %p218 = scmp.ne.s32.totalorder %s206, %s207
    %p219 = scmp.eq.s32.totalorder %s29, 1
    %p220 = por %p218, %p219
    %p222 = scmp.ne.s32.totalorder %s207, %s221
    %p223 = scmp.eq.s32.totalorder %s29, 0
    %p224 = por %p222, %p223
    %s226 = sadd.s32 %s225, 1
    %p229 = scmp.eq.s32.totalorder %s23, 1
    %p230 = scmp.ne.s32.totalorder %s225, %s227
    %p231 = scmp.eq.s32.totalorder %s23, 0
    %p232 = por %p230, %p231
    %p233 = scmp.ne.s32.totalorder %s225, %s227
    %p234 = scmp.eq.s32.totalorder %s28, 1
    %p235 = por %p233, %p234
    %p236 = scmp.ne.s32.totalorder %s227, %s228
    %p237 = scmp.eq.s32.totalorder %s28, 0
    %p238 = por %p236, %p237
    %p239 = scmp.ne.s32.totalorder %s227, %s228
    %p240 = scmp.eq.s32.totalorder %s29, 1
    %p241 = por %p239, %p240
    %p243 = scmp.ne.s32.totalorder %s228, %s242
    %p244 = scmp.eq.s32.totalorder %s29, 0
    %p245 = por %p243, %p244
    %s247 = sadd.s32 %s246, 1
    %p250 = scmp.eq.s32.totalorder %s23, 1
    %p251 = scmp.ne.s32.totalorder %s246, %s248
    %p252 = scmp.eq.s32.totalorder %s23, 0
    %p253 = por %p251, %p252
    %p254 = scmp.ne.s32.totalorder %s246, %s248
    %p255 = scmp.eq.s32.totalorder %s28, 1
    %p256 = por %p254, %p255
    %p257 = scmp.ne.s32.totalorder %s248, %s249
    %p258 = scmp.eq.s32.totalorder %s28, 0
    %p259 = por %p257, %p258
    %p260 = scmp.ne.s32.totalorder %s248, %s249
    %p261 = scmp.eq.s32.totalorder %s29, 1
    %p262 = por %p260, %p261
    %p264 = scmp.ne.s32.totalorder %s249, %s263
    %p265 = scmp.eq.s32.totalorder %s29, 0
    %p266 = por %p264, %p265
    %s268 = sadd.s32 %s267, 1
    %p271 = scmp.eq.s32.totalorder %s23, 1
    %p272 = scmp.ne.s32.totalorder %s267, %s269
    %p273 = scmp.eq.s32.totalorder %s23, 0
    %p274 = por %p272, %p273
    %p275 = scmp.ne.s32.totalorder %s267, %s269
    %p276 = scmp.eq.s32.totalorder %s28, 1
    %p277 = por %p275, %p276
    %p278 = scmp.ne.s32.totalorder %s269, %s270
    %p279 = scmp.eq.s32.totalorder %s28, 0
    %p280 = por %p278, %p279
    %p281 = scmp.ne.s32.totalorder %s269, %s270
    %p282 = scmp.eq.s32.totalorder %s29, 1
    %p283 = por %p281, %p282
    %p285 = scmp.ne.s32.totalorder %s270, %s284
    %p286 = scmp.eq.s32.totalorder %s29, 0
    %p287 = por %p285, %p286
    %s289 = sadd.s32 %s288, 1
    %p292 = scmp.eq.s32.totalorder %s23, 1
    %p293 = scmp.ne.s32.totalorder %s288, %s290
    %p294 = scmp.eq.s32.totalorder %s23, 0
    %p295 = por %p293, %p294
    %p296 = scmp.ne.s32.totalorder %s288, %s290
    %p297 = scmp.eq.s32.totalorder %s28, 1
    %p298 = por %p296, %p297
    %p299 = scmp.ne.s32.totalorder %s290, %s291
    %p300 = scmp.eq.s32.totalorder %s28, 0
    %p301 = por %p299, %p300
    %p302 = scmp.ne.s32.totalorder %s290, %s291
    %p303 = scmp.eq.s32.totalorder %s29, 1
    %p304 = por %p302, %p303
    %p306 = scmp.ne.s32.totalorder %s291, %s305
    %p307 = scmp.eq.s32.totalorder %s29, 0
    %p308 = por %p306, %p307
    %s310 = sadd.s32 %s309, 1
    %p313 = scmp.eq.s32.totalorder %s23, 1
    %p314 = scmp.ne.s32.totalorder %s309, %s311
    %p315 = scmp.eq.s32.totalorder %s23, 0
    %p316 = por %p314, %p315
    %p317 = scmp.ne.s32.totalorder %s309, %s311
    %p318 = scmp.eq.s32.totalorder %s28, 1
    %p319 = por %p317, %p318
    %p320 = scmp.ne.s32.totalorder %s311, %s312
    %p321 = scmp.eq.s32.totalorder %s28, 0
    %p322 = por %p320, %p321
    %p323 = scmp.ne.s32.totalorder %s311, %s312
    %p324 = scmp.eq.s32.totalorder %s29, 1
    %p325 = por %p323, %p324
    %p327 = scmp.ne.s32.totalorder %s312, %s326
    %p328 = scmp.eq.s32.totalorder %s29, 0
    %p329 = por %p327, %p328
    %s331 = sadd.s32 %s330, 1
    %p334 = scmp.eq.s32.totalorder %s23, 1
    %p335 = scmp.ne.s32.totalorder %s330, %s332
    %p336 = scmp.eq.s32.totalorder %s23, 0
    %p337 = por %p335, %p336
    %p338 = scmp.ne.s32.totalorder %s330, %s332
    %p339 = scmp.eq.s32.totalorder %s28, 1
    %p340 = por %p338, %p339
    %p341 = scmp.ne.s32.totalorder %s332, %s333
    %p342 = scmp.eq.s32.totalorder %s28, 0
    %p343 = por %p341, %p342
    %p344 = scmp.ne.s32.totalorder %s332, %s333
    %p345 = scmp.eq.s32.totalorder %s29, 1
    %p346 = por %p344, %p345
    %p348 = scmp.ne.s32.totalorder %s333, %s347
    %p349 = scmp.eq.s32.totalorder %s29, 0
    %p350 = por %p348, %p349
    %s352 = sadd.s32 %s351, 1
    %p355 = scmp.eq.s32.totalorder %s23, 1
    %p356 = scmp.ne.s32.totalorder %s351, %s353
    %p357 = scmp.eq.s32.totalorder %s23, 0
    %p358 = por %p356, %p357
    %p359 = scmp.ne.s32.totalorder %s351, %s353
    %p360 = scmp.eq.s32.totalorder %s28, 1
    %p361 = por %p359, %p360
    %p362 = scmp.ne.s32.totalorder %s353, %s354
    %p363 = scmp.eq.s32.totalorder %s28, 0
    %p364 = por %p362, %p363
    %p365 = scmp.ne.s32.totalorder %s353, %s354
    %p366 = scmp.eq.s32.totalorder %s29, 1
    %p367 = por %p365, %p366
    %p369 = scmp.ne.s32.totalorder %s354, %s368
    %p370 = scmp.eq.s32.totalorder %s29, 0
    %p371 = por %p369, %p370
    %s373 = sadd.s32 %s372, 1
    %p376 = scmp.eq.s32.totalorder %s23, 1
    %p377 = scmp.ne.s32.totalorder %s372, %s374
    %p378 = scmp.eq.s32.totalorder %s23, 0
    %p379 = por %p377, %p378
    %p380 = scmp.ne.s32.totalorder %s372, %s374
    %p381 = scmp.eq.s32.totalorder %s28, 1
    %p382 = por %p380, %p381
    %p383 = scmp.ne.s32.totalorder %s374, %s375
    %p384 = scmp.eq.s32.totalorder %s28, 0
    %p385 = por %p383, %p384
    %p386 = scmp.ne.s32.totalorder %s374, %s375
    %p387 = scmp.eq.s32.totalorder %s29, 1
    %p388 = por %p386, %p387
    %p390 = scmp.ne.s32.totalorder %s375, %s389
    %p391 = scmp.eq.s32.totalorder %s29, 0
    %p392 = por %p390, %p391
    %s393 = ssub.s32 %s23, %s30
    %p394 = scmp.eq.s32.totalorder %s393, 0
    %s396 = sadd.s32 %s395, 1
    %s397 = scalar_select %p394, %s395, %s396
    %p400 = pneg %p394
    %p401 = scmp.eq.s32.totalorder %s23, 1
    %p402 = por %p400, %p401
    %p403 = scmp.ne.s32.totalorder %s395, %s398
    %p404 = scmp.eq.s32.totalorder %s23, 0
    %p405 = por %p403, %p404
    %p406 = scmp.ne.s32.totalorder %s395, %s398
    %p407 = scmp.eq.s32.totalorder %s28, 1
    %p408 = por %p406, %p407
    %p409 = scmp.ne.s32.totalorder %s398, %s399
    %p410 = scmp.eq.s32.totalorder %s28, 0
    %p411 = por %p409, %p410
    %p412 = scmp.ne.s32.totalorder %s398, %s399
    %p413 = scmp.eq.s32.totalorder %s29, 1
    %p414 = por %p412, %p413
    %p416 = scmp.ne.s32.totalorder %s399, %s415
    %p417 = scmp.eq.s32.totalorder %s29, 0
    %p418 = por %p416, %p417
    %p419 = scmp.le.s32.totalorder 1, %s23
    %p420 = scmp.lt.s32.totalorder %s23, 3
    %p421 = pnand %p419, %p420
    %p422 = pneg %p421
    // Predicated region
    $region9: #{tpu_custom_call.1} parent=5 // pred_check
      _
    $region10: #{tpu_custom_call.1} parent=5 // pred_check_branch
      %424 = sbr.rel (%p421) target = $region12
    $region11: #{tpu_custom_call.1} parent=5 // pred_region
      %s425 = ssub.s32 %s23, 1
      // Predicated region
      $region13: #{tpu_custom_call.1} parent=11 // pred_check
        %p426 = pneg %p70
      $region14: #{tpu_custom_call.1} parent=11 // pred_check_branch
        %428 = sbr.rel (%p426) target = $region16
      $region15: #{tpu_custom_call.1} parent=11 // pred_region
        _
      $region16: #{tpu_custom_call.1} parent=11 // pred_fallthru
        _
      // Predicated region
      $region17: #{tpu_custom_call.1} parent=11 // pred_check
        %p429 = pneg %p91
      $region18: #{tpu_custom_call.1} parent=11 // pred_check_branch
        %431 = sbr.rel (%p429) target = $region20
      $region19: #{tpu_custom_call.1} parent=11 // pred_region
        _
      $region20: #{tpu_custom_call.1} parent=11 // pred_fallthru
        _
      // Predicated region
      $region21: #{tpu_custom_call.1} parent=11 // pred_check
        %p432 = pneg %p112
      $region22: #{tpu_custom_call.1} parent=11 // pred_check_branch
        %434 = sbr.rel (%p432) target = $region24
      $region23: #{tpu_custom_call.1} parent=11 // pred_region
        _
      $region24: #{tpu_custom_call.1} parent=11 // pred_fallthru
        _
      // Predicated region
      $region25: #{tpu_custom_call.1} parent=11 // pred_check
        %p435 = pneg %p133
      $region26: #{tpu_custom_call.1} parent=11 // pred_check_branch
        %437 = sbr.rel (%p435) target = $region28
      $region27: #{tpu_custom_call.1} parent=11 // pred_region
        _
      $region28: #{tpu_custom_call.1} parent=11 // pred_fallthru
        _
      // Predicated region
      $region29: #{tpu_custom_call.1} parent=11 // pred_check
        %p438 = pneg %p154
      $region30: #{tpu_custom_call.1} parent=11 // pred_check_branch
        %440 = sbr.rel (%p438) target = $region32
      $region31: #{tpu_custom_call.1} parent=11 // pred_region
        _
      $region32: #{tpu_custom_call.1} parent=11 // pred_fallthru
        _
      // Predicated region
      $region33: #{tpu_custom_call.1} parent=11 // pred_check
        %p441 = pneg %p175
      $region34: #{tpu_custom_call.1} parent=11 // pred_check_branch
        %443 = sbr.rel (%p441) target = $region36
      $region35: #{tpu_custom_call.1} parent=11 // pred_region
        _
      $region36: #{tpu_custom_call.1} parent=11 // pred_fallthru
        _
      // Predicated region
      $region37: #{tpu_custom_call.1} parent=11 // pred_check
        %p444 = pneg %p196
      $region38: #{tpu_custom_call.1} parent=11 // pred_check_branch
        %446 = sbr.rel (%p444) target = $region40
      $region39: #{tpu_custom_call.1} parent=11 // pred_region
        _
      $region40: #{tpu_custom_call.1} parent=11 // pred_fallthru
        _
      // Predicated region
      $region41: #{tpu_custom_call.1} parent=11 // pred_check
        %p447 = pneg %p217
      $region42: #{tpu_custom_call.1} parent=11 // pred_check_branch
        %449 = sbr.rel (%p447) target = $region44
      $region43: #{tpu_custom_call.1} parent=11 // pred_region
        _
      $region44: #{tpu_custom_call.1} parent=11 // pred_fallthru
        _
      // Predicated region
      $region45: #{tpu_custom_call.1} parent=11 // pred_check
        %p450 = pneg %p238
      $region46: #{tpu_custom_call.1} parent=11 // pred_check_branch
        %452 = sbr.rel (%p450) target = $region48
      $region47: #{tpu_custom_call.1} parent=11 // pred_region
        _
      $region48: #{tpu_custom_call.1} parent=11 // pred_fallthru
        _
      // Predicated region
      $region49: #{tpu_custom_call.1} parent=11 // pred_check
        %p453 = pneg %p259
      $region50: #{tpu_custom_call.1} parent=11 // pred_check_branch
        %455 = sbr.rel (%p453) target = $region52
      $region51: #{tpu_custom_call.1} parent=11 // pred_region
        _
      $region52: #{tpu_custom_call.1} parent=11 // pred_fallthru
        _
      // Predicated region
      $region53: #{tpu_custom_call.1} parent=11 // pred_check
        %p456 = pneg %p280
      $region54: #{tpu_custom_call.1} parent=11 // pred_check_branch
        %458 = sbr.rel (%p456) target = $region56
      $region55: #{tpu_custom_call.1} parent=11 // pred_region
        _
      $region56: #{tpu_custom_call.1} parent=11 // pred_fallthru
        _
      // Predicated region
      $region57: #{tpu_custom_call.1} parent=11 // pred_check
        %p459 = pneg %p301
      $region58: #{tpu_custom_call.1} parent=11 // pred_check_branch
        %461 = sbr.rel (%p459) target = $region60
      $region59: #{tpu_custom_call.1} parent=11 // pred_region
        _
      $region60: #{tpu_custom_call.1} parent=11 // pred_fallthru
        _
      // Predicated region
      $region61: #{tpu_custom_call.1} parent=11 // pred_check
        %p462 = pneg %p322
      $region62: #{tpu_custom_call.1} parent=11 // pred_check_branch
        %464 = sbr.rel (%p462) target = $region64
      $region63: #{tpu_custom_call.1} parent=11 // pred_region
        _
      $region64: #{tpu_custom_call.1} parent=11 // pred_fallthru
        _
      // Predicated region
      $region65: #{tpu_custom_call.1} parent=11 // pred_check
        %p465 = pneg %p343
      $region66: #{tpu_custom_call.1} parent=11 // pred_check_branch
        %467 = sbr.rel (%p465) target = $region68
      $region67: #{tpu_custom_call.1} parent=11 // pred_region
        _
      $region68: #{tpu_custom_call.1} parent=11 // pred_fallthru
        _
      // Predicated region
      $region69: #{tpu_custom_call.1} parent=11 // pred_check
        %p468 = pneg %p364
      $region70: #{tpu_custom_call.1} parent=11 // pred_check_branch
        %470 = sbr.rel (%p468) target = $region72
      $region71: #{tpu_custom_call.1} parent=11 // pred_region
        _
      $region72: #{tpu_custom_call.1} parent=11 // pred_fallthru
        _
      // Predicated region
      $region73: #{tpu_custom_call.1} parent=11 // pred_check
        %p471 = pneg %p385
      $region74: #{tpu_custom_call.1} parent=11 // pred_check_branch
        %473 = sbr.rel (%p471) target = $region76
      $region75: #{tpu_custom_call.1} parent=11 // pred_region
        _
      $region76: #{tpu_custom_call.1} parent=11 // pred_fallthru
        _
    $region12: #{tpu_custom_call.1} parent=5 // pred_fallthru
      _
    %p474 = scmp.lt.s32.totalorder %s23, 2
    // Predicated region
    $region77: #{tpu_custom_call.1} parent=5 // pred_check
      %p475 = pneg %p474
    $region78: #{tpu_custom_call.1} parent=5 // pred_check_branch
      %477 = sbr.rel (%p475) target = $region80
    $region79: #{tpu_custom_call.1} parent=5 // pred_region
      // Predicated region
      $region81: #{tpu_custom_call.1} parent=79 // pred_check
        %p478 = pneg %p43
      $region82: #{tpu_custom_call.1} parent=79 // pred_check_branch
        %480 = sbr.rel (%p478) target = $region84
      $region83: #{tpu_custom_call.1} parent=79 // pred_region
        %p481 = scmp.lt.s32.totalorder %s23, 1
        %s482 = scalar_select %p481, %s23, 1
        %s483 = smul.addr %s482, 32
        %s484 = smul.addr %s483, 8
        %s485 = scalar_lea.vmem %s0, %s484
      $region84: #{tpu_custom_call.1} parent=79 // pred_fallthru
        _
    $region80: #{tpu_custom_call.1} parent=5 // pred_fallthru
      _
    %p486 = scmp.le.s32.totalorder 1, %s23
    %p487 = scmp.lt.s32.totalorder %s23, 3
    %p488 = pnand %p486, %p487
    %p489 = pneg %p488
    // Predicated region
    $region85: #{tpu_custom_call.1} parent=5 // pred_check
      _
    $region86: #{tpu_custom_call.1} parent=5 // pred_check_branch
      %491 = sbr.rel (%p488) target = $region88
    $region87: #{tpu_custom_call.1} parent=5 // pred_region
      %s492 = ssub.s32 %s23, 1
      %p493 = scmp.lt.s32.totalorder %s28, 1
      %s494 = scalar_select %p493, %s28, 1
      %s495 = smul.addr %s494, 32
      %s496 = smul.addr %s495, 8
      %s497 = scalar_lea.vmem %s0, %s496
      %p498 = pneg %p49
      %p499 = pneg %p46
      %p500 = pneg %p70
      %p501 = pneg %p67
      %p502 = pneg %p91
      %p503 = pneg %p88
      %p504 = pneg %p112
      %p505 = pneg %p109
      %p506 = pneg %p133
      %p507 = pneg %p130
      %p508 = pneg %p154
      %p509 = pneg %p151
      %p510 = pneg %p175
      %p511 = pneg %p172
      %p512 = pneg %p196
      %p513 = pneg %p193
      %p514 = pneg %p217
      %p515 = pneg %p214
      %p516 = pneg %p238
      %p517 = pneg %p235
      %p518 = pneg %p259
      %p519 = pneg %p256
      %p520 = pneg %p280
      %p521 = pneg %p277
      %p522 = pneg %p301
      %p523 = pneg %p298
      %p524 = pneg %p322
      %p525 = pneg %p319
      %p526 = pneg %p343
      %p527 = pneg %p340
      %p528 = pneg %p364
      %p529 = pneg %p361
      %p530 = pneg %p385
      %p531 = pneg %p382
      %p532 = pneg %p411
      %p533 = pneg %p408
      %p534 = scmp.lt.s32.totalorder %s28, 1
      %s535 = scalar_select %p534, %s28, 1
      %s536 = smul.addr %s535, 32
      %s537 = smul.addr %s536, 8
      %s538 = scalar_lea.vmem %s17, %s537
      %p539 = scmp.lt.s32.totalorder %s28, 1
      %s540 = scalar_select %p539, %s28, 1
      %s541 = smul.addr %s540, 32
      %s542 = smul.addr %s541, 8
      %s543 = scalar_lea.vmem %s0, %s542
      %p544 = scmp.lt.s32.totalorder %s28, 1
      %s545 = scalar_select %p544, %s28, 1
      %s546 = smul.addr %s545, 32
      %s547 = smul.addr %s546, 8
      %s548 = scalar_lea.vmem %s17, %s547
      %v550 = vld [vmem:[%s543] sm:$0xff]
      %v551 = vld [vmem:[%s543 + $0x8] sm:$0xff]
      %v552 = vld [vmem:[%s543 + $0x10] sm:$0xff]
      %v553 = vld [vmem:[%s543 + $0x18] sm:$0xff]
      %v554 = vld [vmem:[%s543 + $0x20] sm:$0xff]
      %v555 = vld [vmem:[%s543 + $0x28] sm:$0xff]
      %v556 = vld [vmem:[%s543 + $0x30] sm:$0xff]
      %v557 = vld [vmem:[%s543 + $0x38] sm:$0xff]
      %v558 = vld [vmem:[%s543 + $0x40] sm:$0xff]
      %v559 = vld [vmem:[%s543 + $0x48] sm:$0xff]
      %v560 = vld [vmem:[%s543 + $0x50] sm:$0xff]
      %v561 = vld [vmem:[%s543 + $0x58] sm:$0xff]
      %v562 = vld [vmem:[%s543 + $0x60] sm:$0xff]
      %v563 = vld [vmem:[%s543 + $0x68] sm:$0xff]
      %v564 = vld [vmem:[%s543 + $0x70] sm:$0xff]
      %v565 = vld [vmem:[%s543 + $0x78] sm:$0xff]
      %v566 = vld [vmem:[%s543 + $0x80] sm:$0xff]
      %v567 = vld [vmem:[%s543 + $0x88] sm:$0xff]
      %v568 = vld [vmem:[%s543 + $0x90] sm:$0xff]
      %v569 = vld [vmem:[%s543 + $0x98] sm:$0xff]
      %v570 = vld [vmem:[%s543 + $0xa0] sm:$0xff]
      %v571 = vld [vmem:[%s543 + $0xa8] sm:$0xff]
      %v572 = vld [vmem:[%s543 + $0xb0] sm:$0xff]
      %v573 = vld [vmem:[%s543 + $0xb8] sm:$0xff]
      %v574 = vld [vmem:[%s543 + $0xc0] sm:$0xff]
      %v575 = vld [vmem:[%s543 + $0xc8] sm:$0xff]
      %v576 = vld [vmem:[%s543 + $0xd0] sm:$0xff]
      %v577 = vld [vmem:[%s543 + $0xd8] sm:$0xff]
      %v578 = vld [vmem:[%s543 + $0xe0] sm:$0xff]
      %v579 = vld [vmem:[%s543 + $0xe8] sm:$0xff]
      %v580 = vld [vmem:[%s543 + $0xf0] sm:$0xff]
      %v581 = vld [vmem:[%s543 + $0xf8] sm:$0xff]
      %v582 = vpack.c.bf16 %v551, %v550
      %v583 = vpack.c.bf16 %v553, %v552
      %v584 = vpack.c.bf16 %v555, %v554
      %v585 = vpack.c.bf16 %v557, %v556
      %v586 = vpack.c.bf16 %v559, %v558
      %v587 = vpack.c.bf16 %v561, %v560
      %v588 = vpack.c.bf16 %v563, %v562
      %v589 = vpack.c.bf16 %v565, %v564
      %v590 = vpack.c.bf16 %v567, %v566
      %v591 = vpack.c.bf16 %v569, %v568
      %v592 = vpack.c.bf16 %v571, %v570
      %v593 = vpack.c.bf16 %v573, %v572
      %v594 = vpack.c.bf16 %v575, %v574
      %v595 = vpack.c.bf16 %v577, %v576
      %v596 = vpack.c.bf16 %v579, %v578
      %v597 = vpack.c.bf16 %v581, %v580
      %v598 = vld [vmem:[%s1] sm:$0xf]
      %v599 = vld [vmem:[%s2] sm:$0x1]
      %v601 = vlaneseq
      %v602 = vshrl.u32 %v601, 7
      %v603 = vsub.s32 0, %v602
      %v604 = vrot.slane %v599, %v603
      %vm606 = vcmask 64512
      %v608 = vsel %vm606, %v582, 0
      %v611 = vsel %vm606, %v583, 0
      %v614 = vsel %vm606, %v584, 0
      %v617 = vsel %vm606, %v585, 0
      %v620 = vsel %vm606, %v586, 0
      %v623 = vsel %vm606, %v587, 0
      %v626 = vsel %vm606, %v588, 0
      %v629 = vsel %vm606, %v589, 0
      %v632 = vsel %vm606, %v590, 0
      %v635 = vsel %vm606, %v591, 0
      %v638 = vsel %vm606, %v592, 0
      %v641 = vsel %vm606, %v593, 0
      %v644 = vsel %vm606, %v594, 0
      %v647 = vsel %vm606, %v595, 0
      %v650 = vsel %vm606, %v596, 0
      %v653 = vsel %vm606, %v597, 0
      %vm655 = vcmask 1043456
      %v657 = vsel %vm655, %v598, 0
      %659 = vmatprep.subr.bf16.mxu0 0
      %660 = vmatpush1.bf16.msra.mxu0 %v657
      %661 = vmatprep.subr.bf16.mxu0 0
      %662 = vmatpush1.bf16.msra.mxu0 0
      %663 = vmatprep.subr.bf16.mxu0 0
      %664 = vmatpush1.bf16.msra.mxu0 0
      %665 = vmatprep.subr.bf16.mxu0 0
      %666 = vmatpush1.bf16.msra.mxu0 0
      %667 = vmatprep.subr.bf16.mxu0 0
      %668 = vmatpush1.bf16.msra.mxu0 0
      %669 = vmatprep.subr.bf16.mxu0 0
      %670 = vmatpush1.bf16.msra.mxu0 0
      %671 = vmatprep.subr.bf16.mxu0 0
      %672 = vmatpush1.bf16.msra.mxu0 0
      %673 = vmatprep.subr.bf16.mxu0 0
      %674 = vmatpush1.bf16.msra.mxu0 0
      %675 = vmatprep.subr.bf16.mxu0 0
      %676 = vmatpush1.bf16.msra.mxu0 0
      %677 = vmatprep.subr.bf16.mxu0 0
      %678 = vmatpush1.bf16.msra.mxu0 0
      %679 = vmatprep.subr.bf16.mxu0 0
      %680 = vmatpush1.bf16.msra.mxu0 0
      %681 = vmatprep.subr.bf16.mxu0 0
      %682 = vmatpush1.bf16.msra.mxu0 0
      %683 = vmatprep.subr.bf16.mxu0 0
      %684 = vmatpush1.bf16.msra.mxu0 0
      %685 = vmatprep.subr.bf16.mxu0 0
      %686 = vmatpush1.bf16.msra.mxu0 0
      %687 = vmatprep.subr.bf16.mxu0 0
      %688 = vmatpush1.bf16.msra.mxu0 0
      %689 = vmatprep.subr.bf16.mxu0 0
      %690 = vmatpush1.bf16.msra.mxu0 0
      %691 = vmatprep.mubr.bf16.mxu0 0
      %692 = vmatmul.mubr.bf16.gmra.mrb[0].mxu0 %v608
      %v693 = vpop.f32.mrb[0].mxu0
      %v694 = vadd.f32 %v604, %v693
      %v695 = vpop.f32.mrb[0].mxu0
      %v696 = vpop.f32.mrb[0].mxu0
      %v697 = vadd.f32 %v604, %v696
      %v698 = vpop.f32.mrb[0].mxu0
      %699 = vmatprep.mubr.bf16.mxu0 0
      %700 = vmatmul.mubr.bf16.gmra.mrb[0].mxu0 %v611
      %v701 = vpop.f32.mrb[0].mxu0
      %v702 = vadd.f32 %v604, %v701
      %v703 = vpop.f32.mrb[0].mxu0
      %v704 = vpop.f32.mrb[0].mxu0
      %v705 = vadd.f32 %v604, %v704
      %v706 = vpop.f32.mrb[0].mxu0
      %707 = vmatprep.mubr.bf16.mxu0 0
      %708 = vmatmul.mubr.bf16.gmra.mrb[0].mxu0 %v614
      %v709 = vpop.f32.mrb[0].mxu0
      %v710 = vadd.f32 %v604, %v709
      %v711 = vpop.f32.mrb[0].mxu0
      %v712 = vpop.f32.mrb[0].mxu0
      %v713 = vadd.f32 %v604, %v712
      %v714 = vpop.f32.mrb[0].mxu0
      %715 = vmatprep.mubr.bf16.mxu0 0
      %716 = vmatmul.mubr.bf16.gmra.mrb[0].mxu0 %v617
      %v717 = vpop.f32.mrb[0].mxu0
      %v718 = vadd.f32 %v604, %v717
      %v719 = vpop.f32.mrb[0].mxu0
      %v720 = vpop.f32.mrb[0].mxu0
      %v721 = vadd.f32 %v604, %v720
      %v722 = vpop.f32.mrb[0].mxu0
      %723 = vmatprep.mubr.bf16.mxu0 0
      %724 = vmatmul.mubr.bf16.gmra.mrb[0].mxu0 %v620
      %v725 = vpop.f32.mrb[0].mxu0
      %v726 = vadd.f32 %v604, %v725
      %v727 = vpop.f32.mrb[0].mxu0
      %v728 = vpop.f32.mrb[0].mxu0
      %v729 = vadd.f32 %v604, %v728
      %v730 = vpop.f32.mrb[0].mxu0
      %731 = vmatprep.mubr.bf16.mxu0 0
      %732 = vmatmul.mubr.bf16.gmra.mrb[0].mxu0 %v623
      %v733 = vpop.f32.mrb[0].mxu0
      %v734 = vadd.f32 %v604, %v733
      %v735 = vpop.f32.mrb[0].mxu0
      %v736 = vpop.f32.mrb[0].mxu0
      %v737 = vadd.f32 %v604, %v736
      %v738 = vpop.f32.mrb[0].mxu0
      %739 = vmatprep.mubr.bf16.mxu0 0
      %740 = vmatmul.mubr.bf16.gmra.mrb[0].mxu0 %v626
      %v741 = vpop.f32.mrb[0].mxu0
      %v742 = vadd.f32 %v604, %v741
      %v743 = vpop.f32.mrb[0].mxu0
      %v744 = vpop.f32.mrb[0].mxu0
      %v745 = vadd.f32 %v604, %v744
      %v746 = vpop.f32.mrb[0].mxu0
      %747 = vmatprep.mubr.bf16.mxu0 0
      %748 = vmatmul.mubr.bf16.gmra.mrb[0].mxu0 %v629
      %v749 = vpop.f32.mrb[0].mxu0
      %v750 = vadd.f32 %v604, %v749
      %v751 = vpop.f32.mrb[0].mxu0
      %v752 = vpop.f32.mrb[0].mxu0
      %v753 = vadd.f32 %v604, %v752
      %v754 = vpop.f32.mrb[0].mxu0
      %755 = vmatprep.mubr.bf16.mxu0 0
      %756 = vmatmul.mubr.bf16.gmra.mrb[0].mxu0 %v632
      %v757 = vpop.f32.mrb[0].mxu0
      %v758 = vadd.f32 %v604, %v757
      %v759 = vpop.f32.mrb[0].mxu0
      %v760 = vpop.f32.mrb[0].mxu0
      %v761 = vadd.f32 %v604, %v760
      %v762 = vpop.f32.mrb[0].mxu0
      %763 = vmatprep.mubr.bf16.mxu0 0
      %764 = vmatmul.mubr.bf16.gmra.mrb[0].mxu0 %v635
      %v765 = vpop.f32.mrb[0].mxu0
      %v766 = vadd.f32 %v604, %v765
      %v767 = vpop.f32.mrb[0].mxu0
      %v768 = vpop.f32.mrb[0].mxu0
      %v769 = vadd.f32 %v604, %v768
      %v770 = vpop.f32.mrb[0].mxu0
      %771 = vmatprep.mubr.bf16.mxu0 0
      %772 = vmatmul.mubr.bf16.gmra.mrb[0].mxu0 %v638
      %v773 = vpop.f32.mrb[0].mxu0
      %v774 = vadd.f32 %v604, %v773
      %v775 = vpop.f32.mrb[0].mxu0
      %v776 = vpop.f32.mrb[0].mxu0
      %v777 = vadd.f32 %v604, %v776
      %v778 = vpop.f32.mrb[0].mxu0
      %779 = vmatprep.mubr.bf16.mxu0 0
      %780 = vmatmul.mubr.bf16.gmra.mrb[0].mxu0 %v641
      %v781 = vpop.f32.mrb[0].mxu0
      %v782 = vadd.f32 %v604, %v781
      %v783 = vpop.f32.mrb[0].mxu0
      %v784 = vpop.f32.mrb[0].mxu0
      %v785 = vadd.f32 %v604, %v784
      %v786 = vpop.f32.mrb[0].mxu0
      %787 = vmatprep.mubr.bf16.mxu0 0
      %788 = vmatmul.mubr.bf16.gmra.mrb[0].mxu0 %v644
      %v789 = vpop.f32.mrb[0].mxu0
      %v790 = vadd.f32 %v604, %v789
      %v791 = vpop.f32.mrb[0].mxu0
      %v792 = vpop.f32.mrb[0].mxu0
      %v793 = vadd.f32 %v604, %v792
      %v794 = vpop.f32.mrb[0].mxu0
      %795 = vmatprep.mubr.bf16.mxu0 0
      %796 = vmatmul.mubr.bf16.gmra.mrb[0].mxu0 %v647
      %v797 = vpop.f32.mrb[0].mxu0
      %v798 = vadd.f32 %v604, %v797
      %v799 = vpop.f32.mrb[0].mxu0
      %v800 = vpop.f32.mrb[0].mxu0
      %v801 = vadd.f32 %v604, %v800
      %v802 = vpop.f32.mrb[0].mxu0
      %803 = vmatprep.mubr.bf16.mxu0 0
      %804 = vmatmul.mubr.bf16.gmra.mrb[0].mxu0 %v650
      %v805 = vpop.f32.mrb[0].mxu0
      %v806 = vadd.f32 %v604, %v805
      %v807 = vpop.f32.mrb[0].mxu0
      %v808 = vpop.f32.mrb[0].mxu0
      %v809 = vadd.f32 %v604, %v808
      %v810 = vpop.f32.mrb[0].mxu0
      %811 = vmatprep.mubr.bf16.mxu0 0
      %812 = vmatmul.mubr.bf16.gmra.mrb[0].mxu0 %v653
      %v813 = vpop.f32.mrb[0].mxu0
      %v814 = vadd.f32 %v604, %v813
      %v815 = vpop.f32.mrb[0].mxu0
      %v816 = vpop.f32.mrb[0].mxu0
      %v817 = vadd.f32 %v604, %v816
      %v818 = vpop.f32.mrb[0].mxu0
      %819 = vdwg.mxu0
      %v820 = vmax.f32 %v694, 0.0
      %v821 = vmax.f32 %v697, 0.0
      %v822 = vmax.f32 %v702, 0.0
      %v823 = vmax.f32 %v705, 0.0
      %v824 = vmax.f32 %v710, 0.0
      %v825 = vmax.f32 %v713, 0.0
      %v826 = vmax.f32 %v718, 0.0
      %v827 = vmax.f32 %v721, 0.0
      %v828 = vmax.f32 %v726, 0.0
      %v829 = vmax.f32 %v729, 0.0
      %v830 = vmax.f32 %v734, 0.0
      %v831 = vmax.f32 %v737, 0.0
      %v832 = vmax.f32 %v742, 0.0
      %v833 = vmax.f32 %v745, 0.0
      %v834 = vmax.f32 %v750, 0.0
      %v835 = vmax.f32 %v753, 0.0
      %v836 = vmax.f32 %v758, 0.0
      %v837 = vmax.f32 %v761, 0.0
      %v838 = vmax.f32 %v766, 0.0
      %v839 = vmax.f32 %v769, 0.0
      %v840 = vmax.f32 %v774, 0.0
      %v841 = vmax.f32 %v777, 0.0
      %v842 = vmax.f32 %v782, 0.0
      %v843 = vmax.f32 %v785, 0.0
      %v844 = vmax.f32 %v790, 0.0
      %v845 = vmax.f32 %v793, 0.0
      %v846 = vmax.f32 %v798, 0.0
      %v847 = vmax.f32 %v801, 0.0
      %v848 = vmax.f32 %v806, 0.0
      %v849 = vmax.f32 %v809, 0.0
      %v850 = vmax.f32 %v814, 0.0
      %v851 = vmax.f32 %v817, 0.0
      %v852 = vpack.c.bf16 %v821, %v820
      %v853 = vpack.c.bf16 %v823, %v822
      %v854 = vpack.c.bf16 %v825, %v824
      %v855 = vpack.c.bf16 %v827, %v826
      %v856 = vpack.c.bf16 %v829, %v828
      %v857 = vpack.c.bf16 %v831, %v830
      %v858 = vpack.c.bf16 %v833, %v832
      %v859 = vpack.c.bf16 %v835, %v834
      %v860 = vpack.c.bf16 %v837, %v836
      %v861 = vpack.c.bf16 %v839, %v838
      %v862 = vpack.c.bf16 %v841, %v840
      %v863 = vpack.c.bf16 %v843, %v842
      %v864 = vpack.c.bf16 %v845, %v844
      %v865 = vpack.c.bf16 %v847, %v846
      %v866 = vpack.c.bf16 %v849, %v848
      %v867 = vpack.c.bf16 %v851, %v850
      %v868 = vld [vmem:[%s13] sm:$0xf]
      %v869 = vld [vmem:[%s3] sm:$0xf]
      %v870 = vld [vmem:[%s4] sm:$0x1]
      %v872 = vlaneseq
      %v873 = vshrl.u32 %v872, 7
      %v874 = vsub.s32 0, %v873
      %v875 = vrot.slane %v870, %v874
      %v878 = vsel %vm655, %v869, 0
      %880 = vmatprep.subr.bf16.mxu0 0
      %881 = vmatpush1.bf16.msra.mxu0 %v878
      %882 = vmatprep.subr.bf16.mxu0 0
      %883 = vmatpush1.bf16.msra.mxu0 0
      %884 = vmatprep.subr.bf16.mxu0 0
      %885 = vmatpush1.bf16.msra.mxu0 0
      %886 = vmatprep.subr.bf16.mxu0 0
      %887 = vmatpush1.bf16.msra.mxu0 0
      %888 = vmatprep.subr.bf16.mxu0 0
      %889 = vmatpush1.bf16.msra.mxu0 0
      %890 = vmatprep.subr.bf16.mxu0 0
      %891 = vmatpush1.bf16.msra.mxu0 0
      %892 = vmatprep.subr.bf16.mxu0 0
      %893 = vmatpush1.bf16.msra.mxu0 0
      %894 = vmatprep.subr.bf16.mxu0 0
      %895 = vmatpush1.bf16.msra.mxu0 0
      %896 = vmatprep.subr.bf16.mxu0 0
      %897 = vmatpush1.bf16.msra.mxu0 0
      %898 = vmatprep.subr.bf16.mxu0 0
      %899 = vmatpush1.bf16.msra.mxu0 0
      %900 = vmatprep.subr.bf16.mxu0 0
      %901 = vmatpush1.bf16.msra.mxu0 0
      %902 = vmatprep.subr.bf16.mxu0 0
      %903 = vmatpush1.bf16.msra.mxu0 0
      %904 = vmatprep.subr.bf16.mxu0 0
      %905 = vmatpush1.bf16.msra.mxu0 0
      %906 = vmatprep.subr.bf16.mxu0 0
      %907 = vmatpush1.bf16.msra.mxu0 0
      %908 = vmatprep.subr.bf16.mxu0 0
      %909 = vmatpush1.bf16.msra.mxu0 0
      %910 = vmatprep.subr.bf16.mxu0 0
      %911 = vmatpush1.bf16.msra.mxu0 0
      %912 = vmatprep.mubr.bf16.mxu0 0
      %913 = vmatmul.mubr.bf16.gmra.mrb[0].mxu0 %v608
      %v914 = vpop.f32.mrb[0].mxu0
      %v915 = vadd.f32 %v875, %v914
      %v916 = vpop.f32.mrb[0].mxu0
      %v917 = vpop.f32.mrb[0].mxu0
      %v918 = vadd.f32 %v875, %v917
      %v919 = vpop.f32.mrb[0].mxu0
      %920 = vmatprep.mubr.bf16.mxu0 0
      %921 = vmatmul.mubr.bf16.gmra.mrb[0].mxu0 %v611
      %v922 = vpop.f32.mrb[0].mxu0
      %v923 = vadd.f32 %v875, %v922
      %v924 = vpop.f32.mrb[0].mxu0
      %v925 = vpop.f32.mrb[0].mxu0
      %v926 = vadd.f32 %v875, %v925
      %v927 = vpop.f32.mrb[0].mxu0
      %928 = vmatprep.mubr.bf16.mxu0 0
      %929 = vmatmul.mubr.bf16.gmra.mrb[0].mxu0 %v614
      %v930 = vpop.f32.mrb[0].mxu0
      %v931 = vadd.f32 %v875, %v930
      %v932 = vpop.f32.mrb[0].mxu0
      %v933 = vpop.f32.mrb[0].mxu0
      %v934 = vadd.f32 %v875, %v933
      %v935 = vpop.f32.mrb[0].mxu0
      %936 = vmatprep.mubr.bf16.mxu0 0
      %937 = vmatmul.mubr.bf16.gmra.mrb[0].mxu0 %v617
      %v938 = vpop.f32.mrb[0].mxu0
      %v939 = vadd.f32 %v875, %v938
      %v940 = vpop.f32.mrb[0].mxu0
      %v941 = vpop.f32.mrb[0].mxu0
      %v942 = vadd.f32 %v875, %v941
      %v943 = vpop.f32.mrb[0].mxu0
      %944 = vmatprep.mubr.bf16.mxu0 0
      %945 = vmatmul.mubr.bf16.gmra.mrb[0].mxu0 %v620
      %v946 = vpop.f32.mrb[0].mxu0
      %v947 = vadd.f32 %v875, %v946
      %v948 = vpop.f32.mrb[0].mxu0
      %v949 = vpop.f32.mrb[0].mxu0
      %v950 = vadd.f32 %v875, %v949
      %v951 = vpop.f32.mrb[0].mxu0
      %952 = vmatprep.mubr.bf16.mxu0 0
      %953 = vmatmul.mubr.bf16.gmra.mrb[0].mxu0 %v623
      %v954 = vpop.f32.mrb[0].mxu0
      %v955 = vadd.f32 %v875, %v954
      %v956 = vpop.f32.mrb[0].mxu0
      %v957 = vpop.f32.mrb[0].mxu0
      %v958 = vadd.f32 %v875, %v957
      %v959 = vpop.f32.mrb[0].mxu0
      %960 = vmatprep.mubr.bf16.mxu0 0
      %961 = vmatmul.mubr.bf16.gmra.mrb[0].mxu0 %v626
      %v962 = vpop.f32.mrb[0].mxu0
      %v963 = vadd.f32 %v875, %v962
      %v964 = vpop.f32.mrb[0].mxu0
      %v965 = vpop.f32.mrb[0].mxu0
      %v966 = vadd.f32 %v875, %v965
      %v967 = vpop.f32.mrb[0].mxu0
      %968 = vmatprep.mubr.bf16.mxu0 0
      %969 = vmatmul.mubr.bf16.gmra.mrb[0].mxu0 %v629
      %v970 = vpop.f32.mrb[0].mxu0
      %v971 = vadd.f32 %v875, %v970
      %v972 = vpop.f32.mrb[0].mxu0
      %v973 = vpop.f32.mrb[0].mxu0
      %v974 = vadd.f32 %v875, %v973
      %v975 = vpop.f32.mrb[0].mxu0
      %976 = vmatprep.mubr.bf16.mxu0 0
      %977 = vmatmul.mubr.bf16.gmra.mrb[0].mxu0 %v632
      %v978 = vpop.f32.mrb[0].mxu0
      %v979 = vadd.f32 %v875, %v978
      %v980 = vpop.f32.mrb[0].mxu0
      %v981 = vpop.f32.mrb[0].mxu0
      %v982 = vadd.f32 %v875, %v981
      %v983 = vpop.f32.mrb[0].mxu0
      %984 = vmatprep.mubr.bf16.mxu0 0
      %985 = vmatmul.mubr.bf16.gmra.mrb[0].mxu0 %v635
      %v986 = vpop.f32.mrb[0].mxu0
      %v987 = vadd.f32 %v875, %v986
      %v988 = vpop.f32.mrb[0].mxu0
      %v989 = vpop.f32.mrb[0].mxu0
      %v990 = vadd.f32 %v875, %v989
      %v991 = vpop.f32.mrb[0].mxu0
      %992 = vmatprep.mubr.bf16.mxu0 0
      %993 = vmatmul.mubr.bf16.gmra.mrb[0].mxu0 %v638
      %v994 = vpop.f32.mrb[0].mxu0
      %v995 = vadd.f32 %v875, %v994
      %v996 = vpop.f32.mrb[0].mxu0
      %v997 = vpop.f32.mrb[0].mxu0
      %v998 = vadd.f32 %v875, %v997
      %v999 = vpop.f32.mrb[0].mxu0
      %1000 = vmatprep.mubr.bf16.mxu0 0
      %1001 = vmatmul.mubr.bf16.gmra.mrb[0].mxu0 %v641
      %v1002 = vpop.f32.mrb[0].mxu0
      %v1003 = vadd.f32 %v875, %v1002
      %v1004 = vpop.f32.mrb[0].mxu0
      %v1005 = vpop.f32.mrb[0].mxu0
      %v1006 = vadd.f32 %v875, %v1005
      %v1007 = vpop.f32.mrb[0].mxu0
      %1008 = vmatprep.mubr.bf16.mxu0 0
      %1009 = vmatmul.mubr.bf16.gmra.mrb[0].mxu0 %v644
      %v1010 = vpop.f32.mrb[0].mxu0
      %v1011 = vadd.f32 %v875, %v1010
      %v1012 = vpop.f32.mrb[0].mxu0
      %v1013 = vpop.f32.mrb[0].mxu0
      %v1014 = vadd.f32 %v875, %v1013
      %v1015 = vpop.f32.mrb[0].mxu0
      %1016 = vmatprep.mubr.bf16.mxu0 0
      %1017 = vmatmul.mubr.bf16.gmra.mrb[0].mxu0 %v647
      %v1018 = vpop.f32.mrb[0].mxu0
      %v1019 = vadd.f32 %v875, %v1018
      %v1020 = vpop.f32.mrb[0].mxu0
      %v1021 = vpop.f32.mrb[0].mxu0
      %v1022 = vadd.f32 %v875, %v1021
      %v1023 = vpop.f32.mrb[0].mxu0
      %1024 = vmatprep.mubr.bf16.mxu0 0
      %1025 = vmatmul.mubr.bf16.gmra.mrb[0].mxu0 %v650
      %v1026 = vpop.f32.mrb[0].mxu0
      %v1027 = vadd.f32 %v875, %v1026
      %v1028 = vpop.f32.mrb[0].mxu0
      %v1029 = vpop.f32.mrb[0].mxu0
      %v1030 = vadd.f32 %v875, %v1029
      %v1031 = vpop.f32.mrb[0].mxu0
      %1032 = vmatprep.mubr.bf16.mxu0 0
      %1033 = vmatmul.mubr.bf16.gmra.mrb[0].mxu0 %v653
      %v1034 = vpop.f32.mrb[0].mxu0
      %v1035 = vadd.f32 %v875, %v1034
      %v1036 = vpop.f32.mrb[0].mxu0
      %v1037 = vpop.f32.mrb[0].mxu0
      %v1038 = vadd.f32 %v875, %v1037
      %v1039 = vpop.f32.mrb[0].mxu0
      %1040 = vdwg.mxu0
      %v1041 = vmax.f32 %v915, 0.0
      %v1042 = vmax.f32 %v918, 0.0
      %v1043 = vmax.f32 %v923, 0.0
      %v1044 = vmax.f32 %v926, 0.0
      %v1045 = vmax.f32 %v931, 0.0
      %v1046 = vmax.f32 %v934, 0.0
      %v1047 = vmax.f32 %v939, 0.0
      %v1048 = vmax.f32 %v942, 0.0
      %v1049 = vmax.f32 %v947, 0.0
      %v1050 = vmax.f32 %v950, 0.0
      %v1051 = vmax.f32 %v955, 0.0
      %v1052 = vmax.f32 %v958, 0.0
      %v1053 = vmax.f32 %v963, 0.0
      %v1054 = vmax.f32 %v966, 0.0
      %v1055 = vmax.f32 %v971, 0.0
      %v1056 = vmax.f32 %v974, 0.0
      %v1057 = vmax.f32 %v979, 0.0
      %v1058 = vmax.f32 %v982, 0.0
      %v1059 = vmax.f32 %v987, 0.0
      %v1060 = vmax.f32 %v990, 0.0
      %v1061 = vmax.f32 %v995, 0.0
      %v1062 = vmax.f32 %v998, 0.0
      %v1063 = vmax.f32 %v1003, 0.0
      %v1064 = vmax.f32 %v1006, 0.0
      %v1065 = vmax.f32 %v1011, 0.0
      %v1066 = vmax.f32 %v1014, 0.0
      %v1067 = vmax.f32 %v1019, 0.0
      %v1068 = vmax.f32 %v1022, 0.0
      %v1069 = vmax.f32 %v1027, 0.0
      %v1070 = vmax.f32 %v1030, 0.0
      %v1071 = vmax.f32 %v1035, 0.0
      %v1072 = vmax.f32 %v1038, 0.0
      %v1073 = vld [vmem:[%s5] sm:$0xf]
      %v1074 = vld [vmem:[%s6] sm:$0x1]
      %v1076 = vlaneseq
      %v1077 = vshrl.u32 %v1076, 7
      %v1078 = vsub.s32 0, %v1077
      %v1079 = vrot.slane %v1074, %v1078
      %v1082 = vsel %vm655, %v1073, 0
      %1084 = vmatprep.subr.bf16.mxu0 0
      %1085 = vmatpush1.bf16.msra.mxu0 %v1082
      %1086 = vmatprep.subr.bf16.mxu0 0
      %1087 = vmatpush1.bf16.msra.mxu0 0
      %1088 = vmatprep.subr.bf16.mxu0 0
      %1089 = vmatpush1.bf16.msra.mxu0 0
      %1090 = vmatprep.subr.bf16.mxu0 0
      %1091 = vmatpush1.bf16.msra.mxu0 0
      %1092 = vmatprep.subr.bf16.mxu0 0
      %1093 = vmatpush1.bf16.msra.mxu0 0
      %1094 = vmatprep.subr.bf16.mxu0 0
      %1095 = vmatpush1.bf16.msra.mxu0 0
      %1096 = vmatprep.subr.bf16.mxu0 0
      %1097 = vmatpush1.bf16.msra.mxu0 0
      %1098 = vmatprep.subr.bf16.mxu0 0
      %1099 = vmatpush1.bf16.msra.mxu0 0
      %1100 = vmatprep.subr.bf16.mxu0 0
      %1101 = vmatpush1.bf16.msra.mxu0 0
      %1102 = vmatprep.subr.bf16.mxu0 0
      %1103 = vmatpush1.bf16.msra.mxu0 0
      %1104 = vmatprep.subr.bf16.mxu0 0
      %1105 = vmatpush1.bf16.msra.mxu0 0
      %1106 = vmatprep.subr.bf16.mxu0 0
      %1107 = vmatpush1.bf16.msra.mxu0 0
      %1108 = vmatprep.subr.bf16.mxu0 0
      %1109 = vmatpush1.bf16.msra.mxu0 0
      %1110 = vmatprep.subr.bf16.mxu0 0
      %1111 = vmatpush1.bf16.msra.mxu0 0
      %1112 = vmatprep.subr.bf16.mxu0 0
      %1113 = vmatpush1.bf16.msra.mxu0 0
      %1114 = vmatprep.subr.bf16.mxu0 0
      %1115 = vmatpush1.bf16.msra.mxu0 0
      %1116 = vmatprep.mubr.bf16.mxu0 0
      %1117 = vmatmul.mubr.bf16.gmra.mrb[0].mxu0 %v608
      %v1118 = vpop.f32.mrb[0].mxu0
      %v1119 = vadd.f32 %v1079, %v1118
      %v1120 = vpop.f32.mrb[0].mxu0
      %v1121 = vpop.f32.mrb[0].mxu0
      %v1122 = vadd.f32 %v1079, %v1121
      %v1123 = vpop.f32.mrb[0].mxu0
      %1124 = vmatprep.mubr.bf16.mxu0 0
      %1125 = vmatmul.mubr.bf16.gmra.mrb[0].mxu0 %v611
      %v1126 = vpop.f32.mrb[0].mxu0
      %v1127 = vadd.f32 %v1079, %v1126
      %v1128 = vpop.f32.mrb[0].mxu0
      %v1129 = vpop.f32.mrb[0].mxu0
      %v1130 = vadd.f32 %v1079, %v1129
      %v1131 = vpop.f32.mrb[0].mxu0
      %1132 = vmatprep.mubr.bf16.mxu0 0
      %1133 = vmatmul.mubr.bf16.gmra.mrb[0].mxu0 %v614
      %v1134 = vpop.f32.mrb[0].mxu0
      %v1135 = vadd.f32 %v1079, %v1134
      %v1136 = vpop.f32.mrb[0].mxu0
      %v1137 = vpop.f32.mrb[0].mxu0
      %v1138 = vadd.f32 %v1079, %v1137
      %v1139 = vpop.f32.mrb[0].mxu0
      %1140 = vmatprep.mubr.bf16.mxu0 0
      %1141 = vmatmul.mubr.bf16.gmra.mrb[0].mxu0 %v617
      %v1142 = vpop.f32.mrb[0].mxu0
      %v1143 = vadd.f32 %v1079, %v1142
      %v1144 = vpop.f32.mrb[0].mxu0
      %v1145 = vpop.f32.mrb[0].mxu0
      %v1146 = vadd.f32 %v1079, %v1145
      %v1147 = vpop.f32.mrb[0].mxu0
      %1148 = vmatprep.mubr.bf16.mxu0 0
      %1149 = vmatmul.mubr.bf16.gmra.mrb[0].mxu0 %v620
      %v1150 = vpop.f32.mrb[0].mxu0
      %v1151 = vadd.f32 %v1079, %v1150
      %v1152 = vpop.f32.mrb[0].mxu0
      %v1153 = vpop.f32.mrb[0].mxu0
      %v1154 = vadd.f32 %v1079, %v1153
      %v1155 = vpop.f32.mrb[0].mxu0
      %1156 = vmatprep.mubr.bf16.mxu0 0
      %1157 = vmatmul.mubr.bf16.gmra.mrb[0].mxu0 %v623
      %v1158 = vpop.f32.mrb[0].mxu0
      %v1159 = vadd.f32 %v1079, %v1158
      %v1160 = vpop.f32.mrb[0].mxu0
      %v1161 = vpop.f32.mrb[0].mxu0
      %v1162 = vadd.f32 %v1079, %v1161
      %v1163 = vpop.f32.mrb[0].mxu0
      %1164 = vmatprep.mubr.bf16.mxu0 0
      %1165 = vmatmul.mubr.bf16.gmra.mrb[0].mxu0 %v626
      %v1166 = vpop.f32.mrb[0].mxu0
      %v1167 = vadd.f32 %v1079, %v1166
      %v1168 = vpop.f32.mrb[0].mxu0
      %v1169 = vpop.f32.mrb[0].mxu0
      %v1170 = vadd.f32 %v1079, %v1169
      %v1171 = vpop.f32.mrb[0].mxu0
      %1172 = vmatprep.mubr.bf16.mxu0 0
      %1173 = vmatmul.mubr.bf16.gmra.mrb[0].mxu0 %v629
      %v1174 = vpop.f32.mrb[0].mxu0
      %v1175 = vadd.f32 %v1079, %v1174
      %v1176 = vpop.f32.mrb[0].mxu0
      %v1177 = vpop.f32.mrb[0].mxu0
      %v1178 = vadd.f32 %v1079, %v1177
      %v1179 = vpop.f32.mrb[0].mxu0
      %1180 = vmatprep.mubr.bf16.mxu0 0
      %1181 = vmatmul.mubr.bf16.gmra.mrb[0].mxu0 %v632
      %v1182 = vpop.f32.mrb[0].mxu0
      %v1183 = vadd.f32 %v1079, %v1182
      %v1184 = vpop.f32.mrb[0].mxu0
      %v1185 = vpop.f32.mrb[0].mxu0
      %v1186 = vadd.f32 %v1079, %v1185
      %v1187 = vpop.f32.mrb[0].mxu0
      %1188 = vmatprep.mubr.bf16.mxu0 0
      %1189 = vmatmul.mubr.bf16.gmra.mrb[0].mxu0 %v635
      %v1190 = vpop.f32.mrb[0].mxu0
      %v1191 = vadd.f32 %v1079, %v1190
      %v1192 = vpop.f32.mrb[0].mxu0
      %v1193 = vpop.f32.mrb[0].mxu0
      %v1194 = vadd.f32 %v1079, %v1193
      %v1195 = vpop.f32.mrb[0].mxu0
      %1196 = vmatprep.mubr.bf16.mxu0 0
      %1197 = vmatmul.mubr.bf16.gmra.mrb[0].mxu0 %v638
      %v1198 = vpop.f32.mrb[0].mxu0
      %v1199 = vadd.f32 %v1079, %v1198
      %v1200 = vpop.f32.mrb[0].mxu0
      %v1201 = vpop.f32.mrb[0].mxu0
      %v1202 = vadd.f32 %v1079, %v1201
      %v1203 = vpop.f32.mrb[0].mxu0
      %1204 = vmatprep.mubr.bf16.mxu0 0
      %1205 = vmatmul.mubr.bf16.gmra.mrb[0].mxu0 %v641
      %v1206 = vpop.f32.mrb[0].mxu0
      %v1207 = vadd.f32 %v1079, %v1206
      %v1208 = vpop.f32.mrb[0].mxu0
      %v1209 = vpop.f32.mrb[0].mxu0
      %v1210 = vadd.f32 %v1079, %v1209
      %v1211 = vpop.f32.mrb[0].mxu0
      %1212 = vmatprep.mubr.bf16.mxu0 0
      %1213 = vmatmul.mubr.bf16.gmra.mrb[0].mxu0 %v644
      %v1214 = vpop.f32.mrb[0].mxu0
      %v1215 = vadd.f32 %v1079, %v1214
      %v1216 = vpop.f32.mrb[0].mxu0
      %v1217 = vpop.f32.mrb[0].mxu0
      %v1218 = vadd.f32 %v1079, %v1217
      %v1219 = vpop.f32.mrb[0].mxu0
      %1220 = vmatprep.mubr.bf16.mxu0 0
      %1221 = vmatmul.mubr.bf16.gmra.mrb[0].mxu0 %v647
      %v1222 = vpop.f32.mrb[0].mxu0
      %v1223 = vadd.f32 %v1079, %v1222
      %v1224 = vpop.f32.mrb[0].mxu0
      %v1225 = vpop.f32.mrb[0].mxu0
      %v1226 = vadd.f32 %v1079, %v1225
      %v1227 = vpop.f32.mrb[0].mxu0
      %1228 = vmatprep.mubr.bf16.mxu0 0
      %1229 = vmatmul.mubr.bf16.gmra.mrb[0].mxu0 %v650
      %v1230 = vpop.f32.mrb[0].mxu0
      %v1231 = vadd.f32 %v1079, %v1230
      %v1232 = vpop.f32.mrb[0].mxu0
      %v1233 = vpop.f32.mrb[0].mxu0
      %v1234 = vadd.f32 %v1079, %v1233
      %v1235 = vpop.f32.mrb[0].mxu0
      %1236 = vmatprep.mubr.bf16.mxu0 0
      %1237 = vmatmul.mubr.bf16.gmra.mrb[0].mxu0 %v653
      %v1238 = vpop.f32.mrb[0].mxu0
      %v1239 = vadd.f32 %v1079, %v1238
      %v1240 = vpop.f32.mrb[0].mxu0
      %v1241 = vpop.f32.mrb[0].mxu0
      %v1242 = vadd.f32 %v1079, %v1241
      %v1243 = vpop.f32.mrb[0].mxu0
      %1244 = vdwg.mxu0
      %v1245 = vmax.f32 %v1119, 0.0
      %v1246 = vmax.f32 %v1122, 0.0
      %v1247 = vmax.f32 %v1127, 0.0
      %v1248 = vmax.f32 %v1130, 0.0
      %v1249 = vmax.f32 %v1135, 0.0
      %v1250 = vmax.f32 %v1138, 0.0
      %v1251 = vmax.f32 %v1143, 0.0
      %v1252 = vmax.f32 %v1146, 0.0
      %v1253 = vmax.f32 %v1151, 0.0
      %v1254 = vmax.f32 %v1154, 0.0
      %v1255 = vmax.f32 %v1159, 0.0
      %v1256 = vmax.f32 %v1162, 0.0
      %v1257 = vmax.f32 %v1167, 0.0
      %v1258 = vmax.f32 %v1170, 0.0
      %v1259 = vmax.f32 %v1175, 0.0
      %v1260 = vmax.f32 %v1178, 0.0
      %v1261 = vmax.f32 %v1183, 0.0
      %v1262 = vmax.f32 %v1186, 0.0
      %v1263 = vmax.f32 %v1191, 0.0
      %v1264 = vmax.f32 %v1194, 0.0
      %v1265 = vmax.f32 %v1199, 0.0
      %v1266 = vmax.f32 %v1202, 0.0
      %v1267 = vmax.f32 %v1207, 0.0
      %v1268 = vmax.f32 %v1210, 0.0
      %v1269 = vmax.f32 %v1215, 0.0
      %v1270 = vmax.f32 %v1218, 0.0
      %v1271 = vmax.f32 %v1223, 0.0
      %v1272 = vmax.f32 %v1226, 0.0
      %v1273 = vmax.f32 %v1231, 0.0
      %v1274 = vmax.f32 %v1234, 0.0
      %v1275 = vmax.f32 %v1239, 0.0
      %v1276 = vmax.f32 %v1242, 0.0
      %v1277 = vlaneseq
      %v1278 = vshrl.u32 %v1277, 7
      %v1279 = vadd.s32 %v1278, 8
      %v1280 = vadd.s32 %v1278, 16
      %v1281 = vadd.s32 %v1278, 24
      %v1282 = vadd.s32 %v1278, 32
      %v1283 = vadd.s32 %v1278, 40
      %v1284 = vadd.s32 %v1278, 48
      %v1285 = vadd.s32 %v1278, 56
      %v1286 = vadd.s32 %v1278, 64
      %v1287 = vadd.s32 %v1278, 72
      %v1288 = vadd.s32 %v1278, 80
      %v1289 = vadd.s32 %v1278, 88
      %v1290 = vadd.s32 %v1278, 96
      %v1291 = vadd.s32 %v1278, 104
      %v1292 = vadd.s32 %v1278, 112
      %v1293 = vadd.s32 %v1278, 120
      %v1294 = vadd.s32 %v1278, 128
      %v1295 = vadd.s32 %v1278, 136
      %v1296 = vadd.s32 %v1278, 144
      %v1297 = vadd.s32 %v1278, 152
      %v1298 = vadd.s32 %v1278, 160
      %v1299 = vadd.s32 %v1278, 168
      %v1300 = vadd.s32 %v1278, 176
      %v1301 = vadd.s32 %v1278, 184
      %v1302 = vadd.s32 %v1278, 192
      %v1303 = vadd.s32 %v1278, 200
      %v1304 = vadd.s32 %v1278, 208
      %v1305 = vadd.s32 %v1278, 216
      %v1306 = vadd.s32 %v1278, 224
      %v1307 = vadd.s32 %v1278, 232
      %v1308 = vadd.s32 %v1278, 240
      %v1309 = vadd.s32 %v1278, 248
      %vm1310 = vcmp.lt.s32.totalorder %v1278, 0
      %v1311 = vsub.s32 0, %v1278
      %v1312 = vsel %vm1310, %v1311, %v1278
      %v1313 = vshrl.u32 %v1312, 4
      %v1314 = vand.u32 %v1312, 15
      %v1315 = vsub.s32 0, %v1314
      %v1316 = vsel %vm1310, %v1315, %v1314
      %vm1317 = vcmp.lt.s32.totalorder %v1279, 0
      %v1318 = vsub.s32 0, %v1279
      %v1319 = vsel %vm1317, %v1318, %v1279
      %v1320 = vshrl.u32 %v1319, 4
      %v1321 = vand.u32 %v1319, 15
      %v1322 = vsub.s32 0, %v1321
      %v1323 = vsel %vm1317, %v1322, %v1321
      %vm1324 = vcmp.lt.s32.totalorder %v1280, 0
      %v1325 = vsub.s32 0, %v1280
      %v1326 = vsel %vm1324, %v1325, %v1280
      %v1327 = vshrl.u32 %v1326, 4
      %v1328 = vand.u32 %v1326, 15
      %v1329 = vsub.s32 0, %v1328
      %v1330 = vsel %vm1324, %v1329, %v1328
      %vm1331 = vcmp.lt.s32.totalorder %v1281, 0
      %v1332 = vsub.s32 0, %v1281
      %v1333 = vsel %vm1331, %v1332, %v1281
      %v1334 = vshrl.u32 %v1333, 4
      %v1335 = vand.u32 %v1333, 15
      %v1336 = vsub.s32 0, %v1335
      %v1337 = vsel %vm1331, %v1336, %v1335
      %vm1338 = vcmp.lt.s32.totalorder %v1282, 0
      %v1339 = vsub.s32 0, %v1282
      %v1340 = vsel %vm1338, %v1339, %v1282
      %v1341 = vshrl.u32 %v1340, 4
      %v1342 = vand.u32 %v1340, 15
      %v1343 = vsub.s32 0, %v1342
      %v1344 = vsel %vm1338, %v1343, %v1342
      %vm1345 = vcmp.lt.s32.totalorder %v1283, 0
      %v1346 = vsub.s32 0, %v1283
      %v1347 = vsel %vm1345, %v1346, %v1283
      %v1348 = vshrl.u32 %v1347, 4
      %v1349 = vand.u32 %v1347, 15
      %v1350 = vsub.s32 0, %v1349
      %v1351 = vsel %vm1345, %v1350, %v1349
      %vm1352 = vcmp.lt.s32.totalorder %v1284, 0
      %v1353 = vsub.s32 0, %v1284
      %v1354 = vsel %vm1352, %v1353, %v1284
      %v1355 = vshrl.u32 %v1354, 4
      %v1356 = vand.u32 %v1354, 15
      %v1357 = vsub.s32 0, %v1356
      %v1358 = vsel %vm1352, %v1357, %v1356
      %vm1359 = vcmp.lt.s32.totalorder %v1285, 0
      %v1360 = vsub.s32 0, %v1285
      %v1361 = vsel %vm1359, %v1360, %v1285
      %v1362 = vshrl.u32 %v1361, 4
      %v1363 = vand.u32 %v1361, 15
      %v1364 = vsub.s32 0, %v1363
      %v1365 = vsel %vm1359, %v1364, %v1363
      %vm1366 = vcmp.lt.s32.totalorder %v1286, 0
      %v1367 = vsub.s32 0, %v1286
      %v1368 = vsel %vm1366, %v1367, %v1286
      %v1369 = vshrl.u32 %v1368, 4
      %v1370 = vand.u32 %v1368, 15
      %v1371 = vsub.s32 0, %v1370
      %v1372 = vsel %vm1366, %v1371, %v1370
      %vm1373 = vcmp.lt.s32.totalorder %v1287, 0
      %v1374 = vsub.s32 0, %v1287
      %v1375 = vsel %vm1373, %v1374, %v1287
      %v1376 = vshrl.u32 %v1375, 4
      %v1377 = vand.u32 %v1375, 15
      %v1378 = vsub.s32 0, %v1377
      %v1379 = vsel %vm1373, %v1378, %v1377
      %vm1380 = vcmp.lt.s32.totalorder %v1288, 0
      %v1381 = vsub.s32 0, %v1288
      %v1382 = vsel %vm1380, %v1381, %v1288
      %v1383 = vshrl.u32 %v1382, 4
      %v1384 = vand.u32 %v1382, 15
      %v1385 = vsub.s32 0, %v1384
      %v1386 = vsel %vm1380, %v1385, %v1384
      %vm1387 = vcmp.lt.s32.totalorder %v1289, 0
      %v1388 = vsub.s32 0, %v1289
      %v1389 = vsel %vm1387, %v1388, %v1289
      %v1390 = vshrl.u32 %v1389, 4
      %v1391 = vand.u32 %v1389, 15
      %v1392 = vsub.s32 0, %v1391
      %v1393 = vsel %vm1387, %v1392, %v1391
      %vm1394 = vcmp.lt.s32.totalorder %v1290, 0
      %v1395 = vsub.s32 0, %v1290
      %v1396 = vsel %vm1394, %v1395, %v1290
      %v1397 = vshrl.u32 %v1396, 4
      %v1398 = vand.u32 %v1396, 15
      %v1399 = vsub.s32 0, %v1398
      %v1400 = vsel %vm1394, %v1399, %v1398
      %vm1401 = vcmp.lt.s32.totalorder %v1291, 0
      %v1402 = vsub.s32 0, %v1291
      %v1403 = vsel %vm1401, %v1402, %v1291
      %v1404 = vshrl.u32 %v1403, 4
      %v1405 = vand.u32 %v1403, 15
      %v1406 = vsub.s32 0, %v1405
      %v1407 = vsel %vm1401, %v1406, %v1405
      %vm1408 = vcmp.lt.s32.totalorder %v1292, 0
      %v1409 = vsub.s32 0, %v1292
      %v1410 = vsel %vm1408, %v1409, %v1292
      %v1411 = vshrl.u32 %v1410, 4
      %v1412 = vand.u32 %v1410, 15
      %v1413 = vsub.s32 0, %v1412
      %v1414 = vsel %vm1408, %v1413, %v1412
      %vm1415 = vcmp.lt.s32.totalorder %v1293, 0
      %v1416 = vsub.s32 0, %v1293
      %v1417 = vsel %vm1415, %v1416, %v1293
      %v1418 = vshrl.u32 %v1417, 4
      %v1419 = vand.u32 %v1417, 15
      %v1420 = vsub.s32 0, %v1419
      %v1421 = vsel %vm1415, %v1420, %v1419
      %vm1422 = vcmp.lt.s32.totalorder %v1294, 0
      %v1423 = vsub.s32 0, %v1294
      %v1424 = vsel %vm1422, %v1423, %v1294
      %v1425 = vshrl.u32 %v1424, 4
      %v1426 = vand.u32 %v1424, 15
      %v1427 = vsub.s32 0, %v1426
      %v1428 = vsel %vm1422, %v1427, %v1426
      %vm1429 = vcmp.lt.s32.totalorder %v1295, 0
      %v1430 = vsub.s32 0, %v1295
      %v1431 = vsel %vm1429, %v1430, %v1295
      %v1432 = vshrl.u32 %v1431, 4
      %v1433 = vand.u32 %v1431, 15
      %v1434 = vsub.s32 0, %v1433
      %v1435 = vsel %vm1429, %v1434, %v1433
      %vm1436 = vcmp.lt.s32.totalorder %v1296, 0
      %v1437 = vsub.s32 0, %v1296
      %v1438 = vsel %vm1436, %v1437, %v1296
      %v1439 = vshrl.u32 %v1438, 4
      %v1440 = vand.u32 %v1438, 15
      %v1441 = vsub.s32 0, %v1440
      %v1442 = vsel %vm1436, %v1441, %v1440
      %vm1443 = vcmp.lt.s32.totalorder %v1297, 0
      %v1444 = vsub.s32 0, %v1297
      %v1445 = vsel %vm1443, %v1444, %v1297
      %v1446 = vshrl.u32 %v1445, 4
      %v1447 = vand.u32 %v1445, 15
      %v1448 = vsub.s32 0, %v1447
      %v1449 = vsel %vm1443, %v1448, %v1447
      %vm1450 = vcmp.lt.s32.totalorder %v1298, 0
      %v1451 = vsub.s32 0, %v1298
      %v1452 = vsel %vm1450, %v1451, %v1298
      %v1453 = vshrl.u32 %v1452, 4
      %v1454 = vand.u32 %v1452, 15
      %v1455 = vsub.s32 0, %v1454
      %v1456 = vsel %vm1450, %v1455, %v1454
      %vm1457 = vcmp.lt.s32.totalorder %v1299, 0
      %v1458 = vsub.s32 0, %v1299
      %v1459 = vsel %vm1457, %v1458, %v1299
      %v1460 = vshrl.u32 %v1459, 4
      %v1461 = vand.u32 %v1459, 15
      %v1462 = vsub.s32 0, %v1461
      %v1463 = vsel %vm1457, %v1462, %v1461
      %vm1464 = vcmp.lt.s32.totalorder %v1300, 0
      %v1465 = vsub.s32 0, %v1300
      %v1466 = vsel %vm1464, %v1465, %v1300
      %v1467 = vshrl.u32 %v1466, 4
      %v1468 = vand.u32 %v1466, 15
      %v1469 = vsub.s32 0, %v1468
      %v1470 = vsel %vm1464, %v1469, %v1468
      %vm1471 = vcmp.lt.s32.totalorder %v1301, 0
      %v1472 = vsub.s32 0, %v1301
      %v1473 = vsel %vm1471, %v1472, %v1301
      %v1474 = vshrl.u32 %v1473, 4
      %v1475 = vand.u32 %v1473, 15
      %v1476 = vsub.s32 0, %v1475
      %v1477 = vsel %vm1471, %v1476, %v1475
      %vm1478 = vcmp.lt.s32.totalorder %v1302, 0
      %v1479 = vsub.s32 0, %v1302
      %v1480 = vsel %vm1478, %v1479, %v1302
      %v1481 = vshrl.u32 %v1480, 4
      %v1482 = vand.u32 %v1480, 15
      %v1483 = vsub.s32 0, %v1482
      %v1484 = vsel %vm1478, %v1483, %v1482
      %vm1485 = vcmp.lt.s32.totalorder %v1303, 0
      %v1486 = vsub.s32 0, %v1303
      %v1487 = vsel %vm1485, %v1486, %v1303
      %v1488 = vshrl.u32 %v1487, 4
      %v1489 = vand.u32 %v1487, 15
      %v1490 = vsub.s32 0, %v1489
      %v1491 = vsel %vm1485, %v1490, %v1489
      %vm1492 = vcmp.lt.s32.totalorder %v1304, 0
      %v1493 = vsub.s32 0, %v1304
      %v1494 = vsel %vm1492, %v1493, %v1304
      %v1495 = vshrl.u32 %v1494, 4
      %v1496 = vand.u32 %v1494, 15
      %v1497 = vsub.s32 0, %v1496
      %v1498 = vsel %vm1492, %v1497, %v1496
      %vm1499 = vcmp.lt.s32.totalorder %v1305, 0
      %v1500 = vsub.s32 0, %v1305
      %v1501 = vsel %vm1499, %v1500, %v1305
      %v1502 = vshrl.u32 %v1501, 4
      %v1503 = vand.u32 %v1501, 15
      %v1504 = vsub.s32 0, %v1503
      %v1505 = vsel %vm1499, %v1504, %v1503
      %vm1506 = vcmp.lt.s32.totalorder %v1306, 0
      %v1507 = vsub.s32 0, %v1306
      %v1508 = vsel %vm1506, %v1507, %v1306
      %v1509 = vshrl.u32 %v1508, 4
      %v1510 = vand.u32 %v1508, 15
      %v1511 = vsub.s32 0, %v1510
      %v1512 = vsel %vm1506, %v1511, %v1510
      %vm1513 = vcmp.lt.s32.totalorder %v1307, 0
      %v1514 = vsub.s32 0, %v1307
      %v1515 = vsel %vm1513, %v1514, %v1307
      %v1516 = vshrl.u32 %v1515, 4
      %v1517 = vand.u32 %v1515, 15
      %v1518 = vsub.s32 0, %v1517
      %v1519 = vsel %vm1513, %v1518, %v1517
      %vm1520 = vcmp.lt.s32.totalorder %v1308, 0
      %v1521 = vsub.s32 0, %v1308
      %v1522 = vsel %vm1520, %v1521, %v1308
      %v1523 = vshrl.u32 %v1522, 4
      %v1524 = vand.u32 %v1522, 15
      %v1525 = vsub.s32 0, %v1524
      %v1526 = vsel %vm1520, %v1525, %v1524
      %vm1527 = vcmp.lt.s32.totalorder %v1309, 0
      %v1528 = vsub.s32 0, %v1309
      %v1529 = vsel %vm1527, %v1528, %v1309
      %v1530 = vshrl.u32 %v1529, 4
      %v1531 = vand.u32 %v1529, 15
      %v1532 = vsub.s32 0, %v1531
      %v1533 = vsel %vm1527, %v1532, %v1531
      %vm1534 = vcmp.ne.s32.totalorder %v1316, 0
      %vm1535 = vcmp.ne.s32.totalorder %v1323, 0
      %vm1536 = vcmp.ne.s32.totalorder %v1330, 0
      %vm1537 = vcmp.ne.s32.totalorder %v1337, 0
      %vm1538 = vcmp.ne.s32.totalorder %v1344, 0
      %vm1539 = vcmp.ne.s32.totalorder %v1351, 0
      %vm1540 = vcmp.ne.s32.totalorder %v1358, 0
      %vm1541 = vcmp.ne.s32.totalorder %v1365, 0
      %vm1542 = vcmp.ne.s32.totalorder %v1372, 0
      %vm1543 = vcmp.ne.s32.totalorder %v1379, 0
      %vm1544 = vcmp.ne.s32.totalorder %v1386, 0
      %vm1545 = vcmp.ne.s32.totalorder %v1393, 0
      %vm1546 = vcmp.ne.s32.totalorder %v1400, 0
      %vm1547 = vcmp.ne.s32.totalorder %v1407, 0
      %vm1548 = vcmp.ne.s32.totalorder %v1414, 0
      %vm1549 = vcmp.ne.s32.totalorder %v1421, 0
      %vm1550 = vcmp.ne.s32.totalorder %v1428, 0
      %vm1551 = vcmp.ne.s32.totalorder %v1435, 0
      %vm1552 = vcmp.ne.s32.totalorder %v1442, 0
      %vm1553 = vcmp.ne.s32.totalorder %v1449, 0
      %vm1554 = vcmp.ne.s32.totalorder %v1456, 0
      %vm1555 = vcmp.ne.s32.totalorder %v1463, 0
      %vm1556 = vcmp.ne.s32.totalorder %v1470, 0
      %vm1557 = vcmp.ne.s32.totalorder %v1477, 0
      %vm1558 = vcmp.ne.s32.totalorder %v1484, 0
      %vm1559 = vcmp.ne.s32.totalorder %v1491, 0
      %vm1560 = vcmp.ne.s32.totalorder %v1498, 0
      %vm1561 = vcmp.ne.s32.totalorder %v1505, 0
      %vm1562 = vcmp.ne.s32.totalorder %v1512, 0
      %vm1563 = vcmp.ne.s32.totalorder %v1519, 0
      %vm1564 = vcmp.ne.s32.totalorder %v1526, 0
      %vm1565 = vcmp.ne.s32.totalorder %v1533, 0
      %vm1566 = vcmp.lt.s32.totalorder %v1316, 0
      %vm1567 = vcmp.lt.s32.totalorder %v1323, 0
      %vm1568 = vcmp.lt.s32.totalorder %v1330, 0
      %vm1569 = vcmp.lt.s32.totalorder %v1337, 0
      %vm1570 = vcmp.lt.s32.totalorder %v1344, 0
      %vm1571 = vcmp.lt.s32.totalorder %v1351, 0
      %vm1572 = vcmp.lt.s32.totalorder %v1358, 0
      %vm1573 = vcmp.lt.s32.totalorder %v1365, 0
      %vm1574 = vcmp.lt.s32.totalorder %v1372, 0
      %vm1575 = vcmp.lt.s32.totalorder %v1379, 0
      %vm1576 = vcmp.lt.s32.totalorder %v1386, 0
      %vm1577 = vcmp.lt.s32.totalorder %v1393, 0
      %vm1578 = vcmp.lt.s32.totalorder %v1400, 0
      %vm1579 = vcmp.lt.s32.totalorder %v1407, 0
      %vm1580 = vcmp.lt.s32.totalorder %v1414, 0
      %vm1581 = vcmp.lt.s32.totalorder %v1421, 0
      %vm1582 = vcmp.lt.s32.totalorder %v1428, 0
      %vm1583 = vcmp.lt.s32.totalorder %v1435, 0
      %vm1584 = vcmp.lt.s32.totalorder %v1442, 0
      %vm1585 = vcmp.lt.s32.totalorder %v1449, 0
      %vm1586 = vcmp.lt.s32.totalorder %v1456, 0
      %vm1587 = vcmp.lt.s32.totalorder %v1463, 0
      %vm1588 = vcmp.lt.s32.totalorder %v1470, 0
      %vm1589 = vcmp.lt.s32.totalorder %v1477, 0
      %vm1590 = vcmp.lt.s32.totalorder %v1484, 0
      %vm1591 = vcmp.lt.s32.totalorder %v1491, 0
      %vm1592 = vcmp.lt.s32.totalorder %v1498, 0
      %vm1593 = vcmp.lt.s32.totalorder %v1505, 0
      %vm1594 = vcmp.lt.s32.totalorder %v1512, 0
      %vm1595 = vcmp.lt.s32.totalorder %v1519, 0
      %vm1596 = vcmp.lt.s32.totalorder %v1526, 0
      %vm1597 = vcmp.lt.s32.totalorder %v1533, 0
      %vm1598 = vmand %vm1566, %vm1534
      %vm1599 = vmand %vm1567, %vm1535
      %vm1600 = vmand %vm1568, %vm1536
      %vm1601 = vmand %vm1569, %vm1537
      %vm1602 = vmand %vm1570, %vm1538
      %vm1603 = vmand %vm1571, %vm1539
      %vm1604 = vmand %vm1572, %vm1540
      %vm1605 = vmand %vm1573, %vm1541
      %vm1606 = vmand %vm1574, %vm1542
      %vm1607 = vmand %vm1575, %vm1543
      %vm1608 = vmand %vm1576, %vm1544
      %vm1609 = vmand %vm1577, %vm1545
      %vm1610 = vmand %vm1578, %vm1546
      %vm1611 = vmand %vm1579, %vm1547
      %vm1612 = vmand %vm1580, %vm1548
      %vm1613 = vmand %vm1581, %vm1549
      %vm1614 = vmand %vm1582, %vm1550
      %vm1615 = vmand %vm1583, %vm1551
      %vm1616 = vmand %vm1584, %vm1552
      %vm1617 = vmand %vm1585, %vm1553
      %vm1618 = vmand %vm1586, %vm1554
      %vm1619 = vmand %vm1587, %vm1555
      %vm1620 = vmand %vm1588, %vm1556
      %vm1621 = vmand %vm1589, %vm1557
      %vm1622 = vmand %vm1590, %vm1558
      %vm1623 = vmand %vm1591, %vm1559
      %vm1624 = vmand %vm1592, %vm1560
      %vm1625 = vmand %vm1593, %vm1561
      %vm1626 = vmand %vm1594, %vm1562
      %vm1627 = vmand %vm1595, %vm1563
      %vm1628 = vmand %vm1596, %vm1564
      %vm1629 = vmand %vm1597, %vm1565
      %v1630 = vadd.s32 %v1316, 16
      %v1631 = vadd.s32 %v1323, 16
      %v1632 = vadd.s32 %v1330, 16
      %v1633 = vadd.s32 %v1337, 16
      %v1634 = vadd.s32 %v1344, 16
      %v1635 = vadd.s32 %v1351, 16
      %v1636 = vadd.s32 %v1358, 16
      %v1637 = vadd.s32 %v1365, 16
      %v1638 = vadd.s32 %v1372, 16
      %v1639 = vadd.s32 %v1379, 16
      %v1640 = vadd.s32 %v1386, 16
      %v1641 = vadd.s32 %v1393, 16
      %v1642 = vadd.s32 %v1400, 16
      %v1643 = vadd.s32 %v1407, 16
      %v1644 = vadd.s32 %v1414, 16
      %v1645 = vadd.s32 %v1421, 16
      %v1646 = vadd.s32 %v1428, 16
      %v1647 = vadd.s32 %v1435, 16
      %v1648 = vadd.s32 %v1442, 16
      %v1649 = vadd.s32 %v1449, 16
      %v1650 = vadd.s32 %v1456, 16
      %v1651 = vadd.s32 %v1463, 16
      %v1652 = vadd.s32 %v1470, 16
      %v1653 = vadd.s32 %v1477, 16
      %v1654 = vadd.s32 %v1484, 16
      %v1655 = vadd.s32 %v1491, 16
      %v1656 = vadd.s32 %v1498, 16
      %v1657 = vadd.s32 %v1505, 16
      %v1658 = vadd.s32 %v1512, 16
      %v1659 = vadd.s32 %v1519, 16
      %v1660 = vadd.s32 %v1526, 16
      %v1661 = vadd.s32 %v1533, 16
      %v1662 = vsel %vm1598, %v1630, %v1316
      %v1663 = vsel %vm1599, %v1631, %v1323
      %v1664 = vsel %vm1600, %v1632, %v1330
      %v1665 = vsel %vm1601, %v1633, %v1337
      %v1666 = vsel %vm1602, %v1634, %v1344
      %v1667 = vsel %vm1603, %v1635, %v1351
      %v1668 = vsel %vm1604, %v1636, %v1358
      %v1669 = vsel %vm1605, %v1637, %v1365
      %v1670 = vsel %vm1606, %v1638, %v1372
      %v1671 = vsel %vm1607, %v1639, %v1379
      %v1672 = vsel %vm1608, %v1640, %v1386
      %v1673 = vsel %vm1609, %v1641, %v1393
      %v1674 = vsel %vm1610, %v1642, %v1400
      %v1675 = vsel %vm1611, %v1643, %v1407
      %v1676 = vsel %vm1612, %v1644, %v1414
      %v1677 = vsel %vm1613, %v1645, %v1421
      %v1678 = vsel %vm1614, %v1646, %v1428
      %v1679 = vsel %vm1615, %v1647, %v1435
      %v1680 = vsel %vm1616, %v1648, %v1442
      %v1681 = vsel %vm1617, %v1649, %v1449
      %v1682 = vsel %vm1618, %v1650, %v1456
      %v1683 = vsel %vm1619, %v1651, %v1463
      %v1684 = vsel %vm1620, %v1652, %v1470
      %v1685 = vsel %vm1621, %v1653, %v1477
      %v1686 = vsel %vm1622, %v1654, %v1484
      %v1687 = vsel %vm1623, %v1655, %v1491
      %v1688 = vsel %vm1624, %v1656, %v1498
      %v1689 = vsel %vm1625, %v1657, %v1505
      %v1690 = vsel %vm1626, %v1658, %v1512
      %v1691 = vsel %vm1627, %v1659, %v1519
      %v1692 = vsel %vm1628, %v1660, %v1526
      %v1693 = vsel %vm1629, %v1661, %v1533
      %vm1694 = vcmp.ge.s32.totalorder %v1662, 1
      %vm1695 = vcmp.ge.s32.totalorder %v1663, 1
      %vm1696 = vcmp.ge.s32.totalorder %v1664, 1
      %vm1697 = vcmp.ge.s32.totalorder %v1665, 1
      %vm1698 = vcmp.ge.s32.totalorder %v1666, 1
      %vm1699 = vcmp.ge.s32.totalorder %v1667, 1
      %vm1700 = vcmp.ge.s32.totalorder %v1668, 1
      %vm1701 = vcmp.ge.s32.totalorder %v1669, 1
      %vm1702 = vcmp.ge.s32.totalorder %v1670, 1
      %vm1703 = vcmp.ge.s32.totalorder %v1671, 1
      %vm1704 = vcmp.ge.s32.totalorder %v1672, 1
      %vm1705 = vcmp.ge.s32.totalorder %v1673, 1
      %vm1706 = vcmp.ge.s32.totalorder %v1674, 1
      %vm1707 = vcmp.ge.s32.totalorder %v1675, 1
      %vm1708 = vcmp.ge.s32.totalorder %v1676, 1
      %vm1709 = vcmp.ge.s32.totalorder %v1677, 1
      %vm1710 = vcmp.ge.s32.totalorder %v1678, 1
      %vm1711 = vcmp.ge.s32.totalorder %v1679, 1
      %vm1712 = vcmp.ge.s32.totalorder %v1680, 1
      %vm1713 = vcmp.ge.s32.totalorder %v1681, 1
      %vm1714 = vcmp.ge.s32.totalorder %v1682, 1
      %vm1715 = vcmp.ge.s32.totalorder %v1683, 1
      %vm1716 = vcmp.ge.s32.totalorder %v1684, 1
      %vm1717 = vcmp.ge.s32.totalorder %v1685, 1
      %vm1718 = vcmp.ge.s32.totalorder %v1686, 1
      %vm1719 = vcmp.ge.s32.totalorder %v1687, 1
      %vm1720 = vcmp.ge.s32.totalorder %v1688, 1
      %vm1721 = vcmp.ge.s32.totalorder %v1689, 1
      %vm1722 = vcmp.ge.s32.totalorder %v1690, 1
      %vm1723 = vcmp.ge.s32.totalorder %v1691, 1
      %vm1724 = vcmp.ge.s32.totalorder %v1692, 1
      %vm1725 = vcmp.ge.s32.totalorder %v1693, 1
      %v1726 = vsel %vm1694, 1, 0
      %v1727 = vsel %vm1695, 1, 0
      %v1728 = vsel %vm1696, 1, 0
      %v1729 = vsel %vm1697, 1, 0
      %v1730 = vsel %vm1698, 1, 0
      %v1731 = vsel %vm1699, 1, 0
      %v1732 = vsel %vm1700, 1, 0
      %v1733 = vsel %vm1701, 1, 0
      %v1734 = vsel %vm1702, 1, 0
      %v1735 = vsel %vm1703, 1, 0
      %v1736 = vsel %vm1704, 1, 0
      %v1737 = vsel %vm1705, 1, 0
      %v1738 = vsel %vm1706, 1, 0
      %v1739 = vsel %vm1707, 1, 0
      %v1740 = vsel %vm1708, 1, 0
      %v1741 = vsel %vm1709, 1, 0
      %v1742 = vsel %vm1710, 1, 0
      %v1743 = vsel %vm1711, 1, 0
      %v1744 = vsel %vm1712, 1, 0
      %v1745 = vsel %vm1713, 1, 0
      %v1746 = vsel %vm1714, 1, 0
      %v1747 = vsel %vm1715, 1, 0
      %v1748 = vsel %vm1716, 1, 0
      %v1749 = vsel %vm1717, 1, 0
      %v1750 = vsel %vm1718, 1, 0
      %v1751 = vsel %vm1719, 1, 0
      %v1752 = vsel %vm1720, 1, 0
      %v1753 = vsel %vm1721, 1, 0
      %v1754 = vsel %vm1722, 1, 0
      %v1755 = vsel %vm1723, 1, 0
      %v1756 = vsel %vm1724, 1, 0
      %v1757 = vsel %vm1725, 1, 0
      %v1758 = vcvt.s32.f32 %v1726
      %v1759 = vcvt.s32.f32 %v1727
      %v1760 = vcvt.s32.f32 %v1728
      %v1761 = vcvt.s32.f32 %v1729
      %v1762 = vcvt.s32.f32 %v1730
      %v1763 = vcvt.s32.f32 %v1731
      %v1764 = vcvt.s32.f32 %v1732
      %v1765 = vcvt.s32.f32 %v1733
      %v1766 = vcvt.s32.f32 %v1734
      %v1767 = vcvt.s32.f32 %v1735
      %v1768 = vcvt.s32.f32 %v1736
      %v1769 = vcvt.s32.f32 %v1737
      %v1770 = vcvt.s32.f32 %v1738
      %v1771 = vcvt.s32.f32 %v1739
      %v1772 = vcvt.s32.f32 %v1740
      %v1773 = vcvt.s32.f32 %v1741
      %v1774 = vcvt.s32.f32 %v1742
      %v1775 = vcvt.s32.f32 %v1743
      %v1776 = vcvt.s32.f32 %v1744
      %v1777 = vcvt.s32.f32 %v1745
      %v1778 = vcvt.s32.f32 %v1746
      %v1779 = vcvt.s32.f32 %v1747
      %v1780 = vcvt.s32.f32 %v1748
      %v1781 = vcvt.s32.f32 %v1749
      %v1782 = vcvt.s32.f32 %v1750
      %v1783 = vcvt.s32.f32 %v1751
      %v1784 = vcvt.s32.f32 %v1752
      %v1785 = vcvt.s32.f32 %v1753
      %v1786 = vcvt.s32.f32 %v1754
      %v1787 = vcvt.s32.f32 %v1755
      %v1788 = vcvt.s32.f32 %v1756
      %v1789 = vcvt.s32.f32 %v1757
      %vm1790 = vcmp.le.s32.totalorder %v1662, 14
      %vm1791 = vcmp.le.s32.totalorder %v1663, 14
      %vm1792 = vcmp.le.s32.totalorder %v1664, 14
      %vm1793 = vcmp.le.s32.totalorder %v1665, 14
      %vm1794 = vcmp.le.s32.totalorder %v1666, 14
      %vm1795 = vcmp.le.s32.totalorder %v1667, 14
      %vm1796 = vcmp.le.s32.totalorder %v1668, 14
      %vm1797 = vcmp.le.s32.totalorder %v1669, 14
      %vm1798 = vcmp.le.s32.totalorder %v1670, 14
      %vm1799 = vcmp.le.s32.totalorder %v1671, 14
      %vm1800 = vcmp.le.s32.totalorder %v1672, 14
      %vm1801 = vcmp.le.s32.totalorder %v1673, 14
      %vm1802 = vcmp.le.s32.totalorder %v1674, 14
      %vm1803 = vcmp.le.s32.totalorder %v1675, 14
      %vm1804 = vcmp.le.s32.totalorder %v1676, 14
      %vm1805 = vcmp.le.s32.totalorder %v1677, 14
      %vm1806 = vcmp.le.s32.totalorder %v1678, 14
      %vm1807 = vcmp.le.s32.totalorder %v1679, 14
      %vm1808 = vcmp.le.s32.totalorder %v1680, 14
      %vm1809 = vcmp.le.s32.totalorder %v1681, 14
      %vm1810 = vcmp.le.s32.totalorder %v1682, 14
      %vm1811 = vcmp.le.s32.totalorder %v1683, 14
      %vm1812 = vcmp.le.s32.totalorder %v1684, 14
      %vm1813 = vcmp.le.s32.totalorder %v1685, 14
      %vm1814 = vcmp.le.s32.totalorder %v1686, 14
      %vm1815 = vcmp.le.s32.totalorder %v1687, 14
      %vm1816 = vcmp.le.s32.totalorder %v1688, 14
      %vm1817 = vcmp.le.s32.totalorder %v1689, 14
      %vm1818 = vcmp.le.s32.totalorder %v1690, 14
      %vm1819 = vcmp.le.s32.totalorder %v1691, 14
      %vm1820 = vcmp.le.s32.totalorder %v1692, 14
      %vm1821 = vcmp.le.s32.totalorder %v1693, 14
      %v1822 = vsel %vm1790, 1, 0
      %v1823 = vsel %vm1791, 1, 0
      %v1824 = vsel %vm1792, 1, 0
      %v1825 = vsel %vm1793, 1, 0
      %v1826 = vsel %vm1794, 1, 0
      %v1827 = vsel %vm1795, 1, 0
      %v1828 = vsel %vm1796, 1, 0
      %v1829 = vsel %vm1797, 1, 0
      %v1830 = vsel %vm1798, 1, 0
      %v1831 = vsel %vm1799, 1, 0
      %v1832 = vsel %vm1800, 1, 0
      %v1833 = vsel %vm1801, 1, 0
      %v1834 = vsel %vm1802, 1, 0
      %v1835 = vsel %vm1803, 1, 0
      %v1836 = vsel %vm1804, 1, 0
      %v1837 = vsel %vm1805, 1, 0
      %v1838 = vsel %vm1806, 1, 0
      %v1839 = vsel %vm1807, 1, 0
      %v1840 = vsel %vm1808, 1, 0
      %v1841 = vsel %vm1809, 1, 0
      %v1842 = vsel %vm1810, 1, 0
      %v1843 = vsel %vm1811, 1, 0
      %v1844 = vsel %vm1812, 1, 0
      %v1845 = vsel %vm1813, 1, 0
      %v1846 = vsel %vm1814, 1, 0
      %v1847 = vsel %vm1815, 1, 0
      %v1848 = vsel %vm1816, 1, 0
      %v1849 = vsel %vm1817, 1, 0
      %v1850 = vsel %vm1818, 1, 0
      %v1851 = vsel %vm1819, 1, 0
      %v1852 = vsel %vm1820, 1, 0
      %v1853 = vsel %vm1821, 1, 0
      %v1854 = vcvt.s32.f32 %v1822
      %v1855 = vcvt.s32.f32 %v1823
      %v1856 = vcvt.s32.f32 %v1824
      %v1857 = vcvt.s32.f32 %v1825
      %v1858 = vcvt.s32.f32 %v1826
      %v1859 = vcvt.s32.f32 %v1827
      %v1860 = vcvt.s32.f32 %v1828
      %v1861 = vcvt.s32.f32 %v1829
      %v1862 = vcvt.s32.f32 %v1830
      %v1863 = vcvt.s32.f32 %v1831
      %v1864 = vcvt.s32.f32 %v1832
      %v1865 = vcvt.s32.f32 %v1833
      %v1866 = vcvt.s32.f32 %v1834
      %v1867 = vcvt.s32.f32 %v1835
      %v1868 = vcvt.s32.f32 %v1836
      %v1869 = vcvt.s32.f32 %v1837
      %v1870 = vcvt.s32.f32 %v1838
      %v1871 = vcvt.s32.f32 %v1839
      %v1872 = vcvt.s32.f32 %v1840
      %v1873 = vcvt.s32.f32 %v1841
      %v1874 = vcvt.s32.f32 %v1842
      %v1875 = vcvt.s32.f32 %v1843
      %v1876 = vcvt.s32.f32 %v1844
      %v1877 = vcvt.s32.f32 %v1845
      %v1878 = vcvt.s32.f32 %v1846
      %v1879 = vcvt.s32.f32 %v1847
      %v1880 = vcvt.s32.f32 %v1848
      %v1881 = vcvt.s32.f32 %v1849
      %v1882 = vcvt.s32.f32 %v1850
      %v1883 = vcvt.s32.f32 %v1851
      %v1884 = vcvt.s32.f32 %v1852
      %v1885 = vcvt.s32.f32 %v1853
      %1886 = vst [vmem:[#allocation2] sm:$0xff] 0.0
      %1887 = vst [vmem:[#allocation2 + $0x8] sm:$0xff] 0.0
      %1888 = vst [vmem:[#allocation2 + $0x10] sm:$0xff] 0.0
      %1889 = vst [vmem:[#allocation2 + $0x18] sm:$0xff] 0.0
      %1890 = vst [vmem:[#allocation2 + $0x120] sm:$0xff] 0.0
      %1891 = vst [vmem:[#allocation2 + $0x128] sm:$0xff] 0.0
      %1892 = vst [vmem:[#allocation2 + $0x130] sm:$0xff] 0.0
      %1893 = vst [vmem:[#allocation2 + $0x138] sm:$0xff] 0.0
      %vm1894 = vcmask 48128
      %1895 = vst.msk [vmem:[#allocation2 + $0x20] sm:$0xff] %vm1894, %v1041
      %1896 = vst.msk [vmem:[#allocation2 + $0x28] sm:$0xff] %vm1894, %v1042
      %1897 = vst.msk [vmem:[#allocation2 + $0x30] sm:$0xff] %vm1894, %v1043
      %1898 = vst.msk [vmem:[#allocation2 + $0x38] sm:$0xff] %vm1894, %v1044
      %1899 = vst.msk [vmem:[#allocation2 + $0x40] sm:$0xff] %vm1894, %v1045
      %1900 = vst.msk [vmem:[#allocation2 + $0x48] sm:$0xff] %vm1894, %v1046
      %1901 = vst.msk [vmem:[#allocation2 + $0x50] sm:$0xff] %vm1894, %v1047
      %1902 = vst.msk [vmem:[#allocation2 + $0x58] sm:$0xff] %vm1894, %v1048
      %1903 = vst.msk [vmem:[#allocation2 + $0x60] sm:$0xff] %vm1894, %v1049
      %1904 = vst.msk [vmem:[#allocation2 + $0x68] sm:$0xff] %vm1894, %v1050
      %1905 = vst.msk [vmem:[#allocation2 + $0x70] sm:$0xff] %vm1894, %v1051
      %1906 = vst.msk [vmem:[#allocation2 + $0x78] sm:$0xff] %vm1894, %v1052
      %1907 = vst.msk [vmem:[#allocation2 + $0x80] sm:$0xff] %vm1894, %v1053
      %1908 = vst.msk [vmem:[#allocation2 + $0x88] sm:$0xff] %vm1894, %v1054
      %1909 = vst.msk [vmem:[#allocation2 + $0x90] sm:$0xff] %vm1894, %v1055
      %1910 = vst.msk [vmem:[#allocation2 + $0x98] sm:$0xff] %vm1894, %v1056
      %1911 = vst.msk [vmem:[#allocation2 + $0xa0] sm:$0xff] %vm1894, %v1057
      %1912 = vst.msk [vmem:[#allocation2 + $0xa8] sm:$0xff] %vm1894, %v1058
      %1913 = vst.msk [vmem:[#allocation2 + $0xb0] sm:$0xff] %vm1894, %v1059
      %1914 = vst.msk [vmem:[#allocation2 + $0xb8] sm:$0xff] %vm1894, %v1060
      %1915 = vst.msk [vmem:[#allocation2 + $0xc0] sm:$0xff] %vm1894, %v1061
      %1916 = vst.msk [vmem:[#allocation2 + $0xc8] sm:$0xff] %vm1894, %v1062
      %1917 = vst.msk [vmem:[#allocation2 + $0xd0] sm:$0xff] %vm1894, %v1063
      %1918 = vst.msk [vmem:[#allocation2 + $0xd8] sm:$0xff] %vm1894, %v1064
      %1919 = vst.msk [vmem:[#allocation2 + $0xe0] sm:$0xff] %vm1894, %v1065
      %1920 = vst.msk [vmem:[#allocation2 + $0xe8] sm:$0xff] %vm1894, %v1066
      %1921 = vst.msk [vmem:[#allocation2 + $0xf0] sm:$0xff] %vm1894, %v1067
      %1922 = vst.msk [vmem:[#allocation2 + $0xf8] sm:$0xff] %vm1894, %v1068
      %1923 = vst.msk [vmem:[#allocation2 + $0x100] sm:$0xff] %vm1894, %v1069
      %1924 = vst.msk [vmem:[#allocation2 + $0x108] sm:$0xff] %vm1894, %v1070
      %1925 = vst.msk [vmem:[#allocation2 + $0x110] sm:$0xff] %vm1894, %v1071
      %1926 = vst.msk [vmem:[#allocation2 + $0x118] sm:$0xff] %vm1894, %v1072
      %v1927 = vld [vmem:[#allocation2 + $0xf] sm:$0xff]
      %v1928 = vld [vmem:[#allocation2 + $0x17] sm:$0xff]
      %v1929 = vld [vmem:[#allocation2 + $0x1f] sm:$0xff]
      %v1930 = vld [vmem:[#allocation2 + $0x27] sm:$0xff]
      %v1931 = vld [vmem:[#allocation2 + $0x2f] sm:$0xff]
      %v1932 = vld [vmem:[#allocation2 + $0x37] sm:$0xff]
      %v1933 = vld [vmem:[#allocation2 + $0x3f] sm:$0xff]
      %v1934 = vld [vmem:[#allocation2 + $0x47] sm:$0xff]
      %v1935 = vld [vmem:[#allocation2 + $0x4f] sm:$0xff]
      %v1936 = vld [vmem:[#allocation2 + $0x57] sm:$0xff]
      %v1937 = vld [vmem:[#allocation2 + $0x5f] sm:$0xff]
      %v1938 = vld [vmem:[#allocation2 + $0x67] sm:$0xff]
      %v1939 = vld [vmem:[#allocation2 + $0x6f] sm:$0xff]
      %v1940 = vld [vmem:[#allocation2 + $0x77] sm:$0xff]
      %v1941 = vld [vmem:[#allocation2 + $0x7f] sm:$0xff]
      %v1942 = vld [vmem:[#allocation2 + $0x87] sm:$0xff]
      %v1943 = vld [vmem:[#allocation2 + $0x8f] sm:$0xff]
      %v1944 = vld [vmem:[#allocation2 + $0x97] sm:$0xff]
      %v1945 = vld [vmem:[#allocation2 + $0x9f] sm:$0xff]
      %v1946 = vld [vmem:[#allocation2 + $0xa7] sm:$0xff]
      %v1947 = vld [vmem:[#allocation2 + $0xaf] sm:$0xff]
      %v1948 = vld [vmem:[#allocation2 + $0xb7] sm:$0xff]
      %v1949 = vld [vmem:[#allocation2 + $0xbf] sm:$0xff]
      %v1950 = vld [vmem:[#allocation2 + $0xc7] sm:$0xff]
      %v1951 = vld [vmem:[#allocation2 + $0xcf] sm:$0xff]
      %v1952 = vld [vmem:[#allocation2 + $0xd7] sm:$0xff]
      %v1953 = vld [vmem:[#allocation2 + $0xdf] sm:$0xff]
      %v1954 = vld [vmem:[#allocation2 + $0xe7] sm:$0xff]
      %v1955 = vld [vmem:[#allocation2 + $0xef] sm:$0xff]
      %v1956 = vld [vmem:[#allocation2 + $0xf7] sm:$0xff]
      %v1957 = vld [vmem:[#allocation2 + $0xff] sm:$0xff]
      %v1958 = vld [vmem:[#allocation2 + $0x107] sm:$0xff]
      %v1959 = vmul.f32 %v1927, %v1758
      %v1960 = vmul.f32 %v1928, %v1759
      %v1961 = vmul.f32 %v1929, %v1760
      %v1962 = vmul.f32 %v1930, %v1761
      %v1963 = vmul.f32 %v1931, %v1762
      %v1964 = vmul.f32 %v1932, %v1763
      %v1965 = vmul.f32 %v1933, %v1764
      %v1966 = vmul.f32 %v1934, %v1765
      %v1967 = vmul.f32 %v1935, %v1766
      %v1968 = vmul.f32 %v1936, %v1767
      %v1969 = vmul.f32 %v1937, %v1768
      %v1970 = vmul.f32 %v1938, %v1769
      %v1971 = vmul.f32 %v1939, %v1770
      %v1972 = vmul.f32 %v1940, %v1771
      %v1973 = vmul.f32 %v1941, %v1772
      %v1974 = vmul.f32 %v1942, %v1773
      %v1975 = vmul.f32 %v1943, %v1774
      %v1976 = vmul.f32 %v1944, %v1775
      %v1977 = vmul.f32 %v1945, %v1776
      %v1978 = vmul.f32 %v1946, %v1777
      %v1979 = vmul.f32 %v1947, %v1778
      %v1980 = vmul.f32 %v1948, %v1779
      %v1981 = vmul.f32 %v1949, %v1780
      %v1982 = vmul.f32 %v1950, %v1781
      %v1983 = vmul.f32 %v1951, %v1782
      %v1984 = vmul.f32 %v1952, %v1783
      %v1985 = vmul.f32 %v1953, %v1784
      %v1986 = vmul.f32 %v1954, %v1785
      %v1987 = vmul.f32 %v1955, %v1786
      %v1988 = vmul.f32 %v1956, %v1787
      %v1989 = vmul.f32 %v1957, %v1788
      %v1990 = vmul.f32 %v1958, %v1789
      %v1991 = vpack.c.bf16 %v1960, %v1959
      %v1992 = vpack.c.bf16 %v1962, %v1961
      %v1993 = vpack.c.bf16 %v1964, %v1963
      %v1994 = vpack.c.bf16 %v1966, %v1965
      %v1995 = vpack.c.bf16 %v1968, %v1967
      %v1996 = vpack.c.bf16 %v1970, %v1969
      %v1997 = vpack.c.bf16 %v1972, %v1971
      %v1998 = vpack.c.bf16 %v1974, %v1973
      %v1999 = vpack.c.bf16 %v1976, %v1975
      %v2000 = vpack.c.bf16 %v1978, %v1977
      %v2001 = vpack.c.bf16 %v1980, %v1979
      %v2002 = vpack.c.bf16 %v1982, %v1981
      %v2003 = vpack.c.bf16 %v1984, %v1983
      %v2004 = vpack.c.bf16 %v1986, %v1985
      %v2005 = vpack.c.bf16 %v1988, %v1987
      %v2006 = vpack.c.bf16 %v1990, %v1989
      %v2007 = vld [vmem:[#allocation2 + $0x10] sm:$0xff]
      %v2008 = vld [vmem:[#allocation2 + $0x18] sm:$0xff]
      %v2009 = vld [vmem:[#allocation2 + $0x20] sm:$0xff]
      %v2010 = vld [vmem:[#allocation2 + $0x28] sm:$0xff]
      %v2011 = vld [vmem:[#allocation2 + $0x30] sm:$0xff]
      %v2012 = vld [vmem:[#allocation2 + $0x38] sm:$0xff]
      %v2013 = vld [vmem:[#allocation2 + $0x40] sm:$0xff]
      %v2014 = vld [vmem:[#allocation2 + $0x48] sm:$0xff]
      %v2015 = vld [vmem:[#allocation2 + $0x50] sm:$0xff]
      %v2016 = vld [vmem:[#allocation2 + $0x58] sm:$0xff]
      %v2017 = vld [vmem:[#allocation2 + $0x60] sm:$0xff]
      %v2018 = vld [vmem:[#allocation2 + $0x68] sm:$0xff]
      %v2019 = vld [vmem:[#allocation2 + $0x70] sm:$0xff]
      %v2020 = vld [vmem:[#allocation2 + $0x78] sm:$0xff]
      %v2021 = vld [vmem:[#allocation2 + $0x80] sm:$0xff]
      %v2022 = vld [vmem:[#allocation2 + $0x88] sm:$0xff]
      %v2023 = vld [vmem:[#allocation2 + $0x90] sm:$0xff]
      %v2024 = vld [vmem:[#allocation2 + $0x98] sm:$0xff]
      %v2025 = vld [vmem:[#allocation2 + $0xa0] sm:$0xff]
      %v2026 = vld [vmem:[#allocation2 + $0xa8] sm:$0xff]
      %v2027 = vld [vmem:[#allocation2 + $0xb0] sm:$0xff]
      %v2028 = vld [vmem:[#allocation2 + $0xb8] sm:$0xff]
      %v2029 = vld [vmem:[#allocation2 + $0xc0] sm:$0xff]
      %v2030 = vld [vmem:[#allocation2 + $0xc8] sm:$0xff]
      %v2031 = vld [vmem:[#allocation2 + $0xd0] sm:$0xff]
      %v2032 = vld [vmem:[#allocation2 + $0xd8] sm:$0xff]
      %v2033 = vld [vmem:[#allocation2 + $0xe0] sm:$0xff]
      %v2034 = vld [vmem:[#allocation2 + $0xe8] sm:$0xff]
      %v2035 = vld [vmem:[#allocation2 + $0xf0] sm:$0xff]
      %v2036 = vld [vmem:[#allocation2 + $0xf8] sm:$0xff]
      %v2037 = vld [vmem:[#allocation2 + $0x100] sm:$0xff]
      %v2038 = vld [vmem:[#allocation2 + $0x108] sm:$0xff]
      %v2039 = vpack.c.bf16 %v2008, %v2007
      %v2040 = vpack.c.bf16 %v2010, %v2009
      %v2041 = vpack.c.bf16 %v2012, %v2011
      %v2042 = vpack.c.bf16 %v2014, %v2013
      %v2043 = vpack.c.bf16 %v2016, %v2015
      %v2044 = vpack.c.bf16 %v2018, %v2017
      %v2045 = vpack.c.bf16 %v2020, %v2019
      %v2046 = vpack.c.bf16 %v2022, %v2021
      %v2047 = vpack.c.bf16 %v2024, %v2023
      %v2048 = vpack.c.bf16 %v2026, %v2025
      %v2049 = vpack.c.bf16 %v2028, %v2027
      %v2050 = vpack.c.bf16 %v2030, %v2029
      %v2051 = vpack.c.bf16 %v2032, %v2031
      %v2052 = vpack.c.bf16 %v2034, %v2033
      %v2053 = vpack.c.bf16 %v2036, %v2035
      %v2054 = vpack.c.bf16 %v2038, %v2037
      %v2055 = vld [vmem:[#allocation2 + $0x11] sm:$0xff]
      %v2056 = vld [vmem:[#allocation2 + $0x19] sm:$0xff]
      %v2057 = vld [vmem:[#allocation2 + $0x21] sm:$0xff]
      %v2058 = vld [vmem:[#allocation2 + $0x29] sm:$0xff]
      %v2059 = vld [vmem:[#allocation2 + $0x31] sm:$0xff]
      %v2060 = vld [vmem:[#allocation2 + $0x39] sm:$0xff]
      %v2061 = vld [vmem:[#allocation2 + $0x41] sm:$0xff]
      %v2062 = vld [vmem:[#allocation2 + $0x49] sm:$0xff]
      %v2063 = vld [vmem:[#allocation2 + $0x51] sm:$0xff]
      %v2064 = vld [vmem:[#allocation2 + $0x59] sm:$0xff]
      %v2065 = vld [vmem:[#allocation2 + $0x61] sm:$0xff]
      %v2066 = vld [vmem:[#allocation2 + $0x69] sm:$0xff]
      %v2067 = vld [vmem:[#allocation2 + $0x71] sm:$0xff]
      %v2068 = vld [vmem:[#allocation2 + $0x79] sm:$0xff]
      %v2069 = vld [vmem:[#allocation2 + $0x81] sm:$0xff]
      %v2070 = vld [vmem:[#allocation2 + $0x89] sm:$0xff]
      %v2071 = vld [vmem:[#allocation2 + $0x91] sm:$0xff]
      %v2072 = vld [vmem:[#allocation2 + $0x99] sm:$0xff]
      %v2073 = vld [vmem:[#allocation2 + $0xa1] sm:$0xff]
      %v2074 = vld [vmem:[#allocation2 + $0xa9] sm:$0xff]
      %v2075 = vld [vmem:[#allocation2 + $0xb1] sm:$0xff]
      %v2076 = vld [vmem:[#allocation2 + $0xb9] sm:$0xff]
      %v2077 = vld [vmem:[#allocation2 + $0xc1] sm:$0xff]
      %v2078 = vld [vmem:[#allocation2 + $0xc9] sm:$0xff]
      %v2079 = vld [vmem:[#allocation2 + $0xd1] sm:$0xff]
      %v2080 = vld [vmem:[#allocation2 + $0xd9] sm:$0xff]
      %v2081 = vld [vmem:[#allocation2 + $0xe1] sm:$0xff]
      %v2082 = vld [vmem:[#allocation2 + $0xe9] sm:$0xff]
      %v2083 = vld [vmem:[#allocation2 + $0xf1] sm:$0xff]
      %v2084 = vld [vmem:[#allocation2 + $0xf9] sm:$0xff]
      %v2085 = vld [vmem:[#allocation2 + $0x101] sm:$0xff]
      %v2086 = vld [vmem:[#allocation2 + $0x109] sm:$0xff]
      %v2087 = vmul.f32 %v2055, %v1854
      %v2088 = vmul.f32 %v2056, %v1855
      %v2089 = vmul.f32 %v2057, %v1856
      %v2090 = vmul.f32 %v2058, %v1857
      %v2091 = vmul.f32 %v2059, %v1858
      %v2092 = vmul.f32 %v2060, %v1859
      %v2093 = vmul.f32 %v2061, %v1860
      %v2094 = vmul.f32 %v2062, %v1861
      %v2095 = vmul.f32 %v2063, %v1862
      %v2096 = vmul.f32 %v2064, %v1863
      %v2097 = vmul.f32 %v2065, %v1864
      %v2098 = vmul.f32 %v2066, %v1865
      %v2099 = vmul.f32 %v2067, %v1866
      %v2100 = vmul.f32 %v2068, %v1867
      %v2101 = vmul.f32 %v2069, %v1868
      %v2102 = vmul.f32 %v2070, %v1869
      %v2103 = vmul.f32 %v2071, %v1870
      %v2104 = vmul.f32 %v2072, %v1871
      %v2105 = vmul.f32 %v2073, %v1872
      %v2106 = vmul.f32 %v2074, %v1873
      %v2107 = vmul.f32 %v2075, %v1874
      %v2108 = vmul.f32 %v2076, %v1875
      %v2109 = vmul.f32 %v2077, %v1876
      %v2110 = vmul.f32 %v2078, %v1877
      %v2111 = vmul.f32 %v2079, %v1878
      %v2112 = vmul.f32 %v2080, %v1879
      %v2113 = vmul.f32 %v2081, %v1880
      %v2114 = vmul.f32 %v2082, %v1881
      %v2115 = vmul.f32 %v2083, %v1882
      %v2116 = vmul.f32 %v2084, %v1883
      %v2117 = vmul.f32 %v2085, %v1884
      %v2118 = vmul.f32 %v2086, %v1885
      %v2119 = vpack.c.bf16 %v2088, %v2087
      %v2120 = vpack.c.bf16 %v2090, %v2089
      %v2121 = vpack.c.bf16 %v2092, %v2091
      %v2122 = vpack.c.bf16 %v2094, %v2093
      %v2123 = vpack.c.bf16 %v2096, %v2095
      %v2124 = vpack.c.bf16 %v2098, %v2097
      %v2125 = vpack.c.bf16 %v2100, %v2099
      %v2126 = vpack.c.bf16 %v2102, %v2101
      %v2127 = vpack.c.bf16 %v2104, %v2103
      %v2128 = vpack.c.bf16 %v2106, %v2105
      %v2129 = vpack.c.bf16 %v2108, %v2107
      %v2130 = vpack.c.bf16 %v2110, %v2109
      %v2131 = vpack.c.bf16 %v2112, %v2111
      %v2132 = vpack.c.bf16 %v2114, %v2113
      %v2133 = vpack.c.bf16 %v2116, %v2115
      %v2134 = vpack.c.bf16 %v2118, %v2117
      %v2135 = vld [vmem:[#allocation2 + $0x10f] sm:$0xff]
      %v2136 = vld [vmem:[#allocation2 + $0x117] sm:$0xff]
      %v2137 = vmul.f32 %v1929, %v1758
      %v2138 = vmul.f32 %v1930, %v1759
      %v2139 = vmul.f32 %v1931, %v1760
      %v2140 = vmul.f32 %v1932, %v1761
      %v2141 = vmul.f32 %v1933, %v1762
      %v2142 = vmul.f32 %v1934, %v1763
      %v2143 = vmul.f32 %v1935, %v1764
      %v2144 = vmul.f32 %v1936, %v1765
      %v2145 = vmul.f32 %v1937, %v1766
      %v2146 = vmul.f32 %v1938, %v1767
      %v2147 = vmul.f32 %v1939, %v1768
      %v2148 = vmul.f32 %v1940, %v1769
      %v2149 = vmul.f32 %v1941, %v1770
      %v2150 = vmul.f32 %v1942, %v1771
      %v2151 = vmul.f32 %v1943, %v1772
      %v2152 = vmul.f32 %v1944, %v1773
      %v2153 = vmul.f32 %v1945, %v1774
      %v2154 = vmul.f32 %v1946, %v1775
      %v2155 = vmul.f32 %v1947, %v1776
      %v2156 = vmul.f32 %v1948, %v1777
      %v2157 = vmul.f32 %v1949, %v1778
      %v2158 = vmul.f32 %v1950, %v1779
      %v2159 = vmul.f32 %v1951, %v1780
      %v2160 = vmul.f32 %v1952, %v1781
      %v2161 = vmul.f32 %v1953, %v1782
      %v2162 = vmul.f32 %v1954, %v1783
      %v2163 = vmul.f32 %v1955, %v1784
      %v2164 = vmul.f32 %v1956, %v1785
      %v2165 = vmul.f32 %v1957, %v1786
      %v2166 = vmul.f32 %v1958, %v1787
      %v2167 = vmul.f32 %v2135, %v1788
      %v2168 = vmul.f32 %v2136, %v1789
      %v2169 = vpack.c.bf16 %v2138, %v2137
      %v2170 = vpack.c.bf16 %v2140, %v2139
      %v2171 = vpack.c.bf16 %v2142, %v2141
      %v2172 = vpack.c.bf16 %v2144, %v2143
      %v2173 = vpack.c.bf16 %v2146, %v2145
      %v2174 = vpack.c.bf16 %v2148, %v2147
      %v2175 = vpack.c.bf16 %v2150, %v2149
      %v2176 = vpack.c.bf16 %v2152, %v2151
      %v2177 = vpack.c.bf16 %v2154, %v2153
      %v2178 = vpack.c.bf16 %v2156, %v2155
      %v2179 = vpack.c.bf16 %v2158, %v2157
      %v2180 = vpack.c.bf16 %v2160, %v2159
      %v2181 = vpack.c.bf16 %v2162, %v2161
      %v2182 = vpack.c.bf16 %v2164, %v2163
      %v2183 = vpack.c.bf16 %v2166, %v2165
      %v2184 = vpack.c.bf16 %v2168, %v2167
      %v2185 = vld [vmem:[#allocation2 + $0x110] sm:$0xff]
      %v2186 = vld [vmem:[#allocation2 + $0x118] sm:$0xff]
      %v2187 = vpack.c.bf16 %v2186, %v2185
      %v2188 = vld [vmem:[#allocation2 + $0x111] sm:$0xff]
      %v2189 = vld [vmem:[#allocation2 + $0x119] sm:$0xff]
      %v2190 = vmul.f32 %v2057, %v1854
      %v2191 = vmul.f32 %v2058, %v1855
      %v2192 = vmul.f32 %v2059, %v1856
      %v2193 = vmul.f32 %v2060, %v1857
      %v2194 = vmul.f32 %v2061, %v1858
      %v2195 = vmul.f32 %v2062, %v1859
      %v2196 = vmul.f32 %v2063, %v1860
      %v2197 = vmul.f32 %v2064, %v1861
      %v2198 = vmul.f32 %v2065, %v1862
      %v2199 = vmul.f32 %v2066, %v1863
      %v2200 = vmul.f32 %v2067, %v1864
      %v2201 = vmul.f32 %v2068, %v1865
      %v2202 = vmul.f32 %v2069, %v1866
      %v2203 = vmul.f32 %v2070, %v1867
      %v2204 = vmul.f32 %v2071, %v1868
      %v2205 = vmul.f32 %v2072, %v1869
      %v2206 = vmul.f32 %v2073, %v1870
      %v2207 = vmul.f32 %v2074, %v1871
      %v2208 = vmul.f32 %v2075, %v1872
      %v2209 = vmul.f32 %v2076, %v1873
      %v2210 = vmul.f32 %v2077, %v1874
      %v2211 = vmul.f32 %v2078, %v1875
      %v2212 = vmul.f32 %v2079, %v1876
      %v2213 = vmul.f32 %v2080, %v1877
      %v2214 = vmul.f32 %v2081, %v1878
      %v2215 = vmul.f32 %v2082, %v1879
      %v2216 = vmul.f32 %v2083, %v1880
      %v2217 = vmul.f32 %v2084, %v1881
      %v2218 = vmul.f32 %v2085, %v1882
      %v2219 = vmul.f32 %v2086, %v1883
      %v2220 = vmul.f32 %v2188, %v1884
      %v2221 = vmul.f32 %v2189, %v1885
      %v2222 = vpack.c.bf16 %v2191, %v2190
      %v2223 = vpack.c.bf16 %v2193, %v2192
      %v2224 = vpack.c.bf16 %v2195, %v2194
      %v2225 = vpack.c.bf16 %v2197, %v2196
      %v2226 = vpack.c.bf16 %v2199, %v2198
      %v2227 = vpack.c.bf16 %v2201, %v2200
      %v2228 = vpack.c.bf16 %v2203, %v2202
      %v2229 = vpack.c.bf16 %v2205, %v2204
      %v2230 = vpack.c.bf16 %v2207, %v2206
      %v2231 = vpack.c.bf16 %v2209, %v2208
      %v2232 = vpack.c.bf16 %v2211, %v2210
      %v2233 = vpack.c.bf16 %v2213, %v2212
      %v2234 = vpack.c.bf16 %v2215, %v2214
      %v2235 = vpack.c.bf16 %v2217, %v2216
      %v2236 = vpack.c.bf16 %v2219, %v2218
      %v2237 = vpack.c.bf16 %v2221, %v2220
      %v2238 = vld [vmem:[#allocation2 + $0x11f] sm:$0xff]
      %v2239 = vld [vmem:[#allocation2 + $0x127] sm:$0xff]
      %v2240 = vmul.f32 %v1931, %v1758
      %v2241 = vmul.f32 %v1932, %v1759
      %v2242 = vmul.f32 %v1933, %v1760
      %v2243 = vmul.f32 %v1934, %v1761
      %v2244 = vmul.f32 %v1935, %v1762
      %v2245 = vmul.f32 %v1936, %v1763
      %v2246 = vmul.f32 %v1937, %v1764
      %v2247 = vmul.f32 %v1938, %v1765
      %v2248 = vmul.f32 %v1939, %v1766
      %v2249 = vmul.f32 %v1940, %v1767
      %v2250 = vmul.f32 %v1941, %v1768
      %v2251 = vmul.f32 %v1942, %v1769
      %v2252 = vmul.f32 %v1943, %v1770
      %v2253 = vmul.f32 %v1944, %v1771
      %v2254 = vmul.f32 %v1945, %v1772
      %v2255 = vmul.f32 %v1946, %v1773
      %v2256 = vmul.f32 %v1947, %v1774
      %v2257 = vmul.f32 %v1948, %v1775
      %v2258 = vmul.f32 %v1949, %v1776
      %v2259 = vmul.f32 %v1950, %v1777
      %v2260 = vmul.f32 %v1951, %v1778
      %v2261 = vmul.f32 %v1952, %v1779
      %v2262 = vmul.f32 %v1953, %v1780
      %v2263 = vmul.f32 %v1954, %v1781
      %v2264 = vmul.f32 %v1955, %v1782
      %v2265 = vmul.f32 %v1956, %v1783
      %v2266 = vmul.f32 %v1957, %v1784
      %v2267 = vmul.f32 %v1958, %v1785
      %v2268 = vmul.f32 %v2135, %v1786
      %v2269 = vmul.f32 %v2136, %v1787
      %v2270 = vmul.f32 %v2238, %v1788
      %v2271 = vmul.f32 %v2239, %v1789
      %v2272 = vpack.c.bf16 %v2241, %v2240
      %v2273 = vpack.c.bf16 %v2243, %v2242
      %v2274 = vpack.c.bf16 %v2245, %v2244
      %v2275 = vpack.c.bf16 %v2247, %v2246
      %v2276 = vpack.c.bf16 %v2249, %v2248
      %v2277 = vpack.c.bf16 %v2251, %v2250
      %v2278 = vpack.c.bf16 %v2253, %v2252
      %v2279 = vpack.c.bf16 %v2255, %v2254
      %v2280 = vpack.c.bf16 %v2257, %v2256
      %v2281 = vpack.c.bf16 %v2259, %v2258
      %v2282 = vpack.c.bf16 %v2261, %v2260
      %v2283 = vpack.c.bf16 %v2263, %v2262
      %v2284 = vpack.c.bf16 %v2265, %v2264
      %v2285 = vpack.c.bf16 %v2267, %v2266
      %v2286 = vpack.c.bf16 %v2269, %v2268
      %v2287 = vpack.c.bf16 %v2271, %v2270
      %v2288 = vld [vmem:[#allocation2 + $0x120] sm:$0xff]
      %v2289 = vld [vmem:[#allocation2 + $0x128] sm:$0xff]
      %v2290 = vpack.c.bf16 %v2289, %v2288
      %v2291 = vld [vmem:[#allocation2 + $0x121] sm:$0xff]
      %v2292 = vld [vmem:[#allocation2 + $0x129] sm:$0xff]
      %v2293 = vmul.f32 %v2059, %v1854
      %v2294 = vmul.f32 %v2060, %v1855
      %v2295 = vmul.f32 %v2061, %v1856
      %v2296 = vmul.f32 %v2062, %v1857
      %v2297 = vmul.f32 %v2063, %v1858
      %v2298 = vmul.f32 %v2064, %v1859
      %v2299 = vmul.f32 %v2065, %v1860
      %v2300 = vmul.f32 %v2066, %v1861
      %v2301 = vmul.f32 %v2067, %v1862
      %v2302 = vmul.f32 %v2068, %v1863
      %v2303 = vmul.f32 %v2069, %v1864
      %v2304 = vmul.f32 %v2070, %v1865
      %v2305 = vmul.f32 %v2071, %v1866
      %v2306 = vmul.f32 %v2072, %v1867
      %v2307 = vmul.f32 %v2073, %v1868
      %v2308 = vmul.f32 %v2074, %v1869
      %v2309 = vmul.f32 %v2075, %v1870
      %v2310 = vmul.f32 %v2076, %v1871
      %v2311 = vmul.f32 %v2077, %v1872
      %v2312 = vmul.f32 %v2078, %v1873
      %v2313 = vmul.f32 %v2079, %v1874
      %v2314 = vmul.f32 %v2080, %v1875
      %v2315 = vmul.f32 %v2081, %v1876
      %v2316 = vmul.f32 %v2082, %v1877
      %v2317 = vmul.f32 %v2083, %v1878
      %v2318 = vmul.f32 %v2084, %v1879
      %v2319 = vmul.f32 %v2085, %v1880
      %v2320 = vmul.f32 %v2086, %v1881
      %v2321 = vmul.f32 %v2188, %v1882
      %v2322 = vmul.f32 %v2189, %v1883
      %v2323 = vmul.f32 %v2291, %v1884
      %v2324 = vmul.f32 %v2292, %v1885
      %v2325 = vpack.c.bf16 %v2294, %v2293
      %v2326 = vpack.c.bf16 %v2296, %v2295
      %v2327 = vpack.c.bf16 %v2298, %v2297
      %v2328 = vpack.c.bf16 %v2300, %v2299
      %v2329 = vpack.c.bf16 %v2302, %v2301
      %v2330 = vpack.c.bf16 %v2304, %v2303
      %v2331 = vpack.c.bf16 %v2306, %v2305
      %v2332 = vpack.c.bf16 %v2308, %v2307
      %v2333 = vpack.c.bf16 %v2310, %v2309
      %v2334 = vpack.c.bf16 %v2312, %v2311
      %v2335 = vpack.c.bf16 %v2314, %v2313
      %v2336 = vpack.c.bf16 %v2316, %v2315
      %v2337 = vpack.c.bf16 %v2318, %v2317
      %v2338 = vpack.c.bf16 %v2320, %v2319
      %v2339 = vpack.c.bf16 %v2322, %v2321
      %v2340 = vpack.c.bf16 %v2324, %v2323
      %2357 = vrot.lane.b32.xlu0 %v2039, 6
      %v2358 = vpop.permute.xlu0 %2357
      %2359 = vrot.lane.b32.xlu0 %v2040, 6
      %v2360 = vpop.permute.xlu0 %2359
      %2361 = vrot.lane.b32.xlu0 %v2041, 6
      %v2362 = vpop.permute.xlu0 %2361
      %2363 = vrot.lane.b32.xlu0 %v2042, 6
      %v2364 = vpop.permute.xlu0 %2363
      %2365 = vrot.lane.b32.xlu0 %v2043, 6
      %v2366 = vpop.permute.xlu0 %2365
      %2367 = vrot.lane.b32.xlu0 %v2044, 6
      %v2368 = vpop.permute.xlu0 %2367
      %2369 = vrot.lane.b32.xlu0 %v2045, 6
      %v2370 = vpop.permute.xlu0 %2369
      %2371 = vrot.lane.b32.xlu0 %v2046, 6
      %v2372 = vpop.permute.xlu0 %2371
      %2373 = vrot.lane.b32.xlu0 %v2047, 6
      %v2374 = vpop.permute.xlu0 %2373
      %2375 = vrot.lane.b32.xlu0 %v2048, 6
      %v2376 = vpop.permute.xlu0 %2375
      %2377 = vrot.lane.b32.xlu0 %v2049, 6
      %v2378 = vpop.permute.xlu0 %2377
      %2379 = vrot.lane.b32.xlu0 %v2050, 6
      %v2380 = vpop.permute.xlu0 %2379
      %2381 = vrot.lane.b32.xlu0 %v2051, 6
      %v2382 = vpop.permute.xlu0 %2381
      %2383 = vrot.lane.b32.xlu0 %v2052, 6
      %v2384 = vpop.permute.xlu0 %2383
      %2385 = vrot.lane.b32.xlu0 %v2053, 6
      %v2386 = vpop.permute.xlu0 %2385
      %2387 = vrot.lane.b32.xlu0 %v2054, 6
      %v2388 = vpop.permute.xlu0 %2387
      %2405 = vrot.lane.b32.xlu0 %v2119, 12
      %v2406 = vpop.permute.xlu0 %2405
      %2407 = vrot.lane.b32.xlu0 %v2120, 12
      %v2408 = vpop.permute.xlu0 %2407
      %2409 = vrot.lane.b32.xlu0 %v2121, 12
      %v2410 = vpop.permute.xlu0 %2409
      %2411 = vrot.lane.b32.xlu0 %v2122, 12
      %v2412 = vpop.permute.xlu0 %2411
      %2413 = vrot.lane.b32.xlu0 %v2123, 12
      %v2414 = vpop.permute.xlu0 %2413
      %2415 = vrot.lane.b32.xlu0 %v2124, 12
      %v2416 = vpop.permute.xlu0 %2415
      %2417 = vrot.lane.b32.xlu0 %v2125, 12
      %v2418 = vpop.permute.xlu0 %2417
      %2419 = vrot.lane.b32.xlu0 %v2126, 12
      %v2420 = vpop.permute.xlu0 %2419
      %2421 = vrot.lane.b32.xlu0 %v2127, 12
      %v2422 = vpop.permute.xlu0 %2421
      %2423 = vrot.lane.b32.xlu0 %v2128, 12
      %v2424 = vpop.permute.xlu0 %2423
      %2425 = vrot.lane.b32.xlu0 %v2129, 12
      %v2426 = vpop.permute.xlu0 %2425
      %2427 = vrot.lane.b32.xlu0 %v2130, 12
      %v2428 = vpop.permute.xlu0 %2427
      %2429 = vrot.lane.b32.xlu0 %v2131, 12
      %v2430 = vpop.permute.xlu0 %2429
      %2431 = vrot.lane.b32.xlu0 %v2132, 12
      %v2432 = vpop.permute.xlu0 %2431
      %2433 = vrot.lane.b32.xlu0 %v2133, 12
      %v2434 = vpop.permute.xlu0 %2433
      %2435 = vrot.lane.b32.xlu0 %v2134, 12
      %v2436 = vpop.permute.xlu0 %2435
      %2453 = vrot.lane.b32.xlu0 %v2169, 18
      %v2454 = vpop.permute.xlu0 %2453
      %2455 = vrot.lane.b32.xlu0 %v2170, 18
      %v2456 = vpop.permute.xlu0 %2455
      %2457 = vrot.lane.b32.xlu0 %v2171, 18
      %v2458 = vpop.permute.xlu0 %2457
      %2459 = vrot.lane.b32.xlu0 %v2172, 18
      %v2460 = vpop.permute.xlu0 %2459
      %2461 = vrot.lane.b32.xlu0 %v2173, 18
      %v2462 = vpop.permute.xlu0 %2461
      %2463 = vrot.lane.b32.xlu0 %v2174, 18
      %v2464 = vpop.permute.xlu0 %2463
      %2465 = vrot.lane.b32.xlu0 %v2175, 18
      %v2466 = vpop.permute.xlu0 %2465
      %2467 = vrot.lane.b32.xlu0 %v2176, 18
      %v2468 = vpop.permute.xlu0 %2467
      %2469 = vrot.lane.b32.xlu0 %v2177, 18
      %v2470 = vpop.permute.xlu0 %2469
      %2471 = vrot.lane.b32.xlu0 %v2178, 18
      %v2472 = vpop.permute.xlu0 %2471
      %2473 = vrot.lane.b32.xlu0 %v2179, 18
      %v2474 = vpop.permute.xlu0 %2473
      %2475 = vrot.lane.b32.xlu0 %v2180, 18
      %v2476 = vpop.permute.xlu0 %2475
      %2477 = vrot.lane.b32.xlu0 %v2181, 18
      %v2478 = vpop.permute.xlu0 %2477
      %2479 = vrot.lane.b32.xlu0 %v2182, 18
      %v2480 = vpop.permute.xlu0 %2479
      %2481 = vrot.lane.b32.xlu0 %v2183, 18
      %v2482 = vpop.permute.xlu0 %2481
      %2483 = vrot.lane.b32.xlu0 %v2184, 18
      %v2484 = vpop.permute.xlu0 %2483
      %2486 = vrot.lane.b32.xlu0 %v2040, 24
      %v2487 = vpop.permute.xlu0 %2486
      %2488 = vrot.lane.b32.xlu0 %v2041, 24
      %v2489 = vpop.permute.xlu0 %2488
      %2490 = vrot.lane.b32.xlu0 %v2042, 24
      %v2491 = vpop.permute.xlu0 %2490
      %2492 = vrot.lane.b32.xlu0 %v2043, 24
      %v2493 = vpop.permute.xlu0 %2492
      %2494 = vrot.lane.b32.xlu0 %v2044, 24
      %v2495 = vpop.permute.xlu0 %2494
      %2496 = vrot.lane.b32.xlu0 %v2045, 24
      %v2497 = vpop.permute.xlu0 %2496
      %2498 = vrot.lane.b32.xlu0 %v2046, 24
      %v2499 = vpop.permute.xlu0 %2498
      %2500 = vrot.lane.b32.xlu0 %v2047, 24
      %v2501 = vpop.permute.xlu0 %2500
      %2502 = vrot.lane.b32.xlu0 %v2048, 24
      %v2503 = vpop.permute.xlu0 %2502
      %2504 = vrot.lane.b32.xlu0 %v2049, 24
      %v2505 = vpop.permute.xlu0 %2504
      %2506 = vrot.lane.b32.xlu0 %v2050, 24
      %v2507 = vpop.permute.xlu0 %2506
      %2508 = vrot.lane.b32.xlu0 %v2051, 24
      %v2509 = vpop.permute.xlu0 %2508
      %2510 = vrot.lane.b32.xlu0 %v2052, 24
      %v2511 = vpop.permute.xlu0 %2510
      %2512 = vrot.lane.b32.xlu0 %v2053, 24
      %v2513 = vpop.permute.xlu0 %2512
      %2514 = vrot.lane.b32.xlu0 %v2054, 24
      %v2515 = vpop.permute.xlu0 %2514
      %2516 = vrot.lane.b32.xlu0 %v2187, 24
      %v2517 = vpop.permute.xlu0 %2516
      %2534 = vrot.lane.b32.xlu0 %v2222, 30
      %v2535 = vpop.permute.xlu0 %2534
      %2536 = vrot.lane.b32.xlu0 %v2223, 30
      %v2537 = vpop.permute.xlu0 %2536
      %2538 = vrot.lane.b32.xlu0 %v2224, 30
      %v2539 = vpop.permute.xlu0 %2538
      %2540 = vrot.lane.b32.xlu0 %v2225, 30
      %v2541 = vpop.permute.xlu0 %2540
      %2542 = vrot.lane.b32.xlu0 %v2226, 30
      %v2543 = vpop.permute.xlu0 %2542
      %2544 = vrot.lane.b32.xlu0 %v2227, 30
      %v2545 = vpop.permute.xlu0 %2544
      %2546 = vrot.lane.b32.xlu0 %v2228, 30
      %v2547 = vpop.permute.xlu0 %2546
      %2548 = vrot.lane.b32.xlu0 %v2229, 30
      %v2549 = vpop.permute.xlu0 %2548
      %2550 = vrot.lane.b32.xlu0 %v2230, 30
      %v2551 = vpop.permute.xlu0 %2550
      %2552 = vrot.lane.b32.xlu0 %v2231, 30
      %v2553 = vpop.permute.xlu0 %2552
      %2554 = vrot.lane.b32.xlu0 %v2232, 30
      %v2555 = vpop.permute.xlu0 %2554
      %2556 = vrot.lane.b32.xlu0 %v2233, 30
      %v2557 = vpop.permute.xlu0 %2556
      %2558 = vrot.lane.b32.xlu0 %v2234, 30
      %v2559 = vpop.permute.xlu0 %2558
      %2560 = vrot.lane.b32.xlu0 %v2235, 30
      %v2561 = vpop.permute.xlu0 %2560
      %2562 = vrot.lane.b32.xlu0 %v2236, 30
      %v2563 = vpop.permute.xlu0 %2562
      %2564 = vrot.lane.b32.xlu0 %v2237, 30
      %v2565 = vpop.permute.xlu0 %2564
      %2582 = vrot.lane.b32.xlu0 %v2272, 36
      %v2583 = vpop.permute.xlu0 %2582
      %2584 = vrot.lane.b32.xlu0 %v2273, 36
      %v2585 = vpop.permute.xlu0 %2584
      %2586 = vrot.lane.b32.xlu0 %v2274, 36
      %v2587 = vpop.permute.xlu0 %2586
      %2588 = vrot.lane.b32.xlu0 %v2275, 36
      %v2589 = vpop.permute.xlu0 %2588
      %2590 = vrot.lane.b32.xlu0 %v2276, 36
      %v2591 = vpop.permute.xlu0 %2590
      %2592 = vrot.lane.b32.xlu0 %v2277, 36
      %v2593 = vpop.permute.xlu0 %2592
      %2594 = vrot.lane.b32.xlu0 %v2278, 36
      %v2595 = vpop.permute.xlu0 %2594
      %2596 = vrot.lane.b32.xlu0 %v2279, 36
      %v2597 = vpop.permute.xlu0 %2596
      %2598 = vrot.lane.b32.xlu0 %v2280, 36
      %v2599 = vpop.permute.xlu0 %2598
      %2600 = vrot.lane.b32.xlu0 %v2281, 36
      %v2601 = vpop.permute.xlu0 %2600
      %2602 = vrot.lane.b32.xlu0 %v2282, 36
      %v2603 = vpop.permute.xlu0 %2602
      %2604 = vrot.lane.b32.xlu0 %v2283, 36
      %v2605 = vpop.permute.xlu0 %2604
      %2606 = vrot.lane.b32.xlu0 %v2284, 36
      %v2607 = vpop.permute.xlu0 %2606
      %2608 = vrot.lane.b32.xlu0 %v2285, 36
      %v2609 = vpop.permute.xlu0 %2608
      %2610 = vrot.lane.b32.xlu0 %v2286, 36
      %v2611 = vpop.permute.xlu0 %2610
      %2612 = vrot.lane.b32.xlu0 %v2287, 36
      %v2613 = vpop.permute.xlu0 %2612
      %2615 = vrot.lane.b32.xlu0 %v2041, 42
      %v2616 = vpop.permute.xlu0 %2615
      %2617 = vrot.lane.b32.xlu0 %v2042, 42
      %v2618 = vpop.permute.xlu0 %2617
      %2619 = vrot.lane.b32.xlu0 %v2043, 42
      %v2620 = vpop.permute.xlu0 %2619
      %2621 = vrot.lane.b32.xlu0 %v2044, 42
      %v2622 = vpop.permute.xlu0 %2621
      %2623 = vrot.lane.b32.xlu0 %v2045, 42
      %v2624 = vpop.permute.xlu0 %2623
      %2625 = vrot.lane.b32.xlu0 %v2046, 42
      %v2626 = vpop.permute.xlu0 %2625
      %2627 = vrot.lane.b32.xlu0 %v2047, 42
      %v2628 = vpop.permute.xlu0 %2627
      %2629 = vrot.lane.b32.xlu0 %v2048, 42
      %v2630 = vpop.permute.xlu0 %2629
      %2631 = vrot.lane.b32.xlu0 %v2049, 42
      %v2632 = vpop.permute.xlu0 %2631
      %2633 = vrot.lane.b32.xlu0 %v2050, 42
      %v2634 = vpop.permute.xlu0 %2633
      %2635 = vrot.lane.b32.xlu0 %v2051, 42
      %v2636 = vpop.permute.xlu0 %2635
      %2637 = vrot.lane.b32.xlu0 %v2052, 42
      %v2638 = vpop.permute.xlu0 %2637
      %2639 = vrot.lane.b32.xlu0 %v2053, 42
      %v2640 = vpop.permute.xlu0 %2639
      %2641 = vrot.lane.b32.xlu0 %v2054, 42
      %v2642 = vpop.permute.xlu0 %2641
      %2643 = vrot.lane.b32.xlu0 %v2187, 42
      %v2644 = vpop.permute.xlu0 %2643
      %2645 = vrot.lane.b32.xlu0 %v2290, 42
      %v2646 = vpop.permute.xlu0 %2645
      %2663 = vrot.lane.b32.xlu0 %v2325, 48
      %v2664 = vpop.permute.xlu0 %2663
      %2665 = vrot.lane.b32.xlu0 %v2326, 48
      %v2666 = vpop.permute.xlu0 %2665
      %2667 = vrot.lane.b32.xlu0 %v2327, 48
      %v2668 = vpop.permute.xlu0 %2667
      %2669 = vrot.lane.b32.xlu0 %v2328, 48
      %v2670 = vpop.permute.xlu0 %2669
      %2671 = vrot.lane.b32.xlu0 %v2329, 48
      %v2672 = vpop.permute.xlu0 %2671
      %2673 = vrot.lane.b32.xlu0 %v2330, 48
      %v2674 = vpop.permute.xlu0 %2673
      %2675 = vrot.lane.b32.xlu0 %v2331, 48
      %v2676 = vpop.permute.xlu0 %2675
      %2677 = vrot.lane.b32.xlu0 %v2332, 48
      %v2678 = vpop.permute.xlu0 %2677
      %2679 = vrot.lane.b32.xlu0 %v2333, 48
      %v2680 = vpop.permute.xlu0 %2679
      %2681 = vrot.lane.b32.xlu0 %v2334, 48
      %v2682 = vpop.permute.xlu0 %2681
      %2683 = vrot.lane.b32.xlu0 %v2335, 48
      %v2684 = vpop.permute.xlu0 %2683
      %2685 = vrot.lane.b32.xlu0 %v2336, 48
      %v2686 = vpop.permute.xlu0 %2685
      %2687 = vrot.lane.b32.xlu0 %v2337, 48
      %v2688 = vpop.permute.xlu0 %2687
      %2689 = vrot.lane.b32.xlu0 %v2338, 48
      %v2690 = vpop.permute.xlu0 %2689
      %2691 = vrot.lane.b32.xlu0 %v2339, 48
      %v2692 = vpop.permute.xlu0 %2691
      %2693 = vrot.lane.b32.xlu0 %v2340, 48
      %v2694 = vpop.permute.xlu0 %2693
      %v2697 = vsel %vm1894, %v1991, %v2358
      %v2700 = vsel %vm1894, %v1992, %v2360
      %v2703 = vsel %vm1894, %v1993, %v2362
      %v2706 = vsel %vm1894, %v1994, %v2364
      %v2709 = vsel %vm1894, %v1995, %v2366
      %v2712 = vsel %vm1894, %v1996, %v2368
      %v2715 = vsel %vm1894, %v1997, %v2370
      %v2718 = vsel %vm1894, %v1998, %v2372
      %v2721 = vsel %vm1894, %v1999, %v2374
      %v2724 = vsel %vm1894, %v2000, %v2376
      %v2727 = vsel %vm1894, %v2001, %v2378
      %v2730 = vsel %vm1894, %v2002, %v2380
      %v2733 = vsel %vm1894, %v2003, %v2382
      %v2736 = vsel %vm1894, %v2004, %v2384
      %v2739 = vsel %vm1894, %v2005, %v2386
      %v2742 = vsel %vm1894, %v2006, %v2388
      %vm2743 = vcmask 97280
      %v2745 = vsel %vm2743, %v2697, %v2406
      %v2747 = vsel %vm2743, %v2700, %v2408
      %v2749 = vsel %vm2743, %v2703, %v2410
      %v2751 = vsel %vm2743, %v2706, %v2412
      %v2753 = vsel %vm2743, %v2709, %v2414
      %v2755 = vsel %vm2743, %v2712, %v2416
      %v2757 = vsel %vm2743, %v2715, %v2418
      %v2759 = vsel %vm2743, %v2718, %v2420
      %v2761 = vsel %vm2743, %v2721, %v2422
      %v2763 = vsel %vm2743, %v2724, %v2424
      %v2765 = vsel %vm2743, %v2727, %v2426
      %v2767 = vsel %vm2743, %v2730, %v2428
      %v2769 = vsel %vm2743, %v2733, %v2430
      %v2771 = vsel %vm2743, %v2736, %v2432
      %v2773 = vsel %vm2743, %v2739, %v2434
      %v2775 = vsel %vm2743, %v2742, %v2436
      %vm2776 = vcmask 146432
      %v2778 = vsel %vm2776, %v2745, %v2454
      %v2780 = vsel %vm2776, %v2747, %v2456
      %v2782 = vsel %vm2776, %v2749, %v2458
      %v2784 = vsel %vm2776, %v2751, %v2460
      %v2786 = vsel %vm2776, %v2753, %v2462
      %v2788 = vsel %vm2776, %v2755, %v2464
      %v2790 = vsel %vm2776, %v2757, %v2466
      %v2792 = vsel %vm2776, %v2759, %v2468
      %v2794 = vsel %vm2776, %v2761, %v2470
      %v2796 = vsel %vm2776, %v2763, %v2472
      %v2798 = vsel %vm2776, %v2765, %v2474
      %v2800 = vsel %vm2776, %v2767, %v2476
      %v2802 = vsel %vm2776, %v2769, %v2478
      %v2804 = vsel %vm2776, %v2771, %v2480
      %v2806 = vsel %vm2776, %v2773, %v2482
      %v2808 = vsel %vm2776, %v2775, %v2484
      %vm2809 = vcmask 195584
      %v2811 = vsel %vm2809, %v2778, %v2487
      %v2813 = vsel %vm2809, %v2780, %v2489
      %v2815 = vsel %vm2809, %v2782, %v2491
      %v2817 = vsel %vm2809, %v2784, %v2493
      %v2819 = vsel %vm2809, %v2786, %v2495
      %v2821 = vsel %vm2809, %v2788, %v2497
      %v2823 = vsel %vm2809, %v2790, %v2499
      %v2825 = vsel %vm2809, %v2792, %v2501
      %v2827 = vsel %vm2809, %v2794, %v2503
      %v2829 = vsel %vm2809, %v2796, %v2505
      %v2831 = vsel %vm2809, %v2798, %v2507
      %v2833 = vsel %vm2809, %v2800, %v2509
      %v2835 = vsel %vm2809, %v2802, %v2511
      %v2837 = vsel %vm2809, %v2804, %v2513
      %v2839 = vsel %vm2809, %v2806, %v2515
      %v2841 = vsel %vm2809, %v2808, %v2517
      %vm2842 = vcmask 244736
      %v2844 = vsel %vm2842, %v2811, %v2535
      %v2846 = vsel %vm2842, %v2813, %v2537
      %v2848 = vsel %vm2842, %v2815, %v2539
      %v2850 = vsel %vm2842, %v2817, %v2541
      %v2852 = vsel %vm2842, %v2819, %v2543
      %v2854 = vsel %vm2842, %v2821, %v2545
      %v2856 = vsel %vm2842, %v2823, %v2547
      %v2858 = vsel %vm2842, %v2825, %v2549
      %v2860 = vsel %vm2842, %v2827, %v2551
      %v2862 = vsel %vm2842, %v2829, %v2553
      %v2864 = vsel %vm2842, %v2831, %v2555
      %v2866 = vsel %vm2842, %v2833, %v2557
      %v2868 = vsel %vm2842, %v2835, %v2559
      %v2870 = vsel %vm2842, %v2837, %v2561
      %v2872 = vsel %vm2842, %v2839, %v2563
      %v2874 = vsel %vm2842, %v2841, %v2565
      %vm2875 = vcmask 293888
      %v2877 = vsel %vm2875, %v2844, %v2583
      %v2879 = vsel %vm2875, %v2846, %v2585
      %v2881 = vsel %vm2875, %v2848, %v2587
      %v2883 = vsel %vm2875, %v2850, %v2589
      %v2885 = vsel %vm2875, %v2852, %v2591
      %v2887 = vsel %vm2875, %v2854, %v2593
      %v2889 = vsel %vm2875, %v2856, %v2595
      %v2891 = vsel %vm2875, %v2858, %v2597
      %v2893 = vsel %vm2875, %v2860, %v2599
      %v2895 = vsel %vm2875, %v2862, %v2601
      %v2897 = vsel %vm2875, %v2864, %v2603
      %v2899 = vsel %vm2875, %v2866, %v2605
      %v2901 = vsel %vm2875, %v2868, %v2607
      %v2903 = vsel %vm2875, %v2870, %v2609
      %v2905 = vsel %vm2875, %v2872, %v2611
      %v2907 = vsel %vm2875, %v2874, %v2613
      %vm2908 = vcmask 343040
      %v2910 = vsel %vm2908, %v2877, %v2616
      %v2912 = vsel %vm2908, %v2879, %v2618
      %v2914 = vsel %vm2908, %v2881, %v2620
      %v2916 = vsel %vm2908, %v2883, %v2622
      %v2918 = vsel %vm2908, %v2885, %v2624
      %v2920 = vsel %vm2908, %v2887, %v2626
      %v2922 = vsel %vm2908, %v2889, %v2628
      %v2924 = vsel %vm2908, %v2891, %v2630
      %v2926 = vsel %vm2908, %v2893, %v2632
      %v2928 = vsel %vm2908, %v2895, %v2634
      %v2930 = vsel %vm2908, %v2897, %v2636
      %v2932 = vsel %vm2908, %v2899, %v2638
      %v2934 = vsel %vm2908, %v2901, %v2640
      %v2936 = vsel %vm2908, %v2903, %v2642
      %v2938 = vsel %vm2908, %v2905, %v2644
      %v2940 = vsel %vm2908, %v2907, %v2646
      %vm2941 = vcmask 392192
      %v2943 = vsel %vm2941, %v2910, %v2664
      %v2945 = vsel %vm2941, %v2912, %v2666
      %v2947 = vsel %vm2941, %v2914, %v2668
      %v2949 = vsel %vm2941, %v2916, %v2670
      %v2951 = vsel %vm2941, %v2918, %v2672
      %v2953 = vsel %vm2941, %v2920, %v2674
      %v2955 = vsel %vm2941, %v2922, %v2676
      %v2957 = vsel %vm2941, %v2924, %v2678
      %v2959 = vsel %vm2941, %v2926, %v2680
      %v2961 = vsel %vm2941, %v2928, %v2682
      %v2963 = vsel %vm2941, %v2930, %v2684
      %v2965 = vsel %vm2941, %v2932, %v2686
      %v2967 = vsel %vm2941, %v2934, %v2688
      %v2969 = vsel %vm2941, %v2936, %v2690
      %v2971 = vsel %vm2941, %v2938, %v2692
      %v2973 = vsel %vm2941, %v2940, %v2694
      %v2974 = vld [vmem:[%s7] sm:$0xf]
      %v2975 = vld [vmem:[%s7 + $0x4] sm:$0xf]
      %v2976 = vld [vmem:[%s7 + $0x8] sm:$0xf]
      %v2977 = vld [vmem:[%s7 + $0xc] sm:$0xf]
      %v2978 = vld [vmem:[%s7 + $0x10] sm:$0xf]
      %v2979 = vld [vmem:[%s7 + $0x14] sm:$0xf]
      %v2980 = vld [vmem:[%s7 + $0x18] sm:$0x7]
      %v2981 = vld [vmem:[%s8] sm:$0x1]
      %v2983 = vlaneseq
      %v2984 = vshrl.u32 %v2983, 7
      %v2985 = vsub.s32 0, %v2984
      %v2986 = vrot.slane %v2981, %v2985
      %v2995 = vunpack.c.l.b16 %v2974
      %v2996 = vunpack.c.l.b16 %v2975
      %v2997 = vunpack.c.l.b16 %v2976
      %v2998 = vunpack.c.l.b16 %v2977
      %v2999 = vunpack.c.l.b16 %v2978
      %v3000 = vunpack.c.l.b16 %v2979
      %v3001 = vunpack.c.l.b16 %v2980
      %v3002 = vpack.c.b16 %v2996, %v2995
      %v3003 = vpack.c.b16 %v2998, %v2997
      %v3004 = vpack.c.b16 %v3000, %v2999
      %v3005 = vpack.c.b16 %v3001, %v3001
      %vm3009 = vcmask 441344
      %v3010 = vsel %vm3009, %v2943, 0
      %v3012 = vsel %vm3009, %v2945, 0
      %v3014 = vsel %vm3009, %v2947, 0
      %v3016 = vsel %vm3009, %v2949, 0
      %v3018 = vsel %vm3009, %v2951, 0
      %v3020 = vsel %vm3009, %v2953, 0
      %v3022 = vsel %vm3009, %v2955, 0
      %v3024 = vsel %vm3009, %v2957, 0
      %v3026 = vsel %vm3009, %v2959, 0
      %v3028 = vsel %vm3009, %v2961, 0
      %v3030 = vsel %vm3009, %v2963, 0
      %v3032 = vsel %vm3009, %v2965, 0
      %v3034 = vsel %vm3009, %v2967, 0
      %v3036 = vsel %vm3009, %v2969, 0
      %v3038 = vsel %vm3009, %v2971, 0
      %v3040 = vsel %vm3009, %v2973, 0
      %vm3042 = vcmask 1042432
      %v3044 = vsel %vm3042, %v3005, 0
      %3046 = vmatprep.subr.bf16.mxu0 0
      %3047 = vmatpush1.bf16.msra.mxu0 %v3002
      %3048 = vmatprep.subr.bf16.mxu0 0
      %3049 = vmatpush1.bf16.msra.mxu0 %v3003
      %3050 = vmatprep.subr.bf16.mxu0 0
      %3051 = vmatpush1.bf16.msra.mxu0 %v3004
      %3052 = vmatprep.subr.bf16.mxu0 0
      %3053 = vmatpush1.bf16.msra.mxu0 %v3044
      %3054 = vmatprep.subr.bf16.mxu0 0
      %3055 = vmatpush1.bf16.msra.mxu0 0
      %3056 = vmatprep.subr.bf16.mxu0 0
      %3057 = vmatpush1.bf16.msra.mxu0 0
      %3058 = vmatprep.subr.bf16.mxu0 0
      %3059 = vmatpush1.bf16.msra.mxu0 0
      %3060 = vmatprep.subr.bf16.mxu0 0
      %3061 = vmatpush1.bf16.msra.mxu0 0
      %3062 = vmatprep.subr.bf16.mxu0 0
      %3063 = vmatpush1.bf16.msra.mxu0 0
      %3064 = vmatprep.subr.bf16.mxu0 0
      %3065 = vmatpush1.bf16.msra.mxu0 0
      %3066 = vmatprep.subr.bf16.mxu0 0
      %3067 = vmatpush1.bf16.msra.mxu0 0
      %3068 = vmatprep.subr.bf16.mxu0 0
      %3069 = vmatpush1.bf16.msra.mxu0 0
      %3070 = vmatprep.subr.bf16.mxu0 0
      %3071 = vmatpush1.bf16.msra.mxu0 0
      %3072 = vmatprep.subr.bf16.mxu0 0
      %3073 = vmatpush1.bf16.msra.mxu0 0
      %3074 = vmatprep.subr.bf16.mxu0 0
      %3075 = vmatpush1.bf16.msra.mxu0 0
      %3076 = vmatprep.subr.bf16.mxu0 0
      %3077 = vmatpush1.bf16.msra.mxu0 0
      %3078 = vmatprep.mubr.bf16.mxu0 0
      %3079 = vmatmul.mubr.bf16.gmra.mrb[0].mxu0 %v3010
      %v3080 = vpop.f32.mrb[0].mxu0
      %v3081 = vadd.f32 %v2986, %v3080
      %v3082 = vpop.f32.mrb[0].mxu0
      %v3083 = vpop.f32.mrb[0].mxu0
      %v3084 = vadd.f32 %v2986, %v3083
      %v3085 = vpop.f32.mrb[0].mxu0
      %3086 = vmatprep.mubr.bf16.mxu0 0
      %3087 = vmatmul.mubr.bf16.gmra.mrb[0].mxu0 %v3012
      %v3088 = vpop.f32.mrb[0].mxu0
      %v3089 = vadd.f32 %v2986, %v3088
      %v3090 = vpop.f32.mrb[0].mxu0
      %v3091 = vpop.f32.mrb[0].mxu0
      %v3092 = vadd.f32 %v2986, %v3091
      %v3093 = vpop.f32.mrb[0].mxu0
      %3094 = vmatprep.mubr.bf16.mxu0 0
      %3095 = vmatmul.mubr.bf16.gmra.mrb[0].mxu0 %v3014
      %v3096 = vpop.f32.mrb[0].mxu0
      %v3097 = vadd.f32 %v2986, %v3096
      %v3098 = vpop.f32.mrb[0].mxu0
      %v3099 = vpop.f32.mrb[0].mxu0
      %v3100 = vadd.f32 %v2986, %v3099
      %v3101 = vpop.f32.mrb[0].mxu0
      %3102 = vmatprep.mubr.bf16.mxu0 0
      %3103 = vmatmul.mubr.bf16.gmra.mrb[0].mxu0 %v3016
      %v3104 = vpop.f32.mrb[0].mxu0
      %v3105 = vadd.f32 %v2986, %v3104
      %v3106 = vpop.f32.mrb[0].mxu0
      %v3107 = vpop.f32.mrb[0].mxu0
      %v3108 = vadd.f32 %v2986, %v3107
      %v3109 = vpop.f32.mrb[0].mxu0
      %3110 = vmatprep.mubr.bf16.mxu0 0
      %3111 = vmatmul.mubr.bf16.gmra.mrb[0].mxu0 %v3018
      %v3112 = vpop.f32.mrb[0].mxu0
      %v3113 = vadd.f32 %v2986, %v3112
      %v3114 = vpop.f32.mrb[0].mxu0
      %v3115 = vpop.f32.mrb[0].mxu0
      %v3116 = vadd.f32 %v2986, %v3115
      %v3117 = vpop.f32.mrb[0].mxu0
      %3118 = vmatprep.mubr.bf16.mxu0 0
      %3119 = vmatmul.mubr.bf16.gmra.mrb[0].mxu0 %v3020
      %v3120 = vpop.f32.mrb[0].mxu0
      %v3121 = vadd.f32 %v2986, %v3120
      %v3122 = vpop.f32.mrb[0].mxu0
      %v3123 = vpop.f32.mrb[0].mxu0
      %v3124 = vadd.f32 %v2986, %v3123
      %v3125 = vpop.f32.mrb[0].mxu0
      %3126 = vmatprep.mubr.bf16.mxu0 0
      %3127 = vmatmul.mubr.bf16.gmra.mrb[0].mxu0 %v3022
      %v3128 = vpop.f32.mrb[0].mxu0
      %v3129 = vadd.f32 %v2986, %v3128
      %v3130 = vpop.f32.mrb[0].mxu0
      %v3131 = vpop.f32.mrb[0].mxu0
      %v3132 = vadd.f32 %v2986, %v3131
      %v3133 = vpop.f32.mrb[0].mxu0
      %3134 = vmatprep.mubr.bf16.mxu0 0
      %3135 = vmatmul.mubr.bf16.gmra.mrb[0].mxu0 %v3024
      %v3136 = vpop.f32.mrb[0].mxu0
      %v3137 = vadd.f32 %v2986, %v3136
      %v3138 = vpop.f32.mrb[0].mxu0
      %v3139 = vpop.f32.mrb[0].mxu0
      %v3140 = vadd.f32 %v2986, %v3139
      %v3141 = vpop.f32.mrb[0].mxu0
      %3142 = vmatprep.mubr.bf16.mxu0 0
      %3143 = vmatmul.mubr.bf16.gmra.mrb[0].mxu0 %v3026
      %v3144 = vpop.f32.mrb[0].mxu0
      %v3145 = vadd.f32 %v2986, %v3144
      %v3146 = vpop.f32.mrb[0].mxu0
      %v3147 = vpop.f32.mrb[0].mxu0
      %v3148 = vadd.f32 %v2986, %v3147
      %v3149 = vpop.f32.mrb[0].mxu0
      %3150 = vmatprep.mubr.bf16.mxu0 0
      %3151 = vmatmul.mubr.bf16.gmra.mrb[0].mxu0 %v3028
      %v3152 = vpop.f32.mrb[0].mxu0
      %v3153 = vadd.f32 %v2986, %v3152
      %v3154 = vpop.f32.mrb[0].mxu0
      %v3155 = vpop.f32.mrb[0].mxu0
      %v3156 = vadd.f32 %v2986, %v3155
      %v3157 = vpop.f32.mrb[0].mxu0
      %3158 = vmatprep.mubr.bf16.mxu0 0
      %3159 = vmatmul.mubr.bf16.gmra.mrb[0].mxu0 %v3030
      %v3160 = vpop.f32.mrb[0].mxu0
      %v3161 = vadd.f32 %v2986, %v3160
      %v3162 = vpop.f32.mrb[0].mxu0
      %v3163 = vpop.f32.mrb[0].mxu0
      %v3164 = vadd.f32 %v2986, %v3163
      %v3165 = vpop.f32.mrb[0].mxu0
      %3166 = vmatprep.mubr.bf16.mxu0 0
      %3167 = vmatmul.mubr.bf16.gmra.mrb[0].mxu0 %v3032
      %v3168 = vpop.f32.mrb[0].mxu0
      %v3169 = vadd.f32 %v2986, %v3168
      %v3170 = vpop.f32.mrb[0].mxu0
      %v3171 = vpop.f32.mrb[0].mxu0
      %v3172 = vadd.f32 %v2986, %v3171
      %v3173 = vpop.f32.mrb[0].mxu0
      %3174 = vmatprep.mubr.bf16.mxu0 0
      %3175 = vmatmul.mubr.bf16.gmra.mrb[0].mxu0 %v3034
      %v3176 = vpop.f32.mrb[0].mxu0
      %v3177 = vadd.f32 %v2986, %v3176
      %v3178 = vpop.f32.mrb[0].mxu0
      %v3179 = vpop.f32.mrb[0].mxu0
      %v3180 = vadd.f32 %v2986, %v3179
      %v3181 = vpop.f32.mrb[0].mxu0
      %3182 = vmatprep.mubr.bf16.mxu0 0
      %3183 = vmatmul.mubr.bf16.gmra.mrb[0].mxu0 %v3036
      %v3184 = vpop.f32.mrb[0].mxu0
      %v3185 = vadd.f32 %v2986, %v3184
      %v3186 = vpop.f32.mrb[0].mxu0
      %v3187 = vpop.f32.mrb[0].mxu0
      %v3188 = vadd.f32 %v2986, %v3187
      %v3189 = vpop.f32.mrb[0].mxu0
      %3190 = vmatprep.mubr.bf16.mxu0 0
      %3191 = vmatmul.mubr.bf16.gmra.mrb[0].mxu0 %v3038
      %v3192 = vpop.f32.mrb[0].mxu0
      %v3193 = vadd.f32 %v2986, %v3192
      %v3194 = vpop.f32.mrb[0].mxu0
      %v3195 = vpop.f32.mrb[0].mxu0
      %v3196 = vadd.f32 %v2986, %v3195
      %v3197 = vpop.f32.mrb[0].mxu0
      %3198 = vmatprep.mubr.bf16.mxu0 0
      %3199 = vmatmul.mubr.bf16.gmra.mrb[0].mxu0 %v3040
      %v3200 = vpop.f32.mrb[0].mxu0
      %v3201 = vadd.f32 %v2986, %v3200
      %v3202 = vpop.f32.mrb[0].mxu0
      %v3203 = vpop.f32.mrb[0].mxu0
      %v3204 = vadd.f32 %v2986, %v3203
      %v3205 = vpop.f32.mrb[0].mxu0
      %3206 = vdwg.mxu0
      %v3207 = vmax.f32 %v3081, 0.0
      %v3208 = vmax.f32 %v3084, 0.0
      %v3209 = vmax.f32 %v3089, 0.0
      %v3210 = vmax.f32 %v3092, 0.0
      %v3211 = vmax.f32 %v3097, 0.0
      %v3212 = vmax.f32 %v3100, 0.0
      %v3213 = vmax.f32 %v3105, 0.0
      %v3214 = vmax.f32 %v3108, 0.0
      %v3215 = vmax.f32 %v3113, 0.0
      %v3216 = vmax.f32 %v3116, 0.0
      %v3217 = vmax.f32 %v3121, 0.0
      %v3218 = vmax.f32 %v3124, 0.0
      %v3219 = vmax.f32 %v3129, 0.0
      %v3220 = vmax.f32 %v3132, 0.0
      %v3221 = vmax.f32 %v3137, 0.0
      %v3222 = vmax.f32 %v3140, 0.0
      %v3223 = vmax.f32 %v3145, 0.0
      %v3224 = vmax.f32 %v3148, 0.0
      %v3225 = vmax.f32 %v3153, 0.0
      %v3226 = vmax.f32 %v3156, 0.0
      %v3227 = vmax.f32 %v3161, 0.0
      %v3228 = vmax.f32 %v3164, 0.0
      %v3229 = vmax.f32 %v3169, 0.0
      %v3230 = vmax.f32 %v3172, 0.0
      %v3231 = vmax.f32 %v3177, 0.0
      %v3232 = vmax.f32 %v3180, 0.0
      %v3233 = vmax.f32 %v3185, 0.0
      %v3234 = vmax.f32 %v3188, 0.0
      %v3235 = vmax.f32 %v3193, 0.0
      %v3236 = vmax.f32 %v3196, 0.0
      %v3237 = vmax.f32 %v3201, 0.0
      %v3238 = vmax.f32 %v3204, 0.0
      %v3239 = vpack.c.bf16 %v3208, %v3207
      %v3240 = vpack.c.bf16 %v3210, %v3209
      %v3241 = vpack.c.bf16 %v3212, %v3211
      %v3242 = vpack.c.bf16 %v3214, %v3213
      %v3243 = vpack.c.bf16 %v3216, %v3215
      %v3244 = vpack.c.bf16 %v3218, %v3217
      %v3245 = vpack.c.bf16 %v3220, %v3219
      %v3246 = vpack.c.bf16 %v3222, %v3221
      %v3247 = vpack.c.bf16 %v3224, %v3223
      %v3248 = vpack.c.bf16 %v3226, %v3225
      %v3249 = vpack.c.bf16 %v3228, %v3227
      %v3250 = vpack.c.bf16 %v3230, %v3229
      %v3251 = vpack.c.bf16 %v3232, %v3231
      %v3252 = vpack.c.bf16 %v3234, %v3233
      %v3253 = vpack.c.bf16 %v3236, %v3235
      %v3254 = vpack.c.bf16 %v3238, %v3237
      %v3255 = vld [vmem:[%s14] sm:$0xf]
      %v3257 = vsel %vm606, %v3239, 0
      %v3260 = vsel %vm606, %v3240, 0
      %v3263 = vsel %vm606, %v3241, 0
      %v3266 = vsel %vm606, %v3242, 0
      %v3269 = vsel %vm606, %v3243, 0
      %v3272 = vsel %vm606, %v3244, 0
      %v3275 = vsel %vm606, %v3245, 0
      %v3278 = vsel %vm606, %v3246, 0
      %v3281 = vsel %vm606, %v3247, 0
      %v3284 = vsel %vm606, %v3248, 0
      %v3287 = vsel %vm606, %v3249, 0
      %v3290 = vsel %vm606, %v3250, 0
      %v3293 = vsel %vm606, %v3251, 0
      %v3296 = vsel %vm606, %v3252, 0
      %v3299 = vsel %vm606, %v3253, 0
      %v3302 = vsel %vm606, %v3254, 0
      %v3305 = vsel %vm655, %v3255, 0
      %3307 = vmatprep.subr.bf16.mxu0 0
      %3308 = vmatpush1.bf16.msra.mxu0 %v3305
      %3309 = vmatprep.subr.bf16.mxu0 0
      %3310 = vmatpush1.bf16.msra.mxu0 0
      %3311 = vmatprep.subr.bf16.mxu0 0
      %3312 = vmatpush1.bf16.msra.mxu0 0
      %3313 = vmatprep.subr.bf16.mxu0 0
      %3314 = vmatpush1.bf16.msra.mxu0 0
      %3315 = vmatprep.subr.bf16.mxu0 0
      %3316 = vmatpush1.bf16.msra.mxu0 0
      %3317 = vmatprep.subr.bf16.mxu0 0
      %3318 = vmatpush1.bf16.msra.mxu0 0
      %3319 = vmatprep.subr.bf16.mxu0 0
      %3320 = vmatpush1.bf16.msra.mxu0 0
      %3321 = vmatprep.subr.bf16.mxu0 0
      %3322 = vmatpush1.bf16.msra.mxu0 0
      %3323 = vmatprep.subr.bf16.mxu0 0
      %3324 = vmatpush1.bf16.msra.mxu0 0
      %3325 = vmatprep.subr.bf16.mxu0 0
      %3326 = vmatpush1.bf16.msra.mxu0 0
      %3327 = vmatprep.subr.bf16.mxu0 0
      %3328 = vmatpush1.bf16.msra.mxu0 0
      %3329 = vmatprep.subr.bf16.mxu0 0
      %3330 = vmatpush1.bf16.msra.mxu0 0
      %3331 = vmatprep.subr.bf16.mxu0 0
      %3332 = vmatpush1.bf16.msra.mxu0 0
      %3333 = vmatprep.subr.bf16.mxu0 0
      %3334 = vmatpush1.bf16.msra.mxu0 0
      %3335 = vmatprep.subr.bf16.mxu0 0
      %3336 = vmatpush1.bf16.msra.mxu0 0
      %3337 = vmatprep.subr.bf16.mxu0 0
      %3338 = vmatpush1.bf16.msra.mxu0 0
      %3339 = vmatprep.mubr.bf16.mxu0 0
      %3340 = vmatmul.mubr.bf16.gmra.mrb[0].mxu0 %v3257
      %v3341 = vpop.f32.mrb[0].mxu0
      %v3342 = vadd.f32 0.0, %v3341
      %v3343 = vpop.f32.mrb[0].mxu0
      %v3344 = vpop.f32.mrb[0].mxu0
      %v3345 = vadd.f32 0.0, %v3344
      %v3346 = vpop.f32.mrb[0].mxu0
      %3347 = vmatprep.mubr.bf16.mxu0 0
      %3348 = vmatmul.mubr.bf16.gmra.mrb[0].mxu0 %v3260
      %v3349 = vpop.f32.mrb[0].mxu0
      %v3350 = vadd.f32 0.0, %v3349
      %v3351 = vpop.f32.mrb[0].mxu0
      %v3352 = vpop.f32.mrb[0].mxu0
      %v3353 = vadd.f32 0.0, %v3352
      %v3354 = vpop.f32.mrb[0].mxu0
      %3355 = vmatprep.mubr.bf16.mxu0 0
      %3356 = vmatmul.mubr.bf16.gmra.mrb[0].mxu0 %v3263
      %v3357 = vpop.f32.mrb[0].mxu0
      %v3358 = vadd.f32 0.0, %v3357
      %v3359 = vpop.f32.mrb[0].mxu0
      %v3360 = vpop.f32.mrb[0].mxu0
      %v3361 = vadd.f32 0.0, %v3360
      %v3362 = vpop.f32.mrb[0].mxu0
      %3363 = vmatprep.mubr.bf16.mxu0 0
      %3364 = vmatmul.mubr.bf16.gmra.mrb[0].mxu0 %v3266
      %v3365 = vpop.f32.mrb[0].mxu0
      %v3366 = vadd.f32 0.0, %v3365
      %v3367 = vpop.f32.mrb[0].mxu0
      %v3368 = vpop.f32.mrb[0].mxu0
      %v3369 = vadd.f32 0.0, %v3368
      %v3370 = vpop.f32.mrb[0].mxu0
      %3371 = vmatprep.mubr.bf16.mxu0 0
      %3372 = vmatmul.mubr.bf16.gmra.mrb[0].mxu0 %v3269
      %v3373 = vpop.f32.mrb[0].mxu0
      %v3374 = vadd.f32 0.0, %v3373
      %v3375 = vpop.f32.mrb[0].mxu0
      %v3376 = vpop.f32.mrb[0].mxu0
      %v3377 = vadd.f32 0.0, %v3376
      %v3378 = vpop.f32.mrb[0].mxu0
      %3379 = vmatprep.mubr.bf16.mxu0 0
      %3380 = vmatmul.mubr.bf16.gmra.mrb[0].mxu0 %v3272
      %v3381 = vpop.f32.mrb[0].mxu0
      %v3382 = vadd.f32 0.0, %v3381
      %v3383 = vpop.f32.mrb[0].mxu0
      %v3384 = vpop.f32.mrb[0].mxu0
      %v3385 = vadd.f32 0.0, %v3384
      %v3386 = vpop.f32.mrb[0].mxu0
      %3387 = vmatprep.mubr.bf16.mxu0 0
      %3388 = vmatmul.mubr.bf16.gmra.mrb[0].mxu0 %v3275
      %v3389 = vpop.f32.mrb[0].mxu0
      %v3390 = vadd.f32 0.0, %v3389
      %v3391 = vpop.f32.mrb[0].mxu0
      %v3392 = vpop.f32.mrb[0].mxu0
      %v3393 = vadd.f32 0.0, %v3392
      %v3394 = vpop.f32.mrb[0].mxu0
      %3395 = vmatprep.mubr.bf16.mxu0 0
      %3396 = vmatmul.mubr.bf16.gmra.mrb[0].mxu0 %v3278
      %v3397 = vpop.f32.mrb[0].mxu0
      %v3398 = vadd.f32 0.0, %v3397
      %v3399 = vpop.f32.mrb[0].mxu0
      %v3400 = vpop.f32.mrb[0].mxu0
      %v3401 = vadd.f32 0.0, %v3400
      %v3402 = vpop.f32.mrb[0].mxu0
      %3403 = vmatprep.mubr.bf16.mxu0 0
      %3404 = vmatmul.mubr.bf16.gmra.mrb[0].mxu0 %v3281
      %v3405 = vpop.f32.mrb[0].mxu0
      %v3406 = vadd.f32 0.0, %v3405
      %v3407 = vpop.f32.mrb[0].mxu0
      %v3408 = vpop.f32.mrb[0].mxu0
      %v3409 = vadd.f32 0.0, %v3408
      %v3410 = vpop.f32.mrb[0].mxu0
      %3411 = vmatprep.mubr.bf16.mxu0 0
      %3412 = vmatmul.mubr.bf16.gmra.mrb[0].mxu0 %v3284
      %v3413 = vpop.f32.mrb[0].mxu0
      %v3414 = vadd.f32 0.0, %v3413
      %v3415 = vpop.f32.mrb[0].mxu0
      %v3416 = vpop.f32.mrb[0].mxu0
      %v3417 = vadd.f32 0.0, %v3416
      %v3418 = vpop.f32.mrb[0].mxu0
      %3419 = vmatprep.mubr.bf16.mxu0 0
      %3420 = vmatmul.mubr.bf16.gmra.mrb[0].mxu0 %v3287
      %v3421 = vpop.f32.mrb[0].mxu0
      %v3422 = vadd.f32 0.0, %v3421
      %v3423 = vpop.f32.mrb[0].mxu0
      %v3424 = vpop.f32.mrb[0].mxu0
      %v3425 = vadd.f32 0.0, %v3424
      %v3426 = vpop.f32.mrb[0].mxu0
      %3427 = vmatprep.mubr.bf16.mxu0 0
      %3428 = vmatmul.mubr.bf16.gmra.mrb[0].mxu0 %v3290
      %v3429 = vpop.f32.mrb[0].mxu0
      %v3430 = vadd.f32 0.0, %v3429
      %v3431 = vpop.f32.mrb[0].mxu0
      %v3432 = vpop.f32.mrb[0].mxu0
      %v3433 = vadd.f32 0.0, %v3432
      %v3434 = vpop.f32.mrb[0].mxu0
      %3435 = vmatprep.mubr.bf16.mxu0 0
      %3436 = vmatmul.mubr.bf16.gmra.mrb[0].mxu0 %v3293
      %v3437 = vpop.f32.mrb[0].mxu0
      %v3438 = vadd.f32 0.0, %v3437
      %v3439 = vpop.f32.mrb[0].mxu0
      %v3440 = vpop.f32.mrb[0].mxu0
      %v3441 = vadd.f32 0.0, %v3440
      %v3442 = vpop.f32.mrb[0].mxu0
      %3443 = vmatprep.mubr.bf16.mxu0 0
      %3444 = vmatmul.mubr.bf16.gmra.mrb[0].mxu0 %v3296
      %v3445 = vpop.f32.mrb[0].mxu0
      %v3446 = vadd.f32 0.0, %v3445
      %v3447 = vpop.f32.mrb[0].mxu0
      %v3448 = vpop.f32.mrb[0].mxu0
      %v3449 = vadd.f32 0.0, %v3448
      %v3450 = vpop.f32.mrb[0].mxu0
      %3451 = vmatprep.mubr.bf16.mxu0 0
      %3452 = vmatmul.mubr.bf16.gmra.mrb[0].mxu0 %v3299
      %v3453 = vpop.f32.mrb[0].mxu0
      %v3454 = vadd.f32 0.0, %v3453
      %v3455 = vpop.f32.mrb[0].mxu0
      %v3456 = vpop.f32.mrb[0].mxu0
      %v3457 = vadd.f32 0.0, %v3456
      %v3458 = vpop.f32.mrb[0].mxu0
      %3459 = vmatprep.mubr.bf16.mxu0 0
      %3460 = vmatmul.mubr.bf16.gmra.mrb[0].mxu0 %v3302
      %v3461 = vpop.f32.mrb[0].mxu0
      %v3462 = vadd.f32 0.0, %v3461
      %v3463 = vpop.f32.mrb[0].mxu0
      %v3464 = vpop.f32.mrb[0].mxu0
      %v3465 = vadd.f32 0.0, %v3464
      %v3466 = vpop.f32.mrb[0].mxu0
      %3467 = vdwg.mxu0
      %v3469 = vsel %vm606, %v852, 0
      %v3472 = vsel %vm606, %v853, 0
      %v3475 = vsel %vm606, %v854, 0
      %v3478 = vsel %vm606, %v855, 0
      %v3481 = vsel %vm606, %v856, 0
      %v3484 = vsel %vm606, %v857, 0
      %v3487 = vsel %vm606, %v858, 0
      %v3490 = vsel %vm606, %v859, 0
      %v3493 = vsel %vm606, %v860, 0
      %v3496 = vsel %vm606, %v861, 0
      %v3499 = vsel %vm606, %v862, 0
      %v3502 = vsel %vm606, %v863, 0
      %v3505 = vsel %vm606, %v864, 0
      %v3508 = vsel %vm606, %v865, 0
      %v3511 = vsel %vm606, %v866, 0
      %v3514 = vsel %vm606, %v867, 0
      %v3517 = vsel %vm655, %v868, 0
      %3519 = vmatprep.subr.bf16.mxu0 0
      %3520 = vmatpush1.bf16.msra.mxu0 %v3517
      %3521 = vmatprep.subr.bf16.mxu0 0
      %3522 = vmatpush1.bf16.msra.mxu0 0
      %3523 = vmatprep.subr.bf16.mxu0 0
      %3524 = vmatpush1.bf16.msra.mxu0 0
      %3525 = vmatprep.subr.bf16.mxu0 0
      %3526 = vmatpush1.bf16.msra.mxu0 0
      %3527 = vmatprep.subr.bf16.mxu0 0
      %3528 = vmatpush1.bf16.msra.mxu0 0
      %3529 = vmatprep.subr.bf16.mxu0 0
      %3530 = vmatpush1.bf16.msra.mxu0 0
      %3531 = vmatprep.subr.bf16.mxu0 0
      %3532 = vmatpush1.bf16.msra.mxu0 0
      %3533 = vmatprep.subr.bf16.mxu0 0
      %3534 = vmatpush1.bf16.msra.mxu0 0
      %3535 = vmatprep.subr.bf16.mxu0 0
      %3536 = vmatpush1.bf16.msra.mxu0 0
      %3537 = vmatprep.subr.bf16.mxu0 0
      %3538 = vmatpush1.bf16.msra.mxu0 0
      %3539 = vmatprep.subr.bf16.mxu0 0
      %3540 = vmatpush1.bf16.msra.mxu0 0
      %3541 = vmatprep.subr.bf16.mxu0 0
      %3542 = vmatpush1.bf16.msra.mxu0 0
      %3543 = vmatprep.subr.bf16.mxu0 0
      %3544 = vmatpush1.bf16.msra.mxu0 0
      %3545 = vmatprep.subr.bf16.mxu0 0
      %3546 = vmatpush1.bf16.msra.mxu0 0
      %3547 = vmatprep.subr.bf16.mxu0 0
      %3548 = vmatpush1.bf16.msra.mxu0 0
      %3549 = vmatprep.subr.bf16.mxu0 0
      %3550 = vmatpush1.bf16.msra.mxu0 0
      %3551 = vmatprep.mubr.bf16.mxu0 0
      %3552 = vmatmul.mubr.bf16.gmra.mrb[0].mxu0 %v3469
      %v3553 = vpop.f32.mrb[0].mxu0
      %v3554 = vadd.f32 %v3342, %v3553
      %v3555 = vpop.f32.mrb[0].mxu0
      %v3556 = vpop.f32.mrb[0].mxu0
      %v3557 = vadd.f32 %v3345, %v3556
      %v3558 = vpop.f32.mrb[0].mxu0
      %3559 = vmatprep.mubr.bf16.mxu0 0
      %3560 = vmatmul.mubr.bf16.gmra.mrb[0].mxu0 %v3472
      %v3561 = vpop.f32.mrb[0].mxu0
      %v3562 = vadd.f32 %v3350, %v3561
      %v3563 = vpop.f32.mrb[0].mxu0
      %v3564 = vpop.f32.mrb[0].mxu0
      %v3565 = vadd.f32 %v3353, %v3564
      %v3566 = vpop.f32.mrb[0].mxu0
      %3567 = vmatprep.mubr.bf16.mxu0 0
      %3568 = vmatmul.mubr.bf16.gmra.mrb[0].mxu0 %v3475
      %v3569 = vpop.f32.mrb[0].mxu0
      %v3570 = vadd.f32 %v3358, %v3569
      %v3571 = vpop.f32.mrb[0].mxu0
      %v3572 = vpop.f32.mrb[0].mxu0
      %v3573 = vadd.f32 %v3361, %v3572
      %v3574 = vpop.f32.mrb[0].mxu0
      %3575 = vmatprep.mubr.bf16.mxu0 0
      %3576 = vmatmul.mubr.bf16.gmra.mrb[0].mxu0 %v3478
      %v3577 = vpop.f32.mrb[0].mxu0
      %v3578 = vadd.f32 %v3366, %v3577
      %v3579 = vpop.f32.mrb[0].mxu0
      %v3580 = vpop.f32.mrb[0].mxu0
      %v3581 = vadd.f32 %v3369, %v3580
      %v3582 = vpop.f32.mrb[0].mxu0
      %3583 = vmatprep.mubr.bf16.mxu0 0
      %3584 = vmatmul.mubr.bf16.gmra.mrb[0].mxu0 %v3481
      %v3585 = vpop.f32.mrb[0].mxu0
      %v3586 = vadd.f32 %v3374, %v3585
      %v3587 = vpop.f32.mrb[0].mxu0
      %v3588 = vpop.f32.mrb[0].mxu0
      %v3589 = vadd.f32 %v3377, %v3588
      %v3590 = vpop.f32.mrb[0].mxu0
      %3591 = vmatprep.mubr.bf16.mxu0 0
      %3592 = vmatmul.mubr.bf16.gmra.mrb[0].mxu0 %v3484
      %v3593 = vpop.f32.mrb[0].mxu0
      %v3594 = vadd.f32 %v3382, %v3593
      %v3595 = vpop.f32.mrb[0].mxu0
      %v3596 = vpop.f32.mrb[0].mxu0
      %v3597 = vadd.f32 %v3385, %v3596
      %v3598 = vpop.f32.mrb[0].mxu0
      %3599 = vmatprep.mubr.bf16.mxu0 0
      %3600 = vmatmul.mubr.bf16.gmra.mrb[0].mxu0 %v3487
      %v3601 = vpop.f32.mrb[0].mxu0
      %v3602 = vadd.f32 %v3390, %v3601
      %v3603 = vpop.f32.mrb[0].mxu0
      %v3604 = vpop.f32.mrb[0].mxu0
      %v3605 = vadd.f32 %v3393, %v3604
      %v3606 = vpop.f32.mrb[0].mxu0
      %3607 = vmatprep.mubr.bf16.mxu0 0
      %3608 = vmatmul.mubr.bf16.gmra.mrb[0].mxu0 %v3490
      %v3609 = vpop.f32.mrb[0].mxu0
      %v3610 = vadd.f32 %v3398, %v3609
      %v3611 = vpop.f32.mrb[0].mxu0
      %v3612 = vpop.f32.mrb[0].mxu0
      %v3613 = vadd.f32 %v3401, %v3612
      %v3614 = vpop.f32.mrb[0].mxu0
      %3615 = vmatprep.mubr.bf16.mxu0 0
      %3616 = vmatmul.mubr.bf16.gmra.mrb[0].mxu0 %v3493
      %v3617 = vpop.f32.mrb[0].mxu0
      %v3618 = vadd.f32 %v3406, %v3617
      %v3619 = vpop.f32.mrb[0].mxu0
      %v3620 = vpop.f32.mrb[0].mxu0
      %v3621 = vadd.f32 %v3409, %v3620
      %v3622 = vpop.f32.mrb[0].mxu0
      %3623 = vmatprep.mubr.bf16.mxu0 0
      %3624 = vmatmul.mubr.bf16.gmra.mrb[0].mxu0 %v3496
      %v3625 = vpop.f32.mrb[0].mxu0
      %v3626 = vadd.f32 %v3414, %v3625
      %v3627 = vpop.f32.mrb[0].mxu0
      %v3628 = vpop.f32.mrb[0].mxu0
      %v3629 = vadd.f32 %v3417, %v3628
      %v3630 = vpop.f32.mrb[0].mxu0
      %3631 = vmatprep.mubr.bf16.mxu0 0
      %3632 = vmatmul.mubr.bf16.gmra.mrb[0].mxu0 %v3499
      %v3633 = vpop.f32.mrb[0].mxu0
      %v3634 = vadd.f32 %v3422, %v3633
      %v3635 = vpop.f32.mrb[0].mxu0
      %v3636 = vpop.f32.mrb[0].mxu0
      %v3637 = vadd.f32 %v3425, %v3636
      %v3638 = vpop.f32.mrb[0].mxu0
      %3639 = vmatprep.mubr.bf16.mxu0 0
      %3640 = vmatmul.mubr.bf16.gmra.mrb[0].mxu0 %v3502
      %v3641 = vpop.f32.mrb[0].mxu0
      %v3642 = vadd.f32 %v3430, %v3641
      %v3643 = vpop.f32.mrb[0].mxu0
      %v3644 = vpop.f32.mrb[0].mxu0
      %v3645 = vadd.f32 %v3433, %v3644
      %v3646 = vpop.f32.mrb[0].mxu0
      %3647 = vmatprep.mubr.bf16.mxu0 0
      %3648 = vmatmul.mubr.bf16.gmra.mrb[0].mxu0 %v3505
      %v3649 = vpop.f32.mrb[0].mxu0
      %v3650 = vadd.f32 %v3438, %v3649
      %v3651 = vpop.f32.mrb[0].mxu0
      %v3652 = vpop.f32.mrb[0].mxu0
      %v3653 = vadd.f32 %v3441, %v3652
      %v3654 = vpop.f32.mrb[0].mxu0
      %3655 = vmatprep.mubr.bf16.mxu0 0
      %3656 = vmatmul.mubr.bf16.gmra.mrb[0].mxu0 %v3508
      %v3657 = vpop.f32.mrb[0].mxu0
      %v3658 = vadd.f32 %v3446, %v3657
      %v3659 = vpop.f32.mrb[0].mxu0
      %v3660 = vpop.f32.mrb[0].mxu0
      %v3661 = vadd.f32 %v3449, %v3660
      %v3662 = vpop.f32.mrb[0].mxu0
      %3663 = vmatprep.mubr.bf16.mxu0 0
      %3664 = vmatmul.mubr.bf16.gmra.mrb[0].mxu0 %v3511
      %v3665 = vpop.f32.mrb[0].mxu0
      %v3666 = vadd.f32 %v3454, %v3665
      %v3667 = vpop.f32.mrb[0].mxu0
      %v3668 = vpop.f32.mrb[0].mxu0
      %v3669 = vadd.f32 %v3457, %v3668
      %v3670 = vpop.f32.mrb[0].mxu0
      %3671 = vmatprep.mubr.bf16.mxu0 0
      %3672 = vmatmul.mubr.bf16.gmra.mrb[0].mxu0 %v3514
      %v3673 = vpop.f32.mrb[0].mxu0
      %v3674 = vadd.f32 %v3462, %v3673
      %v3675 = vpop.f32.mrb[0].mxu0
      %v3676 = vpop.f32.mrb[0].mxu0
      %v3677 = vadd.f32 %v3465, %v3676
      %v3678 = vpop.f32.mrb[0].mxu0
      %3679 = vdwg.mxu0
      %3680 = vst.msk [vmem:[#allocation2 + $0x20] sm:$0xff] %vm1894, %v1245
      %3681 = vst.msk [vmem:[#allocation2 + $0x28] sm:$0xff] %vm1894, %v1246
      %3682 = vst.msk [vmem:[#allocation2 + $0x30] sm:$0xff] %vm1894, %v1247
      %3683 = vst.msk [vmem:[#allocation2 + $0x38] sm:$0xff] %vm1894, %v1248
      %3684 = vst.msk [vmem:[#allocation2 + $0x40] sm:$0xff] %vm1894, %v1249
      %3685 = vst.msk [vmem:[#allocation2 + $0x48] sm:$0xff] %vm1894, %v1250
      %3686 = vst.msk [vmem:[#allocation2 + $0x50] sm:$0xff] %vm1894, %v1251
      %3687 = vst.msk [vmem:[#allocation2 + $0x58] sm:$0xff] %vm1894, %v1252
      %3688 = vst.msk [vmem:[#allocation2 + $0x60] sm:$0xff] %vm1894, %v1253
      %3689 = vst.msk [vmem:[#allocation2 + $0x68] sm:$0xff] %vm1894, %v1254
      %3690 = vst.msk [vmem:[#allocation2 + $0x70] sm:$0xff] %vm1894, %v1255
      %3691 = vst.msk [vmem:[#allocation2 + $0x78] sm:$0xff] %vm1894, %v1256
      %3692 = vst.msk [vmem:[#allocation2 + $0x80] sm:$0xff] %vm1894, %v1257
      %3693 = vst.msk [vmem:[#allocation2 + $0x88] sm:$0xff] %vm1894, %v1258
      %3694 = vst.msk [vmem:[#allocation2 + $0x90] sm:$0xff] %vm1894, %v1259
      %3695 = vst.msk [vmem:[#allocation2 + $0x98] sm:$0xff] %vm1894, %v1260
      %3696 = vst.msk [vmem:[#allocation2 + $0xa0] sm:$0xff] %vm1894, %v1261
      %3697 = vst.msk [vmem:[#allocation2 + $0xa8] sm:$0xff] %vm1894, %v1262
      %3698 = vst.msk [vmem:[#allocation2 + $0xb0] sm:$0xff] %vm1894, %v1263
      %3699 = vst.msk [vmem:[#allocation2 + $0xb8] sm:$0xff] %vm1894, %v1264
      %3700 = vst.msk [vmem:[#allocation2 + $0xc0] sm:$0xff] %vm1894, %v1265
      %3701 = vst.msk [vmem:[#allocation2 + $0xc8] sm:$0xff] %vm1894, %v1266
      %3702 = vst.msk [vmem:[#allocation2 + $0xd0] sm:$0xff] %vm1894, %v1267
      %3703 = vst.msk [vmem:[#allocation2 + $0xd8] sm:$0xff] %vm1894, %v1268
      %3704 = vst.msk [vmem:[#allocation2 + $0xe0] sm:$0xff] %vm1894, %v1269
      %3705 = vst.msk [vmem:[#allocation2 + $0xe8] sm:$0xff] %vm1894, %v1270
      %3706 = vst.msk [vmem:[#allocation2 + $0xf0] sm:$0xff] %vm1894, %v1271
      %3707 = vst.msk [vmem:[#allocation2 + $0xf8] sm:$0xff] %vm1894, %v1272
      %3708 = vst.msk [vmem:[#allocation2 + $0x100] sm:$0xff] %vm1894, %v1273
      %3709 = vst.msk [vmem:[#allocation2 + $0x108] sm:$0xff] %vm1894, %v1274
      %3710 = vst.msk [vmem:[#allocation2 + $0x110] sm:$0xff] %vm1894, %v1275
      %3711 = vst.msk [vmem:[#allocation2 + $0x118] sm:$0xff] %vm1894, %v1276
      %v3712 = vld [vmem:[#allocation2 + $0xf] sm:$0xff]
      %v3713 = vld [vmem:[#allocation2 + $0x17] sm:$0xff]
      %v3714 = vld [vmem:[#allocation2 + $0x1f] sm:$0xff]
      %v3715 = vld [vmem:[#allocation2 + $0x27] sm:$0xff]
      %v3716 = vld [vmem:[#allocation2 + $0x2f] sm:$0xff]
      %v3717 = vld [vmem:[#allocation2 + $0x37] sm:$0xff]
      %v3718 = vld [vmem:[#allocation2 + $0x3f] sm:$0xff]
      %v3719 = vld [vmem:[#allocation2 + $0x47] sm:$0xff]
      %v3720 = vld [vmem:[#allocation2 + $0x4f] sm:$0xff]
      %v3721 = vld [vmem:[#allocation2 + $0x57] sm:$0xff]
      %v3722 = vld [vmem:[#allocation2 + $0x5f] sm:$0xff]
      %v3723 = vld [vmem:[#allocation2 + $0x67] sm:$0xff]
      %v3724 = vld [vmem:[#allocation2 + $0x6f] sm:$0xff]
      %v3725 = vld [vmem:[#allocation2 + $0x77] sm:$0xff]
      %v3726 = vld [vmem:[#allocation2 + $0x7f] sm:$0xff]
      %v3727 = vld [vmem:[#allocation2 + $0x87] sm:$0xff]
      %v3728 = vld [vmem:[#allocation2 + $0x8f] sm:$0xff]
      %v3729 = vld [vmem:[#allocation2 + $0x97] sm:$0xff]
      %v3730 = vld [vmem:[#allocation2 + $0x9f] sm:$0xff]
      %v3731 = vld [vmem:[#allocation2 + $0xa7] sm:$0xff]
      %v3732 = vld [vmem:[#allocation2 + $0xaf] sm:$0xff]
      %v3733 = vld [vmem:[#allocation2 + $0xb7] sm:$0xff]
      %v3734 = vld [vmem:[#allocation2 + $0xbf] sm:$0xff]
      %v3735 = vld [vmem:[#allocation2 + $0xc7] sm:$0xff]
      %v3736 = vld [vmem:[#allocation2 + $0xcf] sm:$0xff]
      %v3737 = vld [vmem:[#allocation2 + $0xd7] sm:$0xff]
      %v3738 = vld [vmem:[#allocation2 + $0xdf] sm:$0xff]
      %v3739 = vld [vmem:[#allocation2 + $0xe7] sm:$0xff]
      %v3740 = vld [vmem:[#allocation2 + $0xef] sm:$0xff]
      %v3741 = vld [vmem:[#allocation2 + $0xf7] sm:$0xff]
      %v3742 = vld [vmem:[#allocation2 + $0xff] sm:$0xff]
      %v3743 = vld [vmem:[#allocation2 + $0x107] sm:$0xff]
      %v3744 = vmul.f32 %v3712, %v1758
      %v3745 = vmul.f32 %v3713, %v1759
      %v3746 = vmul.f32 %v3714, %v1760
      %v3747 = vmul.f32 %v3715, %v1761
      %v3748 = vmul.f32 %v3716, %v1762
      %v3749 = vmul.f32 %v3717, %v1763
      %v3750 = vmul.f32 %v3718, %v1764
      %v3751 = vmul.f32 %v3719, %v1765
      %v3752 = vmul.f32 %v3720, %v1766
      %v3753 = vmul.f32 %v3721, %v1767
      %v3754 = vmul.f32 %v3722, %v1768
      %v3755 = vmul.f32 %v3723, %v1769
      %v3756 = vmul.f32 %v3724, %v1770
      %v3757 = vmul.f32 %v3725, %v1771
      %v3758 = vmul.f32 %v3726, %v1772
      %v3759 = vmul.f32 %v3727, %v1773
      %v3760 = vmul.f32 %v3728, %v1774
      %v3761 = vmul.f32 %v3729, %v1775
      %v3762 = vmul.f32 %v3730, %v1776
      %v3763 = vmul.f32 %v3731, %v1777
      %v3764 = vmul.f32 %v3732, %v1778
      %v3765 = vmul.f32 %v3733, %v1779
      %v3766 = vmul.f32 %v3734, %v1780
      %v3767 = vmul.f32 %v3735, %v1781
      %v3768 = vmul.f32 %v3736, %v1782
      %v3769 = vmul.f32 %v3737, %v1783
      %v3770 = vmul.f32 %v3738, %v1784
      %v3771 = vmul.f32 %v3739, %v1785
      %v3772 = vmul.f32 %v3740, %v1786
      %v3773 = vmul.f32 %v3741, %v1787
      %v3774 = vmul.f32 %v3742, %v1788
      %v3775 = vmul.f32 %v3743, %v1789
      %v3776 = vpack.c.bf16 %v3745, %v3744
      %v3777 = vpack.c.bf16 %v3747, %v3746
      %v3778 = vpack.c.bf16 %v3749, %v3748
      %v3779 = vpack.c.bf16 %v3751, %v3750
      %v3780 = vpack.c.bf16 %v3753, %v3752
      %v3781 = vpack.c.bf16 %v3755, %v3754
      %v3782 = vpack.c.bf16 %v3757, %v3756
      %v3783 = vpack.c.bf16 %v3759, %v3758
      %v3784 = vpack.c.bf16 %v3761, %v3760
      %v3785 = vpack.c.bf16 %v3763, %v3762
      %v3786 = vpack.c.bf16 %v3765, %v3764
      %v3787 = vpack.c.bf16 %v3767, %v3766
      %v3788 = vpack.c.bf16 %v3769, %v3768
      %v3789 = vpack.c.bf16 %v3771, %v3770
      %v3790 = vpack.c.bf16 %v3773, %v3772
      %v3791 = vpack.c.bf16 %v3775, %v3774
      %v3792 = vld [vmem:[#allocation2 + $0x10] sm:$0xff]
      %v3793 = vld [vmem:[#allocation2 + $0x18] sm:$0xff]
      %v3794 = vld [vmem:[#allocation2 + $0x20] sm:$0xff]
      %v3795 = vld [vmem:[#allocation2 + $0x28] sm:$0xff]
      %v3796 = vld [vmem:[#allocation2 + $0x30] sm:$0xff]
      %v3797 = vld [vmem:[#allocation2 + $0x38] sm:$0xff]
      %v3798 = vld [vmem:[#allocation2 + $0x40] sm:$0xff]
      %v3799 = vld [vmem:[#allocation2 + $0x48] sm:$0xff]
      %v3800 = vld [vmem:[#allocation2 + $0x50] sm:$0xff]
      %v3801 = vld [vmem:[#allocation2 + $0x58] sm:$0xff]
      %v3802 = vld [vmem:[#allocation2 + $0x60] sm:$0xff]
      %v3803 = vld [vmem:[#allocation2 + $0x68] sm:$0xff]
      %v3804 = vld [vmem:[#allocation2 + $0x70] sm:$0xff]
      %v3805 = vld [vmem:[#allocation2 + $0x78] sm:$0xff]
      %v3806 = vld [vmem:[#allocation2 + $0x80] sm:$0xff]
      %v3807 = vld [vmem:[#allocation2 + $0x88] sm:$0xff]
      %v3808 = vld [vmem:[#allocation2 + $0x90] sm:$0xff]
      %v3809 = vld [vmem:[#allocation2 + $0x98] sm:$0xff]
      %v3810 = vld [vmem:[#allocation2 + $0xa0] sm:$0xff]
      %v3811 = vld [vmem:[#allocation2 + $0xa8] sm:$0xff]
      %v3812 = vld [vmem:[#allocation2 + $0xb0] sm:$0xff]
      %v3813 = vld [vmem:[#allocation2 + $0xb8] sm:$0xff]
      %v3814 = vld [vmem:[#allocation2 + $0xc0] sm:$0xff]
      %v3815 = vld [vmem:[#allocation2 + $0xc8] sm:$0xff]
      %v3816 = vld [vmem:[#allocation2 + $0xd0] sm:$0xff]
      %v3817 = vld [vmem:[#allocation2 + $0xd8] sm:$0xff]
      %v3818 = vld [vmem:[#allocation2 + $0xe0] sm:$0xff]
      %v3819 = vld [vmem:[#allocation2 + $0xe8] sm:$0xff]
      %v3820 = vld [vmem:[#allocation2 + $0xf0] sm:$0xff]
      %v3821 = vld [vmem:[#allocation2 + $0xf8] sm:$0xff]
      %v3822 = vld [vmem:[#allocation2 + $0x100] sm:$0xff]
      %v3823 = vld [vmem:[#allocation2 + $0x108] sm:$0xff]
      %v3824 = vpack.c.bf16 %v3793, %v3792
      %v3825 = vpack.c.bf16 %v3795, %v3794
      %v3826 = vpack.c.bf16 %v3797, %v3796
      %v3827 = vpack.c.bf16 %v3799, %v3798
      %v3828 = vpack.c.bf16 %v3801, %v3800
      %v3829 = vpack.c.bf16 %v3803, %v3802
      %v3830 = vpack.c.bf16 %v3805, %v3804
      %v3831 = vpack.c.bf16 %v3807, %v3806
      %v3832 = vpack.c.bf16 %v3809, %v3808
      %v3833 = vpack.c.bf16 %v3811, %v3810
      %v3834 = vpack.c.bf16 %v3813, %v3812
      %v3835 = vpack.c.bf16 %v3815, %v3814
      %v3836 = vpack.c.bf16 %v3817, %v3816
      %v3837 = vpack.c.bf16 %v3819, %v3818
      %v3838 = vpack.c.bf16 %v3821, %v3820
      %v3839 = vpack.c.bf16 %v3823, %v3822
      %v3840 = vld [vmem:[#allocation2 + $0x11] sm:$0xff]
      %v3841 = vld [vmem:[#allocation2 + $0x19] sm:$0xff]
      %v3842 = vld [vmem:[#allocation2 + $0x21] sm:$0xff]
      %v3843 = vld [vmem:[#allocation2 + $0x29] sm:$0xff]
      %v3844 = vld [vmem:[#allocation2 + $0x31] sm:$0xff]
      %v3845 = vld [vmem:[#allocation2 + $0x39] sm:$0xff]
      %v3846 = vld [vmem:[#allocation2 + $0x41] sm:$0xff]
      %v3847 = vld [vmem:[#allocation2 + $0x49] sm:$0xff]
      %v3848 = vld [vmem:[#allocation2 + $0x51] sm:$0xff]
      %v3849 = vld [vmem:[#allocation2 + $0x59] sm:$0xff]
      %v3850 = vld [vmem:[#allocation2 + $0x61] sm:$0xff]
      %v3851 = vld [vmem:[#allocation2 + $0x69] sm:$0xff]
      %v3852 = vld [vmem:[#allocation2 + $0x71] sm:$0xff]
      %v3853 = vld [vmem:[#allocation2 + $0x79] sm:$0xff]
      %v3854 = vld [vmem:[#allocation2 + $0x81] sm:$0xff]
      %v3855 = vld [vmem:[#allocation2 + $0x89] sm:$0xff]
      %v3856 = vld [vmem:[#allocation2 + $0x91] sm:$0xff]
      %v3857 = vld [vmem:[#allocation2 + $0x99] sm:$0xff]
      %v3858 = vld [vmem:[#allocation2 + $0xa1] sm:$0xff]
      %v3859 = vld [vmem:[#allocation2 + $0xa9] sm:$0xff]
      %v3860 = vld [vmem:[#allocation2 + $0xb1] sm:$0xff]
      %v3861 = vld [vmem:[#allocation2 + $0xb9] sm:$0xff]
      %v3862 = vld [vmem:[#allocation2 + $0xc1] sm:$0xff]
      %v3863 = vld [vmem:[#allocation2 + $0xc9] sm:$0xff]
      %v3864 = vld [vmem:[#allocation2 + $0xd1] sm:$0xff]
      %v3865 = vld [vmem:[#allocation2 + $0xd9] sm:$0xff]
      %v3866 = vld [vmem:[#allocation2 + $0xe1] sm:$0xff]
      %v3867 = vld [vmem:[#allocation2 + $0xe9] sm:$0xff]
      %v3868 = vld [vmem:[#allocation2 + $0xf1] sm:$0xff]
      %v3869 = vld [vmem:[#allocation2 + $0xf9] sm:$0xff]
      %v3870 = vld [vmem:[#allocation2 + $0x101] sm:$0xff]
      %v3871 = vld [vmem:[#allocation2 + $0x109] sm:$0xff]
      %v3872 = vmul.f32 %v3840, %v1854
      %v3873 = vmul.f32 %v3841, %v1855
      %v3874 = vmul.f32 %v3842, %v1856
      %v3875 = vmul.f32 %v3843, %v1857
      %v3876 = vmul.f32 %v3844, %v1858
      %v3877 = vmul.f32 %v3845, %v1859
      %v3878 = vmul.f32 %v3846, %v1860
      %v3879 = vmul.f32 %v3847, %v1861
      %v3880 = vmul.f32 %v3848, %v1862
      %v3881 = vmul.f32 %v3849, %v1863
      %v3882 = vmul.f32 %v3850, %v1864
      %v3883 = vmul.f32 %v3851, %v1865
      %v3884 = vmul.f32 %v3852, %v1866
      %v3885 = vmul.f32 %v3853, %v1867
      %v3886 = vmul.f32 %v3854, %v1868
      %v3887 = vmul.f32 %v3855, %v1869
      %v3888 = vmul.f32 %v3856, %v1870
      %v3889 = vmul.f32 %v3857, %v1871
      %v3890 = vmul.f32 %v3858, %v1872
      %v3891 = vmul.f32 %v3859, %v1873
      %v3892 = vmul.f32 %v3860, %v1874
      %v3893 = vmul.f32 %v3861, %v1875
      %v3894 = vmul.f32 %v3862, %v1876
      %v3895 = vmul.f32 %v3863, %v1877
      %v3896 = vmul.f32 %v3864, %v1878
      %v3897 = vmul.f32 %v3865, %v1879
      %v3898 = vmul.f32 %v3866, %v1880
      %v3899 = vmul.f32 %v3867, %v1881
      %v3900 = vmul.f32 %v3868, %v1882
      %v3901 = vmul.f32 %v3869, %v1883
      %v3902 = vmul.f32 %v3870, %v1884
      %v3903 = vmul.f32 %v3871, %v1885
      %v3904 = vpack.c.bf16 %v3873, %v3872
      %v3905 = vpack.c.bf16 %v3875, %v3874
      %v3906 = vpack.c.bf16 %v3877, %v3876
      %v3907 = vpack.c.bf16 %v3879, %v3878
      %v3908 = vpack.c.bf16 %v3881, %v3880
      %v3909 = vpack.c.bf16 %v3883, %v3882
      %v3910 = vpack.c.bf16 %v3885, %v3884
      %v3911 = vpack.c.bf16 %v3887, %v3886
      %v3912 = vpack.c.bf16 %v3889, %v3888
      %v3913 = vpack.c.bf16 %v3891, %v3890
      %v3914 = vpack.c.bf16 %v3893, %v3892
      %v3915 = vpack.c.bf16 %v3895, %v3894
      %v3916 = vpack.c.bf16 %v3897, %v3896
      %v3917 = vpack.c.bf16 %v3899, %v3898
      %v3918 = vpack.c.bf16 %v3901, %v3900
      %v3919 = vpack.c.bf16 %v3903, %v3902
      %v3920 = vld [vmem:[#allocation2 + $0x10f] sm:$0xff]
      %v3921 = vld [vmem:[#allocation2 + $0x117] sm:$0xff]
      %v3922 = vmul.f32 %v3714, %v1758
      %v3923 = vmul.f32 %v3715, %v1759
      %v3924 = vmul.f32 %v3716, %v1760
      %v3925 = vmul.f32 %v3717, %v1761
      %v3926 = vmul.f32 %v3718, %v1762
      %v3927 = vmul.f32 %v3719, %v1763
      %v3928 = vmul.f32 %v3720, %v1764
      %v3929 = vmul.f32 %v3721, %v1765
      %v3930 = vmul.f32 %v3722, %v1766
      %v3931 = vmul.f32 %v3723, %v1767
      %v3932 = vmul.f32 %v3724, %v1768
      %v3933 = vmul.f32 %v3725, %v1769
      %v3934 = vmul.f32 %v3726, %v1770
      %v3935 = vmul.f32 %v3727, %v1771
      %v3936 = vmul.f32 %v3728, %v1772
      %v3937 = vmul.f32 %v3729, %v1773
      %v3938 = vmul.f32 %v3730, %v1774
      %v3939 = vmul.f32 %v3731, %v1775
      %v3940 = vmul.f32 %v3732, %v1776
      %v3941 = vmul.f32 %v3733, %v1777
      %v3942 = vmul.f32 %v3734, %v1778
      %v3943 = vmul.f32 %v3735, %v1779
      %v3944 = vmul.f32 %v3736, %v1780
      %v3945 = vmul.f32 %v3737, %v1781
      %v3946 = vmul.f32 %v3738, %v1782
      %v3947 = vmul.f32 %v3739, %v1783
      %v3948 = vmul.f32 %v3740, %v1784
      %v3949 = vmul.f32 %v3741, %v1785
      %v3950 = vmul.f32 %v3742, %v1786
      %v3951 = vmul.f32 %v3743, %v1787
      %v3952 = vmul.f32 %v3920, %v1788
      %v3953 = vmul.f32 %v3921, %v1789
      %v3954 = vpack.c.bf16 %v3923, %v3922
      %v3955 = vpack.c.bf16 %v3925, %v3924
      %v3956 = vpack.c.bf16 %v3927, %v3926
      %v3957 = vpack.c.bf16 %v3929, %v3928
      %v3958 = vpack.c.bf16 %v3931, %v3930
      %v3959 = vpack.c.bf16 %v3933, %v3932
      %v3960 = vpack.c.bf16 %v3935, %v3934
      %v3961 = vpack.c.bf16 %v3937, %v3936
      %v3962 = vpack.c.bf16 %v3939, %v3938
      %v3963 = vpack.c.bf16 %v3941, %v3940
      %v3964 = vpack.c.bf16 %v3943, %v3942
      %v3965 = vpack.c.bf16 %v3945, %v3944
      %v3966 = vpack.c.bf16 %v3947, %v3946
      %v3967 = vpack.c.bf16 %v3949, %v3948
      %v3968 = vpack.c.bf16 %v3951, %v3950
      %v3969 = vpack.c.bf16 %v3953, %v3952
      %v3970 = vld [vmem:[#allocation2 + $0x110] sm:$0xff]
      %v3971 = vld [vmem:[#allocation2 + $0x118] sm:$0xff]
      %v3972 = vpack.c.bf16 %v3971, %v3970
      %v3973 = vld [vmem:[#allocation2 + $0x111] sm:$0xff]
      %v3974 = vld [vmem:[#allocation2 + $0x119] sm:$0xff]
      %v3975 = vmul.f32 %v3842, %v1854
      %v3976 = vmul.f32 %v3843, %v1855
      %v3977 = vmul.f32 %v3844, %v1856
      %v3978 = vmul.f32 %v3845, %v1857
      %v3979 = vmul.f32 %v3846, %v1858
      %v3980 = vmul.f32 %v3847, %v1859
      %v3981 = vmul.f32 %v3848, %v1860
      %v3982 = vmul.f32 %v3849, %v1861
      %v3983 = vmul.f32 %v3850, %v1862
      %v3984 = vmul.f32 %v3851, %v1863
      %v3985 = vmul.f32 %v3852, %v1864
      %v3986 = vmul.f32 %v3853, %v1865
      %v3987 = vmul.f32 %v3854, %v1866
      %v3988 = vmul.f32 %v3855, %v1867
      %v3989 = vmul.f32 %v3856, %v1868
      %v3990 = vmul.f32 %v3857, %v1869
      %v3991 = vmul.f32 %v3858, %v1870
      %v3992 = vmul.f32 %v3859, %v1871
      %v3993 = vmul.f32 %v3860, %v1872
      %v3994 = vmul.f32 %v3861, %v1873
      %v3995 = vmul.f32 %v3862, %v1874
      %v3996 = vmul.f32 %v3863, %v1875
      %v3997 = vmul.f32 %v3864, %v1876
      %v3998 = vmul.f32 %v3865, %v1877
      %v3999 = vmul.f32 %v3866, %v1878
      %v4000 = vmul.f32 %v3867, %v1879
      %v4001 = vmul.f32 %v3868, %v1880
      %v4002 = vmul.f32 %v3869, %v1881
      %v4003 = vmul.f32 %v3870, %v1882
      %v4004 = vmul.f32 %v3871, %v1883
      %v4005 = vmul.f32 %v3973, %v1884
      %v4006 = vmul.f32 %v3974, %v1885
      %v4007 = vpack.c.bf16 %v3976, %v3975
      %v4008 = vpack.c.bf16 %v3978, %v3977
      %v4009 = vpack.c.bf16 %v3980, %v3979
      %v4010 = vpack.c.bf16 %v3982, %v3981
      %v4011 = vpack.c.bf16 %v3984, %v3983
      %v4012 = vpack.c.bf16 %v3986, %v3985
      %v4013 = vpack.c.bf16 %v3988, %v3987
      %v4014 = vpack.c.bf16 %v3990, %v3989
      %v4015 = vpack.c.bf16 %v3992, %v3991
      %v4016 = vpack.c.bf16 %v3994, %v3993
      %v4017 = vpack.c.bf16 %v3996, %v3995
      %v4018 = vpack.c.bf16 %v3998, %v3997
      %v4019 = vpack.c.bf16 %v4000, %v3999
      %v4020 = vpack.c.bf16 %v4002, %v4001
      %v4021 = vpack.c.bf16 %v4004, %v4003
      %v4022 = vpack.c.bf16 %v4006, %v4005
      %v4023 = vld [vmem:[#allocation2 + $0x11f] sm:$0xff]
      %v4024 = vld [vmem:[#allocation2 + $0x127] sm:$0xff]
      %v4025 = vmul.f32 %v3716, %v1758
      %v4026 = vmul.f32 %v3717, %v1759
      %v4027 = vmul.f32 %v3718, %v1760
      %v4028 = vmul.f32 %v3719, %v1761
      %v4029 = vmul.f32 %v3720, %v1762
      %v4030 = vmul.f32 %v3721, %v1763
      %v4031 = vmul.f32 %v3722, %v1764
      %v4032 = vmul.f32 %v3723, %v1765
      %v4033 = vmul.f32 %v3724, %v1766
      %v4034 = vmul.f32 %v3725, %v1767
      %v4035 = vmul.f32 %v3726, %v1768
      %v4036 = vmul.f32 %v3727, %v1769
      %v4037 = vmul.f32 %v3728, %v1770
      %v4038 = vmul.f32 %v3729, %v1771
      %v4039 = vmul.f32 %v3730, %v1772
      %v4040 = vmul.f32 %v3731, %v1773
      %v4041 = vmul.f32 %v3732, %v1774
      %v4042 = vmul.f32 %v3733, %v1775
      %v4043 = vmul.f32 %v3734, %v1776
      %v4044 = vmul.f32 %v3735, %v1777
      %v4045 = vmul.f32 %v3736, %v1778
      %v4046 = vmul.f32 %v3737, %v1779
      %v4047 = vmul.f32 %v3738, %v1780
      %v4048 = vmul.f32 %v3739, %v1781
      %v4049 = vmul.f32 %v3740, %v1782
      %v4050 = vmul.f32 %v3741, %v1783
      %v4051 = vmul.f32 %v3742, %v1784
      %v4052 = vmul.f32 %v3743, %v1785
      %v4053 = vmul.f32 %v3920, %v1786
      %v4054 = vmul.f32 %v3921, %v1787
      %v4055 = vmul.f32 %v4023, %v1788
      %v4056 = vmul.f32 %v4024, %v1789
      %v4057 = vpack.c.bf16 %v4026, %v4025
      %v4058 = vpack.c.bf16 %v4028, %v4027
      %v4059 = vpack.c.bf16 %v4030, %v4029
      %v4060 = vpack.c.bf16 %v4032, %v4031
      %v4061 = vpack.c.bf16 %v4034, %v4033
      %v4062 = vpack.c.bf16 %v4036, %v4035
      %v4063 = vpack.c.bf16 %v4038, %v4037
      %v4064 = vpack.c.bf16 %v4040, %v4039
      %v4065 = vpack.c.bf16 %v4042, %v4041
      %v4066 = vpack.c.bf16 %v4044, %v4043
      %v4067 = vpack.c.bf16 %v4046, %v4045
      %v4068 = vpack.c.bf16 %v4048, %v4047
      %v4069 = vpack.c.bf16 %v4050, %v4049
      %v4070 = vpack.c.bf16 %v4052, %v4051
      %v4071 = vpack.c.bf16 %v4054, %v4053
      %v4072 = vpack.c.bf16 %v4056, %v4055
      %v4073 = vld [vmem:[#allocation2 + $0x120] sm:$0xff]
      %v4074 = vld [vmem:[#allocation2 + $0x128] sm:$0xff]
      %v4075 = vpack.c.bf16 %v4074, %v4073
      %v4076 = vld [vmem:[#allocation2 + $0x121] sm:$0xff]
      %v4077 = vld [vmem:[#allocation2 + $0x129] sm:$0xff]
      %v4078 = vmul.f32 %v3844, %v1854
      %v4079 = vmul.f32 %v3845, %v1855
      %v4080 = vmul.f32 %v3846, %v1856
      %v4081 = vmul.f32 %v3847, %v1857
      %v4082 = vmul.f32 %v3848, %v1858
      %v4083 = vmul.f32 %v3849, %v1859
      %v4084 = vmul.f32 %v3850, %v1860
      %v4085 = vmul.f32 %v3851, %v1861
      %v4086 = vmul.f32 %v3852, %v1862
      %v4087 = vmul.f32 %v3853, %v1863
      %v4088 = vmul.f32 %v3854, %v1864
      %v4089 = vmul.f32 %v3855, %v1865
      %v4090 = vmul.f32 %v3856, %v1866
      %v4091 = vmul.f32 %v3857, %v1867
      %v4092 = vmul.f32 %v3858, %v1868
      %v4093 = vmul.f32 %v3859, %v1869
      %v4094 = vmul.f32 %v3860, %v1870
      %v4095 = vmul.f32 %v3861, %v1871
      %v4096 = vmul.f32 %v3862, %v1872
      %v4097 = vmul.f32 %v3863, %v1873
      %v4098 = vmul.f32 %v3864, %v1874
      %v4099 = vmul.f32 %v3865, %v1875
      %v4100 = vmul.f32 %v3866, %v1876
      %v4101 = vmul.f32 %v3867, %v1877
      %v4102 = vmul.f32 %v3868, %v1878
      %v4103 = vmul.f32 %v3869, %v1879
      %v4104 = vmul.f32 %v3870, %v1880
      %v4105 = vmul.f32 %v3871, %v1881
      %v4106 = vmul.f32 %v3973, %v1882
      %v4107 = vmul.f32 %v3974, %v1883
      %v4108 = vmul.f32 %v4076, %v1884
      %v4109 = vmul.f32 %v4077, %v1885
      %v4110 = vpack.c.bf16 %v4079, %v4078
      %v4111 = vpack.c.bf16 %v4081, %v4080
      %v4112 = vpack.c.bf16 %v4083, %v4082
      %v4113 = vpack.c.bf16 %v4085, %v4084
      %v4114 = vpack.c.bf16 %v4087, %v4086
      %v4115 = vpack.c.bf16 %v4089, %v4088
      %v4116 = vpack.c.bf16 %v4091, %v4090
      %v4117 = vpack.c.bf16 %v4093, %v4092
      %v4118 = vpack.c.bf16 %v4095, %v4094
      %v4119 = vpack.c.bf16 %v4097, %v4096
      %v4120 = vpack.c.bf16 %v4099, %v4098
      %v4121 = vpack.c.bf16 %v4101, %v4100
      %v4122 = vpack.c.bf16 %v4103, %v4102
      %v4123 = vpack.c.bf16 %v4105, %v4104
      %v4124 = vpack.c.bf16 %v4107, %v4106
      %v4125 = vpack.c.bf16 %v4109, %v4108
      %4142 = vrot.lane.b32.xlu0 %v3824, 6
      %v4143 = vpop.permute.xlu0 %4142
      %4144 = vrot.lane.b32.xlu0 %v3825, 6
      %v4145 = vpop.permute.xlu0 %4144
      %4146 = vrot.lane.b32.xlu0 %v3826, 6
      %v4147 = vpop.permute.xlu0 %4146
      %4148 = vrot.lane.b32.xlu0 %v3827, 6
      %v4149 = vpop.permute.xlu0 %4148
      %4150 = vrot.lane.b32.xlu0 %v3828, 6
      %v4151 = vpop.permute.xlu0 %4150
      %4152 = vrot.lane.b32.xlu0 %v3829, 6
      %v4153 = vpop.permute.xlu0 %4152
      %4154 = vrot.lane.b32.xlu0 %v3830, 6
      %v4155 = vpop.permute.xlu0 %4154
      %4156 = vrot.lane.b32.xlu0 %v3831, 6
      %v4157 = vpop.permute.xlu0 %4156
      %4158 = vrot.lane.b32.xlu0 %v3832, 6
      %v4159 = vpop.permute.xlu0 %4158
      %4160 = vrot.lane.b32.xlu0 %v3833, 6
      %v4161 = vpop.permute.xlu0 %4160
      %4162 = vrot.lane.b32.xlu0 %v3834, 6
      %v4163 = vpop.permute.xlu0 %4162
      %4164 = vrot.lane.b32.xlu0 %v3835, 6
      %v4165 = vpop.permute.xlu0 %4164
      %4166 = vrot.lane.b32.xlu0 %v3836, 6
      %v4167 = vpop.permute.xlu0 %4166
      %4168 = vrot.lane.b32.xlu0 %v3837, 6
      %v4169 = vpop.permute.xlu0 %4168
      %4170 = vrot.lane.b32.xlu0 %v3838, 6
      %v4171 = vpop.permute.xlu0 %4170
      %4172 = vrot.lane.b32.xlu0 %v3839, 6
      %v4173 = vpop.permute.xlu0 %4172
      %4190 = vrot.lane.b32.xlu0 %v3904, 12
      %v4191 = vpop.permute.xlu0 %4190
      %4192 = vrot.lane.b32.xlu0 %v3905, 12
      %v4193 = vpop.permute.xlu0 %4192
      %4194 = vrot.lane.b32.xlu0 %v3906, 12
      %v4195 = vpop.permute.xlu0 %4194
      %4196 = vrot.lane.b32.xlu0 %v3907, 12
      %v4197 = vpop.permute.xlu0 %4196
      %4198 = vrot.lane.b32.xlu0 %v3908, 12
      %v4199 = vpop.permute.xlu0 %4198
      %4200 = vrot.lane.b32.xlu0 %v3909, 12
      %v4201 = vpop.permute.xlu0 %4200
      %4202 = vrot.lane.b32.xlu0 %v3910, 12
      %v4203 = vpop.permute.xlu0 %4202
      %4204 = vrot.lane.b32.xlu0 %v3911, 12
      %v4205 = vpop.permute.xlu0 %4204
      %4206 = vrot.lane.b32.xlu0 %v3912, 12
      %v4207 = vpop.permute.xlu0 %4206
      %4208 = vrot.lane.b32.xlu0 %v3913, 12
      %v4209 = vpop.permute.xlu0 %4208
      %4210 = vrot.lane.b32.xlu0 %v3914, 12
      %v4211 = vpop.permute.xlu0 %4210
      %4212 = vrot.lane.b32.xlu0 %v3915, 12
      %v4213 = vpop.permute.xlu0 %4212
      %4214 = vrot.lane.b32.xlu0 %v3916, 12
      %v4215 = vpop.permute.xlu0 %4214
      %4216 = vrot.lane.b32.xlu0 %v3917, 12
      %v4217 = vpop.permute.xlu0 %4216
      %4218 = vrot.lane.b32.xlu0 %v3918, 12
      %v4219 = vpop.permute.xlu0 %4218
      %4220 = vrot.lane.b32.xlu0 %v3919, 12
      %v4221 = vpop.permute.xlu0 %4220
      %4238 = vrot.lane.b32.xlu0 %v3954, 18
      %v4239 = vpop.permute.xlu0 %4238
      %4240 = vrot.lane.b32.xlu0 %v3955, 18
      %v4241 = vpop.permute.xlu0 %4240
      %4242 = vrot.lane.b32.xlu0 %v3956, 18
      %v4243 = vpop.permute.xlu0 %4242
      %4244 = vrot.lane.b32.xlu0 %v3957, 18
      %v4245 = vpop.permute.xlu0 %4244
      %4246 = vrot.lane.b32.xlu0 %v3958, 18
      %v4247 = vpop.permute.xlu0 %4246
      %4248 = vrot.lane.b32.xlu0 %v3959, 18
      %v4249 = vpop.permute.xlu0 %4248
      %4250 = vrot.lane.b32.xlu0 %v3960, 18
      %v4251 = vpop.permute.xlu0 %4250
      %4252 = vrot.lane.b32.xlu0 %v3961, 18
      %v4253 = vpop.permute.xlu0 %4252
      %4254 = vrot.lane.b32.xlu0 %v3962, 18
      %v4255 = vpop.permute.xlu0 %4254
      %4256 = vrot.lane.b32.xlu0 %v3963, 18
      %v4257 = vpop.permute.xlu0 %4256
      %4258 = vrot.lane.b32.xlu0 %v3964, 18
      %v4259 = vpop.permute.xlu0 %4258
      %4260 = vrot.lane.b32.xlu0 %v3965, 18
      %v4261 = vpop.permute.xlu0 %4260
      %4262 = vrot.lane.b32.xlu0 %v3966, 18
      %v4263 = vpop.permute.xlu0 %4262
      %4264 = vrot.lane.b32.xlu0 %v3967, 18
      %v4265 = vpop.permute.xlu0 %4264
      %4266 = vrot.lane.b32.xlu0 %v3968, 18
      %v4267 = vpop.permute.xlu0 %4266
      %4268 = vrot.lane.b32.xlu0 %v3969, 18
      %v4269 = vpop.permute.xlu0 %4268
      %4271 = vrot.lane.b32.xlu0 %v3825, 24
      %v4272 = vpop.permute.xlu0 %4271
      %4273 = vrot.lane.b32.xlu0 %v3826, 24
      %v4274 = vpop.permute.xlu0 %4273
      %4275 = vrot.lane.b32.xlu0 %v3827, 24
      %v4276 = vpop.permute.xlu0 %4275
      %4277 = vrot.lane.b32.xlu0 %v3828, 24
      %v4278 = vpop.permute.xlu0 %4277
      %4279 = vrot.lane.b32.xlu0 %v3829, 24
      %v4280 = vpop.permute.xlu0 %4279
      %4281 = vrot.lane.b32.xlu0 %v3830, 24
      %v4282 = vpop.permute.xlu0 %4281
      %4283 = vrot.lane.b32.xlu0 %v3831, 24
      %v4284 = vpop.permute.xlu0 %4283
      %4285 = vrot.lane.b32.xlu0 %v3832, 24
      %v4286 = vpop.permute.xlu0 %4285
      %4287 = vrot.lane.b32.xlu0 %v3833, 24
      %v4288 = vpop.permute.xlu0 %4287
      %4289 = vrot.lane.b32.xlu0 %v3834, 24
      %v4290 = vpop.permute.xlu0 %4289
      %4291 = vrot.lane.b32.xlu0 %v3835, 24
      %v4292 = vpop.permute.xlu0 %4291
      %4293 = vrot.lane.b32.xlu0 %v3836, 24
      %v4294 = vpop.permute.xlu0 %4293
      %4295 = vrot.lane.b32.xlu0 %v3837, 24
      %v4296 = vpop.permute.xlu0 %4295
      %4297 = vrot.lane.b32.xlu0 %v3838, 24
      %v4298 = vpop.permute.xlu0 %4297
      %4299 = vrot.lane.b32.xlu0 %v3839, 24
      %v4300 = vpop.permute.xlu0 %4299
      %4301 = vrot.lane.b32.xlu0 %v3972, 24
      %v4302 = vpop.permute.xlu0 %4301
      %4319 = vrot.lane.b32.xlu0 %v4007, 30
      %v4320 = vpop.permute.xlu0 %4319
      %4321 = vrot.lane.b32.xlu0 %v4008, 30
      %v4322 = vpop.permute.xlu0 %4321
      %4323 = vrot.lane.b32.xlu0 %v4009, 30
      %v4324 = vpop.permute.xlu0 %4323
      %4325 = vrot.lane.b32.xlu0 %v4010, 30
      %v4326 = vpop.permute.xlu0 %4325
      %4327 = vrot.lane.b32.xlu0 %v4011, 30
      %v4328 = vpop.permute.xlu0 %4327
      %4329 = vrot.lane.b32.xlu0 %v4012, 30
      %v4330 = vpop.permute.xlu0 %4329
      %4331 = vrot.lane.b32.xlu0 %v4013, 30
      %v4332 = vpop.permute.xlu0 %4331
      %4333 = vrot.lane.b32.xlu0 %v4014, 30
      %v4334 = vpop.permute.xlu0 %4333
      %4335 = vrot.lane.b32.xlu0 %v4015, 30
      %v4336 = vpop.permute.xlu0 %4335
      %4337 = vrot.lane.b32.xlu0 %v4016, 30
      %v4338 = vpop.permute.xlu0 %4337
      %4339 = vrot.lane.b32.xlu0 %v4017, 30
      %v4340 = vpop.permute.xlu0 %4339
      %4341 = vrot.lane.b32.xlu0 %v4018, 30
      %v4342 = vpop.permute.xlu0 %4341
      %4343 = vrot.lane.b32.xlu0 %v4019, 30
      %v4344 = vpop.permute.xlu0 %4343
      %4345 = vrot.lane.b32.xlu0 %v4020, 30
      %v4346 = vpop.permute.xlu0 %4345
      %4347 = vrot.lane.b32.xlu0 %v4021, 30
      %v4348 = vpop.permute.xlu0 %4347
      %4349 = vrot.lane.b32.xlu0 %v4022, 30
      %v4350 = vpop.permute.xlu0 %4349
      %4367 = vrot.lane.b32.xlu0 %v4057, 36
      %v4368 = vpop.permute.xlu0 %4367
      %4369 = vrot.lane.b32.xlu0 %v4058, 36
      %v4370 = vpop.permute.xlu0 %4369
      %4371 = vrot.lane.b32.xlu0 %v4059, 36
      %v4372 = vpop.permute.xlu0 %4371
      %4373 = vrot.lane.b32.xlu0 %v4060, 36
      %v4374 = vpop.permute.xlu0 %4373
      %4375 = vrot.lane.b32.xlu0 %v4061, 36
      %v4376 = vpop.permute.xlu0 %4375
      %4377 = vrot.lane.b32.xlu0 %v4062, 36
      %v4378 = vpop.permute.xlu0 %4377
      %4379 = vrot.lane.b32.xlu0 %v4063, 36
      %v4380 = vpop.permute.xlu0 %4379
      %4381 = vrot.lane.b32.xlu0 %v4064, 36
      %v4382 = vpop.permute.xlu0 %4381
      %4383 = vrot.lane.b32.xlu0 %v4065, 36
      %v4384 = vpop.permute.xlu0 %4383
      %4385 = vrot.lane.b32.xlu0 %v4066, 36
      %v4386 = vpop.permute.xlu0 %4385
      %4387 = vrot.lane.b32.xlu0 %v4067, 36
      %v4388 = vpop.permute.xlu0 %4387
      %4389 = vrot.lane.b32.xlu0 %v4068, 36
      %v4390 = vpop.permute.xlu0 %4389
      %4391 = vrot.lane.b32.xlu0 %v4069, 36
      %v4392 = vpop.permute.xlu0 %4391
      %4393 = vrot.lane.b32.xlu0 %v4070, 36
      %v4394 = vpop.permute.xlu0 %4393
      %4395 = vrot.lane.b32.xlu0 %v4071, 36
      %v4396 = vpop.permute.xlu0 %4395
      %4397 = vrot.lane.b32.xlu0 %v4072, 36
      %v4398 = vpop.permute.xlu0 %4397
      %4400 = vrot.lane.b32.xlu0 %v3826, 42
      %v4401 = vpop.permute.xlu0 %4400
      %4402 = vrot.lane.b32.xlu0 %v3827, 42
      %v4403 = vpop.permute.xlu0 %4402
      %4404 = vrot.lane.b32.xlu0 %v3828, 42
      %v4405 = vpop.permute.xlu0 %4404
      %4406 = vrot.lane.b32.xlu0 %v3829, 42
      %v4407 = vpop.permute.xlu0 %4406
      %4408 = vrot.lane.b32.xlu0 %v3830, 42
      %v4409 = vpop.permute.xlu0 %4408
      %4410 = vrot.lane.b32.xlu0 %v3831, 42
      %v4411 = vpop.permute.xlu0 %4410
      %4412 = vrot.lane.b32.xlu0 %v3832, 42
      %v4413 = vpop.permute.xlu0 %4412
      %4414 = vrot.lane.b32.xlu0 %v3833, 42
      %v4415 = vpop.permute.xlu0 %4414
      %4416 = vrot.lane.b32.xlu0 %v3834, 42
      %v4417 = vpop.permute.xlu0 %4416
      %4418 = vrot.lane.b32.xlu0 %v3835, 42
      %v4419 = vpop.permute.xlu0 %4418
      %4420 = vrot.lane.b32.xlu0 %v3836, 42
      %v4421 = vpop.permute.xlu0 %4420
      %4422 = vrot.lane.b32.xlu0 %v3837, 42
      %v4423 = vpop.permute.xlu0 %4422
      %4424 = vrot.lane.b32.xlu0 %v3838, 42
      %v4425 = vpop.permute.xlu0 %4424
      %4426 = vrot.lane.b32.xlu0 %v3839, 42
      %v4427 = vpop.permute.xlu0 %4426
      %4428 = vrot.lane.b32.xlu0 %v3972, 42
      %v4429 = vpop.permute.xlu0 %4428
      %4430 = vrot.lane.b32.xlu0 %v4075, 42
      %v4431 = vpop.permute.xlu0 %4430
      %4448 = vrot.lane.b32.xlu0 %v4110, 48
      %v4449 = vpop.permute.xlu0 %4448
      %4450 = vrot.lane.b32.xlu0 %v4111, 48
      %v4451 = vpop.permute.xlu0 %4450
      %4452 = vrot.lane.b32.xlu0 %v4112, 48
      %v4453 = vpop.permute.xlu0 %4452
      %4454 = vrot.lane.b32.xlu0 %v4113, 48
      %v4455 = vpop.permute.xlu0 %4454
      %4456 = vrot.lane.b32.xlu0 %v4114, 48
      %v4457 = vpop.permute.xlu0 %4456
      %4458 = vrot.lane.b32.xlu0 %v4115, 48
      %v4459 = vpop.permute.xlu0 %4458
      %4460 = vrot.lane.b32.xlu0 %v4116, 48
      %v4461 = vpop.permute.xlu0 %4460
      %4462 = vrot.lane.b32.xlu0 %v4117, 48
      %v4463 = vpop.permute.xlu0 %4462
      %4464 = vrot.lane.b32.xlu0 %v4118, 48
      %v4465 = vpop.permute.xlu0 %4464
      %4466 = vrot.lane.b32.xlu0 %v4119, 48
      %v4467 = vpop.permute.xlu0 %4466
      %4468 = vrot.lane.b32.xlu0 %v4120, 48
      %v4469 = vpop.permute.xlu0 %4468
      %4470 = vrot.lane.b32.xlu0 %v4121, 48
      %v4471 = vpop.permute.xlu0 %4470
      %4472 = vrot.lane.b32.xlu0 %v4122, 48
      %v4473 = vpop.permute.xlu0 %4472
      %4474 = vrot.lane.b32.xlu0 %v4123, 48
      %v4475 = vpop.permute.xlu0 %4474
      %4476 = vrot.lane.b32.xlu0 %v4124, 48
      %v4477 = vpop.permute.xlu0 %4476
      %4478 = vrot.lane.b32.xlu0 %v4125, 48
      %v4479 = vpop.permute.xlu0 %4478
      %v4482 = vsel %vm1894, %v3776, %v4143
      %v4485 = vsel %vm1894, %v3777, %v4145
      %v4488 = vsel %vm1894, %v3778, %v4147
      %v4491 = vsel %vm1894, %v3779, %v4149
      %v4494 = vsel %vm1894, %v3780, %v4151
      %v4497 = vsel %vm1894, %v3781, %v4153
      %v4500 = vsel %vm1894, %v3782, %v4155
      %v4503 = vsel %vm1894, %v3783, %v4157
      %v4506 = vsel %vm1894, %v3784, %v4159
      %v4509 = vsel %vm1894, %v3785, %v4161
      %v4512 = vsel %vm1894, %v3786, %v4163
      %v4515 = vsel %vm1894, %v3787, %v4165
      %v4518 = vsel %vm1894, %v3788, %v4167
      %v4521 = vsel %vm1894, %v3789, %v4169
      %v4524 = vsel %vm1894, %v3790, %v4171
      %v4527 = vsel %vm1894, %v3791, %v4173
      %v4529 = vsel %vm2743, %v4482, %v4191
      %v4531 = vsel %vm2743, %v4485, %v4193
      %v4533 = vsel %vm2743, %v4488, %v4195
      %v4535 = vsel %vm2743, %v4491, %v4197
      %v4537 = vsel %vm2743, %v4494, %v4199
      %v4539 = vsel %vm2743, %v4497, %v4201
      %v4541 = vsel %vm2743, %v4500, %v4203
      %v4543 = vsel %vm2743, %v4503, %v4205
      %v4545 = vsel %vm2743, %v4506, %v4207
      %v4547 = vsel %vm2743, %v4509, %v4209
      %v4549 = vsel %vm2743, %v4512, %v4211
      %v4551 = vsel %vm2743, %v4515, %v4213
      %v4553 = vsel %vm2743, %v4518, %v4215
      %v4555 = vsel %vm2743, %v4521, %v4217
      %v4557 = vsel %vm2743, %v4524, %v4219
      %v4559 = vsel %vm2743, %v4527, %v4221
      %v4561 = vsel %vm2776, %v4529, %v4239
      %v4563 = vsel %vm2776, %v4531, %v4241
      %v4565 = vsel %vm2776, %v4533, %v4243
      %v4567 = vsel %vm2776, %v4535, %v4245
      %v4569 = vsel %vm2776, %v4537, %v4247
      %v4571 = vsel %vm2776, %v4539, %v4249
      %v4573 = vsel %vm2776, %v4541, %v4251
      %v4575 = vsel %vm2776, %v4543, %v4253
      %v4577 = vsel %vm2776, %v4545, %v4255
      %v4579 = vsel %vm2776, %v4547, %v4257
      %v4581 = vsel %vm2776, %v4549, %v4259
      %v4583 = vsel %vm2776, %v4551, %v4261
      %v4585 = vsel %vm2776, %v4553, %v4263
      %v4587 = vsel %vm2776, %v4555, %v4265
      %v4589 = vsel %vm2776, %v4557, %v4267
      %v4591 = vsel %vm2776, %v4559, %v4269
      %v4593 = vsel %vm2809, %v4561, %v4272
      %v4595 = vsel %vm2809, %v4563, %v4274
      %v4597 = vsel %vm2809, %v4565, %v4276
      %v4599 = vsel %vm2809, %v4567, %v4278
      %v4601 = vsel %vm2809, %v4569, %v4280
      %v4603 = vsel %vm2809, %v4571, %v4282
      %v4605 = vsel %vm2809, %v4573, %v4284
      %v4607 = vsel %vm2809, %v4575, %v4286
      %v4609 = vsel %vm2809, %v4577, %v4288
      %v4611 = vsel %vm2809, %v4579, %v4290
      %v4613 = vsel %vm2809, %v4581, %v4292
      %v4615 = vsel %vm2809, %v4583, %v4294
      %v4617 = vsel %vm2809, %v4585, %v4296
      %v4619 = vsel %vm2809, %v4587, %v4298
      %v4621 = vsel %vm2809, %v4589, %v4300
      %v4623 = vsel %vm2809, %v4591, %v4302
      %v4625 = vsel %vm2842, %v4593, %v4320
      %v4627 = vsel %vm2842, %v4595, %v4322
      %v4629 = vsel %vm2842, %v4597, %v4324
      %v4631 = vsel %vm2842, %v4599, %v4326
      %v4633 = vsel %vm2842, %v4601, %v4328
      %v4635 = vsel %vm2842, %v4603, %v4330
      %v4637 = vsel %vm2842, %v4605, %v4332
      %v4639 = vsel %vm2842, %v4607, %v4334
      %v4641 = vsel %vm2842, %v4609, %v4336
      %v4643 = vsel %vm2842, %v4611, %v4338
      %v4645 = vsel %vm2842, %v4613, %v4340
      %v4647 = vsel %vm2842, %v4615, %v4342
      %v4649 = vsel %vm2842, %v4617, %v4344
      %v4651 = vsel %vm2842, %v4619, %v4346
      %v4653 = vsel %vm2842, %v4621, %v4348
      %v4655 = vsel %vm2842, %v4623, %v4350
      %v4657 = vsel %vm2875, %v4625, %v4368
      %v4659 = vsel %vm2875, %v4627, %v4370
      %v4661 = vsel %vm2875, %v4629, %v4372
      %v4663 = vsel %vm2875, %v4631, %v4374
      %v4665 = vsel %vm2875, %v4633, %v4376
      %v4667 = vsel %vm2875, %v4635, %v4378
      %v4669 = vsel %vm2875, %v4637, %v4380
      %v4671 = vsel %vm2875, %v4639, %v4382
      %v4673 = vsel %vm2875, %v4641, %v4384
      %v4675 = vsel %vm2875, %v4643, %v4386
      %v4677 = vsel %vm2875, %v4645, %v4388
      %v4679 = vsel %vm2875, %v4647, %v4390
      %v4681 = vsel %vm2875, %v4649, %v4392
      %v4683 = vsel %vm2875, %v4651, %v4394
      %v4685 = vsel %vm2875, %v4653, %v4396
      %v4687 = vsel %vm2875, %v4655, %v4398
      %v4689 = vsel %vm2908, %v4657, %v4401
      %v4691 = vsel %vm2908, %v4659, %v4403
      %v4693 = vsel %vm2908, %v4661, %v4405
      %v4695 = vsel %vm2908, %v4663, %v4407
      %v4697 = vsel %vm2908, %v4665, %v4409
      %v4699 = vsel %vm2908, %v4667, %v4411
      %v4701 = vsel %vm2908, %v4669, %v4413
      %v4703 = vsel %vm2908, %v4671, %v4415
      %v4705 = vsel %vm2908, %v4673, %v4417
      %v4707 = vsel %vm2908, %v4675, %v4419
      %v4709 = vsel %vm2908, %v4677, %v4421
      %v4711 = vsel %vm2908, %v4679, %v4423
      %v4713 = vsel %vm2908, %v4681, %v4425
      %v4715 = vsel %vm2908, %v4683, %v4427
      %v4717 = vsel %vm2908, %v4685, %v4429
      %v4719 = vsel %vm2908, %v4687, %v4431
      %v4721 = vsel %vm2941, %v4689, %v4449
      %v4723 = vsel %vm2941, %v4691, %v4451
      %v4725 = vsel %vm2941, %v4693, %v4453
      %v4727 = vsel %vm2941, %v4695, %v4455
      %v4729 = vsel %vm2941, %v4697, %v4457
      %v4731 = vsel %vm2941, %v4699, %v4459
      %v4733 = vsel %vm2941, %v4701, %v4461
      %v4735 = vsel %vm2941, %v4703, %v4463
      %v4737 = vsel %vm2941, %v4705, %v4465
      %v4739 = vsel %vm2941, %v4707, %v4467
      %v4741 = vsel %vm2941, %v4709, %v4469
      %v4743 = vsel %vm2941, %v4711, %v4471
      %v4745 = vsel %vm2941, %v4713, %v4473
      %v4747 = vsel %vm2941, %v4715, %v4475
      %v4749 = vsel %vm2941, %v4717, %v4477
      %v4751 = vsel %vm2941, %v4719, %v4479
      %v4752 = vld [vmem:[%s9] sm:$0xf]
      %v4753 = vld [vmem:[%s9 + $0x4] sm:$0xf]
      %v4754 = vld [vmem:[%s9 + $0x8] sm:$0xf]
      %v4755 = vld [vmem:[%s9 + $0xc] sm:$0xf]
      %v4756 = vld [vmem:[%s9 + $0x10] sm:$0xf]
      %v4757 = vld [vmem:[%s9 + $0x14] sm:$0xf]
      %v4758 = vld [vmem:[%s9 + $0x18] sm:$0x7]
      %v4759 = vld [vmem:[%s10] sm:$0x1]
      %v4761 = vlaneseq
      %v4762 = vshrl.u32 %v4761, 7
      %v4763 = vsub.s32 0, %v4762
      %v4764 = vrot.slane %v4759, %v4763
      %v4773 = vunpack.c.l.b16 %v4752
      %v4774 = vunpack.c.l.b16 %v4753
      %v4775 = vunpack.c.l.b16 %v4754
      %v4776 = vunpack.c.l.b16 %v4755
      %v4777 = vunpack.c.l.b16 %v4756
      %v4778 = vunpack.c.l.b16 %v4757
      %v4779 = vunpack.c.l.b16 %v4758
      %v4780 = vpack.c.b16 %v4774, %v4773
      %v4781 = vpack.c.b16 %v4776, %v4775
      %v4782 = vpack.c.b16 %v4778, %v4777
      %v4783 = vpack.c.b16 %v4779, %v4779
      %v4787 = vsel %vm3009, %v4721, 0
      %v4789 = vsel %vm3009, %v4723, 0
      %v4791 = vsel %vm3009, %v4725, 0
      %v4793 = vsel %vm3009, %v4727, 0
      %v4795 = vsel %vm3009, %v4729, 0
      %v4797 = vsel %vm3009, %v4731, 0
      %v4799 = vsel %vm3009, %v4733, 0
      %v4801 = vsel %vm3009, %v4735, 0
      %v4803 = vsel %vm3009, %v4737, 0
      %v4805 = vsel %vm3009, %v4739, 0
      %v4807 = vsel %vm3009, %v4741, 0
      %v4809 = vsel %vm3009, %v4743, 0
      %v4811 = vsel %vm3009, %v4745, 0
      %v4813 = vsel %vm3009, %v4747, 0
      %v4815 = vsel %vm3009, %v4749, 0
      %v4817 = vsel %vm3009, %v4751, 0
      %v4820 = vsel %vm3042, %v4783, 0
      %4822 = vmatprep.subr.bf16.mxu0 0
      %4823 = vmatpush1.bf16.msra.mxu0 %v4780
      %4824 = vmatprep.subr.bf16.mxu0 0
      %4825 = vmatpush1.bf16.msra.mxu0 %v4781
      %4826 = vmatprep.subr.bf16.mxu0 0
      %4827 = vmatpush1.bf16.msra.mxu0 %v4782
      %4828 = vmatprep.subr.bf16.mxu0 0
      %4829 = vmatpush1.bf16.msra.mxu0 %v4820
      %4830 = vmatprep.subr.bf16.mxu0 0
      %4831 = vmatpush1.bf16.msra.mxu0 0
      %4832 = vmatprep.subr.bf16.mxu0 0
      %4833 = vmatpush1.bf16.msra.mxu0 0
      %4834 = vmatprep.subr.bf16.mxu0 0
      %4835 = vmatpush1.bf16.msra.mxu0 0
      %4836 = vmatprep.subr.bf16.mxu0 0
      %4837 = vmatpush1.bf16.msra.mxu0 0
      %4838 = vmatprep.subr.bf16.mxu0 0
      %4839 = vmatpush1.bf16.msra.mxu0 0
      %4840 = vmatprep.subr.bf16.mxu0 0
      %4841 = vmatpush1.bf16.msra.mxu0 0
      %4842 = vmatprep.subr.bf16.mxu0 0
      %4843 = vmatpush1.bf16.msra.mxu0 0
      %4844 = vmatprep.subr.bf16.mxu0 0
      %4845 = vmatpush1.bf16.msra.mxu0 0
      %4846 = vmatprep.subr.bf16.mxu0 0
      %4847 = vmatpush1.bf16.msra.mxu0 0
      %4848 = vmatprep.subr.bf16.mxu0 0
      %4849 = vmatpush1.bf16.msra.mxu0 0
      %4850 = vmatprep.subr.bf16.mxu0 0
      %4851 = vmatpush1.bf16.msra.mxu0 0
      %4852 = vmatprep.subr.bf16.mxu0 0
      %4853 = vmatpush1.bf16.msra.mxu0 0
      %4854 = vmatprep.mubr.bf16.mxu0 0
      %4855 = vmatmul.mubr.bf16.gmra.mrb[0].mxu0 %v4787
      %v4856 = vpop.f32.mrb[0].mxu0
      %v4857 = vadd.f32 %v4764, %v4856
      %v4858 = vpop.f32.mrb[0].mxu0
      %v4859 = vpop.f32.mrb[0].mxu0
      %v4860 = vadd.f32 %v4764, %v4859
      %v4861 = vpop.f32.mrb[0].mxu0
      %4862 = vmatprep.mubr.bf16.mxu0 0
      %4863 = vmatmul.mubr.bf16.gmra.mrb[0].mxu0 %v4789
      %v4864 = vpop.f32.mrb[0].mxu0
      %v4865 = vadd.f32 %v4764, %v4864
      %v4866 = vpop.f32.mrb[0].mxu0
      %v4867 = vpop.f32.mrb[0].mxu0
      %v4868 = vadd.f32 %v4764, %v4867
      %v4869 = vpop.f32.mrb[0].mxu0
      %4870 = vmatprep.mubr.bf16.mxu0 0
      %4871 = vmatmul.mubr.bf16.gmra.mrb[0].mxu0 %v4791
      %v4872 = vpop.f32.mrb[0].mxu0
      %v4873 = vadd.f32 %v4764, %v4872
      %v4874 = vpop.f32.mrb[0].mxu0
      %v4875 = vpop.f32.mrb[0].mxu0
      %v4876 = vadd.f32 %v4764, %v4875
      %v4877 = vpop.f32.mrb[0].mxu0
      %4878 = vmatprep.mubr.bf16.mxu0 0
      %4879 = vmatmul.mubr.bf16.gmra.mrb[0].mxu0 %v4793
      %v4880 = vpop.f32.mrb[0].mxu0
      %v4881 = vadd.f32 %v4764, %v4880
      %v4882 = vpop.f32.mrb[0].mxu0
      %v4883 = vpop.f32.mrb[0].mxu0
      %v4884 = vadd.f32 %v4764, %v4883
      %v4885 = vpop.f32.mrb[0].mxu0
      %4886 = vmatprep.mubr.bf16.mxu0 0
      %4887 = vmatmul.mubr.bf16.gmra.mrb[0].mxu0 %v4795
      %v4888 = vpop.f32.mrb[0].mxu0
      %v4889 = vadd.f32 %v4764, %v4888
      %v4890 = vpop.f32.mrb[0].mxu0
      %v4891 = vpop.f32.mrb[0].mxu0
      %v4892 = vadd.f32 %v4764, %v4891
      %v4893 = vpop.f32.mrb[0].mxu0
      %4894 = vmatprep.mubr.bf16.mxu0 0
      %4895 = vmatmul.mubr.bf16.gmra.mrb[0].mxu0 %v4797
      %v4896 = vpop.f32.mrb[0].mxu0
      %v4897 = vadd.f32 %v4764, %v4896
      %v4898 = vpop.f32.mrb[0].mxu0
      %v4899 = vpop.f32.mrb[0].mxu0
      %v4900 = vadd.f32 %v4764, %v4899
      %v4901 = vpop.f32.mrb[0].mxu0
      %4902 = vmatprep.mubr.bf16.mxu0 0
      %4903 = vmatmul.mubr.bf16.gmra.mrb[0].mxu0 %v4799
      %v4904 = vpop.f32.mrb[0].mxu0
      %v4905 = vadd.f32 %v4764, %v4904
      %v4906 = vpop.f32.mrb[0].mxu0
      %v4907 = vpop.f32.mrb[0].mxu0
      %v4908 = vadd.f32 %v4764, %v4907
      %v4909 = vpop.f32.mrb[0].mxu0
      %4910 = vmatprep.mubr.bf16.mxu0 0
      %4911 = vmatmul.mubr.bf16.gmra.mrb[0].mxu0 %v4801
      %v4912 = vpop.f32.mrb[0].mxu0
      %v4913 = vadd.f32 %v4764, %v4912
      %v4914 = vpop.f32.mrb[0].mxu0
      %v4915 = vpop.f32.mrb[0].mxu0
      %v4916 = vadd.f32 %v4764, %v4915
      %v4917 = vpop.f32.mrb[0].mxu0
      %4918 = vmatprep.mubr.bf16.mxu0 0
      %4919 = vmatmul.mubr.bf16.gmra.mrb[0].mxu0 %v4803
      %v4920 = vpop.f32.mrb[0].mxu0
      %v4921 = vadd.f32 %v4764, %v4920
      %v4922 = vpop.f32.mrb[0].mxu0
      %v4923 = vpop.f32.mrb[0].mxu0
      %v4924 = vadd.f32 %v4764, %v4923
      %v4925 = vpop.f32.mrb[0].mxu0
      %4926 = vmatprep.mubr.bf16.mxu0 0
      %4927 = vmatmul.mubr.bf16.gmra.mrb[0].mxu0 %v4805
      %v4928 = vpop.f32.mrb[0].mxu0
      %v4929 = vadd.f32 %v4764, %v4928
      %v4930 = vpop.f32.mrb[0].mxu0
      %v4931 = vpop.f32.mrb[0].mxu0
      %v4932 = vadd.f32 %v4764, %v4931
      %v4933 = vpop.f32.mrb[0].mxu0
      %4934 = vmatprep.mubr.bf16.mxu0 0
      %4935 = vmatmul.mubr.bf16.gmra.mrb[0].mxu0 %v4807
      %v4936 = vpop.f32.mrb[0].mxu0
      %v4937 = vadd.f32 %v4764, %v4936
      %v4938 = vpop.f32.mrb[0].mxu0
      %v4939 = vpop.f32.mrb[0].mxu0
      %v4940 = vadd.f32 %v4764, %v4939
      %v4941 = vpop.f32.mrb[0].mxu0
      %4942 = vmatprep.mubr.bf16.mxu0 0
      %4943 = vmatmul.mubr.bf16.gmra.mrb[0].mxu0 %v4809
      %v4944 = vpop.f32.mrb[0].mxu0
      %v4945 = vadd.f32 %v4764, %v4944
      %v4946 = vpop.f32.mrb[0].mxu0
      %v4947 = vpop.f32.mrb[0].mxu0
      %v4948 = vadd.f32 %v4764, %v4947
      %v4949 = vpop.f32.mrb[0].mxu0
      %4950 = vmatprep.mubr.bf16.mxu0 0
      %4951 = vmatmul.mubr.bf16.gmra.mrb[0].mxu0 %v4811
      %v4952 = vpop.f32.mrb[0].mxu0
      %v4953 = vadd.f32 %v4764, %v4952
      %v4954 = vpop.f32.mrb[0].mxu0
      %v4955 = vpop.f32.mrb[0].mxu0
      %v4956 = vadd.f32 %v4764, %v4955
      %v4957 = vpop.f32.mrb[0].mxu0
      %4958 = vmatprep.mubr.bf16.mxu0 0
      %4959 = vmatmul.mubr.bf16.gmra.mrb[0].mxu0 %v4813
      %v4960 = vpop.f32.mrb[0].mxu0
      %v4961 = vadd.f32 %v4764, %v4960
      %v4962 = vpop.f32.mrb[0].mxu0
      %v4963 = vpop.f32.mrb[0].mxu0
      %v4964 = vadd.f32 %v4764, %v4963
      %v4965 = vpop.f32.mrb[0].mxu0
      %4966 = vmatprep.mubr.bf16.mxu0 0
      %4967 = vmatmul.mubr.bf16.gmra.mrb[0].mxu0 %v4815
      %v4968 = vpop.f32.mrb[0].mxu0
      %v4969 = vadd.f32 %v4764, %v4968
      %v4970 = vpop.f32.mrb[0].mxu0
      %v4971 = vpop.f32.mrb[0].mxu0
      %v4972 = vadd.f32 %v4764, %v4971
      %v4973 = vpop.f32.mrb[0].mxu0
      %4974 = vmatprep.mubr.bf16.mxu0 0
      %4975 = vmatmul.mubr.bf16.gmra.mrb[0].mxu0 %v4817
      %v4976 = vpop.f32.mrb[0].mxu0
      %v4977 = vadd.f32 %v4764, %v4976
      %v4978 = vpop.f32.mrb[0].mxu0
      %v4979 = vpop.f32.mrb[0].mxu0
      %v4980 = vadd.f32 %v4764, %v4979
      %v4981 = vpop.f32.mrb[0].mxu0
      %4982 = vdwg.mxu0
      %v4983 = vmax.f32 %v4857, 0.0
      %v4984 = vmax.f32 %v4860, 0.0
      %v4985 = vmax.f32 %v4865, 0.0
      %v4986 = vmax.f32 %v4868, 0.0
      %v4987 = vmax.f32 %v4873, 0.0
      %v4988 = vmax.f32 %v4876, 0.0
      %v4989 = vmax.f32 %v4881, 0.0
      %v4990 = vmax.f32 %v4884, 0.0
      %v4991 = vmax.f32 %v4889, 0.0
      %v4992 = vmax.f32 %v4892, 0.0
      %v4993 = vmax.f32 %v4897, 0.0
      %v4994 = vmax.f32 %v4900, 0.0
      %v4995 = vmax.f32 %v4905, 0.0
      %v4996 = vmax.f32 %v4908, 0.0
      %v4997 = vmax.f32 %v4913, 0.0
      %v4998 = vmax.f32 %v4916, 0.0
      %v4999 = vmax.f32 %v4921, 0.0
      %v5000 = vmax.f32 %v4924, 0.0
      %v5001 = vmax.f32 %v4929, 0.0
      %v5002 = vmax.f32 %v4932, 0.0
      %v5003 = vmax.f32 %v4937, 0.0
      %v5004 = vmax.f32 %v4940, 0.0
      %v5005 = vmax.f32 %v4945, 0.0
      %v5006 = vmax.f32 %v4948, 0.0
      %v5007 = vmax.f32 %v4953, 0.0
      %v5008 = vmax.f32 %v4956, 0.0
      %v5009 = vmax.f32 %v4961, 0.0
      %v5010 = vmax.f32 %v4964, 0.0
      %v5011 = vmax.f32 %v4969, 0.0
      %v5012 = vmax.f32 %v4972, 0.0
      %v5013 = vmax.f32 %v4977, 0.0
      %v5014 = vmax.f32 %v4980, 0.0
      %5015 = vst.msk [vmem:[#allocation2 + $0x20] sm:$0xff] %vm606, %v4983
      %5016 = vst.msk [vmem:[#allocation2 + $0x28] sm:$0xff] %vm606, %v4984
      %5017 = vst.msk [vmem:[#allocation2 + $0x30] sm:$0xff] %vm606, %v4985
      %5018 = vst.msk [vmem:[#allocation2 + $0x38] sm:$0xff] %vm606, %v4986
      %5019 = vst.msk [vmem:[#allocation2 + $0x40] sm:$0xff] %vm606, %v4987
      %5020 = vst.msk [vmem:[#allocation2 + $0x48] sm:$0xff] %vm606, %v4988
      %5021 = vst.msk [vmem:[#allocation2 + $0x50] sm:$0xff] %vm606, %v4989
      %5022 = vst.msk [vmem:[#allocation2 + $0x58] sm:$0xff] %vm606, %v4990
      %5023 = vst.msk [vmem:[#allocation2 + $0x60] sm:$0xff] %vm606, %v4991
      %5024 = vst.msk [vmem:[#allocation2 + $0x68] sm:$0xff] %vm606, %v4992
      %5025 = vst.msk [vmem:[#allocation2 + $0x70] sm:$0xff] %vm606, %v4993
      %5026 = vst.msk [vmem:[#allocation2 + $0x78] sm:$0xff] %vm606, %v4994
      %5027 = vst.msk [vmem:[#allocation2 + $0x80] sm:$0xff] %vm606, %v4995
      %5028 = vst.msk [vmem:[#allocation2 + $0x88] sm:$0xff] %vm606, %v4996
      %5029 = vst.msk [vmem:[#allocation2 + $0x90] sm:$0xff] %vm606, %v4997
      %5030 = vst.msk [vmem:[#allocation2 + $0x98] sm:$0xff] %vm606, %v4998
      %5031 = vst.msk [vmem:[#allocation2 + $0xa0] sm:$0xff] %vm606, %v4999
      %5032 = vst.msk [vmem:[#allocation2 + $0xa8] sm:$0xff] %vm606, %v5000
      %5033 = vst.msk [vmem:[#allocation2 + $0xb0] sm:$0xff] %vm606, %v5001
      %5034 = vst.msk [vmem:[#allocation2 + $0xb8] sm:$0xff] %vm606, %v5002
      %5035 = vst.msk [vmem:[#allocation2 + $0xc0] sm:$0xff] %vm606, %v5003
      %5036 = vst.msk [vmem:[#allocation2 + $0xc8] sm:$0xff] %vm606, %v5004
      %5037 = vst.msk [vmem:[#allocation2 + $0xd0] sm:$0xff] %vm606, %v5005
      %5038 = vst.msk [vmem:[#allocation2 + $0xd8] sm:$0xff] %vm606, %v5006
      %5039 = vst.msk [vmem:[#allocation2 + $0xe0] sm:$0xff] %vm606, %v5007
      %5040 = vst.msk [vmem:[#allocation2 + $0xe8] sm:$0xff] %vm606, %v5008
      %5041 = vst.msk [vmem:[#allocation2 + $0xf0] sm:$0xff] %vm606, %v5009
      %5042 = vst.msk [vmem:[#allocation2 + $0xf8] sm:$0xff] %vm606, %v5010
      %5043 = vst.msk [vmem:[#allocation2 + $0x100] sm:$0xff] %vm606, %v5011
      %5044 = vst.msk [vmem:[#allocation2 + $0x108] sm:$0xff] %vm606, %v5012
      %5045 = vst.msk [vmem:[#allocation2 + $0x110] sm:$0xff] %vm606, %v5013
      %5046 = vst.msk [vmem:[#allocation2 + $0x118] sm:$0xff] %vm606, %v5014
      %v5047 = vld [vmem:[#allocation2 + $0xf] sm:$0xff]
      %v5048 = vld [vmem:[#allocation2 + $0x17] sm:$0xff]
      %v5049 = vld [vmem:[#allocation2 + $0x1f] sm:$0xff]
      %v5050 = vld [vmem:[#allocation2 + $0x27] sm:$0xff]
      %v5051 = vld [vmem:[#allocation2 + $0x2f] sm:$0xff]
      %v5052 = vld [vmem:[#allocation2 + $0x37] sm:$0xff]
      %v5053 = vld [vmem:[#allocation2 + $0x3f] sm:$0xff]
      %v5054 = vld [vmem:[#allocation2 + $0x47] sm:$0xff]
      %v5055 = vld [vmem:[#allocation2 + $0x4f] sm:$0xff]
      %v5056 = vld [vmem:[#allocation2 + $0x57] sm:$0xff]
      %v5057 = vld [vmem:[#allocation2 + $0x5f] sm:$0xff]
      %v5058 = vld [vmem:[#allocation2 + $0x67] sm:$0xff]
      %v5059 = vld [vmem:[#allocation2 + $0x6f] sm:$0xff]
      %v5060 = vld [vmem:[#allocation2 + $0x77] sm:$0xff]
      %v5061 = vld [vmem:[#allocation2 + $0x7f] sm:$0xff]
      %v5062 = vld [vmem:[#allocation2 + $0x87] sm:$0xff]
      %v5063 = vld [vmem:[#allocation2 + $0x8f] sm:$0xff]
      %v5064 = vld [vmem:[#allocation2 + $0x97] sm:$0xff]
      %v5065 = vld [vmem:[#allocation2 + $0x9f] sm:$0xff]
      %v5066 = vld [vmem:[#allocation2 + $0xa7] sm:$0xff]
      %v5067 = vld [vmem:[#allocation2 + $0xaf] sm:$0xff]
      %v5068 = vld [vmem:[#allocation2 + $0xb7] sm:$0xff]
      %v5069 = vld [vmem:[#allocation2 + $0xbf] sm:$0xff]
      %v5070 = vld [vmem:[#allocation2 + $0xc7] sm:$0xff]
      %v5071 = vld [vmem:[#allocation2 + $0xcf] sm:$0xff]
      %v5072 = vld [vmem:[#allocation2 + $0xd7] sm:$0xff]
      %v5073 = vld [vmem:[#allocation2 + $0xdf] sm:$0xff]
      %v5074 = vld [vmem:[#allocation2 + $0xe7] sm:$0xff]
      %v5075 = vld [vmem:[#allocation2 + $0xef] sm:$0xff]
      %v5076 = vld [vmem:[#allocation2 + $0xf7] sm:$0xff]
      %v5077 = vld [vmem:[#allocation2 + $0xff] sm:$0xff]
      %v5078 = vld [vmem:[#allocation2 + $0x107] sm:$0xff]
      %v5079 = vmul.f32 %v5047, %v1758
      %v5080 = vmul.f32 %v5048, %v1759
      %v5081 = vmul.f32 %v5049, %v1760
      %v5082 = vmul.f32 %v5050, %v1761
      %v5083 = vmul.f32 %v5051, %v1762
      %v5084 = vmul.f32 %v5052, %v1763
      %v5085 = vmul.f32 %v5053, %v1764
      %v5086 = vmul.f32 %v5054, %v1765
      %v5087 = vmul.f32 %v5055, %v1766
      %v5088 = vmul.f32 %v5056, %v1767
      %v5089 = vmul.f32 %v5057, %v1768
      %v5090 = vmul.f32 %v5058, %v1769
      %v5091 = vmul.f32 %v5059, %v1770
      %v5092 = vmul.f32 %v5060, %v1771
      %v5093 = vmul.f32 %v5061, %v1772
      %v5094 = vmul.f32 %v5062, %v1773
      %v5095 = vmul.f32 %v5063, %v1774
      %v5096 = vmul.f32 %v5064, %v1775
      %v5097 = vmul.f32 %v5065, %v1776
      %v5098 = vmul.f32 %v5066, %v1777
      %v5099 = vmul.f32 %v5067, %v1778
      %v5100 = vmul.f32 %v5068, %v1779
      %v5101 = vmul.f32 %v5069, %v1780
      %v5102 = vmul.f32 %v5070, %v1781
      %v5103 = vmul.f32 %v5071, %v1782
      %v5104 = vmul.f32 %v5072, %v1783
      %v5105 = vmul.f32 %v5073, %v1784
      %v5106 = vmul.f32 %v5074, %v1785
      %v5107 = vmul.f32 %v5075, %v1786
      %v5108 = vmul.f32 %v5076, %v1787
      %v5109 = vmul.f32 %v5077, %v1788
      %v5110 = vmul.f32 %v5078, %v1789
      %v5111 = vpack.c.bf16 %v5080, %v5079
      %v5112 = vpack.c.bf16 %v5082, %v5081
      %v5113 = vpack.c.bf16 %v5084, %v5083
      %v5114 = vpack.c.bf16 %v5086, %v5085
      %v5115 = vpack.c.bf16 %v5088, %v5087
      %v5116 = vpack.c.bf16 %v5090, %v5089
      %v5117 = vpack.c.bf16 %v5092, %v5091
      %v5118 = vpack.c.bf16 %v5094, %v5093
      %v5119 = vpack.c.bf16 %v5096, %v5095
      %v5120 = vpack.c.bf16 %v5098, %v5097
      %v5121 = vpack.c.bf16 %v5100, %v5099
      %v5122 = vpack.c.bf16 %v5102, %v5101
      %v5123 = vpack.c.bf16 %v5104, %v5103
      %v5124 = vpack.c.bf16 %v5106, %v5105
      %v5125 = vpack.c.bf16 %v5108, %v5107
      %v5126 = vpack.c.bf16 %v5110, %v5109
      %v5127 = vld [vmem:[#allocation2 + $0x10] sm:$0xff]
      %v5128 = vld [vmem:[#allocation2 + $0x18] sm:$0xff]
      %v5129 = vld [vmem:[#allocation2 + $0x20] sm:$0xff]
      %v5130 = vld [vmem:[#allocation2 + $0x28] sm:$0xff]
      %v5131 = vld [vmem:[#allocation2 + $0x30] sm:$0xff]
      %v5132 = vld [vmem:[#allocation2 + $0x38] sm:$0xff]
      %v5133 = vld [vmem:[#allocation2 + $0x40] sm:$0xff]
      %v5134 = vld [vmem:[#allocation2 + $0x48] sm:$0xff]
      %v5135 = vld [vmem:[#allocation2 + $0x50] sm:$0xff]
      %v5136 = vld [vmem:[#allocation2 + $0x58] sm:$0xff]
      %v5137 = vld [vmem:[#allocation2 + $0x60] sm:$0xff]
      %v5138 = vld [vmem:[#allocation2 + $0x68] sm:$0xff]
      %v5139 = vld [vmem:[#allocation2 + $0x70] sm:$0xff]
      %v5140 = vld [vmem:[#allocation2 + $0x78] sm:$0xff]
      %v5141 = vld [vmem:[#allocation2 + $0x80] sm:$0xff]
      %v5142 = vld [vmem:[#allocation2 + $0x88] sm:$0xff]
      %v5143 = vld [vmem:[#allocation2 + $0x90] sm:$0xff]
      %v5144 = vld [vmem:[#allocation2 + $0x98] sm:$0xff]
      %v5145 = vld [vmem:[#allocation2 + $0xa0] sm:$0xff]
      %v5146 = vld [vmem:[#allocation2 + $0xa8] sm:$0xff]
      %v5147 = vld [vmem:[#allocation2 + $0xb0] sm:$0xff]
      %v5148 = vld [vmem:[#allocation2 + $0xb8] sm:$0xff]
      %v5149 = vld [vmem:[#allocation2 + $0xc0] sm:$0xff]
      %v5150 = vld [vmem:[#allocation2 + $0xc8] sm:$0xff]
      %v5151 = vld [vmem:[#allocation2 + $0xd0] sm:$0xff]
      %v5152 = vld [vmem:[#allocation2 + $0xd8] sm:$0xff]
      %v5153 = vld [vmem:[#allocation2 + $0xe0] sm:$0xff]
      %v5154 = vld [vmem:[#allocation2 + $0xe8] sm:$0xff]
      %v5155 = vld [vmem:[#allocation2 + $0xf0] sm:$0xff]
      %v5156 = vld [vmem:[#allocation2 + $0xf8] sm:$0xff]
      %v5157 = vld [vmem:[#allocation2 + $0x100] sm:$0xff]
      %v5158 = vld [vmem:[#allocation2 + $0x108] sm:$0xff]
      %v5159 = vpack.c.bf16 %v5128, %v5127
      %v5160 = vpack.c.bf16 %v5130, %v5129
      %v5161 = vpack.c.bf16 %v5132, %v5131
      %v5162 = vpack.c.bf16 %v5134, %v5133
      %v5163 = vpack.c.bf16 %v5136, %v5135
      %v5164 = vpack.c.bf16 %v5138, %v5137
      %v5165 = vpack.c.bf16 %v5140, %v5139
      %v5166 = vpack.c.bf16 %v5142, %v5141
      %v5167 = vpack.c.bf16 %v5144, %v5143
      %v5168 = vpack.c.bf16 %v5146, %v5145
      %v5169 = vpack.c.bf16 %v5148, %v5147
      %v5170 = vpack.c.bf16 %v5150, %v5149
      %v5171 = vpack.c.bf16 %v5152, %v5151
      %v5172 = vpack.c.bf16 %v5154, %v5153
      %v5173 = vpack.c.bf16 %v5156, %v5155
      %v5174 = vpack.c.bf16 %v5158, %v5157
      %v5175 = vld [vmem:[#allocation2 + $0x11] sm:$0xff]
      %v5176 = vld [vmem:[#allocation2 + $0x19] sm:$0xff]
      %v5177 = vld [vmem:[#allocation2 + $0x21] sm:$0xff]
      %v5178 = vld [vmem:[#allocation2 + $0x29] sm:$0xff]
      %v5179 = vld [vmem:[#allocation2 + $0x31] sm:$0xff]
      %v5180 = vld [vmem:[#allocation2 + $0x39] sm:$0xff]
      %v5181 = vld [vmem:[#allocation2 + $0x41] sm:$0xff]
      %v5182 = vld [vmem:[#allocation2 + $0x49] sm:$0xff]
      %v5183 = vld [vmem:[#allocation2 + $0x51] sm:$0xff]
      %v5184 = vld [vmem:[#allocation2 + $0x59] sm:$0xff]
      %v5185 = vld [vmem:[#allocation2 + $0x61] sm:$0xff]
      %v5186 = vld [vmem:[#allocation2 + $0x69] sm:$0xff]
      %v5187 = vld [vmem:[#allocation2 + $0x71] sm:$0xff]
      %v5188 = vld [vmem:[#allocation2 + $0x79] sm:$0xff]
      %v5189 = vld [vmem:[#allocation2 + $0x81] sm:$0xff]
      %v5190 = vld [vmem:[#allocation2 + $0x89] sm:$0xff]
      %v5191 = vld [vmem:[#allocation2 + $0x91] sm:$0xff]
      %v5192 = vld [vmem:[#allocation2 + $0x99] sm:$0xff]
      %v5193 = vld [vmem:[#allocation2 + $0xa1] sm:$0xff]
      %v5194 = vld [vmem:[#allocation2 + $0xa9] sm:$0xff]
      %v5195 = vld [vmem:[#allocation2 + $0xb1] sm:$0xff]
      %v5196 = vld [vmem:[#allocation2 + $0xb9] sm:$0xff]
      %v5197 = vld [vmem:[#allocation2 + $0xc1] sm:$0xff]
      %v5198 = vld [vmem:[#allocation2 + $0xc9] sm:$0xff]
      %v5199 = vld [vmem:[#allocation2 + $0xd1] sm:$0xff]
      %v5200 = vld [vmem:[#allocation2 + $0xd9] sm:$0xff]
      %v5201 = vld [vmem:[#allocation2 + $0xe1] sm:$0xff]
      %v5202 = vld [vmem:[#allocation2 + $0xe9] sm:$0xff]
      %v5203 = vld [vmem:[#allocation2 + $0xf1] sm:$0xff]
      %v5204 = vld [vmem:[#allocation2 + $0xf9] sm:$0xff]
      %v5205 = vld [vmem:[#allocation2 + $0x101] sm:$0xff]
      %v5206 = vld [vmem:[#allocation2 + $0x109] sm:$0xff]
      %v5207 = vmul.f32 %v5175, %v1854
      %v5208 = vmul.f32 %v5176, %v1855
      %v5209 = vmul.f32 %v5177, %v1856
      %v5210 = vmul.f32 %v5178, %v1857
      %v5211 = vmul.f32 %v5179, %v1858
      %v5212 = vmul.f32 %v5180, %v1859
      %v5213 = vmul.f32 %v5181, %v1860
      %v5214 = vmul.f32 %v5182, %v1861
      %v5215 = vmul.f32 %v5183, %v1862
      %v5216 = vmul.f32 %v5184, %v1863
      %v5217 = vmul.f32 %v5185, %v1864
      %v5218 = vmul.f32 %v5186, %v1865
      %v5219 = vmul.f32 %v5187, %v1866
      %v5220 = vmul.f32 %v5188, %v1867
      %v5221 = vmul.f32 %v5189, %v1868
      %v5222 = vmul.f32 %v5190, %v1869
      %v5223 = vmul.f32 %v5191, %v1870
      %v5224 = vmul.f32 %v5192, %v1871
      %v5225 = vmul.f32 %v5193, %v1872
      %v5226 = vmul.f32 %v5194, %v1873
      %v5227 = vmul.f32 %v5195, %v1874
      %v5228 = vmul.f32 %v5196, %v1875
      %v5229 = vmul.f32 %v5197, %v1876
      %v5230 = vmul.f32 %v5198, %v1877
      %v5231 = vmul.f32 %v5199, %v1878
      %v5232 = vmul.f32 %v5200, %v1879
      %v5233 = vmul.f32 %v5201, %v1880
      %v5234 = vmul.f32 %v5202, %v1881
      %v5235 = vmul.f32 %v5203, %v1882
      %v5236 = vmul.f32 %v5204, %v1883
      %v5237 = vmul.f32 %v5205, %v1884
      %v5238 = vmul.f32 %v5206, %v1885
      %v5239 = vpack.c.bf16 %v5208, %v5207
      %v5240 = vpack.c.bf16 %v5210, %v5209
      %v5241 = vpack.c.bf16 %v5212, %v5211
      %v5242 = vpack.c.bf16 %v5214, %v5213
      %v5243 = vpack.c.bf16 %v5216, %v5215
      %v5244 = vpack.c.bf16 %v5218, %v5217
      %v5245 = vpack.c.bf16 %v5220, %v5219
      %v5246 = vpack.c.bf16 %v5222, %v5221
      %v5247 = vpack.c.bf16 %v5224, %v5223
      %v5248 = vpack.c.bf16 %v5226, %v5225
      %v5249 = vpack.c.bf16 %v5228, %v5227
      %v5250 = vpack.c.bf16 %v5230, %v5229
      %v5251 = vpack.c.bf16 %v5232, %v5231
      %v5252 = vpack.c.bf16 %v5234, %v5233
      %v5253 = vpack.c.bf16 %v5236, %v5235
      %v5254 = vpack.c.bf16 %v5238, %v5237
      %v5255 = vld [vmem:[#allocation2 + $0x10f] sm:$0xff]
      %v5256 = vld [vmem:[#allocation2 + $0x117] sm:$0xff]
      %v5257 = vmul.f32 %v5049, %v1758
      %v5258 = vmul.f32 %v5050, %v1759
      %v5259 = vmul.f32 %v5051, %v1760
      %v5260 = vmul.f32 %v5052, %v1761
      %v5261 = vmul.f32 %v5053, %v1762
      %v5262 = vmul.f32 %v5054, %v1763
      %v5263 = vmul.f32 %v5055, %v1764
      %v5264 = vmul.f32 %v5056, %v1765
      %v5265 = vmul.f32 %v5057, %v1766
      %v5266 = vmul.f32 %v5058, %v1767
      %v5267 = vmul.f32 %v5059, %v1768
      %v5268 = vmul.f32 %v5060, %v1769
      %v5269 = vmul.f32 %v5061, %v1770
      %v5270 = vmul.f32 %v5062, %v1771
      %v5271 = vmul.f32 %v5063, %v1772
      %v5272 = vmul.f32 %v5064, %v1773
      %v5273 = vmul.f32 %v5065, %v1774
      %v5274 = vmul.f32 %v5066, %v1775
      %v5275 = vmul.f32 %v5067, %v1776
      %v5276 = vmul.f32 %v5068, %v1777
      %v5277 = vmul.f32 %v5069, %v1778
      %v5278 = vmul.f32 %v5070, %v1779
      %v5279 = vmul.f32 %v5071, %v1780
      %v5280 = vmul.f32 %v5072, %v1781
      %v5281 = vmul.f32 %v5073, %v1782
      %v5282 = vmul.f32 %v5074, %v1783
      %v5283 = vmul.f32 %v5075, %v1784
      %v5284 = vmul.f32 %v5076, %v1785
      %v5285 = vmul.f32 %v5077, %v1786
      %v5286 = vmul.f32 %v5078, %v1787
      %v5287 = vmul.f32 %v5255, %v1788
      %v5288 = vmul.f32 %v5256, %v1789
      %v5289 = vpack.c.bf16 %v5258, %v5257
      %v5290 = vpack.c.bf16 %v5260, %v5259
      %v5291 = vpack.c.bf16 %v5262, %v5261
      %v5292 = vpack.c.bf16 %v5264, %v5263
      %v5293 = vpack.c.bf16 %v5266, %v5265
      %v5294 = vpack.c.bf16 %v5268, %v5267
      %v5295 = vpack.c.bf16 %v5270, %v5269
      %v5296 = vpack.c.bf16 %v5272, %v5271
      %v5297 = vpack.c.bf16 %v5274, %v5273
      %v5298 = vpack.c.bf16 %v5276, %v5275
      %v5299 = vpack.c.bf16 %v5278, %v5277
      %v5300 = vpack.c.bf16 %v5280, %v5279
      %v5301 = vpack.c.bf16 %v5282, %v5281
      %v5302 = vpack.c.bf16 %v5284, %v5283
      %v5303 = vpack.c.bf16 %v5286, %v5285
      %v5304 = vpack.c.bf16 %v5288, %v5287
      %v5305 = vld [vmem:[#allocation2 + $0x110] sm:$0xff]
      %v5306 = vld [vmem:[#allocation2 + $0x118] sm:$0xff]
      %v5307 = vpack.c.bf16 %v5306, %v5305
      %v5308 = vld [vmem:[#allocation2 + $0x111] sm:$0xff]
      %v5309 = vld [vmem:[#allocation2 + $0x119] sm:$0xff]
      %v5310 = vmul.f32 %v5177, %v1854
      %v5311 = vmul.f32 %v5178, %v1855
      %v5312 = vmul.f32 %v5179, %v1856
      %v5313 = vmul.f32 %v5180, %v1857
      %v5314 = vmul.f32 %v5181, %v1858
      %v5315 = vmul.f32 %v5182, %v1859
      %v5316 = vmul.f32 %v5183, %v1860
      %v5317 = vmul.f32 %v5184, %v1861
      %v5318 = vmul.f32 %v5185, %v1862
      %v5319 = vmul.f32 %v5186, %v1863
      %v5320 = vmul.f32 %v5187, %v1864
      %v5321 = vmul.f32 %v5188, %v1865
      %v5322 = vmul.f32 %v5189, %v1866
      %v5323 = vmul.f32 %v5190, %v1867
      %v5324 = vmul.f32 %v5191, %v1868
      %v5325 = vmul.f32 %v5192, %v1869
      %v5326 = vmul.f32 %v5193, %v1870
      %v5327 = vmul.f32 %v5194, %v1871
      %v5328 = vmul.f32 %v5195, %v1872
      %v5329 = vmul.f32 %v5196, %v1873
      %v5330 = vmul.f32 %v5197, %v1874
      %v5331 = vmul.f32 %v5198, %v1875
      %v5332 = vmul.f32 %v5199, %v1876
      %v5333 = vmul.f32 %v5200, %v1877
      %v5334 = vmul.f32 %v5201, %v1878
      %v5335 = vmul.f32 %v5202, %v1879
      %v5336 = vmul.f32 %v5203, %v1880
      %v5337 = vmul.f32 %v5204, %v1881
      %v5338 = vmul.f32 %v5205, %v1882
      %v5339 = vmul.f32 %v5206, %v1883
      %v5340 = vmul.f32 %v5308, %v1884
      %v5341 = vmul.f32 %v5309, %v1885
      %v5342 = vpack.c.bf16 %v5311, %v5310
      %v5343 = vpack.c.bf16 %v5313, %v5312
      %v5344 = vpack.c.bf16 %v5315, %v5314
      %v5345 = vpack.c.bf16 %v5317, %v5316
      %v5346 = vpack.c.bf16 %v5319, %v5318
      %v5347 = vpack.c.bf16 %v5321, %v5320
      %v5348 = vpack.c.bf16 %v5323, %v5322
      %v5349 = vpack.c.bf16 %v5325, %v5324
      %v5350 = vpack.c.bf16 %v5327, %v5326
      %v5351 = vpack.c.bf16 %v5329, %v5328
      %v5352 = vpack.c.bf16 %v5331, %v5330
      %v5353 = vpack.c.bf16 %v5333, %v5332
      %v5354 = vpack.c.bf16 %v5335, %v5334
      %v5355 = vpack.c.bf16 %v5337, %v5336
      %v5356 = vpack.c.bf16 %v5339, %v5338
      %v5357 = vpack.c.bf16 %v5341, %v5340
      %v5358 = vld [vmem:[#allocation2 + $0x11f] sm:$0xff]
      %v5359 = vld [vmem:[#allocation2 + $0x127] sm:$0xff]
      %v5360 = vmul.f32 %v5051, %v1758
      %v5361 = vmul.f32 %v5052, %v1759
      %v5362 = vmul.f32 %v5053, %v1760
      %v5363 = vmul.f32 %v5054, %v1761
      %v5364 = vmul.f32 %v5055, %v1762
      %v5365 = vmul.f32 %v5056, %v1763
      %v5366 = vmul.f32 %v5057, %v1764
      %v5367 = vmul.f32 %v5058, %v1765
      %v5368 = vmul.f32 %v5059, %v1766
      %v5369 = vmul.f32 %v5060, %v1767
      %v5370 = vmul.f32 %v5061, %v1768
      %v5371 = vmul.f32 %v5062, %v1769
      %v5372 = vmul.f32 %v5063, %v1770
      %v5373 = vmul.f32 %v5064, %v1771
      %v5374 = vmul.f32 %v5065, %v1772
      %v5375 = vmul.f32 %v5066, %v1773
      %v5376 = vmul.f32 %v5067, %v1774
      %v5377 = vmul.f32 %v5068, %v1775
      %v5378 = vmul.f32 %v5069, %v1776
      %v5379 = vmul.f32 %v5070, %v1777
      %v5380 = vmul.f32 %v5071, %v1778
      %v5381 = vmul.f32 %v5072, %v1779
      %v5382 = vmul.f32 %v5073, %v1780
      %v5383 = vmul.f32 %v5074, %v1781
      %v5384 = vmul.f32 %v5075, %v1782
      %v5385 = vmul.f32 %v5076, %v1783
      %v5386 = vmul.f32 %v5077, %v1784
      %v5387 = vmul.f32 %v5078, %v1785
      %v5388 = vmul.f32 %v5255, %v1786
      %v5389 = vmul.f32 %v5256, %v1787
      %v5390 = vmul.f32 %v5358, %v1788
      %v5391 = vmul.f32 %v5359, %v1789
      %v5392 = vpack.c.bf16 %v5361, %v5360
      %v5393 = vpack.c.bf16 %v5363, %v5362
      %v5394 = vpack.c.bf16 %v5365, %v5364
      %v5395 = vpack.c.bf16 %v5367, %v5366
      %v5396 = vpack.c.bf16 %v5369, %v5368
      %v5397 = vpack.c.bf16 %v5371, %v5370
      %v5398 = vpack.c.bf16 %v5373, %v5372
      %v5399 = vpack.c.bf16 %v5375, %v5374
      %v5400 = vpack.c.bf16 %v5377, %v5376
      %v5401 = vpack.c.bf16 %v5379, %v5378
      %v5402 = vpack.c.bf16 %v5381, %v5380
      %v5403 = vpack.c.bf16 %v5383, %v5382
      %v5404 = vpack.c.bf16 %v5385, %v5384
      %v5405 = vpack.c.bf16 %v5387, %v5386
      %v5406 = vpack.c.bf16 %v5389, %v5388
      %v5407 = vpack.c.bf16 %v5391, %v5390
      %v5408 = vld [vmem:[#allocation2 + $0x120] sm:$0xff]
      %v5409 = vld [vmem:[#allocation2 + $0x128] sm:$0xff]
      %v5410 = vpack.c.bf16 %v5409, %v5408
      %v5411 = vld [vmem:[#allocation2 + $0x121] sm:$0xff]
      %v5412 = vld [vmem:[#allocation2 + $0x129] sm:$0xff]
      %v5413 = vmul.f32 %v5179, %v1854
      %v5414 = vmul.f32 %v5180, %v1855
      %v5415 = vmul.f32 %v5181, %v1856
      %v5416 = vmul.f32 %v5182, %v1857
      %v5417 = vmul.f32 %v5183, %v1858
      %v5418 = vmul.f32 %v5184, %v1859
      %v5419 = vmul.f32 %v5185, %v1860
      %v5420 = vmul.f32 %v5186, %v1861
      %v5421 = vmul.f32 %v5187, %v1862
      %v5422 = vmul.f32 %v5188, %v1863
      %v5423 = vmul.f32 %v5189, %v1864
      %v5424 = vmul.f32 %v5190, %v1865
      %v5425 = vmul.f32 %v5191, %v1866
      %v5426 = vmul.f32 %v5192, %v1867
      %v5427 = vmul.f32 %v5193, %v1868
      %v5428 = vmul.f32 %v5194, %v1869
      %v5429 = vmul.f32 %v5195, %v1870
      %v5430 = vmul.f32 %v5196, %v1871
      %v5431 = vmul.f32 %v5197, %v1872
      %v5432 = vmul.f32 %v5198, %v1873
      %v5433 = vmul.f32 %v5199, %v1874
      %v5434 = vmul.f32 %v5200, %v1875
      %v5435 = vmul.f32 %v5201, %v1876
      %v5436 = vmul.f32 %v5202, %v1877
      %v5437 = vmul.f32 %v5203, %v1878
      %v5438 = vmul.f32 %v5204, %v1879
      %v5439 = vmul.f32 %v5205, %v1880
      %v5440 = vmul.f32 %v5206, %v1881
      %v5441 = vmul.f32 %v5308, %v1882
      %v5442 = vmul.f32 %v5309, %v1883
      %v5443 = vmul.f32 %v5411, %v1884
      %v5444 = vmul.f32 %v5412, %v1885
      %v5445 = vpack.c.bf16 %v5414, %v5413
      %v5446 = vpack.c.bf16 %v5416, %v5415
      %v5447 = vpack.c.bf16 %v5418, %v5417
      %v5448 = vpack.c.bf16 %v5420, %v5419
      %v5449 = vpack.c.bf16 %v5422, %v5421
      %v5450 = vpack.c.bf16 %v5424, %v5423
      %v5451 = vpack.c.bf16 %v5426, %v5425
      %v5452 = vpack.c.bf16 %v5428, %v5427
      %v5453 = vpack.c.bf16 %v5430, %v5429
      %v5454 = vpack.c.bf16 %v5432, %v5431
      %v5455 = vpack.c.bf16 %v5434, %v5433
      %v5456 = vpack.c.bf16 %v5436, %v5435
      %v5457 = vpack.c.bf16 %v5438, %v5437
      %v5458 = vpack.c.bf16 %v5440, %v5439
      %v5459 = vpack.c.bf16 %v5442, %v5441
      %v5460 = vpack.c.bf16 %v5444, %v5443
      %5477 = vrot.lane.b32.xlu0 %v5159, 8
      %v5478 = vpop.permute.xlu0 %5477
      %5479 = vrot.lane.b32.xlu0 %v5160, 8
      %v5480 = vpop.permute.xlu0 %5479
      %5481 = vrot.lane.b32.xlu0 %v5161, 8
      %v5482 = vpop.permute.xlu0 %5481
      %5483 = vrot.lane.b32.xlu0 %v5162, 8
      %v5484 = vpop.permute.xlu0 %5483
      %5485 = vrot.lane.b32.xlu0 %v5163, 8
      %v5486 = vpop.permute.xlu0 %5485
      %5487 = vrot.lane.b32.xlu0 %v5164, 8
      %v5488 = vpop.permute.xlu0 %5487
      %5489 = vrot.lane.b32.xlu0 %v5165, 8
      %v5490 = vpop.permute.xlu0 %5489
      %5491 = vrot.lane.b32.xlu0 %v5166, 8
      %v5492 = vpop.permute.xlu0 %5491
      %5493 = vrot.lane.b32.xlu0 %v5167, 8
      %v5494 = vpop.permute.xlu0 %5493
      %5495 = vrot.lane.b32.xlu0 %v5168, 8
      %v5496 = vpop.permute.xlu0 %5495
      %5497 = vrot.lane.b32.xlu0 %v5169, 8
      %v5498 = vpop.permute.xlu0 %5497
      %5499 = vrot.lane.b32.xlu0 %v5170, 8
      %v5500 = vpop.permute.xlu0 %5499
      %5501 = vrot.lane.b32.xlu0 %v5171, 8
      %v5502 = vpop.permute.xlu0 %5501
      %5503 = vrot.lane.b32.xlu0 %v5172, 8
      %v5504 = vpop.permute.xlu0 %5503
      %5505 = vrot.lane.b32.xlu0 %v5173, 8
      %v5506 = vpop.permute.xlu0 %5505
      %5507 = vrot.lane.b32.xlu0 %v5174, 8
      %v5508 = vpop.permute.xlu0 %5507
      %5525 = vrot.lane.b32.xlu0 %v5239, 16
      %v5526 = vpop.permute.xlu0 %5525
      %5527 = vrot.lane.b32.xlu0 %v5240, 16
      %v5528 = vpop.permute.xlu0 %5527
      %5529 = vrot.lane.b32.xlu0 %v5241, 16
      %v5530 = vpop.permute.xlu0 %5529
      %5531 = vrot.lane.b32.xlu0 %v5242, 16
      %v5532 = vpop.permute.xlu0 %5531
      %5533 = vrot.lane.b32.xlu0 %v5243, 16
      %v5534 = vpop.permute.xlu0 %5533
      %5535 = vrot.lane.b32.xlu0 %v5244, 16
      %v5536 = vpop.permute.xlu0 %5535
      %5537 = vrot.lane.b32.xlu0 %v5245, 16
      %v5538 = vpop.permute.xlu0 %5537
      %5539 = vrot.lane.b32.xlu0 %v5246, 16
      %v5540 = vpop.permute.xlu0 %5539
      %5541 = vrot.lane.b32.xlu0 %v5247, 16
      %v5542 = vpop.permute.xlu0 %5541
      %5543 = vrot.lane.b32.xlu0 %v5248, 16
      %v5544 = vpop.permute.xlu0 %5543
      %5545 = vrot.lane.b32.xlu0 %v5249, 16
      %v5546 = vpop.permute.xlu0 %5545
      %5547 = vrot.lane.b32.xlu0 %v5250, 16
      %v5548 = vpop.permute.xlu0 %5547
      %5549 = vrot.lane.b32.xlu0 %v5251, 16
      %v5550 = vpop.permute.xlu0 %5549
      %5551 = vrot.lane.b32.xlu0 %v5252, 16
      %v5552 = vpop.permute.xlu0 %5551
      %5553 = vrot.lane.b32.xlu0 %v5253, 16
      %v5554 = vpop.permute.xlu0 %5553
      %5555 = vrot.lane.b32.xlu0 %v5254, 16
      %v5556 = vpop.permute.xlu0 %5555
      %5573 = vrot.lane.b32.xlu0 %v5289, 24
      %v5574 = vpop.permute.xlu0 %5573
      %5575 = vrot.lane.b32.xlu0 %v5290, 24
      %v5576 = vpop.permute.xlu0 %5575
      %5577 = vrot.lane.b32.xlu0 %v5291, 24
      %v5578 = vpop.permute.xlu0 %5577
      %5579 = vrot.lane.b32.xlu0 %v5292, 24
      %v5580 = vpop.permute.xlu0 %5579
      %5581 = vrot.lane.b32.xlu0 %v5293, 24
      %v5582 = vpop.permute.xlu0 %5581
      %5583 = vrot.lane.b32.xlu0 %v5294, 24
      %v5584 = vpop.permute.xlu0 %5583
      %5585 = vrot.lane.b32.xlu0 %v5295, 24
      %v5586 = vpop.permute.xlu0 %5585
      %5587 = vrot.lane.b32.xlu0 %v5296, 24
      %v5588 = vpop.permute.xlu0 %5587
      %5589 = vrot.lane.b32.xlu0 %v5297, 24
      %v5590 = vpop.permute.xlu0 %5589
      %5591 = vrot.lane.b32.xlu0 %v5298, 24
      %v5592 = vpop.permute.xlu0 %5591
      %5593 = vrot.lane.b32.xlu0 %v5299, 24
      %v5594 = vpop.permute.xlu0 %5593
      %5595 = vrot.lane.b32.xlu0 %v5300, 24
      %v5596 = vpop.permute.xlu0 %5595
      %5597 = vrot.lane.b32.xlu0 %v5301, 24
      %v5598 = vpop.permute.xlu0 %5597
      %5599 = vrot.lane.b32.xlu0 %v5302, 24
      %v5600 = vpop.permute.xlu0 %5599
      %5601 = vrot.lane.b32.xlu0 %v5303, 24
      %v5602 = vpop.permute.xlu0 %5601
      %5603 = vrot.lane.b32.xlu0 %v5304, 24
      %v5604 = vpop.permute.xlu0 %5603
      %5606 = vrot.lane.b32.xlu0 %v5160, 32
      %v5607 = vpop.permute.xlu0 %5606
      %5608 = vrot.lane.b32.xlu0 %v5161, 32
      %v5609 = vpop.permute.xlu0 %5608
      %5610 = vrot.lane.b32.xlu0 %v5162, 32
      %v5611 = vpop.permute.xlu0 %5610
      %5612 = vrot.lane.b32.xlu0 %v5163, 32
      %v5613 = vpop.permute.xlu0 %5612
      %5614 = vrot.lane.b32.xlu0 %v5164, 32
      %v5615 = vpop.permute.xlu0 %5614
      %5616 = vrot.lane.b32.xlu0 %v5165, 32
      %v5617 = vpop.permute.xlu0 %5616
      %5618 = vrot.lane.b32.xlu0 %v5166, 32
      %v5619 = vpop.permute.xlu0 %5618
      %5620 = vrot.lane.b32.xlu0 %v5167, 32
      %v5621 = vpop.permute.xlu0 %5620
      %5622 = vrot.lane.b32.xlu0 %v5168, 32
      %v5623 = vpop.permute.xlu0 %5622
      %5624 = vrot.lane.b32.xlu0 %v5169, 32
      %v5625 = vpop.permute.xlu0 %5624
      %5626 = vrot.lane.b32.xlu0 %v5170, 32
      %v5627 = vpop.permute.xlu0 %5626
      %5628 = vrot.lane.b32.xlu0 %v5171, 32
      %v5629 = vpop.permute.xlu0 %5628
      %5630 = vrot.lane.b32.xlu0 %v5172, 32
      %v5631 = vpop.permute.xlu0 %5630
      %5632 = vrot.lane.b32.xlu0 %v5173, 32
      %v5633 = vpop.permute.xlu0 %5632
      %5634 = vrot.lane.b32.xlu0 %v5174, 32
      %v5635 = vpop.permute.xlu0 %5634
      %5636 = vrot.lane.b32.xlu0 %v5307, 32
      %v5637 = vpop.permute.xlu0 %5636
      %5654 = vrot.lane.b32.xlu0 %v5342, 40
      %v5655 = vpop.permute.xlu0 %5654
      %5656 = vrot.lane.b32.xlu0 %v5343, 40
      %v5657 = vpop.permute.xlu0 %5656
      %5658 = vrot.lane.b32.xlu0 %v5344, 40
      %v5659 = vpop.permute.xlu0 %5658
      %5660 = vrot.lane.b32.xlu0 %v5345, 40
      %v5661 = vpop.permute.xlu0 %5660
      %5662 = vrot.lane.b32.xlu0 %v5346, 40
      %v5663 = vpop.permute.xlu0 %5662
      %5664 = vrot.lane.b32.xlu0 %v5347, 40
      %v5665 = vpop.permute.xlu0 %5664
      %5666 = vrot.lane.b32.xlu0 %v5348, 40
      %v5667 = vpop.permute.xlu0 %5666
      %5668 = vrot.lane.b32.xlu0 %v5349, 40
      %v5669 = vpop.permute.xlu0 %5668
      %5670 = vrot.lane.b32.xlu0 %v5350, 40
      %v5671 = vpop.permute.xlu0 %5670
      %5672 = vrot.lane.b32.xlu0 %v5351, 40
      %v5673 = vpop.permute.xlu0 %5672
      %5674 = vrot.lane.b32.xlu0 %v5352, 40
      %v5675 = vpop.permute.xlu0 %5674
      %5676 = vrot.lane.b32.xlu0 %v5353, 40
      %v5677 = vpop.permute.xlu0 %5676
      %5678 = vrot.lane.b32.xlu0 %v5354, 40
      %v5679 = vpop.permute.xlu0 %5678
      %5680 = vrot.lane.b32.xlu0 %v5355, 40
      %v5681 = vpop.permute.xlu0 %5680
      %5682 = vrot.lane.b32.xlu0 %v5356, 40
      %v5683 = vpop.permute.xlu0 %5682
      %5684 = vrot.lane.b32.xlu0 %v5357, 40
      %v5685 = vpop.permute.xlu0 %5684
      %5702 = vrot.lane.b32.xlu0 %v5392, 48
      %v5703 = vpop.permute.xlu0 %5702
      %5704 = vrot.lane.b32.xlu0 %v5393, 48
      %v5705 = vpop.permute.xlu0 %5704
      %5706 = vrot.lane.b32.xlu0 %v5394, 48
      %v5707 = vpop.permute.xlu0 %5706
      %5708 = vrot.lane.b32.xlu0 %v5395, 48
      %v5709 = vpop.permute.xlu0 %5708
      %5710 = vrot.lane.b32.xlu0 %v5396, 48
      %v5711 = vpop.permute.xlu0 %5710
      %5712 = vrot.lane.b32.xlu0 %v5397, 48
      %v5713 = vpop.permute.xlu0 %5712
      %5714 = vrot.lane.b32.xlu0 %v5398, 48
      %v5715 = vpop.permute.xlu0 %5714
      %5716 = vrot.lane.b32.xlu0 %v5399, 48
      %v5717 = vpop.permute.xlu0 %5716
      %5718 = vrot.lane.b32.xlu0 %v5400, 48
      %v5719 = vpop.permute.xlu0 %5718
      %5720 = vrot.lane.b32.xlu0 %v5401, 48
      %v5721 = vpop.permute.xlu0 %5720
      %5722 = vrot.lane.b32.xlu0 %v5402, 48
      %v5723 = vpop.permute.xlu0 %5722
      %5724 = vrot.lane.b32.xlu0 %v5403, 48
      %v5725 = vpop.permute.xlu0 %5724
      %5726 = vrot.lane.b32.xlu0 %v5404, 48
      %v5727 = vpop.permute.xlu0 %5726
      %5728 = vrot.lane.b32.xlu0 %v5405, 48
      %v5729 = vpop.permute.xlu0 %5728
      %5730 = vrot.lane.b32.xlu0 %v5406, 48
      %v5731 = vpop.permute.xlu0 %5730
      %5732 = vrot.lane.b32.xlu0 %v5407, 48
      %v5733 = vpop.permute.xlu0 %5732
      %5735 = vrot.lane.b32.xlu0 %v5161, 56
      %v5736 = vpop.permute.xlu0 %5735
      %5737 = vrot.lane.b32.xlu0 %v5162, 56
      %v5738 = vpop.permute.xlu0 %5737
      %5739 = vrot.lane.b32.xlu0 %v5163, 56
      %v5740 = vpop.permute.xlu0 %5739
      %5741 = vrot.lane.b32.xlu0 %v5164, 56
      %v5742 = vpop.permute.xlu0 %5741
      %5743 = vrot.lane.b32.xlu0 %v5165, 56
      %v5744 = vpop.permute.xlu0 %5743
      %5745 = vrot.lane.b32.xlu0 %v5166, 56
      %v5746 = vpop.permute.xlu0 %5745
      %5747 = vrot.lane.b32.xlu0 %v5167, 56
      %v5748 = vpop.permute.xlu0 %5747
      %5749 = vrot.lane.b32.xlu0 %v5168, 56
      %v5750 = vpop.permute.xlu0 %5749
      %5751 = vrot.lane.b32.xlu0 %v5169, 56
      %v5752 = vpop.permute.xlu0 %5751
      %5753 = vrot.lane.b32.xlu0 %v5170, 56
      %v5754 = vpop.permute.xlu0 %5753
      %5755 = vrot.lane.b32.xlu0 %v5171, 56
      %v5756 = vpop.permute.xlu0 %5755
      %5757 = vrot.lane.b32.xlu0 %v5172, 56
      %v5758 = vpop.permute.xlu0 %5757
      %5759 = vrot.lane.b32.xlu0 %v5173, 56
      %v5760 = vpop.permute.xlu0 %5759
      %5761 = vrot.lane.b32.xlu0 %v5174, 56
      %v5762 = vpop.permute.xlu0 %5761
      %5763 = vrot.lane.b32.xlu0 %v5307, 56
      %v5764 = vpop.permute.xlu0 %5763
      %5765 = vrot.lane.b32.xlu0 %v5410, 56
      %v5766 = vpop.permute.xlu0 %5765
      %5783 = vrot.lane.b32.xlu0 %v5445, 64
      %v5784 = vpop.permute.xlu0 %5783
      %5785 = vrot.lane.b32.xlu0 %v5446, 64
      %v5786 = vpop.permute.xlu0 %5785
      %5787 = vrot.lane.b32.xlu0 %v5447, 64
      %v5788 = vpop.permute.xlu0 %5787
      %5789 = vrot.lane.b32.xlu0 %v5448, 64
      %v5790 = vpop.permute.xlu0 %5789
      %5791 = vrot.lane.b32.xlu0 %v5449, 64
      %v5792 = vpop.permute.xlu0 %5791
      %5793 = vrot.lane.b32.xlu0 %v5450, 64
      %v5794 = vpop.permute.xlu0 %5793
      %5795 = vrot.lane.b32.xlu0 %v5451, 64
      %v5796 = vpop.permute.xlu0 %5795
      %5797 = vrot.lane.b32.xlu0 %v5452, 64
      %v5798 = vpop.permute.xlu0 %5797
      %5799 = vrot.lane.b32.xlu0 %v5453, 64
      %v5800 = vpop.permute.xlu0 %5799
      %5801 = vrot.lane.b32.xlu0 %v5454, 64
      %v5802 = vpop.permute.xlu0 %5801
      %5803 = vrot.lane.b32.xlu0 %v5455, 64
      %v5804 = vpop.permute.xlu0 %5803
      %5805 = vrot.lane.b32.xlu0 %v5456, 64
      %v5806 = vpop.permute.xlu0 %5805
      %5807 = vrot.lane.b32.xlu0 %v5457, 64
      %v5808 = vpop.permute.xlu0 %5807
      %5809 = vrot.lane.b32.xlu0 %v5458, 64
      %v5810 = vpop.permute.xlu0 %5809
      %5811 = vrot.lane.b32.xlu0 %v5459, 64
      %v5812 = vpop.permute.xlu0 %5811
      %5813 = vrot.lane.b32.xlu0 %v5460, 64
      %v5814 = vpop.permute.xlu0 %5813
      %v5817 = vsel %vm606, %v5111, %v5478
      %v5820 = vsel %vm606, %v5112, %v5480
      %v5823 = vsel %vm606, %v5113, %v5482
      %v5826 = vsel %vm606, %v5114, %v5484
      %v5829 = vsel %vm606, %v5115, %v5486
      %v5832 = vsel %vm606, %v5116, %v5488
      %v5835 = vsel %vm606, %v5117, %v5490
      %v5838 = vsel %vm606, %v5118, %v5492
      %v5841 = vsel %vm606, %v5119, %v5494
      %v5844 = vsel %vm606, %v5120, %v5496
      %v5847 = vsel %vm606, %v5121, %v5498
      %v5850 = vsel %vm606, %v5122, %v5500
      %v5853 = vsel %vm606, %v5123, %v5502
      %v5856 = vsel %vm606, %v5124, %v5504
      %v5859 = vsel %vm606, %v5125, %v5506
      %v5862 = vsel %vm606, %v5126, %v5508
      %vm5863 = vcmask 130048
      %v5865 = vsel %vm5863, %v5817, %v5526
      %v5867 = vsel %vm5863, %v5820, %v5528
      %v5869 = vsel %vm5863, %v5823, %v5530
      %v5871 = vsel %vm5863, %v5826, %v5532
      %v5873 = vsel %vm5863, %v5829, %v5534
      %v5875 = vsel %vm5863, %v5832, %v5536
      %v5877 = vsel %vm5863, %v5835, %v5538
      %v5879 = vsel %vm5863, %v5838, %v5540
      %v5881 = vsel %vm5863, %v5841, %v5542
      %v5883 = vsel %vm5863, %v5844, %v5544
      %v5885 = vsel %vm5863, %v5847, %v5546
      %v5887 = vsel %vm5863, %v5850, %v5548
      %v5889 = vsel %vm5863, %v5853, %v5550
      %v5891 = vsel %vm5863, %v5856, %v5552
      %v5893 = vsel %vm5863, %v5859, %v5554
      %v5895 = vsel %vm5863, %v5862, %v5556
      %v5897 = vsel %vm2809, %v5865, %v5574
      %v5899 = vsel %vm2809, %v5867, %v5576
      %v5901 = vsel %vm2809, %v5869, %v5578
      %v5903 = vsel %vm2809, %v5871, %v5580
      %v5905 = vsel %vm2809, %v5873, %v5582
      %v5907 = vsel %vm2809, %v5875, %v5584
      %v5909 = vsel %vm2809, %v5877, %v5586
      %v5911 = vsel %vm2809, %v5879, %v5588
      %v5913 = vsel %vm2809, %v5881, %v5590
      %v5915 = vsel %vm2809, %v5883, %v5592
      %v5917 = vsel %vm2809, %v5885, %v5594
      %v5919 = vsel %vm2809, %v5887, %v5596
      %v5921 = vsel %vm2809, %v5889, %v5598
      %v5923 = vsel %vm2809, %v5891, %v5600
      %v5925 = vsel %vm2809, %v5893, %v5602
      %v5927 = vsel %vm2809, %v5895, %v5604
      %vm5928 = vcmask 261120
      %v5930 = vsel %vm5928, %v5897, %v5607
      %v5932 = vsel %vm5928, %v5899, %v5609
      %v5934 = vsel %vm5928, %v5901, %v5611
      %v5936 = vsel %vm5928, %v5903, %v5613
      %v5938 = vsel %vm5928, %v5905, %v5615
      %v5940 = vsel %vm5928, %v5907, %v5617
      %v5942 = vsel %vm5928, %v5909, %v5619
      %v5944 = vsel %vm5928, %v5911, %v5621
      %v5946 = vsel %vm5928, %v5913, %v5623
      %v5948 = vsel %vm5928, %v5915, %v5625
      %v5950 = vsel %vm5928, %v5917, %v5627
      %v5952 = vsel %vm5928, %v5919, %v5629
      %v5954 = vsel %vm5928, %v5921, %v5631
      %v5956 = vsel %vm5928, %v5923, %v5633
      %v5958 = vsel %vm5928, %v5925, %v5635
      %v5960 = vsel %vm5928, %v5927, %v5637
      %vm5961 = vcmask 326656
      %v5963 = vsel %vm5961, %v5930, %v5655
      %v5965 = vsel %vm5961, %v5932, %v5657
      %v5967 = vsel %vm5961, %v5934, %v5659
      %v5969 = vsel %vm5961, %v5936, %v5661
      %v5971 = vsel %vm5961, %v5938, %v5663
      %v5973 = vsel %vm5961, %v5940, %v5665
      %v5975 = vsel %vm5961, %v5942, %v5667
      %v5977 = vsel %vm5961, %v5944, %v5669
      %v5979 = vsel %vm5961, %v5946, %v5671
      %v5981 = vsel %vm5961, %v5948, %v5673
      %v5983 = vsel %vm5961, %v5950, %v5675
      %v5985 = vsel %vm5961, %v5952, %v5677
      %v5987 = vsel %vm5961, %v5954, %v5679
      %v5989 = vsel %vm5961, %v5956, %v5681
      %v5991 = vsel %vm5961, %v5958, %v5683
      %v5993 = vsel %vm5961, %v5960, %v5685
      %v5995 = vsel %vm2941, %v5963, %v5703
      %v5997 = vsel %vm2941, %v5965, %v5705
      %v5999 = vsel %vm2941, %v5967, %v5707
      %v6001 = vsel %vm2941, %v5969, %v5709
      %v6003 = vsel %vm2941, %v5971, %v5711
      %v6005 = vsel %vm2941, %v5973, %v5713
      %v6007 = vsel %vm2941, %v5975, %v5715
      %v6009 = vsel %vm2941, %v5977, %v5717
      %v6011 = vsel %vm2941, %v5979, %v5719
      %v6013 = vsel %vm2941, %v5981, %v5721
      %v6015 = vsel %vm2941, %v5983, %v5723
      %v6017 = vsel %vm2941, %v5985, %v5725
      %v6019 = vsel %vm2941, %v5987, %v5727
      %v6021 = vsel %vm2941, %v5989, %v5729
      %v6023 = vsel %vm2941, %v5991, %v5731
      %v6025 = vsel %vm2941, %v5993, %v5733
      %vm6026 = vcmask 457728
      %v6028 = vsel %vm6026, %v5995, %v5736
      %v6030 = vsel %vm6026, %v5997, %v5738
      %v6032 = vsel %vm6026, %v5999, %v5740
      %v6034 = vsel %vm6026, %v6001, %v5742
      %v6036 = vsel %vm6026, %v6003, %v5744
      %v6038 = vsel %vm6026, %v6005, %v5746
      %v6040 = vsel %vm6026, %v6007, %v5748
      %v6042 = vsel %vm6026, %v6009, %v5750
      %v6044 = vsel %vm6026, %v6011, %v5752
      %v6046 = vsel %vm6026, %v6013, %v5754
      %v6048 = vsel %vm6026, %v6015, %v5756
      %v6050 = vsel %vm6026, %v6017, %v5758
      %v6052 = vsel %vm6026, %v6019, %v5760
      %v6054 = vsel %vm6026, %v6021, %v5762
      %v6056 = vsel %vm6026, %v6023, %v5764
      %v6058 = vsel %vm6026, %v6025, %v5766
      %vm6059 = vcmask 523264
      %v6061 = vsel %vm6059, %v6028, %v5784
      %v6063 = vsel %vm6059, %v6030, %v5786
      %v6065 = vsel %vm6059, %v6032, %v5788
      %v6067 = vsel %vm6059, %v6034, %v5790
      %v6069 = vsel %vm6059, %v6036, %v5792
      %v6071 = vsel %vm6059, %v6038, %v5794
      %v6073 = vsel %vm6059, %v6040, %v5796
      %v6075 = vsel %vm6059, %v6042, %v5798
      %v6077 = vsel %vm6059, %v6044, %v5800
      %v6079 = vsel %vm6059, %v6046, %v5802
      %v6081 = vsel %vm6059, %v6048, %v5804
      %v6083 = vsel %vm6059, %v6050, %v5806
      %v6085 = vsel %vm6059, %v6052, %v5808
      %v6087 = vsel %vm6059, %v6054, %v5810
      %v6089 = vsel %vm6059, %v6056, %v5812
      %v6091 = vsel %vm6059, %v6058, %v5814
      %v6092 = vld [vmem:[%s11] sm:$0xf]
      %v6093 = vld [vmem:[%s11 + $0x4] sm:$0xf]
      %v6094 = vld [vmem:[%s11 + $0x8] sm:$0xf]
      %v6095 = vld [vmem:[%s11 + $0xc] sm:$0xf]
      %v6096 = vld [vmem:[%s11 + $0x10] sm:$0xf]
      %v6097 = vld [vmem:[%s11 + $0x14] sm:$0xf]
      %v6098 = vld [vmem:[%s11 + $0x18] sm:$0xf]
      %v6099 = vld [vmem:[%s11 + $0x1c] sm:$0xf]
      %v6100 = vld [vmem:[%s11 + $0x20] sm:$0xf]
      %v6101 = vld [vmem:[%s12] sm:$0x1]
      %v6103 = vlaneseq
      %v6104 = vshrl.u32 %v6103, 7
      %v6105 = vsub.s32 0, %v6104
      %v6106 = vrot.slane %v6101, %v6105
      %v6117 = vunpack.c.l.b16 %v6092
      %v6118 = vunpack.c.l.b16 %v6093
      %v6119 = vunpack.c.l.b16 %v6094
      %v6120 = vunpack.c.l.b16 %v6095
      %v6121 = vunpack.c.l.b16 %v6096
      %v6122 = vunpack.c.l.b16 %v6097
      %v6123 = vunpack.c.l.b16 %v6098
      %v6124 = vunpack.c.l.b16 %v6099
      %v6125 = vunpack.c.l.b16 %v6100
      %v6126 = vpack.c.b16 %v6118, %v6117
      %v6127 = vpack.c.b16 %v6120, %v6119
      %v6128 = vpack.c.b16 %v6122, %v6121
      %v6129 = vpack.c.b16 %v6124, %v6123
      %v6130 = vpack.c.b16 %v6125, %v6125
      %vm6135 = vcmask 588800
      %v6136 = vsel %vm6135, %v6061, 0
      %v6138 = vsel %vm6135, %v6063, 0
      %v6140 = vsel %vm6135, %v6065, 0
      %v6142 = vsel %vm6135, %v6067, 0
      %v6144 = vsel %vm6135, %v6069, 0
      %v6146 = vsel %vm6135, %v6071, 0
      %v6148 = vsel %vm6135, %v6073, 0
      %v6150 = vsel %vm6135, %v6075, 0
      %v6152 = vsel %vm6135, %v6077, 0
      %v6154 = vsel %vm6135, %v6079, 0
      %v6156 = vsel %vm6135, %v6081, 0
      %v6158 = vsel %vm6135, %v6083, 0
      %v6160 = vsel %vm6135, %v6085, 0
      %v6162 = vsel %vm6135, %v6087, 0
      %v6164 = vsel %vm6135, %v6089, 0
      %v6166 = vsel %vm6135, %v6091, 0
      %v6169 = vsel %vm655, %v6130, 0
      %6171 = vmatprep.subr.bf16.mxu0 0
      %6172 = vmatpush1.bf16.msra.mxu0 %v6126
      %6173 = vmatprep.subr.bf16.mxu0 0
      %6174 = vmatpush1.bf16.msra.mxu0 %v6127
      %6175 = vmatprep.subr.bf16.mxu0 0
      %6176 = vmatpush1.bf16.msra.mxu0 %v6128
      %6177 = vmatprep.subr.bf16.mxu0 0
      %6178 = vmatpush1.bf16.msra.mxu0 %v6129
      %6179 = vmatprep.subr.bf16.mxu0 0
      %6180 = vmatpush1.bf16.msra.mxu0 %v6169
      %6181 = vmatprep.subr.bf16.mxu0 0
      %6182 = vmatpush1.bf16.msra.mxu0 0
      %6183 = vmatprep.subr.bf16.mxu0 0
      %6184 = vmatpush1.bf16.msra.mxu0 0
      %6185 = vmatprep.subr.bf16.mxu0 0
      %6186 = vmatpush1.bf16.msra.mxu0 0
      %6187 = vmatprep.subr.bf16.mxu0 0
      %6188 = vmatpush1.bf16.msra.mxu0 0
      %6189 = vmatprep.subr.bf16.mxu0 0
      %6190 = vmatpush1.bf16.msra.mxu0 0
      %6191 = vmatprep.subr.bf16.mxu0 0
      %6192 = vmatpush1.bf16.msra.mxu0 0
      %6193 = vmatprep.subr.bf16.mxu0 0
      %6194 = vmatpush1.bf16.msra.mxu0 0
      %6195 = vmatprep.subr.bf16.mxu0 0
      %6196 = vmatpush1.bf16.msra.mxu0 0
      %6197 = vmatprep.subr.bf16.mxu0 0
      %6198 = vmatpush1.bf16.msra.mxu0 0
      %6199 = vmatprep.subr.bf16.mxu0 0
      %6200 = vmatpush1.bf16.msra.mxu0 0
      %6201 = vmatprep.subr.bf16.mxu0 0
      %6202 = vmatpush1.bf16.msra.mxu0 0
      %6203 = vmatprep.mubr.bf16.mxu0 0
      %6204 = vmatmul.mubr.bf16.gmra.mrb[0].mxu0 %v6136
      %v6205 = vpop.f32.mrb[0].mxu0
      %v6206 = vadd.f32 %v6106, %v6205
      %v6207 = vpop.f32.mrb[0].mxu0
      %v6208 = vpop.f32.mrb[0].mxu0
      %v6209 = vadd.f32 %v6106, %v6208
      %v6210 = vpop.f32.mrb[0].mxu0
      %6211 = vmatprep.mubr.bf16.mxu0 0
      %6212 = vmatmul.mubr.bf16.gmra.mrb[0].mxu0 %v6138
      %v6213 = vpop.f32.mrb[0].mxu0
      %v6214 = vadd.f32 %v6106, %v6213
      %v6215 = vpop.f32.mrb[0].mxu0
      %v6216 = vpop.f32.mrb[0].mxu0
      %v6217 = vadd.f32 %v6106, %v6216
      %v6218 = vpop.f32.mrb[0].mxu0
      %6219 = vmatprep.mubr.bf16.mxu0 0
      %6220 = vmatmul.mubr.bf16.gmra.mrb[0].mxu0 %v6140
      %v6221 = vpop.f32.mrb[0].mxu0
      %v6222 = vadd.f32 %v6106, %v6221
      %v6223 = vpop.f32.mrb[0].mxu0
      %v6224 = vpop.f32.mrb[0].mxu0
      %v6225 = vadd.f32 %v6106, %v6224
      %v6226 = vpop.f32.mrb[0].mxu0
      %6227 = vmatprep.mubr.bf16.mxu0 0
      %6228 = vmatmul.mubr.bf16.gmra.mrb[0].mxu0 %v6142
      %v6229 = vpop.f32.mrb[0].mxu0
      %v6230 = vadd.f32 %v6106, %v6229
      %v6231 = vpop.f32.mrb[0].mxu0
      %v6232 = vpop.f32.mrb[0].mxu0
      %v6233 = vadd.f32 %v6106, %v6232
      %v6234 = vpop.f32.mrb[0].mxu0
      %6235 = vmatprep.mubr.bf16.mxu0 0
      %6236 = vmatmul.mubr.bf16.gmra.mrb[0].mxu0 %v6144
      %v6237 = vpop.f32.mrb[0].mxu0
      %v6238 = vadd.f32 %v6106, %v6237
      %v6239 = vpop.f32.mrb[0].mxu0
      %v6240 = vpop.f32.mrb[0].mxu0
      %v6241 = vadd.f32 %v6106, %v6240
      %v6242 = vpop.f32.mrb[0].mxu0
      %6243 = vmatprep.mubr.bf16.mxu0 0
      %6244 = vmatmul.mubr.bf16.gmra.mrb[0].mxu0 %v6146
      %v6245 = vpop.f32.mrb[0].mxu0
      %v6246 = vadd.f32 %v6106, %v6245
      %v6247 = vpop.f32.mrb[0].mxu0
      %v6248 = vpop.f32.mrb[0].mxu0
      %v6249 = vadd.f32 %v6106, %v6248
      %v6250 = vpop.f32.mrb[0].mxu0
      %6251 = vmatprep.mubr.bf16.mxu0 0
      %6252 = vmatmul.mubr.bf16.gmra.mrb[0].mxu0 %v6148
      %v6253 = vpop.f32.mrb[0].mxu0
      %v6254 = vadd.f32 %v6106, %v6253
      %v6255 = vpop.f32.mrb[0].mxu0
      %v6256 = vpop.f32.mrb[0].mxu0
      %v6257 = vadd.f32 %v6106, %v6256
      %v6258 = vpop.f32.mrb[0].mxu0
      %6259 = vmatprep.mubr.bf16.mxu0 0
      %6260 = vmatmul.mubr.bf16.gmra.mrb[0].mxu0 %v6150
      %v6261 = vpop.f32.mrb[0].mxu0
      %v6262 = vadd.f32 %v6106, %v6261
      %v6263 = vpop.f32.mrb[0].mxu0
      %v6264 = vpop.f32.mrb[0].mxu0
      %v6265 = vadd.f32 %v6106, %v6264
      %v6266 = vpop.f32.mrb[0].mxu0
      %6267 = vmatprep.mubr.bf16.mxu0 0
      %6268 = vmatmul.mubr.bf16.gmra.mrb[0].mxu0 %v6152
      %v6269 = vpop.f32.mrb[0].mxu0
      %v6270 = vadd.f32 %v6106, %v6269
      %v6271 = vpop.f32.mrb[0].mxu0
      %v6272 = vpop.f32.mrb[0].mxu0
      %v6273 = vadd.f32 %v6106, %v6272
      %v6274 = vpop.f32.mrb[0].mxu0
      %6275 = vmatprep.mubr.bf16.mxu0 0
      %6276 = vmatmul.mubr.bf16.gmra.mrb[0].mxu0 %v6154
      %v6277 = vpop.f32.mrb[0].mxu0
      %v6278 = vadd.f32 %v6106, %v6277
      %v6279 = vpop.f32.mrb[0].mxu0
      %v6280 = vpop.f32.mrb[0].mxu0
      %v6281 = vadd.f32 %v6106, %v6280
      %v6282 = vpop.f32.mrb[0].mxu0
      %6283 = vmatprep.mubr.bf16.mxu0 0
      %6284 = vmatmul.mubr.bf16.gmra.mrb[0].mxu0 %v6156
      %v6285 = vpop.f32.mrb[0].mxu0
      %v6286 = vadd.f32 %v6106, %v6285
      %v6287 = vpop.f32.mrb[0].mxu0
      %v6288 = vpop.f32.mrb[0].mxu0
      %v6289 = vadd.f32 %v6106, %v6288
      %v6290 = vpop.f32.mrb[0].mxu0
      %6291 = vmatprep.mubr.bf16.mxu0 0
      %6292 = vmatmul.mubr.bf16.gmra.mrb[0].mxu0 %v6158
      %v6293 = vpop.f32.mrb[0].mxu0
      %v6294 = vadd.f32 %v6106, %v6293
      %v6295 = vpop.f32.mrb[0].mxu0
      %v6296 = vpop.f32.mrb[0].mxu0
      %v6297 = vadd.f32 %v6106, %v6296
      %v6298 = vpop.f32.mrb[0].mxu0
      %6299 = vmatprep.mubr.bf16.mxu0 0
      %6300 = vmatmul.mubr.bf16.gmra.mrb[0].mxu0 %v6160
      %v6301 = vpop.f32.mrb[0].mxu0
      %v6302 = vadd.f32 %v6106, %v6301
      %v6303 = vpop.f32.mrb[0].mxu0
      %v6304 = vpop.f32.mrb[0].mxu0
      %v6305 = vadd.f32 %v6106, %v6304
      %v6306 = vpop.f32.mrb[0].mxu0
      %6307 = vmatprep.mubr.bf16.mxu0 0
      %6308 = vmatmul.mubr.bf16.gmra.mrb[0].mxu0 %v6162
      %v6309 = vpop.f32.mrb[0].mxu0
      %v6310 = vadd.f32 %v6106, %v6309
      %v6311 = vpop.f32.mrb[0].mxu0
      %v6312 = vpop.f32.mrb[0].mxu0
      %v6313 = vadd.f32 %v6106, %v6312
      %v6314 = vpop.f32.mrb[0].mxu0
      %6315 = vmatprep.mubr.bf16.mxu0 0
      %6316 = vmatmul.mubr.bf16.gmra.mrb[0].mxu0 %v6164
      %v6317 = vpop.f32.mrb[0].mxu0
      %v6318 = vadd.f32 %v6106, %v6317
      %v6319 = vpop.f32.mrb[0].mxu0
      %v6320 = vpop.f32.mrb[0].mxu0
      %v6321 = vadd.f32 %v6106, %v6320
      %v6322 = vpop.f32.mrb[0].mxu0
      %6323 = vmatprep.mubr.bf16.mxu0 0
      %6324 = vmatmul.mubr.bf16.gmra.mrb[0].mxu0 %v6166
      %v6325 = vpop.f32.mrb[0].mxu0
      %v6326 = vadd.f32 %v6106, %v6325
      %v6327 = vpop.f32.mrb[0].mxu0
      %v6328 = vpop.f32.mrb[0].mxu0
      %v6329 = vadd.f32 %v6106, %v6328
      %v6330 = vpop.f32.mrb[0].mxu0
      %6331 = vdwg.mxu0
      %v6332 = vmax.f32 %v6206, 0.0
      %v6333 = vmax.f32 %v6209, 0.0
      %v6334 = vmax.f32 %v6214, 0.0
      %v6335 = vmax.f32 %v6217, 0.0
      %v6336 = vmax.f32 %v6222, 0.0
      %v6337 = vmax.f32 %v6225, 0.0
      %v6338 = vmax.f32 %v6230, 0.0
      %v6339 = vmax.f32 %v6233, 0.0
      %v6340 = vmax.f32 %v6238, 0.0
      %v6341 = vmax.f32 %v6241, 0.0
      %v6342 = vmax.f32 %v6246, 0.0
      %v6343 = vmax.f32 %v6249, 0.0
      %v6344 = vmax.f32 %v6254, 0.0
      %v6345 = vmax.f32 %v6257, 0.0
      %v6346 = vmax.f32 %v6262, 0.0
      %v6347 = vmax.f32 %v6265, 0.0
      %v6348 = vmax.f32 %v6270, 0.0
      %v6349 = vmax.f32 %v6273, 0.0
      %v6350 = vmax.f32 %v6278, 0.0
      %v6351 = vmax.f32 %v6281, 0.0
      %v6352 = vmax.f32 %v6286, 0.0
      %v6353 = vmax.f32 %v6289, 0.0
      %v6354 = vmax.f32 %v6294, 0.0
      %v6355 = vmax.f32 %v6297, 0.0
      %v6356 = vmax.f32 %v6302, 0.0
      %v6357 = vmax.f32 %v6305, 0.0
      %v6358 = vmax.f32 %v6310, 0.0
      %v6359 = vmax.f32 %v6313, 0.0
      %v6360 = vmax.f32 %v6318, 0.0
      %v6361 = vmax.f32 %v6321, 0.0
      %v6362 = vmax.f32 %v6326, 0.0
      %v6363 = vmax.f32 %v6329, 0.0
      %v6364 = vpack.c.bf16 %v6333, %v6332
      %v6365 = vpack.c.bf16 %v6335, %v6334
      %v6366 = vpack.c.bf16 %v6337, %v6336
      %v6367 = vpack.c.bf16 %v6339, %v6338
      %v6368 = vpack.c.bf16 %v6341, %v6340
      %v6369 = vpack.c.bf16 %v6343, %v6342
      %v6370 = vpack.c.bf16 %v6345, %v6344
      %v6371 = vpack.c.bf16 %v6347, %v6346
      %v6372 = vpack.c.bf16 %v6349, %v6348
      %v6373 = vpack.c.bf16 %v6351, %v6350
      %v6374 = vpack.c.bf16 %v6353, %v6352
      %v6375 = vpack.c.bf16 %v6355, %v6354
      %v6376 = vpack.c.bf16 %v6357, %v6356
      %v6377 = vpack.c.bf16 %v6359, %v6358
      %v6378 = vpack.c.bf16 %v6361, %v6360
      %v6379 = vpack.c.bf16 %v6363, %v6362
      %v6380 = vld [vmem:[%s15] sm:$0xf]
      %v6381 = vld [vmem:[%s15 + $0x4] sm:$0x1]
      %v6384 = vunpack.c.l.b16 %v6380
      %v6385 = vunpack.c.l.b16 %v6381
      %v6386 = vpack.c.b16 %v6385, %v6384
      %vm6387 = vcmask 80896
      %v6389 = vsel %vm6387, %v6364, 0
      %v6392 = vsel %vm6387, %v6365, 0
      %v6395 = vsel %vm6387, %v6366, 0
      %v6398 = vsel %vm6387, %v6367, 0
      %v6401 = vsel %vm6387, %v6368, 0
      %v6404 = vsel %vm6387, %v6369, 0
      %v6407 = vsel %vm6387, %v6370, 0
      %v6410 = vsel %vm6387, %v6371, 0
      %v6413 = vsel %vm6387, %v6372, 0
      %v6416 = vsel %vm6387, %v6373, 0
      %v6419 = vsel %vm6387, %v6374, 0
      %v6422 = vsel %vm6387, %v6375, 0
      %v6425 = vsel %vm6387, %v6376, 0
      %v6428 = vsel %vm6387, %v6377, 0
      %v6431 = vsel %vm6387, %v6378, 0
      %v6434 = vsel %vm6387, %v6379, 0
      %vm6436 = vcmask 1044480
      %v6438 = vsel %vm6436, %v6386, 0
      %6440 = vmatprep.subr.bf16.mxu0 0
      %6441 = vmatpush1.bf16.msra.mxu0 %v6438
      %6442 = vmatprep.subr.bf16.mxu0 0
      %6443 = vmatpush1.bf16.msra.mxu0 0
      %6444 = vmatprep.subr.bf16.mxu0 0
      %6445 = vmatpush1.bf16.msra.mxu0 0
      %6446 = vmatprep.subr.bf16.mxu0 0
      %6447 = vmatpush1.bf16.msra.mxu0 0
      %6448 = vmatprep.subr.bf16.mxu0 0
      %6449 = vmatpush1.bf16.msra.mxu0 0
      %6450 = vmatprep.subr.bf16.mxu0 0
      %6451 = vmatpush1.bf16.msra.mxu0 0
      %6452 = vmatprep.subr.bf16.mxu0 0
      %6453 = vmatpush1.bf16.msra.mxu0 0
      %6454 = vmatprep.subr.bf16.mxu0 0
      %6455 = vmatpush1.bf16.msra.mxu0 0
      %6456 = vmatprep.subr.bf16.mxu0 0
      %6457 = vmatpush1.bf16.msra.mxu0 0
      %6458 = vmatprep.subr.bf16.mxu0 0
      %6459 = vmatpush1.bf16.msra.mxu0 0
      %6460 = vmatprep.subr.bf16.mxu0 0
      %6461 = vmatpush1.bf16.msra.mxu0 0
      %6462 = vmatprep.subr.bf16.mxu0 0
      %6463 = vmatpush1.bf16.msra.mxu0 0
      %6464 = vmatprep.subr.bf16.mxu0 0
      %6465 = vmatpush1.bf16.msra.mxu0 0
      %6466 = vmatprep.subr.bf16.mxu0 0
      %6467 = vmatpush1.bf16.msra.mxu0 0
      %6468 = vmatprep.subr.bf16.mxu0 0
      %6469 = vmatpush1.bf16.msra.mxu0 0
      %6470 = vmatprep.subr.bf16.mxu0 0
      %6471 = vmatpush1.bf16.msra.mxu0 0
      %6472 = vmatprep.mubr.bf16.mxu0 0
      %6473 = vmatmul.mubr.bf16.gmra.mrb[0].mxu0 %v6389
      %v6474 = vpop.f32.mrb[0].mxu0
      %v6475 = vadd.f32 0.0, %v6474
      %v6476 = vpop.f32.mrb[0].mxu0
      %v6477 = vpop.f32.mrb[0].mxu0
      %v6478 = vadd.f32 0.0, %v6477
      %v6479 = vpop.f32.mrb[0].mxu0
      %6480 = vmatprep.mubr.bf16.mxu0 0
      %6481 = vmatmul.mubr.bf16.gmra.mrb[0].mxu0 %v6392
      %v6482 = vpop.f32.mrb[0].mxu0
      %v6483 = vadd.f32 0.0, %v6482
      %v6484 = vpop.f32.mrb[0].mxu0
      %v6485 = vpop.f32.mrb[0].mxu0
      %v6486 = vadd.f32 0.0, %v6485
      %v6487 = vpop.f32.mrb[0].mxu0
      %6488 = vmatprep.mubr.bf16.mxu0 0
      %6489 = vmatmul.mubr.bf16.gmra.mrb[0].mxu0 %v6395
      %v6490 = vpop.f32.mrb[0].mxu0
      %v6491 = vadd.f32 0.0, %v6490
      %v6492 = vpop.f32.mrb[0].mxu0
      %v6493 = vpop.f32.mrb[0].mxu0
      %v6494 = vadd.f32 0.0, %v6493
      %v6495 = vpop.f32.mrb[0].mxu0
      %6496 = vmatprep.mubr.bf16.mxu0 0
      %6497 = vmatmul.mubr.bf16.gmra.mrb[0].mxu0 %v6398
      %v6498 = vpop.f32.mrb[0].mxu0
      %v6499 = vadd.f32 0.0, %v6498
      %v6500 = vpop.f32.mrb[0].mxu0
      %v6501 = vpop.f32.mrb[0].mxu0
      %v6502 = vadd.f32 0.0, %v6501
      %v6503 = vpop.f32.mrb[0].mxu0
      %6504 = vmatprep.mubr.bf16.mxu0 0
      %6505 = vmatmul.mubr.bf16.gmra.mrb[0].mxu0 %v6401
      %v6506 = vpop.f32.mrb[0].mxu0
      %v6507 = vadd.f32 0.0, %v6506
      %v6508 = vpop.f32.mrb[0].mxu0
      %v6509 = vpop.f32.mrb[0].mxu0
      %v6510 = vadd.f32 0.0, %v6509
      %v6511 = vpop.f32.mrb[0].mxu0
      %6512 = vmatprep.mubr.bf16.mxu0 0
      %6513 = vmatmul.mubr.bf16.gmra.mrb[0].mxu0 %v6404
      %v6514 = vpop.f32.mrb[0].mxu0
      %v6515 = vadd.f32 0.0, %v6514
      %v6516 = vpop.f32.mrb[0].mxu0
      %v6517 = vpop.f32.mrb[0].mxu0
      %v6518 = vadd.f32 0.0, %v6517
      %v6519 = vpop.f32.mrb[0].mxu0
      %6520 = vmatprep.mubr.bf16.mxu0 0
      %6521 = vmatmul.mubr.bf16.gmra.mrb[0].mxu0 %v6407
      %v6522 = vpop.f32.mrb[0].mxu0
      %v6523 = vadd.f32 0.0, %v6522
      %v6524 = vpop.f32.mrb[0].mxu0
      %v6525 = vpop.f32.mrb[0].mxu0
      %v6526 = vadd.f32 0.0, %v6525
      %v6527 = vpop.f32.mrb[0].mxu0
      %6528 = vmatprep.mubr.bf16.mxu0 0
      %6529 = vmatmul.mubr.bf16.gmra.mrb[0].mxu0 %v6410
      %v6530 = vpop.f32.mrb[0].mxu0
      %v6531 = vadd.f32 0.0, %v6530
      %v6532 = vpop.f32.mrb[0].mxu0
      %v6533 = vpop.f32.mrb[0].mxu0
      %v6534 = vadd.f32 0.0, %v6533
      %v6535 = vpop.f32.mrb[0].mxu0
      %6536 = vmatprep.mubr.bf16.mxu0 0
      %6537 = vmatmul.mubr.bf16.gmra.mrb[0].mxu0 %v6413
      %v6538 = vpop.f32.mrb[0].mxu0
      %v6539 = vadd.f32 0.0, %v6538
      %v6540 = vpop.f32.mrb[0].mxu0
      %v6541 = vpop.f32.mrb[0].mxu0
      %v6542 = vadd.f32 0.0, %v6541
      %v6543 = vpop.f32.mrb[0].mxu0
      %6544 = vmatprep.mubr.bf16.mxu0 0
      %6545 = vmatmul.mubr.bf16.gmra.mrb[0].mxu0 %v6416
      %v6546 = vpop.f32.mrb[0].mxu0
      %v6547 = vadd.f32 0.0, %v6546
      %v6548 = vpop.f32.mrb[0].mxu0
      %v6549 = vpop.f32.mrb[0].mxu0
      %v6550 = vadd.f32 0.0, %v6549
      %v6551 = vpop.f32.mrb[0].mxu0
      %6552 = vmatprep.mubr.bf16.mxu0 0
      %6553 = vmatmul.mubr.bf16.gmra.mrb[0].mxu0 %v6419
      %v6554 = vpop.f32.mrb[0].mxu0
      %v6555 = vadd.f32 0.0, %v6554
      %v6556 = vpop.f32.mrb[0].mxu0
      %v6557 = vpop.f32.mrb[0].mxu0
      %v6558 = vadd.f32 0.0, %v6557
      %v6559 = vpop.f32.mrb[0].mxu0
      %6560 = vmatprep.mubr.bf16.mxu0 0
      %6561 = vmatmul.mubr.bf16.gmra.mrb[0].mxu0 %v6422
      %v6562 = vpop.f32.mrb[0].mxu0
      %v6563 = vadd.f32 0.0, %v6562
      %v6564 = vpop.f32.mrb[0].mxu0
      %v6565 = vpop.f32.mrb[0].mxu0
      %v6566 = vadd.f32 0.0, %v6565
      %v6567 = vpop.f32.mrb[0].mxu0
      %6568 = vmatprep.mubr.bf16.mxu0 0
      %6569 = vmatmul.mubr.bf16.gmra.mrb[0].mxu0 %v6425
      %v6570 = vpop.f32.mrb[0].mxu0
      %v6571 = vadd.f32 0.0, %v6570
      %v6572 = vpop.f32.mrb[0].mxu0
      %v6573 = vpop.f32.mrb[0].mxu0
      %v6574 = vadd.f32 0.0, %v6573
      %v6575 = vpop.f32.mrb[0].mxu0
      %6576 = vmatprep.mubr.bf16.mxu0 0
      %6577 = vmatmul.mubr.bf16.gmra.mrb[0].mxu0 %v6428
      %v6578 = vpop.f32.mrb[0].mxu0
      %v6579 = vadd.f32 0.0, %v6578
      %v6580 = vpop.f32.mrb[0].mxu0
      %v6581 = vpop.f32.mrb[0].mxu0
      %v6582 = vadd.f32 0.0, %v6581
      %v6583 = vpop.f32.mrb[0].mxu0
      %6584 = vmatprep.mubr.bf16.mxu0 0
      %6585 = vmatmul.mubr.bf16.gmra.mrb[0].mxu0 %v6431
      %v6586 = vpop.f32.mrb[0].mxu0
      %v6587 = vadd.f32 0.0, %v6586
      %v6588 = vpop.f32.mrb[0].mxu0
      %v6589 = vpop.f32.mrb[0].mxu0
      %v6590 = vadd.f32 0.0, %v6589
      %v6591 = vpop.f32.mrb[0].mxu0
      %6592 = vmatprep.mubr.bf16.mxu0 0
      %6593 = vmatmul.mubr.bf16.gmra.mrb[0].mxu0 %v6434
      %v6594 = vpop.f32.mrb[0].mxu0
      %v6595 = vadd.f32 0.0, %v6594
      %v6596 = vpop.f32.mrb[0].mxu0
      %v6597 = vpop.f32.mrb[0].mxu0
      %v6598 = vadd.f32 0.0, %v6597
      %v6599 = vpop.f32.mrb[0].mxu0
      %6600 = vdwg.mxu0
      %v6601 = vadd.f32 %v3554, %v6475
      %v6602 = vadd.f32 %v3557, %v6478
      %v6603 = vadd.f32 %v3562, %v6483
      %v6604 = vadd.f32 %v3565, %v6486
      %v6605 = vadd.f32 %v3570, %v6491
      %v6606 = vadd.f32 %v3573, %v6494
      %v6607 = vadd.f32 %v3578, %v6499
      %v6608 = vadd.f32 %v3581, %v6502
      %v6609 = vadd.f32 %v3586, %v6507
      %v6610 = vadd.f32 %v3589, %v6510
      %v6611 = vadd.f32 %v3594, %v6515
      %v6612 = vadd.f32 %v3597, %v6518
      %v6613 = vadd.f32 %v3602, %v6523
      %v6614 = vadd.f32 %v3605, %v6526
      %v6615 = vadd.f32 %v3610, %v6531
      %v6616 = vadd.f32 %v3613, %v6534
      %v6617 = vadd.f32 %v3618, %v6539
      %v6618 = vadd.f32 %v3621, %v6542
      %v6619 = vadd.f32 %v3626, %v6547
      %v6620 = vadd.f32 %v3629, %v6550
      %v6621 = vadd.f32 %v3634, %v6555
      %v6622 = vadd.f32 %v3637, %v6558
      %v6623 = vadd.f32 %v3642, %v6563
      %v6624 = vadd.f32 %v3645, %v6566
      %v6625 = vadd.f32 %v3650, %v6571
      %v6626 = vadd.f32 %v3653, %v6574
      %v6627 = vadd.f32 %v3658, %v6579
      %v6628 = vadd.f32 %v3661, %v6582
      %v6629 = vadd.f32 %v3666, %v6587
      %v6630 = vadd.f32 %v3669, %v6590
      %v6631 = vadd.f32 %v3674, %v6595
      %v6632 = vadd.f32 %v3677, %v6598
      %v6633 = vld [vmem:[%s16] sm:$0x1]
      %v6635 = vlaneseq
      %v6636 = vshrl.u32 %v6635, 7
      %v6637 = vsub.s32 0, %v6636
      %v6638 = vrot.slane %v6633, %v6637
      %v6640 = vadd.f32 %v6601, %v6638
      %v6641 = vadd.f32 %v6602, %v6638
      %v6642 = vadd.f32 %v6603, %v6638
      %v6643 = vadd.f32 %v6604, %v6638
      %v6644 = vadd.f32 %v6605, %v6638
      %v6645 = vadd.f32 %v6606, %v6638
      %v6646 = vadd.f32 %v6607, %v6638
      %v6647 = vadd.f32 %v6608, %v6638
      %v6648 = vadd.f32 %v6609, %v6638
      %v6649 = vadd.f32 %v6610, %v6638
      %v6650 = vadd.f32 %v6611, %v6638
      %v6651 = vadd.f32 %v6612, %v6638
      %v6652 = vadd.f32 %v6613, %v6638
      %v6653 = vadd.f32 %v6614, %v6638
      %v6654 = vadd.f32 %v6615, %v6638
      %v6655 = vadd.f32 %v6616, %v6638
      %v6656 = vadd.f32 %v6617, %v6638
      %v6657 = vadd.f32 %v6618, %v6638
      %v6658 = vadd.f32 %v6619, %v6638
      %v6659 = vadd.f32 %v6620, %v6638
      %v6660 = vadd.f32 %v6621, %v6638
      %v6661 = vadd.f32 %v6622, %v6638
      %v6662 = vadd.f32 %v6623, %v6638
      %v6663 = vadd.f32 %v6624, %v6638
      %v6664 = vadd.f32 %v6625, %v6638
      %v6665 = vadd.f32 %v6626, %v6638
      %v6666 = vadd.f32 %v6627, %v6638
      %v6667 = vadd.f32 %v6628, %v6638
      %v6668 = vadd.f32 %v6629, %v6638
      %v6669 = vadd.f32 %v6630, %v6638
      %v6670 = vadd.f32 %v6631, %v6638
      %v6671 = vadd.f32 %v6632, %v6638
      %v6672 = vmul.f32 %v6640, 0.17
      %v6673 = vmul.f32 %v6641, 0.17
      %v6674 = vmul.f32 %v6642, 0.17
      %v6675 = vmul.f32 %v6643, 0.17
      %v6676 = vmul.f32 %v6644, 0.17
      %v6677 = vmul.f32 %v6645, 0.17
      %v6678 = vmul.f32 %v6646, 0.17
      %v6679 = vmul.f32 %v6647, 0.17
      %v6680 = vmul.f32 %v6648, 0.17
      %v6681 = vmul.f32 %v6649, 0.17
      %v6682 = vmul.f32 %v6650, 0.17
      %v6683 = vmul.f32 %v6651, 0.17
      %v6684 = vmul.f32 %v6652, 0.17
      %v6685 = vmul.f32 %v6653, 0.17
      %v6686 = vmul.f32 %v6654, 0.17
      %v6687 = vmul.f32 %v6655, 0.17
      %v6688 = vmul.f32 %v6656, 0.17
      %v6689 = vmul.f32 %v6657, 0.17
      %v6690 = vmul.f32 %v6658, 0.17
      %v6691 = vmul.f32 %v6659, 0.17
      %v6692 = vmul.f32 %v6660, 0.17
      %v6693 = vmul.f32 %v6661, 0.17
      %v6694 = vmul.f32 %v6662, 0.17
      %v6695 = vmul.f32 %v6663, 0.17
      %v6696 = vmul.f32 %v6664, 0.17
      %v6697 = vmul.f32 %v6665, 0.17
      %v6698 = vmul.f32 %v6666, 0.17
      %v6699 = vmul.f32 %v6667, 0.17
      %v6700 = vmul.f32 %v6668, 0.17
      %v6701 = vmul.f32 %v6669, 0.17
      %v6702 = vmul.f32 %v6670, 0.17
      %v6703 = vmul.f32 %v6671, 0.17
      %v6704 = vadd.f32 %v6672, %v550
      %v6705 = vadd.f32 %v6673, %v551
      %v6706 = vadd.f32 %v6674, %v552
      %v6707 = vadd.f32 %v6675, %v553
      %v6708 = vadd.f32 %v6676, %v554
      %v6709 = vadd.f32 %v6677, %v555
      %v6710 = vadd.f32 %v6678, %v556
      %v6711 = vadd.f32 %v6679, %v557
      %v6712 = vadd.f32 %v6680, %v558
      %v6713 = vadd.f32 %v6681, %v559
      %v6714 = vadd.f32 %v6682, %v560
      %v6715 = vadd.f32 %v6683, %v561
      %v6716 = vadd.f32 %v6684, %v562
      %v6717 = vadd.f32 %v6685, %v563
      %v6718 = vadd.f32 %v6686, %v564
      %v6719 = vadd.f32 %v6687, %v565
      %v6720 = vadd.f32 %v6688, %v566
      %v6721 = vadd.f32 %v6689, %v567
      %v6722 = vadd.f32 %v6690, %v568
      %v6723 = vadd.f32 %v6691, %v569
      %v6724 = vadd.f32 %v6692, %v570
      %v6725 = vadd.f32 %v6693, %v571
      %v6726 = vadd.f32 %v6694, %v572
      %v6727 = vadd.f32 %v6695, %v573
      %v6728 = vadd.f32 %v6696, %v574
      %v6729 = vadd.f32 %v6697, %v575
      %v6730 = vadd.f32 %v6698, %v576
      %v6731 = vadd.f32 %v6699, %v577
      %v6732 = vadd.f32 %v6700, %v578
      %v6733 = vadd.f32 %v6701, %v579
      %v6734 = vadd.f32 %v6702, %v580
      %v6735 = vadd.f32 %v6703, %v581
      %v6736 = vmax.f32 %v6704, 0.0
      %v6737 = vmax.f32 %v6705, 0.0
      %v6738 = vmax.f32 %v6706, 0.0
      %v6739 = vmax.f32 %v6707, 0.0
      %v6740 = vmax.f32 %v6708, 0.0
      %v6741 = vmax.f32 %v6709, 0.0
      %v6742 = vmax.f32 %v6710, 0.0
      %v6743 = vmax.f32 %v6711, 0.0
      %v6744 = vmax.f32 %v6712, 0.0
      %v6745 = vmax.f32 %v6713, 0.0
      %v6746 = vmax.f32 %v6714, 0.0
      %v6747 = vmax.f32 %v6715, 0.0
      %v6748 = vmax.f32 %v6716, 0.0
      %v6749 = vmax.f32 %v6717, 0.0
      %v6750 = vmax.f32 %v6718, 0.0
      %v6751 = vmax.f32 %v6719, 0.0
      %v6752 = vmax.f32 %v6720, 0.0
      %v6753 = vmax.f32 %v6721, 0.0
      %v6754 = vmax.f32 %v6722, 0.0
      %v6755 = vmax.f32 %v6723, 0.0
      %v6756 = vmax.f32 %v6724, 0.0
      %v6757 = vmax.f32 %v6725, 0.0
      %v6758 = vmax.f32 %v6726, 0.0
      %v6759 = vmax.f32 %v6727, 0.0
      %v6760 = vmax.f32 %v6728, 0.0
      %v6761 = vmax.f32 %v6729, 0.0
      %v6762 = vmax.f32 %v6730, 0.0
      %v6763 = vmax.f32 %v6731, 0.0
      %v6764 = vmax.f32 %v6732, 0.0
      %v6765 = vmax.f32 %v6733, 0.0
      %v6766 = vmax.f32 %v6734, 0.0
      %v6767 = vmax.f32 %v6735, 0.0
      %6768 = vst.msk [vmem:[%s548] sm:$0xff] %vm606, %v6736
      %6769 = vst.msk [vmem:[%s548 + $0x8] sm:$0xff] %vm606, %v6737
      %6770 = vst.msk [vmem:[%s548 + $0x10] sm:$0xff] %vm606, %v6738
      %6771 = vst.msk [vmem:[%s548 + $0x18] sm:$0xff] %vm606, %v6739
      %6772 = vst.msk [vmem:[%s548 + $0x20] sm:$0xff] %vm606, %v6740
      %6773 = vst.msk [vmem:[%s548 + $0x28] sm:$0xff] %vm606, %v6741
      %6774 = vst.msk [vmem:[%s548 + $0x30] sm:$0xff] %vm606, %v6742
      %6775 = vst.msk [vmem:[%s548 + $0x38] sm:$0xff] %vm606, %v6743
      %6776 = vst.msk [vmem:[%s548 + $0x40] sm:$0xff] %vm606, %v6744
      %6777 = vst.msk [vmem:[%s548 + $0x48] sm:$0xff] %vm606, %v6745
      %6778 = vst.msk [vmem:[%s548 + $0x50] sm:$0xff] %vm606, %v6746
      %6779 = vst.msk [vmem:[%s548 + $0x58] sm:$0xff] %vm606, %v6747
      %6780 = vst.msk [vmem:[%s548 + $0x60] sm:$0xff] %vm606, %v6748
      %6781 = vst.msk [vmem:[%s548 + $0x68] sm:$0xff] %vm606, %v6749
      %6782 = vst.msk [vmem:[%s548 + $0x70] sm:$0xff] %vm606, %v6750
      %6783 = vst.msk [vmem:[%s548 + $0x78] sm:$0xff] %vm606, %v6751
      %6784 = vst.msk [vmem:[%s548 + $0x80] sm:$0xff] %vm606, %v6752
      %6785 = vst.msk [vmem:[%s548 + $0x88] sm:$0xff] %vm606, %v6753
      %6786 = vst.msk [vmem:[%s548 + $0x90] sm:$0xff] %vm606, %v6754
      %6787 = vst.msk [vmem:[%s548 + $0x98] sm:$0xff] %vm606, %v6755
      %6788 = vst.msk [vmem:[%s548 + $0xa0] sm:$0xff] %vm606, %v6756
      %6789 = vst.msk [vmem:[%s548 + $0xa8] sm:$0xff] %vm606, %v6757
      %6790 = vst.msk [vmem:[%s548 + $0xb0] sm:$0xff] %vm606, %v6758
      %6791 = vst.msk [vmem:[%s548 + $0xb8] sm:$0xff] %vm606, %v6759
      %6792 = vst.msk [vmem:[%s548 + $0xc0] sm:$0xff] %vm606, %v6760
      %6793 = vst.msk [vmem:[%s548 + $0xc8] sm:$0xff] %vm606, %v6761
      %6794 = vst.msk [vmem:[%s548 + $0xd0] sm:$0xff] %vm606, %v6762
      %6795 = vst.msk [vmem:[%s548 + $0xd8] sm:$0xff] %vm606, %v6763
      %6796 = vst.msk [vmem:[%s548 + $0xe0] sm:$0xff] %vm606, %v6764
      %6797 = vst.msk [vmem:[%s548 + $0xe8] sm:$0xff] %vm606, %v6765
      %6798 = vst.msk [vmem:[%s548 + $0xf0] sm:$0xff] %vm606, %v6766
      %6799 = vst.msk [vmem:[%s548 + $0xf8] sm:$0xff] %vm606, %v6767
      %p6800 = scmp.lt.s32.totalorder %s28, 1
      %s6801 = scalar_select %p6800, %s28, 1
      %s6802 = smul.addr %s6801, 32
      %s6803 = smul.addr %s6802, 8
      %s6804 = scalar_lea.vmem %s17, %s6803
      // Predicated region
      $region89: #{tpu_custom_call.1} parent=87 // pred_check
        %p6805 = pneg %p408
      $region90: #{tpu_custom_call.1} parent=87 // pred_check_branch
        %6807 = sbr.rel (%p6805) target = $region92
      $region91: #{tpu_custom_call.1} parent=87 // pred_region
        _
      $region92: #{tpu_custom_call.1} parent=87 // pred_fallthru
        _
    $region88: #{tpu_custom_call.1} parent=5 // pred_fallthru
      _
    %p6808 = scmp.le.s32.totalorder 2, %s23
    // Predicated region
    $region93: #{tpu_custom_call.1} parent=5 // pred_check
      %p6809 = pneg %p6808
    $region94: #{tpu_custom_call.1} parent=5 // pred_check_branch
      %6811 = sbr.rel (%p6809) target = $region96
    $region95: #{tpu_custom_call.1} parent=5 // pred_region
      %s6812 = ssub.s32 %s23, 2
      // Predicated region
      $region97: #{tpu_custom_call.1} parent=95 // pred_check
        %p6813 = pneg %p414
      $region98: #{tpu_custom_call.1} parent=95 // pred_check_branch
        %6815 = sbr.rel (%p6813) target = $region100
      $region99: #{tpu_custom_call.1} parent=95 // pred_region
        %p6816 = scmp.lt.s32.totalorder %s29, 1
        %s6817 = scalar_select %p6816, %s29, 1
        %s6818 = smul.addr %s6817, 32
        %s6819 = smul.addr %s6818, 8
        %s6820 = scalar_lea.vmem %s17, %s6819
      $region100: #{tpu_custom_call.1} parent=95 // pred_fallthru
        _
    $region96: #{tpu_custom_call.1} parent=5 // pred_fallthru
      _
  $region6: #{tpu_custom_call.1} parent=0 // loop_footer
    %s27 = sadd.s32 1, %s23
  $region7: #{tpu_custom_call.1} parent=0 // loop_footer_branch
    %22 = sbr.rel target = $region3
  $region8: #{tpu_custom_call.1} parent=0 // loop_exit
    _

</llo_original>
